<compile_context>
chip_gen: v7x
topology: tpu7x:2x2x1
jax: 0.10.0
libtpu: 0.0.40
codegen_flags: <defaults>
</compile_context>

<pallas_src>
import functools

import jax
import jax.numpy as jnp
from jax.experimental import pallas as pl
from jax.experimental.pallas import tpu as pltpu


def _gcn_critic_kernel(xp_ref, adj_ref, vx_ref,
                       w1bt_ref, b1_ref, w2t_ref, b2_ref,
                       wm1t_ref, bm1_ref, wm2t_ref, bm2_ref,
                       wf1t_ref, bf1_ref, wf2_ref, bf2_ref,
                       out_ref, *, n):
    # Shapes (feature-major, batch along lanes):
    #   xp_ref : [N*XP, tb]   xp[j*XP+k, b] = X[b, j, k]
    #   adj_ref: [N*N, tb]    adj[i*N+j, b] = A_hat[b, i, j]
    #   vx_ref : [XV, tb]
    #   w1bt   : [N*D, N*XP]  kron(I_N, W1)^T (block-diagonal layer-1 projection)
    #   w2t/wm1t/wm2t/wf1t   : transposed weights;   b*: [D, 1] column biases
    #   wf2    : [D, 1]       final Linear(D,1) weight as a column
    #   bf2    : (1,)         scalar bias, in SMEM
    #   out_ref: [1, tb]      per-batch value (lane dense)
    tb = vx_ref.shape[1]
    d = w2t_ref.shape[0]

    def adj_row(c):
        # A_hat[:, i, j] for c = i*n + j, as a [1, tb] row (sublane-broadcast operand).
        return adj_ref[pl.ds(c, 1), :]

    # ---- GCN layer 1: block-diagonal MXU projection, then VPU aggregation ----
    # xw rows [j*d, (j+1)*d) hold (X W1)^T for node j.
    xw = jnp.dot(w1bt_ref[...], xp_ref[...], preferred_element_type=jnp.float32)
    xw_nodes = [xw[j * d:(j + 1) * d, :] for j in range(n)]            # n x [d, tb]

    b1 = b1_ref[...]
    h1_nodes = []
    for i in range(n):
        acc = adj_row(i * n) * xw_nodes[0]
        for j in range(1, n):
            acc = acc + adj_row(i * n + j) * xw_nodes[j]
        h1_nodes.append(jnp.maximum(acc + b1, 0.0))
    h1 = jnp.concatenate(h1_nodes, axis=1)                             # [d, n*tb]

    # ---- GCN layer 2: one big MXU matmul, then VPU aggregation ----
    hw2 = jnp.dot(w2t_ref[...], h1, preferred_element_type=jnp.float32)    # [d, n*tb]
    hw2_nodes = [hw2[:, j * tb:(j + 1) * tb] for j in range(n)]
    b2 = b2_ref[...]
    h2_nodes = []
    for i in range(n):
        acc = adj_row(i * n) * hw2_nodes[0]
        for j in range(1, n):
            acc = acc + adj_row(i * n + j) * hw2_nodes[j]
        h2_nodes.append(acc + b2)                                      # n x [d, tb]

    # ---- MLPNet on v_net_x: Linear -> ReLU -> Linear ----
    v = jnp.dot(wm1t_ref[...], vx_ref[...], preferred_element_type=jnp.float32)
    v = jnp.maximum(v + bm1_ref[...], 0.0)
    v = jnp.dot(wm2t_ref[...], v, preferred_element_type=jnp.float32) + bm2_ref[...]

    # ---- Fusion + first head layer (one big MXU matmul) ----
    f = jnp.concatenate([h2_nodes[i] + v for i in range(n)], axis=1)   # [d, n*tb]
    g = jnp.dot(wf1t_ref[...], f, preferred_element_type=jnp.float32)
    g = jnp.maximum(g + bf1_ref[...], 0.0)                             # [d, n*tb]

    # ---- Head: mean over nodes FIRST, then Linear(D,1) as a sublane reduce ----
    gm = g[:, 0:tb]
    for i in range(1, n):
        gm = gm + g[:, i * tb:(i + 1) * tb]
    gm = gm * (1.0 / n)                                                # [d, tb]
    value = jnp.sum(gm * wf2_ref[...], axis=0, keepdims=True) + bf2_ref[0]   # [1, tb]
    out_ref[...] = value.astype(out_ref.dtype)


def _round_up(x, m):
    return ((x + m - 1) // m) * m


def _pad_cols(a, cols):
    if a.shape[1] == cols:
        return a
    return jnp.pad(a, ((0, 0), (0, cols - a.shape[1])))


def gcn_critic_forward(p_x, p_adj_norm, v_x, params, *, tile_b=None):
    """p_x: [B, N, XP]; p_adj_norm: [B, N, N] = D^-1/2 (A+I) D^-1/2; v_x: [B, XV] -> [B]."""
    B, N, XP = p_x.shape
    if v_x.shape[0] != B:
        raise ValueError(f"Batch size mismatch: p_net {p_x.shape}, v_net_x {v_x.shape}")
    XV = v_x.shape[1]
    D = params["w_gcn1"].shape[1]
    f32 = jnp.float32

    if tile_b is None:
        # Multiple of 128 (lane-aligned node/batch slices), capped at 512 so the
        # per-step working set (~12 MiB) stays far below v7x's 64 MiB VMEM, and
        # aiming for >=2 grid steps so both v7x TensorCores get work.  On v5e/v6e
        # (128 MiB VMEM) a larger tile_b can be passed explicitly for big batches.
        tile_b = min(512, max(128, _round_up(pl.cdiv(B, 2), 128)))
    tile_b = max(128, _round_up(tile_b, 128))
    b_pad = pl.cdiv(B, tile_b) * tile_b
    num_tiles = b_pad // tile_b

    # Flattened, feature-major inputs: one lane-dense row block per grid step.
    xp_t = _pad_cols(p_x.reshape(B, N * XP).T.astype(f32), b_pad)          # [N*XP, b_pad]
    adj_t = _pad_cols(p_adj_norm.reshape(B, N * N).T.astype(f32), b_pad)   # [N*N,  b_pad]
    vx_t = _pad_cols(v_x.T.astype(f32), b_pad)                             # [XV,   b_pad]

    # Transposed weights / column biases. Layer-1 projection of all N nodes is one
    # matmul with the block-diagonal weight kron(I_N, W1)^T.
    w1bt = jnp.kron(jnp.eye(N, dtype=f32), params["w_gcn1"].astype(f32)).T  # [N*D, N*XP]
    w2t = params["w_gcn2"].T
    wm1t = params["w_mlp1"].T
    wm2t = params["w_mlp2"].T
    wf1t = params["w_fuse1"].T
    b1c = params["b_gcn1"].reshape(D, 1)
    b2c = params["b_gcn2"].reshape(D, 1)
    bm1c = params["b_mlp1"].reshape(D, 1)
    bm2c = params["b_mlp2"].reshape(D, 1)
    bf1c = params["b_fuse1"].reshape(D, 1)
    wf2c = params["w_fuse2"].reshape(D, 1)
    bf2 = params["b_fuse2"].reshape(1)

    def batch_spec(rows):
        return pl.BlockSpec((rows, tile_b), lambda i: (0, i))

    const = lambda i: (0, 0)
    # NOTE: the weight/bias inputs have constant index_maps so Pallas keeps them
    # resident across grid steps; Buffered(1) would only shave ~1 MiB of VMEM here.

    out = pl.pallas_call(
        functools.partial(_gcn_critic_kernel, n=N),
        out_shape=jax.ShapeDtypeStruct((1, b_pad), jnp.float32),
        grid=(num_tiles,),
        in_specs=[
            batch_spec(N * XP),
            batch_spec(N * N),
            batch_spec(XV),
            pl.BlockSpec((N * D, N * XP), const),
            pl.BlockSpec((D, 1), const),
            pl.BlockSpec((D, D), const),
            pl.BlockSpec((D, 1), const),
            pl.BlockSpec((D, XV), const),
            pl.BlockSpec((D, 1), const),
            pl.BlockSpec((D, D), const),
            pl.BlockSpec((D, 1), const),
            pl.BlockSpec((D, D), const),
            pl.BlockSpec((D, 1), const),
            pl.BlockSpec((D, 1), const),
            pl.BlockSpec(memory_space=pltpu.MemorySpace.SMEM),
        ],
        out_specs=pl.BlockSpec((1, tile_b), lambda i: (0, i)),
        compiler_params=pltpu.CompilerParams(
            dimension_semantics=("parallel",),
            vmem_limit_bytes=48 * 1024 * 1024,
        ),
    )(xp_t, adj_t, vx_t, w1bt,
      b1c, w2t, b2c, wm1t, bm1c, wm2t, bm2c, wf1t, bf1c, wf2c, bf2)
    return out[0, :B]


def _normalize_adj(adj):
    """A_hat = D^-1/2 (A + I) D^-1/2 (GCNConv default, with self-loops)."""
    n = adj.shape[-1]
    a = adj + jnp.eye(n, dtype=adj.dtype)
    deg = a.sum(-1)
    dinv = jnp.where(deg > 0, 1.0 / jnp.sqrt(deg), 0.0)
    return a * dinv[..., :, None] * dinv[..., None, :]


def _reference(p_x, adj_norm, v_x, p):
    hi = jax.lax.Precision.HIGHEST
    h = jnp.einsum("bnk,kd->bnd", p_x, p["w_gcn1"], precision=hi)
    h = jnp.einsum("bij,bjd->bid", adj_norm, h, precision=hi) + p["b_gcn1"]
    h = jnp.maximum(h, 0.0)
    h = jnp.einsum("bnk,kd->bnd", h, p["w_gcn2"], precision=hi)
    h = jnp.einsum("bij,bjd->bid", adj_norm, h, precision=hi) + p["b_gcn2"]

    v = jnp.maximum(jnp.dot(v_x, p["w_mlp1"], precision=hi) + p["b_mlp1"], 0.0)
    v = jnp.dot(v, p["w_mlp2"], precision=hi) + p["b_mlp2"]

    f = h + v[:, None, :]
    g = jnp.maximum(jnp.einsum("bnd,de->bne", f, p["w_fuse1"], precision=hi)
                    + p["b_fuse1"], 0.0)
    logits = jnp.einsum("bnd,d->bn", g, p["w_fuse2"][0], precision=hi) + p["b_fuse2"][0]
    return logits.mean(axis=1)


if __name__ == "__main__":
    # Small shapes consistent with the module: batch=2, p_net_num_nodes=8,
    # p_net_x_dim=4, v_node_feature_dim=6, embedding_dim=128 (module default).
    B, N, XP, XV, D = 2, 8, 4, 6, 128
    key = jax.random.PRNGKey(0)
    ks = jax.random.split(key, 18)

    p_x = jax.random.normal(ks[0], (B, N, XP), dtype=jnp.float32)
    v_x = jax.random.normal(ks[1], (B, XV), dtype=jnp.float32)

    # Random undirected p-net graph -> dense normalized adjacency.
    a = (jax.random.uniform(ks[2], (B, N, N)) < 0.4).astype(jnp.float32)
    a = jnp.maximum(a, jnp.swapaxes(a, -1, -2))
    a = a * (1.0 - jnp.eye(N, dtype=jnp.float32))
    adj_norm = _normalize_adj(a)

    def u(k, shape, fan_in):
        bnd = 1.0 / jnp.sqrt(jnp.float32(fan_in))
        return jax.random.uniform(k, shape, jnp.float32, -bnd, bnd)

    params = {
        "w_gcn1": u(ks[3], (XP, D), XP),  "b_gcn1": u(ks[4], (1, D), XP),
        "w_gcn2": u(ks[5], (D, D), D),    "b_gcn2": u(ks[6], (1, D), D),
        "w_mlp1": u(ks[7], (XV, D), XV),  "b_mlp1": u(ks[8], (1, D), XV),
        "w_mlp2": u(ks[9], (D, D), D),    "b_mlp2": u(ks[10], (1, D), D),
        "w_fuse1": u(ks[11], (D, D), D),  "b_fuse1": u(ks[12], (1, D), D),
        "w_fuse2": u(ks[13], (1, D), D),  "b_fuse2": u(ks[14], (1,), D),
    }

    out = gcn_critic_forward(p_x, adj_norm, v_x, params)
    out = jax.block_until_ready(out)

    ref = _reference(p_x, adj_norm, v_x, params)
    assert out.shape == (B,), out.shape
    assert jnp.allclose(out, ref, atol=1e-3, rtol=1e-3), (out, ref)
    print("KERNEL_OK")
</pallas_src>

<mosaic_0001>
module attributes {stable_mosaic.version = 11 : i64} {
  func.func @_gcn_critic_kernel(%arg0: i32, %arg1: memref<32x128xf32, #tpu.memory_space<vmem>>, %arg2: memref<64x128xf32, #tpu.memory_space<vmem>>, %arg3: memref<6x128xf32, #tpu.memory_space<vmem>>, %arg4: memref<1024x32xf32, #tpu.memory_space<vmem>>, %arg5: memref<128x1xf32, #tpu.memory_space<vmem>>, %arg6: memref<128x128xf32, #tpu.memory_space<vmem>>, %arg7: memref<128x1xf32, #tpu.memory_space<vmem>>, %arg8: memref<128x6xf32, #tpu.memory_space<vmem>>, %arg9: memref<128x1xf32, #tpu.memory_space<vmem>>, %arg10: memref<128x128xf32, #tpu.memory_space<vmem>>, %arg11: memref<128x1xf32, #tpu.memory_space<vmem>>, %arg12: memref<128x128xf32, #tpu.memory_space<vmem>>, %arg13: memref<128x1xf32, #tpu.memory_space<vmem>>, %arg14: memref<128x1xf32, #tpu.memory_space<vmem>>, %arg15: memref<1xf32, #tpu.memory_space<smem>>, %arg16: memref<1x128xf32, #tpu.memory_space<vmem>>) attributes {dimension_semantics = [#tpu.dimension_semantics<parallel>], iteration_bounds = array<i64: 1>, scalar_prefetch = 0 : i64, scratch_operands = 0 : i64, tpu.core_type = #tpu.core_type<tc>, window_params = [{transform_indices = @transform_0, window_bounds = array<i64: 32, 128>}, {transform_indices = @transform_1, window_bounds = array<i64: 64, 128>}, {transform_indices = @transform_2, window_bounds = array<i64: 6, 128>}, {pipeline_mode = #tpu.pipeline_mode<synchronous>, transform_indices = @transform_3, window_bounds = array<i64: 1024, 32>}, {pipeline_mode = #tpu.pipeline_mode<synchronous>, transform_indices = @transform_4, window_bounds = array<i64: 128, 1>}, {pipeline_mode = #tpu.pipeline_mode<synchronous>, transform_indices = @transform_5, window_bounds = array<i64: 128, 128>}, {pipeline_mode = #tpu.pipeline_mode<synchronous>, transform_indices = @transform_6, window_bounds = array<i64: 128, 1>}, {pipeline_mode = #tpu.pipeline_mode<synchronous>, transform_indices = @transform_7, window_bounds = array<i64: 128, 6>}, {pipeline_mode = #tpu.pipeline_mode<synchronous>, transform_indices = @transform_8, window_bounds = array<i64: 128, 1>}, {pipeline_mode = #tpu.pipeline_mode<synchronous>, transform_indices = @transform_9, window_bounds = array<i64: 128, 128>}, {pipeline_mode = #tpu.pipeline_mode<synchronous>, transform_indices = @transform_10, window_bounds = array<i64: 128, 1>}, {pipeline_mode = #tpu.pipeline_mode<synchronous>, transform_indices = @transform_11, window_bounds = array<i64: 128, 128>}, {pipeline_mode = #tpu.pipeline_mode<synchronous>, transform_indices = @transform_12, window_bounds = array<i64: 128, 1>}, {pipeline_mode = #tpu.pipeline_mode<synchronous>, transform_indices = @transform_13, window_bounds = array<i64: 128, 1>}, {transform_indices = @transform_14, window_bounds = array<i64: 1>}, {transform_indices = @transform_15, window_bounds = array<i64: 1, 128>}]} {
    %c0 = arith.constant 0 : index
    %c0_0 = arith.constant 0 : index
    %0 = vector.load %arg4[%c0, %c0_0] : memref<1024x32xf32, #tpu.memory_space<vmem>>, vector<1024x32xf32>
    %c0_1 = arith.constant 0 : index
    %c0_2 = arith.constant 0 : index
    %1 = vector.load %arg1[%c0_1, %c0_2] : memref<32x128xf32, #tpu.memory_space<vmem>>, vector<32x128xf32>
    %cst = arith.constant dense<0.000000e+00> : vector<1024x128xf32>
    %2 = tpu.matmul %0, %1, %cst {dimension_numbers = #tpu.dot_dimension_numbers<[1], [0], [0], [1], [0, 0, 1, 1], [], []>} : vector<1024x32xf32>, vector<32x128xf32>, vector<1024x128xf32> -> vector<1024x128xf32>
    %3 = vector.extract_strided_slice %2 {offsets = [0, 0], sizes = [128, 128], strides = [1, 1]} : vector<1024x128xf32> to vector<128x128xf32>
    %4 = vector.extract_strided_slice %2 {offsets = [128, 0], sizes = [128, 128], strides = [1, 1]} : vector<1024x128xf32> to vector<128x128xf32>
    %5 = vector.extract_strided_slice %2 {offsets = [256, 0], sizes = [128, 128], strides = [1, 1]} : vector<1024x128xf32> to vector<128x128xf32>
    %6 = vector.extract_strided_slice %2 {offsets = [384, 0], sizes = [128, 128], strides = [1, 1]} : vector<1024x128xf32> to vector<128x128xf32>
    %7 = vector.extract_strided_slice %2 {offsets = [512, 0], sizes = [128, 128], strides = [1, 1]} : vector<1024x128xf32> to vector<128x128xf32>
    %8 = vector.extract_strided_slice %2 {offsets = [640, 0], sizes = [128, 128], strides = [1, 1]} : vector<1024x128xf32> to vector<128x128xf32>
    %9 = vector.extract_strided_slice %2 {offsets = [768, 0], sizes = [128, 128], strides = [1, 1]} : vector<1024x128xf32> to vector<128x128xf32>
    %10 = vector.extract_strided_slice %2 {offsets = [896, 0], sizes = [128, 128], strides = [1, 1]} : vector<1024x128xf32> to vector<128x128xf32>
    %c0_3 = arith.constant 0 : index
    %c0_4 = arith.constant 0 : index
    %11 = vector.load %arg5[%c0_3, %c0_4] : memref<128x1xf32, #tpu.memory_space<vmem>>, vector<128x1xf32>
    %c0_5 = arith.constant 0 : index
    %c0_6 = arith.constant 0 : index
    %12 = vector.load %arg2[%c0_5, %c0_6] : memref<64x128xf32, #tpu.memory_space<vmem>>, vector<1x128xf32>
    %13 = vector.broadcast %12 : vector<1x128xf32> to vector<128x128xf32>
    %14 = arith.mulf %13, %3 : vector<128x128xf32>
    %c1 = arith.constant 1 : index
    %c0_7 = arith.constant 0 : index
    %15 = vector.load %arg2[%c1, %c0_7] : memref<64x128xf32, #tpu.memory_space<vmem>>, vector<1x128xf32>
    %16 = vector.broadcast %15 : vector<1x128xf32> to vector<128x128xf32>
    %17 = arith.mulf %16, %4 : vector<128x128xf32>
    %18 = arith.addf %14, %17 : vector<128x128xf32>
    %c2 = arith.constant 2 : index
    %c0_8 = arith.constant 0 : index
    %19 = vector.load %arg2[%c2, %c0_8] : memref<64x128xf32, #tpu.memory_space<vmem>>, vector<1x128xf32>
    %20 = vector.broadcast %19 : vector<1x128xf32> to vector<128x128xf32>
    %21 = arith.mulf %20, %5 : vector<128x128xf32>
    %22 = arith.addf %18, %21 : vector<128x128xf32>
    %c3 = arith.constant 3 : index
    %c0_9 = arith.constant 0 : index
    %23 = vector.load %arg2[%c3, %c0_9] : memref<64x128xf32, #tpu.memory_space<vmem>>, vector<1x128xf32>
    %24 = vector.broadcast %23 : vector<1x128xf32> to vector<128x128xf32>
    %25 = arith.mulf %24, %6 : vector<128x128xf32>
    %26 = arith.addf %22, %25 : vector<128x128xf32>
    %c4 = arith.constant 4 : index
    %c0_10 = arith.constant 0 : index
    %27 = vector.load %arg2[%c4, %c0_10] : memref<64x128xf32, #tpu.memory_space<vmem>>, vector<1x128xf32>
    %28 = vector.broadcast %27 : vector<1x128xf32> to vector<128x128xf32>
    %29 = arith.mulf %28, %7 : vector<128x128xf32>
    %30 = arith.addf %26, %29 : vector<128x128xf32>
    %c5 = arith.constant 5 : index
    %c0_11 = arith.constant 0 : index
    %31 = vector.load %arg2[%c5, %c0_11] : memref<64x128xf32, #tpu.memory_space<vmem>>, vector<1x128xf32>
    %32 = vector.broadcast %31 : vector<1x128xf32> to vector<128x128xf32>
    %33 = arith.mulf %32, %8 : vector<128x128xf32>
    %34 = arith.addf %30, %33 : vector<128x128xf32>
    %c6 = arith.constant 6 : index
    %c0_12 = arith.constant 0 : index
    %35 = vector.load %arg2[%c6, %c0_12] : memref<64x128xf32, #tpu.memory_space<vmem>>, vector<1x128xf32>
    %36 = vector.broadcast %35 : vector<1x128xf32> to vector<128x128xf32>
    %37 = arith.mulf %36, %9 : vector<128x128xf32>
    %38 = arith.addf %34, %37 : vector<128x128xf32>
    %c7 = arith.constant 7 : index
    %c0_13 = arith.constant 0 : index
    %39 = vector.load %arg2[%c7, %c0_13] : memref<64x128xf32, #tpu.memory_space<vmem>>, vector<1x128xf32>
    %40 = vector.broadcast %39 : vector<1x128xf32> to vector<128x128xf32>
    %41 = arith.mulf %40, %10 : vector<128x128xf32>
    %42 = arith.addf %38, %41 : vector<128x128xf32>
    %43 = vector.broadcast %11 : vector<128x1xf32> to vector<128x128xf32>
    %44 = arith.addf %42, %43 : vector<128x128xf32>
    %cst_14 = arith.constant 0.000000e+00 : f32
    %45 = vector.broadcast %cst_14 : f32 to vector<128x128xf32>
    %46 = arith.maximumf %44, %45 : vector<128x128xf32>
    %c8 = arith.constant 8 : index
    %c0_15 = arith.constant 0 : index
    %47 = vector.load %arg2[%c8, %c0_15] : memref<64x128xf32, #tpu.memory_space<vmem>>, vector<1x128xf32>
    %48 = vector.broadcast %47 : vector<1x128xf32> to vector<128x128xf32>
    %49 = arith.mulf %48, %3 : vector<128x128xf32>
    %c9 = arith.constant 9 : index
    %c0_16 = arith.constant 0 : index
    %50 = vector.load %arg2[%c9, %c0_16] : memref<64x128xf32, #tpu.memory_space<vmem>>, vector<1x128xf32>
    %51 = vector.broadcast %50 : vector<1x128xf32> to vector<128x128xf32>
    %52 = arith.mulf %51, %4 : vector<128x128xf32>
    %53 = arith.addf %49, %52 : vector<128x128xf32>
    %c10 = arith.constant 10 : index
    %c0_17 = arith.constant 0 : index
    %54 = vector.load %arg2[%c10, %c0_17] : memref<64x128xf32, #tpu.memory_space<vmem>>, vector<1x128xf32>
    %55 = vector.broadcast %54 : vector<1x128xf32> to vector<128x128xf32>
    %56 = arith.mulf %55, %5 : vector<128x128xf32>
    %57 = arith.addf %53, %56 : vector<128x128xf32>
    %c11 = arith.constant 11 : index
    %c0_18 = arith.constant 0 : index
    %58 = vector.load %arg2[%c11, %c0_18] : memref<64x128xf32, #tpu.memory_space<vmem>>, vector<1x128xf32>
    %59 = vector.broadcast %58 : vector<1x128xf32> to vector<128x128xf32>
    %60 = arith.mulf %59, %6 : vector<128x128xf32>
    %61 = arith.addf %57, %60 : vector<128x128xf32>
    %c12 = arith.constant 12 : index
    %c0_19 = arith.constant 0 : index
    %62 = vector.load %arg2[%c12, %c0_19] : memref<64x128xf32, #tpu.memory_space<vmem>>, vector<1x128xf32>
    %63 = vector.broadcast %62 : vector<1x128xf32> to vector<128x128xf32>
    %64 = arith.mulf %63, %7 : vector<128x128xf32>
    %65 = arith.addf %61, %64 : vector<128x128xf32>
    %c13 = arith.constant 13 : index
    %c0_20 = arith.constant 0 : index
    %66 = vector.load %arg2[%c13, %c0_20] : memref<64x128xf32, #tpu.memory_space<vmem>>, vector<1x128xf32>
    %67 = vector.broadcast %66 : vector<1x128xf32> to vector<128x128xf32>
    %68 = arith.mulf %67, %8 : vector<128x128xf32>
    %69 = arith.addf %65, %68 : vector<128x128xf32>
    %c14 = arith.constant 14 : index
    %c0_21 = arith.constant 0 : index
    %70 = vector.load %arg2[%c14, %c0_21] : memref<64x128xf32, #tpu.memory_space<vmem>>, vector<1x128xf32>
    %71 = vector.broadcast %70 : vector<1x128xf32> to vector<128x128xf32>
    %72 = arith.mulf %71, %9 : vector<128x128xf32>
    %73 = arith.addf %69, %72 : vector<128x128xf32>
    %c15 = arith.constant 15 : index
    %c0_22 = arith.constant 0 : index
    %74 = vector.load %arg2[%c15, %c0_22] : memref<64x128xf32, #tpu.memory_space<vmem>>, vector<1x128xf32>
    %75 = vector.broadcast %74 : vector<1x128xf32> to vector<128x128xf32>
    %76 = arith.mulf %75, %10 : vector<128x128xf32>
    %77 = arith.addf %73, %76 : vector<128x128xf32>
    %78 = vector.broadcast %11 : vector<128x1xf32> to vector<128x128xf32>
    %79 = arith.addf %77, %78 : vector<128x128xf32>
    %cst_23 = arith.constant 0.000000e+00 : f32
    %80 = vector.broadcast %cst_23 : f32 to vector<128x128xf32>
    %81 = arith.maximumf %79, %80 : vector<128x128xf32>
    %c16 = arith.constant 16 : index
    %c0_24 = arith.constant 0 : index
    %82 = vector.load %arg2[%c16, %c0_24] : memref<64x128xf32, #tpu.memory_space<vmem>>, vector<1x128xf32>
    %83 = vector.broadcast %82 : vector<1x128xf32> to vector<128x128xf32>
    %84 = arith.mulf %83, %3 : vector<128x128xf32>
    %c17 = arith.constant 17 : index
    %c0_25 = arith.constant 0 : index
    %85 = vector.load %arg2[%c17, %c0_25] : memref<64x128xf32, #tpu.memory_space<vmem>>, vector<1x128xf32>
    %86 = vector.broadcast %85 : vector<1x128xf32> to vector<128x128xf32>
    %87 = arith.mulf %86, %4 : vector<128x128xf32>
    %88 = arith.addf %84, %87 : vector<128x128xf32>
    %c18 = arith.constant 18 : index
    %c0_26 = arith.constant 0 : index
    %89 = vector.load %arg2[%c18, %c0_26] : memref<64x128xf32, #tpu.memory_space<vmem>>, vector<1x128xf32>
    %90 = vector.broadcast %89 : vector<1x128xf32> to vector<128x128xf32>
    %91 = arith.mulf %90, %5 : vector<128x128xf32>
    %92 = arith.addf %88, %91 : vector<128x128xf32>
    %c19 = arith.constant 19 : index
    %c0_27 = arith.constant 0 : index
    %93 = vector.load %arg2[%c19, %c0_27] : memref<64x128xf32, #tpu.memory_space<vmem>>, vector<1x128xf32>
    %94 = vector.broadcast %93 : vector<1x128xf32> to vector<128x128xf32>
    %95 = arith.mulf %94, %6 : vector<128x128xf32>
    %96 = arith.addf %92, %95 : vector<128x128xf32>
    %c20 = arith.constant 20 : index
    %c0_28 = arith.constant 0 : index
    %97 = vector.load %arg2[%c20, %c0_28] : memref<64x128xf32, #tpu.memory_space<vmem>>, vector<1x128xf32>
    %98 = vector.broadcast %97 : vector<1x128xf32> to vector<128x128xf32>
    %99 = arith.mulf %98, %7 : vector<128x128xf32>
    %100 = arith.addf %96, %99 : vector<128x128xf32>
    %c21 = arith.constant 21 : index
    %c0_29 = arith.constant 0 : index
    %101 = vector.load %arg2[%c21, %c0_29] : memref<64x128xf32, #tpu.memory_space<vmem>>, vector<1x128xf32>
    %102 = vector.broadcast %101 : vector<1x128xf32> to vector<128x128xf32>
    %103 = arith.mulf %102, %8 : vector<128x128xf32>
    %104 = arith.addf %100, %103 : vector<128x128xf32>
    %c22 = arith.constant 22 : index
    %c0_30 = arith.constant 0 : index
    %105 = vector.load %arg2[%c22, %c0_30] : memref<64x128xf32, #tpu.memory_space<vmem>>, vector<1x128xf32>
    %106 = vector.broadcast %105 : vector<1x128xf32> to vector<128x128xf32>
    %107 = arith.mulf %106, %9 : vector<128x128xf32>
    %108 = arith.addf %104, %107 : vector<128x128xf32>
    %c23 = arith.constant 23 : index
    %c0_31 = arith.constant 0 : index
    %109 = vector.load %arg2[%c23, %c0_31] : memref<64x128xf32, #tpu.memory_space<vmem>>, vector<1x128xf32>
    %110 = vector.broadcast %109 : vector<1x128xf32> to vector<128x128xf32>
    %111 = arith.mulf %110, %10 : vector<128x128xf32>
    %112 = arith.addf %108, %111 : vector<128x128xf32>
    %113 = vector.broadcast %11 : vector<128x1xf32> to vector<128x128xf32>
    %114 = arith.addf %112, %113 : vector<128x128xf32>
    %cst_32 = arith.constant 0.000000e+00 : f32
    %115 = vector.broadcast %cst_32 : f32 to vector<128x128xf32>
    %116 = arith.maximumf %114, %115 : vector<128x128xf32>
    %c24 = arith.constant 24 : index
    %c0_33 = arith.constant 0 : index
    %117 = vector.load %arg2[%c24, %c0_33] : memref<64x128xf32, #tpu.memory_space<vmem>>, vector<1x128xf32>
    %118 = vector.broadcast %117 : vector<1x128xf32> to vector<128x128xf32>
    %119 = arith.mulf %118, %3 : vector<128x128xf32>
    %c25 = arith.constant 25 : index
    %c0_34 = arith.constant 0 : index
    %120 = vector.load %arg2[%c25, %c0_34] : memref<64x128xf32, #tpu.memory_space<vmem>>, vector<1x128xf32>
    %121 = vector.broadcast %120 : vector<1x128xf32> to vector<128x128xf32>
    %122 = arith.mulf %121, %4 : vector<128x128xf32>
    %123 = arith.addf %119, %122 : vector<128x128xf32>
    %c26 = arith.constant 26 : index
    %c0_35 = arith.constant 0 : index
    %124 = vector.load %arg2[%c26, %c0_35] : memref<64x128xf32, #tpu.memory_space<vmem>>, vector<1x128xf32>
    %125 = vector.broadcast %124 : vector<1x128xf32> to vector<128x128xf32>
    %126 = arith.mulf %125, %5 : vector<128x128xf32>
    %127 = arith.addf %123, %126 : vector<128x128xf32>
    %c27 = arith.constant 27 : index
    %c0_36 = arith.constant 0 : index
    %128 = vector.load %arg2[%c27, %c0_36] : memref<64x128xf32, #tpu.memory_space<vmem>>, vector<1x128xf32>
    %129 = vector.broadcast %128 : vector<1x128xf32> to vector<128x128xf32>
    %130 = arith.mulf %129, %6 : vector<128x128xf32>
    %131 = arith.addf %127, %130 : vector<128x128xf32>
    %c28 = arith.constant 28 : index
    %c0_37 = arith.constant 0 : index
    %132 = vector.load %arg2[%c28, %c0_37] : memref<64x128xf32, #tpu.memory_space<vmem>>, vector<1x128xf32>
    %133 = vector.broadcast %132 : vector<1x128xf32> to vector<128x128xf32>
    %134 = arith.mulf %133, %7 : vector<128x128xf32>
    %135 = arith.addf %131, %134 : vector<128x128xf32>
    %c29 = arith.constant 29 : index
    %c0_38 = arith.constant 0 : index
    %136 = vector.load %arg2[%c29, %c0_38] : memref<64x128xf32, #tpu.memory_space<vmem>>, vector<1x128xf32>
    %137 = vector.broadcast %136 : vector<1x128xf32> to vector<128x128xf32>
    %138 = arith.mulf %137, %8 : vector<128x128xf32>
    %139 = arith.addf %135, %138 : vector<128x128xf32>
    %c30 = arith.constant 30 : index
    %c0_39 = arith.constant 0 : index
    %140 = vector.load %arg2[%c30, %c0_39] : memref<64x128xf32, #tpu.memory_space<vmem>>, vector<1x128xf32>
    %141 = vector.broadcast %140 : vector<1x128xf32> to vector<128x128xf32>
    %142 = arith.mulf %141, %9 : vector<128x128xf32>
    %143 = arith.addf %139, %142 : vector<128x128xf32>
    %c31 = arith.constant 31 : index
    %c0_40 = arith.constant 0 : index
    %144 = vector.load %arg2[%c31, %c0_40] : memref<64x128xf32, #tpu.memory_space<vmem>>, vector<1x128xf32>
    %145 = vector.broadcast %144 : vector<1x128xf32> to vector<128x128xf32>
    %146 = arith.mulf %145, %10 : vector<128x128xf32>
    %147 = arith.addf %143, %146 : vector<128x128xf32>
    %148 = vector.broadcast %11 : vector<128x1xf32> to vector<128x128xf32>
    %149 = arith.addf %147, %148 : vector<128x128xf32>
    %cst_41 = arith.constant 0.000000e+00 : f32
    %150 = vector.broadcast %cst_41 : f32 to vector<128x128xf32>
    %151 = arith.maximumf %149, %150 : vector<128x128xf32>
    %c32 = arith.constant 32 : index
    %c0_42 = arith.constant 0 : index
    %152 = vector.load %arg2[%c32, %c0_42] : memref<64x128xf32, #tpu.memory_space<vmem>>, vector<1x128xf32>
    %153 = vector.broadcast %152 : vector<1x128xf32> to vector<128x128xf32>
    %154 = arith.mulf %153, %3 : vector<128x128xf32>
    %c33 = arith.constant 33 : index
    %c0_43 = arith.constant 0 : index
    %155 = vector.load %arg2[%c33, %c0_43] : memref<64x128xf32, #tpu.memory_space<vmem>>, vector<1x128xf32>
    %156 = vector.broadcast %155 : vector<1x128xf32> to vector<128x128xf32>
    %157 = arith.mulf %156, %4 : vector<128x128xf32>
    %158 = arith.addf %154, %157 : vector<128x128xf32>
    %c34 = arith.constant 34 : index
    %c0_44 = arith.constant 0 : index
    %159 = vector.load %arg2[%c34, %c0_44] : memref<64x128xf32, #tpu.memory_space<vmem>>, vector<1x128xf32>
    %160 = vector.broadcast %159 : vector<1x128xf32> to vector<128x128xf32>
    %161 = arith.mulf %160, %5 : vector<128x128xf32>
    %162 = arith.addf %158, %161 : vector<128x128xf32>
    %c35 = arith.constant 35 : index
    %c0_45 = arith.constant 0 : index
    %163 = vector.load %arg2[%c35, %c0_45] : memref<64x128xf32, #tpu.memory_space<vmem>>, vector<1x128xf32>
    %164 = vector.broadcast %163 : vector<1x128xf32> to vector<128x128xf32>
    %165 = arith.mulf %164, %6 : vector<128x128xf32>
    %166 = arith.addf %162, %165 : vector<128x128xf32>
    %c36 = arith.constant 36 : index
    %c0_46 = arith.constant 0 : index
    %167 = vector.load %arg2[%c36, %c0_46] : memref<64x128xf32, #tpu.memory_space<vmem>>, vector<1x128xf32>
    %168 = vector.broadcast %167 : vector<1x128xf32> to vector<128x128xf32>
    %169 = arith.mulf %168, %7 : vector<128x128xf32>
    %170 = arith.addf %166, %169 : vector<128x128xf32>
    %c37 = arith.constant 37 : index
    %c0_47 = arith.constant 0 : index
    %171 = vector.load %arg2[%c37, %c0_47] : memref<64x128xf32, #tpu.memory_space<vmem>>, vector<1x128xf32>
    %172 = vector.broadcast %171 : vector<1x128xf32> to vector<128x128xf32>
    %173 = arith.mulf %172, %8 : vector<128x128xf32>
    %174 = arith.addf %170, %173 : vector<128x128xf32>
    %c38 = arith.constant 38 : index
    %c0_48 = arith.constant 0 : index
    %175 = vector.load %arg2[%c38, %c0_48] : memref<64x128xf32, #tpu.memory_space<vmem>>, vector<1x128xf32>
    %176 = vector.broadcast %175 : vector<1x128xf32> to vector<128x128xf32>
    %177 = arith.mulf %176, %9 : vector<128x128xf32>
    %178 = arith.addf %174, %177 : vector<128x128xf32>
    %c39 = arith.constant 39 : index
    %c0_49 = arith.constant 0 : index
    %179 = vector.load %arg2[%c39, %c0_49] : memref<64x128xf32, #tpu.memory_space<vmem>>, vector<1x128xf32>
    %180 = vector.broadcast %179 : vector<1x128xf32> to vector<128x128xf32>
    %181 = arith.mulf %180, %10 : vector<128x128xf32>
    %182 = arith.addf %178, %181 : vector<128x128xf32>
    %183 = vector.broadcast %11 : vector<128x1xf32> to vector<128x128xf32>
    %184 = arith.addf %182, %183 : vector<128x128xf32>
    %cst_50 = arith.constant 0.000000e+00 : f32
    %185 = vector.broadcast %cst_50 : f32 to vector<128x128xf32>
    %186 = arith.maximumf %184, %185 : vector<128x128xf32>
    %c40 = arith.constant 40 : index
    %c0_51 = arith.constant 0 : index
    %187 = vector.load %arg2[%c40, %c0_51] : memref<64x128xf32, #tpu.memory_space<vmem>>, vector<1x128xf32>
    %188 = vector.broadcast %187 : vector<1x128xf32> to vector<128x128xf32>
    %189 = arith.mulf %188, %3 : vector<128x128xf32>
    %c41 = arith.constant 41 : index
    %c0_52 = arith.constant 0 : index
    %190 = vector.load %arg2[%c41, %c0_52] : memref<64x128xf32, #tpu.memory_space<vmem>>, vector<1x128xf32>
    %191 = vector.broadcast %190 : vector<1x128xf32> to vector<128x128xf32>
    %192 = arith.mulf %191, %4 : vector<128x128xf32>
    %193 = arith.addf %189, %192 : vector<128x128xf32>
    %c42 = arith.constant 42 : index
    %c0_53 = arith.constant 0 : index
    %194 = vector.load %arg2[%c42, %c0_53] : memref<64x128xf32, #tpu.memory_space<vmem>>, vector<1x128xf32>
    %195 = vector.broadcast %194 : vector<1x128xf32> to vector<128x128xf32>
    %196 = arith.mulf %195, %5 : vector<128x128xf32>
    %197 = arith.addf %193, %196 : vector<128x128xf32>
    %c43 = arith.constant 43 : index
    %c0_54 = arith.constant 0 : index
    %198 = vector.load %arg2[%c43, %c0_54] : memref<64x128xf32, #tpu.memory_space<vmem>>, vector<1x128xf32>
    %199 = vector.broadcast %198 : vector<1x128xf32> to vector<128x128xf32>
    %200 = arith.mulf %199, %6 : vector<128x128xf32>
    %201 = arith.addf %197, %200 : vector<128x128xf32>
    %c44 = arith.constant 44 : index
    %c0_55 = arith.constant 0 : index
    %202 = vector.load %arg2[%c44, %c0_55] : memref<64x128xf32, #tpu.memory_space<vmem>>, vector<1x128xf32>
    %203 = vector.broadcast %202 : vector<1x128xf32> to vector<128x128xf32>
    %204 = arith.mulf %203, %7 : vector<128x128xf32>
    %205 = arith.addf %201, %204 : vector<128x128xf32>
    %c45 = arith.constant 45 : index
    %c0_56 = arith.constant 0 : index
    %206 = vector.load %arg2[%c45, %c0_56] : memref<64x128xf32, #tpu.memory_space<vmem>>, vector<1x128xf32>
    %207 = vector.broadcast %206 : vector<1x128xf32> to vector<128x128xf32>
    %208 = arith.mulf %207, %8 : vector<128x128xf32>
    %209 = arith.addf %205, %208 : vector<128x128xf32>
    %c46 = arith.constant 46 : index
    %c0_57 = arith.constant 0 : index
    %210 = vector.load %arg2[%c46, %c0_57] : memref<64x128xf32, #tpu.memory_space<vmem>>, vector<1x128xf32>
    %211 = vector.broadcast %210 : vector<1x128xf32> to vector<128x128xf32>
    %212 = arith.mulf %211, %9 : vector<128x128xf32>
    %213 = arith.addf %209, %212 : vector<128x128xf32>
    %c47 = arith.constant 47 : index
    %c0_58 = arith.constant 0 : index
    %214 = vector.load %arg2[%c47, %c0_58] : memref<64x128xf32, #tpu.memory_space<vmem>>, vector<1x128xf32>
    %215 = vector.broadcast %214 : vector<1x128xf32> to vector<128x128xf32>
    %216 = arith.mulf %215, %10 : vector<128x128xf32>
    %217 = arith.addf %213, %216 : vector<128x128xf32>
    %218 = vector.broadcast %11 : vector<128x1xf32> to vector<128x128xf32>
    %219 = arith.addf %217, %218 : vector<128x128xf32>
    %cst_59 = arith.constant 0.000000e+00 : f32
    %220 = vector.broadcast %cst_59 : f32 to vector<128x128xf32>
    %221 = arith.maximumf %219, %220 : vector<128x128xf32>
    %c48 = arith.constant 48 : index
    %c0_60 = arith.constant 0 : index
    %222 = vector.load %arg2[%c48, %c0_60] : memref<64x128xf32, #tpu.memory_space<vmem>>, vector<1x128xf32>
    %223 = vector.broadcast %222 : vector<1x128xf32> to vector<128x128xf32>
    %224 = arith.mulf %223, %3 : vector<128x128xf32>
    %c49 = arith.constant 49 : index
    %c0_61 = arith.constant 0 : index
    %225 = vector.load %arg2[%c49, %c0_61] : memref<64x128xf32, #tpu.memory_space<vmem>>, vector<1x128xf32>
    %226 = vector.broadcast %225 : vector<1x128xf32> to vector<128x128xf32>
    %227 = arith.mulf %226, %4 : vector<128x128xf32>
    %228 = arith.addf %224, %227 : vector<128x128xf32>
    %c50 = arith.constant 50 : index
    %c0_62 = arith.constant 0 : index
    %229 = vector.load %arg2[%c50, %c0_62] : memref<64x128xf32, #tpu.memory_space<vmem>>, vector<1x128xf32>
    %230 = vector.broadcast %229 : vector<1x128xf32> to vector<128x128xf32>
    %231 = arith.mulf %230, %5 : vector<128x128xf32>
    %232 = arith.addf %228, %231 : vector<128x128xf32>
    %c51 = arith.constant 51 : index
    %c0_63 = arith.constant 0 : index
    %233 = vector.load %arg2[%c51, %c0_63] : memref<64x128xf32, #tpu.memory_space<vmem>>, vector<1x128xf32>
    %234 = vector.broadcast %233 : vector<1x128xf32> to vector<128x128xf32>
    %235 = arith.mulf %234, %6 : vector<128x128xf32>
    %236 = arith.addf %232, %235 : vector<128x128xf32>
    %c52 = arith.constant 52 : index
    %c0_64 = arith.constant 0 : index
    %237 = vector.load %arg2[%c52, %c0_64] : memref<64x128xf32, #tpu.memory_space<vmem>>, vector<1x128xf32>
    %238 = vector.broadcast %237 : vector<1x128xf32> to vector<128x128xf32>
    %239 = arith.mulf %238, %7 : vector<128x128xf32>
    %240 = arith.addf %236, %239 : vector<128x128xf32>
    %c53 = arith.constant 53 : index
    %c0_65 = arith.constant 0 : index
    %241 = vector.load %arg2[%c53, %c0_65] : memref<64x128xf32, #tpu.memory_space<vmem>>, vector<1x128xf32>
    %242 = vector.broadcast %241 : vector<1x128xf32> to vector<128x128xf32>
    %243 = arith.mulf %242, %8 : vector<128x128xf32>
    %244 = arith.addf %240, %243 : vector<128x128xf32>
    %c54 = arith.constant 54 : index
    %c0_66 = arith.constant 0 : index
    %245 = vector.load %arg2[%c54, %c0_66] : memref<64x128xf32, #tpu.memory_space<vmem>>, vector<1x128xf32>
    %246 = vector.broadcast %245 : vector<1x128xf32> to vector<128x128xf32>
    %247 = arith.mulf %246, %9 : vector<128x128xf32>
    %248 = arith.addf %244, %247 : vector<128x128xf32>
    %c55 = arith.constant 55 : index
    %c0_67 = arith.constant 0 : index
    %249 = vector.load %arg2[%c55, %c0_67] : memref<64x128xf32, #tpu.memory_space<vmem>>, vector<1x128xf32>
    %250 = vector.broadcast %249 : vector<1x128xf32> to vector<128x128xf32>
    %251 = arith.mulf %250, %10 : vector<128x128xf32>
    %252 = arith.addf %248, %251 : vector<128x128xf32>
    %253 = vector.broadcast %11 : vector<128x1xf32> to vector<128x128xf32>
    %254 = arith.addf %252, %253 : vector<128x128xf32>
    %cst_68 = arith.constant 0.000000e+00 : f32
    %255 = vector.broadcast %cst_68 : f32 to vector<128x128xf32>
    %256 = arith.maximumf %254, %255 : vector<128x128xf32>
    %c56 = arith.constant 56 : index
    %c0_69 = arith.constant 0 : index
    %257 = vector.load %arg2[%c56, %c0_69] : memref<64x128xf32, #tpu.memory_space<vmem>>, vector<1x128xf32>
    %258 = vector.broadcast %257 : vector<1x128xf32> to vector<128x128xf32>
    %259 = arith.mulf %258, %3 : vector<128x128xf32>
    %c57 = arith.constant 57 : index
    %c0_70 = arith.constant 0 : index
    %260 = vector.load %arg2[%c57, %c0_70] : memref<64x128xf32, #tpu.memory_space<vmem>>, vector<1x128xf32>
    %261 = vector.broadcast %260 : vector<1x128xf32> to vector<128x128xf32>
    %262 = arith.mulf %261, %4 : vector<128x128xf32>
    %263 = arith.addf %259, %262 : vector<128x128xf32>
    %c58 = arith.constant 58 : index
    %c0_71 = arith.constant 0 : index
    %264 = vector.load %arg2[%c58, %c0_71] : memref<64x128xf32, #tpu.memory_space<vmem>>, vector<1x128xf32>
    %265 = vector.broadcast %264 : vector<1x128xf32> to vector<128x128xf32>
    %266 = arith.mulf %265, %5 : vector<128x128xf32>
    %267 = arith.addf %263, %266 : vector<128x128xf32>
    %c59 = arith.constant 59 : index
    %c0_72 = arith.constant 0 : index
    %268 = vector.load %arg2[%c59, %c0_72] : memref<64x128xf32, #tpu.memory_space<vmem>>, vector<1x128xf32>
    %269 = vector.broadcast %268 : vector<1x128xf32> to vector<128x128xf32>
    %270 = arith.mulf %269, %6 : vector<128x128xf32>
    %271 = arith.addf %267, %270 : vector<128x128xf32>
    %c60 = arith.constant 60 : index
    %c0_73 = arith.constant 0 : index
    %272 = vector.load %arg2[%c60, %c0_73] : memref<64x128xf32, #tpu.memory_space<vmem>>, vector<1x128xf32>
    %273 = vector.broadcast %272 : vector<1x128xf32> to vector<128x128xf32>
    %274 = arith.mulf %273, %7 : vector<128x128xf32>
    %275 = arith.addf %271, %274 : vector<128x128xf32>
    %c61 = arith.constant 61 : index
    %c0_74 = arith.constant 0 : index
    %276 = vector.load %arg2[%c61, %c0_74] : memref<64x128xf32, #tpu.memory_space<vmem>>, vector<1x128xf32>
    %277 = vector.broadcast %276 : vector<1x128xf32> to vector<128x128xf32>
    %278 = arith.mulf %277, %8 : vector<128x128xf32>
    %279 = arith.addf %275, %278 : vector<128x128xf32>
    %c62 = arith.constant 62 : index
    %c0_75 = arith.constant 0 : index
    %280 = vector.load %arg2[%c62, %c0_75] : memref<64x128xf32, #tpu.memory_space<vmem>>, vector<1x128xf32>
    %281 = vector.broadcast %280 : vector<1x128xf32> to vector<128x128xf32>
    %282 = arith.mulf %281, %9 : vector<128x128xf32>
    %283 = arith.addf %279, %282 : vector<128x128xf32>
    %c63 = arith.constant 63 : index
    %c0_76 = arith.constant 0 : index
    %284 = vector.load %arg2[%c63, %c0_76] : memref<64x128xf32, #tpu.memory_space<vmem>>, vector<1x128xf32>
    %285 = vector.broadcast %284 : vector<1x128xf32> to vector<128x128xf32>
    %286 = arith.mulf %285, %10 : vector<128x128xf32>
    %287 = arith.addf %283, %286 : vector<128x128xf32>
    %288 = vector.broadcast %11 : vector<128x1xf32> to vector<128x128xf32>
    %289 = arith.addf %287, %288 : vector<128x128xf32>
    %cst_77 = arith.constant 0.000000e+00 : f32
    %290 = vector.broadcast %cst_77 : f32 to vector<128x128xf32>
    %291 = arith.maximumf %289, %290 : vector<128x128xf32>
    %292 = tpu.concatenate %46, %81, %116, %151, %186, %221, %256, %291 in 1 : vector<128x128xf32>, vector<128x128xf32>, vector<128x128xf32>, vector<128x128xf32>, vector<128x128xf32>, vector<128x128xf32>, vector<128x128xf32>, vector<128x128xf32> -> vector<128x1024xf32>
    %c0_78 = arith.constant 0 : index
    %c0_79 = arith.constant 0 : index
    %293 = vector.load %arg6[%c0_78, %c0_79] : memref<128x128xf32, #tpu.memory_space<vmem>>, vector<128x128xf32>
    %cst_80 = arith.constant dense<0.000000e+00> : vector<128x1024xf32>
    %294 = tpu.matmul %293, %292, %cst_80 {dimension_numbers = #tpu.dot_dimension_numbers<[1], [0], [0], [1], [0, 0, 1, 1], [], []>} : vector<128x128xf32>, vector<128x1024xf32>, vector<128x1024xf32> -> vector<128x1024xf32>
    %295 = vector.extract_strided_slice %294 {offsets = [0, 0], sizes = [128, 128], strides = [1, 1]} : vector<128x1024xf32> to vector<128x128xf32>
    %296 = vector.extract_strided_slice %294 {offsets = [0, 128], sizes = [128, 128], strides = [1, 1]} : vector<128x1024xf32> to vector<128x128xf32>
    %297 = vector.extract_strided_slice %294 {offsets = [0, 256], sizes = [128, 128], strides = [1, 1]} : vector<128x1024xf32> to vector<128x128xf32>
    %298 = vector.extract_strided_slice %294 {offsets = [0, 384], sizes = [128, 128], strides = [1, 1]} : vector<128x1024xf32> to vector<128x128xf32>
    %299 = vector.extract_strided_slice %294 {offsets = [0, 512], sizes = [128, 128], strides = [1, 1]} : vector<128x1024xf32> to vector<128x128xf32>
    %300 = vector.extract_strided_slice %294 {offsets = [0, 640], sizes = [128, 128], strides = [1, 1]} : vector<128x1024xf32> to vector<128x128xf32>
    %301 = vector.extract_strided_slice %294 {offsets = [0, 768], sizes = [128, 128], strides = [1, 1]} : vector<128x1024xf32> to vector<128x128xf32>
    %302 = vector.extract_strided_slice %294 {offsets = [0, 896], sizes = [128, 128], strides = [1, 1]} : vector<128x1024xf32> to vector<128x128xf32>
    %c0_81 = arith.constant 0 : index
    %c0_82 = arith.constant 0 : index
    %303 = vector.load %arg7[%c0_81, %c0_82] : memref<128x1xf32, #tpu.memory_space<vmem>>, vector<128x1xf32>
    %c0_83 = arith.constant 0 : index
    %c0_84 = arith.constant 0 : index
    %304 = vector.load %arg2[%c0_83, %c0_84] : memref<64x128xf32, #tpu.memory_space<vmem>>, vector<1x128xf32>
    %305 = vector.broadcast %304 : vector<1x128xf32> to vector<128x128xf32>
    %306 = arith.mulf %305, %295 : vector<128x128xf32>
    %c1_85 = arith.constant 1 : index
    %c0_86 = arith.constant 0 : index
    %307 = vector.load %arg2[%c1_85, %c0_86] : memref<64x128xf32, #tpu.memory_space<vmem>>, vector<1x128xf32>
    %308 = vector.broadcast %307 : vector<1x128xf32> to vector<128x128xf32>
    %309 = arith.mulf %308, %296 : vector<128x128xf32>
    %310 = arith.addf %306, %309 : vector<128x128xf32>
    %c2_87 = arith.constant 2 : index
    %c0_88 = arith.constant 0 : index
    %311 = vector.load %arg2[%c2_87, %c0_88] : memref<64x128xf32, #tpu.memory_space<vmem>>, vector<1x128xf32>
    %312 = vector.broadcast %311 : vector<1x128xf32> to vector<128x128xf32>
    %313 = arith.mulf %312, %297 : vector<128x128xf32>
    %314 = arith.addf %310, %313 : vector<128x128xf32>
    %c3_89 = arith.constant 3 : index
    %c0_90 = arith.constant 0 : index
    %315 = vector.load %arg2[%c3_89, %c0_90] : memref<64x128xf32, #tpu.memory_space<vmem>>, vector<1x128xf32>
    %316 = vector.broadcast %315 : vector<1x128xf32> to vector<128x128xf32>
    %317 = arith.mulf %316, %298 : vector<128x128xf32>
    %318 = arith.addf %314, %317 : vector<128x128xf32>
    %c4_91 = arith.constant 4 : index
    %c0_92 = arith.constant 0 : index
    %319 = vector.load %arg2[%c4_91, %c0_92] : memref<64x128xf32, #tpu.memory_space<vmem>>, vector<1x128xf32>
    %320 = vector.broadcast %319 : vector<1x128xf32> to vector<128x128xf32>
    %321 = arith.mulf %320, %299 : vector<128x128xf32>
    %322 = arith.addf %318, %321 : vector<128x128xf32>
    %c5_93 = arith.constant 5 : index
    %c0_94 = arith.constant 0 : index
    %323 = vector.load %arg2[%c5_93, %c0_94] : memref<64x128xf32, #tpu.memory_space<vmem>>, vector<1x128xf32>
    %324 = vector.broadcast %323 : vector<1x128xf32> to vector<128x128xf32>
    %325 = arith.mulf %324, %300 : vector<128x128xf32>
    %326 = arith.addf %322, %325 : vector<128x128xf32>
    %c6_95 = arith.constant 6 : index
    %c0_96 = arith.constant 0 : index
    %327 = vector.load %arg2[%c6_95, %c0_96] : memref<64x128xf32, #tpu.memory_space<vmem>>, vector<1x128xf32>
    %328 = vector.broadcast %327 : vector<1x128xf32> to vector<128x128xf32>
    %329 = arith.mulf %328, %301 : vector<128x128xf32>
    %330 = arith.addf %326, %329 : vector<128x128xf32>
    %c7_97 = arith.constant 7 : index
    %c0_98 = arith.constant 0 : index
    %331 = vector.load %arg2[%c7_97, %c0_98] : memref<64x128xf32, #tpu.memory_space<vmem>>, vector<1x128xf32>
    %332 = vector.broadcast %331 : vector<1x128xf32> to vector<128x128xf32>
    %333 = arith.mulf %332, %302 : vector<128x128xf32>
    %334 = arith.addf %330, %333 : vector<128x128xf32>
    %335 = vector.broadcast %303 : vector<128x1xf32> to vector<128x128xf32>
    %336 = arith.addf %334, %335 : vector<128x128xf32>
    %c8_99 = arith.constant 8 : index
    %c0_100 = arith.constant 0 : index
    %337 = vector.load %arg2[%c8_99, %c0_100] : memref<64x128xf32, #tpu.memory_space<vmem>>, vector<1x128xf32>
    %338 = vector.broadcast %337 : vector<1x128xf32> to vector<128x128xf32>
    %339 = arith.mulf %338, %295 : vector<128x128xf32>
    %c9_101 = arith.constant 9 : index
    %c0_102 = arith.constant 0 : index
    %340 = vector.load %arg2[%c9_101, %c0_102] : memref<64x128xf32, #tpu.memory_space<vmem>>, vector<1x128xf32>
    %341 = vector.broadcast %340 : vector<1x128xf32> to vector<128x128xf32>
    %342 = arith.mulf %341, %296 : vector<128x128xf32>
    %343 = arith.addf %339, %342 : vector<128x128xf32>
    %c10_103 = arith.constant 10 : index
    %c0_104 = arith.constant 0 : index
    %344 = vector.load %arg2[%c10_103, %c0_104] : memref<64x128xf32, #tpu.memory_space<vmem>>, vector<1x128xf32>
    %345 = vector.broadcast %344 : vector<1x128xf32> to vector<128x128xf32>
    %346 = arith.mulf %345, %297 : vector<128x128xf32>
    %347 = arith.addf %343, %346 : vector<128x128xf32>
    %c11_105 = arith.constant 11 : index
    %c0_106 = arith.constant 0 : index
    %348 = vector.load %arg2[%c11_105, %c0_106] : memref<64x128xf32, #tpu.memory_space<vmem>>, vector<1x128xf32>
    %349 = vector.broadcast %348 : vector<1x128xf32> to vector<128x128xf32>
    %350 = arith.mulf %349, %298 : vector<128x128xf32>
    %351 = arith.addf %347, %350 : vector<128x128xf32>
    %c12_107 = arith.constant 12 : index
    %c0_108 = arith.constant 0 : index
    %352 = vector.load %arg2[%c12_107, %c0_108] : memref<64x128xf32, #tpu.memory_space<vmem>>, vector<1x128xf32>
    %353 = vector.broadcast %352 : vector<1x128xf32> to vector<128x128xf32>
    %354 = arith.mulf %353, %299 : vector<128x128xf32>
    %355 = arith.addf %351, %354 : vector<128x128xf32>
    %c13_109 = arith.constant 13 : index
    %c0_110 = arith.constant 0 : index
    %356 = vector.load %arg2[%c13_109, %c0_110] : memref<64x128xf32, #tpu.memory_space<vmem>>, vector<1x128xf32>
    %357 = vector.broadcast %356 : vector<1x128xf32> to vector<128x128xf32>
    %358 = arith.mulf %357, %300 : vector<128x128xf32>
    %359 = arith.addf %355, %358 : vector<128x128xf32>
    %c14_111 = arith.constant 14 : index
    %c0_112 = arith.constant 0 : index
    %360 = vector.load %arg2[%c14_111, %c0_112] : memref<64x128xf32, #tpu.memory_space<vmem>>, vector<1x128xf32>
    %361 = vector.broadcast %360 : vector<1x128xf32> to vector<128x128xf32>
    %362 = arith.mulf %361, %301 : vector<128x128xf32>
    %363 = arith.addf %359, %362 : vector<128x128xf32>
    %c15_113 = arith.constant 15 : index
    %c0_114 = arith.constant 0 : index
    %364 = vector.load %arg2[%c15_113, %c0_114] : memref<64x128xf32, #tpu.memory_space<vmem>>, vector<1x128xf32>
    %365 = vector.broadcast %364 : vector<1x128xf32> to vector<128x128xf32>
    %366 = arith.mulf %365, %302 : vector<128x128xf32>
    %367 = arith.addf %363, %366 : vector<128x128xf32>
    %368 = vector.broadcast %303 : vector<128x1xf32> to vector<128x128xf32>
    %369 = arith.addf %367, %368 : vector<128x128xf32>
    %c16_115 = arith.constant 16 : index
    %c0_116 = arith.constant 0 : index
    %370 = vector.load %arg2[%c16_115, %c0_116] : memref<64x128xf32, #tpu.memory_space<vmem>>, vector<1x128xf32>
    %371 = vector.broadcast %370 : vector<1x128xf32> to vector<128x128xf32>
    %372 = arith.mulf %371, %295 : vector<128x128xf32>
    %c17_117 = arith.constant 17 : index
    %c0_118 = arith.constant 0 : index
    %373 = vector.load %arg2[%c17_117, %c0_118] : memref<64x128xf32, #tpu.memory_space<vmem>>, vector<1x128xf32>
    %374 = vector.broadcast %373 : vector<1x128xf32> to vector<128x128xf32>
    %375 = arith.mulf %374, %296 : vector<128x128xf32>
    %376 = arith.addf %372, %375 : vector<128x128xf32>
    %c18_119 = arith.constant 18 : index
    %c0_120 = arith.constant 0 : index
    %377 = vector.load %arg2[%c18_119, %c0_120] : memref<64x128xf32, #tpu.memory_space<vmem>>, vector<1x128xf32>
    %378 = vector.broadcast %377 : vector<1x128xf32> to vector<128x128xf32>
    %379 = arith.mulf %378, %297 : vector<128x128xf32>
    %380 = arith.addf %376, %379 : vector<128x128xf32>
    %c19_121 = arith.constant 19 : index
    %c0_122 = arith.constant 0 : index
    %381 = vector.load %arg2[%c19_121, %c0_122] : memref<64x128xf32, #tpu.memory_space<vmem>>, vector<1x128xf32>
    %382 = vector.broadcast %381 : vector<1x128xf32> to vector<128x128xf32>
    %383 = arith.mulf %382, %298 : vector<128x128xf32>
    %384 = arith.addf %380, %383 : vector<128x128xf32>
    %c20_123 = arith.constant 20 : index
    %c0_124 = arith.constant 0 : index
    %385 = vector.load %arg2[%c20_123, %c0_124] : memref<64x128xf32, #tpu.memory_space<vmem>>, vector<1x128xf32>
    %386 = vector.broadcast %385 : vector<1x128xf32> to vector<128x128xf32>
    %387 = arith.mulf %386, %299 : vector<128x128xf32>
    %388 = arith.addf %384, %387 : vector<128x128xf32>
    %c21_125 = arith.constant 21 : index
    %c0_126 = arith.constant 0 : index
    %389 = vector.load %arg2[%c21_125, %c0_126] : memref<64x128xf32, #tpu.memory_space<vmem>>, vector<1x128xf32>
    %390 = vector.broadcast %389 : vector<1x128xf32> to vector<128x128xf32>
    %391 = arith.mulf %390, %300 : vector<128x128xf32>
    %392 = arith.addf %388, %391 : vector<128x128xf32>
    %c22_127 = arith.constant 22 : index
    %c0_128 = arith.constant 0 : index
    %393 = vector.load %arg2[%c22_127, %c0_128] : memref<64x128xf32, #tpu.memory_space<vmem>>, vector<1x128xf32>
    %394 = vector.broadcast %393 : vector<1x128xf32> to vector<128x128xf32>
    %395 = arith.mulf %394, %301 : vector<128x128xf32>
    %396 = arith.addf %392, %395 : vector<128x128xf32>
    %c23_129 = arith.constant 23 : index
    %c0_130 = arith.constant 0 : index
    %397 = vector.load %arg2[%c23_129, %c0_130] : memref<64x128xf32, #tpu.memory_space<vmem>>, vector<1x128xf32>
    %398 = vector.broadcast %397 : vector<1x128xf32> to vector<128x128xf32>
    %399 = arith.mulf %398, %302 : vector<128x128xf32>
    %400 = arith.addf %396, %399 : vector<128x128xf32>
    %401 = vector.broadcast %303 : vector<128x1xf32> to vector<128x128xf32>
    %402 = arith.addf %400, %401 : vector<128x128xf32>
    %c24_131 = arith.constant 24 : index
    %c0_132 = arith.constant 0 : index
    %403 = vector.load %arg2[%c24_131, %c0_132] : memref<64x128xf32, #tpu.memory_space<vmem>>, vector<1x128xf32>
    %404 = vector.broadcast %403 : vector<1x128xf32> to vector<128x128xf32>
    %405 = arith.mulf %404, %295 : vector<128x128xf32>
    %c25_133 = arith.constant 25 : index
    %c0_134 = arith.constant 0 : index
    %406 = vector.load %arg2[%c25_133, %c0_134] : memref<64x128xf32, #tpu.memory_space<vmem>>, vector<1x128xf32>
    %407 = vector.broadcast %406 : vector<1x128xf32> to vector<128x128xf32>
    %408 = arith.mulf %407, %296 : vector<128x128xf32>
    %409 = arith.addf %405, %408 : vector<128x128xf32>
    %c26_135 = arith.constant 26 : index
    %c0_136 = arith.constant 0 : index
    %410 = vector.load %arg2[%c26_135, %c0_136] : memref<64x128xf32, #tpu.memory_space<vmem>>, vector<1x128xf32>
    %411 = vector.broadcast %410 : vector<1x128xf32> to vector<128x128xf32>
    %412 = arith.mulf %411, %297 : vector<128x128xf32>
    %413 = arith.addf %409, %412 : vector<128x128xf32>
    %c27_137 = arith.constant 27 : index
    %c0_138 = arith.constant 0 : index
    %414 = vector.load %arg2[%c27_137, %c0_138] : memref<64x128xf32, #tpu.memory_space<vmem>>, vector<1x128xf32>
    %415 = vector.broadcast %414 : vector<1x128xf32> to vector<128x128xf32>
    %416 = arith.mulf %415, %298 : vector<128x128xf32>
    %417 = arith.addf %413, %416 : vector<128x128xf32>
    %c28_139 = arith.constant 28 : index
    %c0_140 = arith.constant 0 : index
    %418 = vector.load %arg2[%c28_139, %c0_140] : memref<64x128xf32, #tpu.memory_space<vmem>>, vector<1x128xf32>
    %419 = vector.broadcast %418 : vector<1x128xf32> to vector<128x128xf32>
    %420 = arith.mulf %419, %299 : vector<128x128xf32>
    %421 = arith.addf %417, %420 : vector<128x128xf32>
    %c29_141 = arith.constant 29 : index
    %c0_142 = arith.constant 0 : index
    %422 = vector.load %arg2[%c29_141, %c0_142] : memref<64x128xf32, #tpu.memory_space<vmem>>, vector<1x128xf32>
    %423 = vector.broadcast %422 : vector<1x128xf32> to vector<128x128xf32>
    %424 = arith.mulf %423, %300 : vector<128x128xf32>
    %425 = arith.addf %421, %424 : vector<128x128xf32>
    %c30_143 = arith.constant 30 : index
    %c0_144 = arith.constant 0 : index
    %426 = vector.load %arg2[%c30_143, %c0_144] : memref<64x128xf32, #tpu.memory_space<vmem>>, vector<1x128xf32>
    %427 = vector.broadcast %426 : vector<1x128xf32> to vector<128x128xf32>
    %428 = arith.mulf %427, %301 : vector<128x128xf32>
    %429 = arith.addf %425, %428 : vector<128x128xf32>
    %c31_145 = arith.constant 31 : index
    %c0_146 = arith.constant 0 : index
    %430 = vector.load %arg2[%c31_145, %c0_146] : memref<64x128xf32, #tpu.memory_space<vmem>>, vector<1x128xf32>
    %431 = vector.broadcast %430 : vector<1x128xf32> to vector<128x128xf32>
    %432 = arith.mulf %431, %302 : vector<128x128xf32>
    %433 = arith.addf %429, %432 : vector<128x128xf32>
    %434 = vector.broadcast %303 : vector<128x1xf32> to vector<128x128xf32>
    %435 = arith.addf %433, %434 : vector<128x128xf32>
    %c32_147 = arith.constant 32 : index
    %c0_148 = arith.constant 0 : index
    %436 = vector.load %arg2[%c32_147, %c0_148] : memref<64x128xf32, #tpu.memory_space<vmem>>, vector<1x128xf32>
    %437 = vector.broadcast %436 : vector<1x128xf32> to vector<128x128xf32>
    %438 = arith.mulf %437, %295 : vector<128x128xf32>
    %c33_149 = arith.constant 33 : index
    %c0_150 = arith.constant 0 : index
    %439 = vector.load %arg2[%c33_149, %c0_150] : memref<64x128xf32, #tpu.memory_space<vmem>>, vector<1x128xf32>
    %440 = vector.broadcast %439 : vector<1x128xf32> to vector<128x128xf32>
    %441 = arith.mulf %440, %296 : vector<128x128xf32>
    %442 = arith.addf %438, %441 : vector<128x128xf32>
    %c34_151 = arith.constant 34 : index
    %c0_152 = arith.constant 0 : index
    %443 = vector.load %arg2[%c34_151, %c0_152] : memref<64x128xf32, #tpu.memory_space<vmem>>, vector<1x128xf32>
    %444 = vector.broadcast %443 : vector<1x128xf32> to vector<128x128xf32>
    %445 = arith.mulf %444, %297 : vector<128x128xf32>
    %446 = arith.addf %442, %445 : vector<128x128xf32>
    %c35_153 = arith.constant 35 : index
    %c0_154 = arith.constant 0 : index
    %447 = vector.load %arg2[%c35_153, %c0_154] : memref<64x128xf32, #tpu.memory_space<vmem>>, vector<1x128xf32>
    %448 = vector.broadcast %447 : vector<1x128xf32> to vector<128x128xf32>
    %449 = arith.mulf %448, %298 : vector<128x128xf32>
    %450 = arith.addf %446, %449 : vector<128x128xf32>
    %c36_155 = arith.constant 36 : index
    %c0_156 = arith.constant 0 : index
    %451 = vector.load %arg2[%c36_155, %c0_156] : memref<64x128xf32, #tpu.memory_space<vmem>>, vector<1x128xf32>
    %452 = vector.broadcast %451 : vector<1x128xf32> to vector<128x128xf32>
    %453 = arith.mulf %452, %299 : vector<128x128xf32>
    %454 = arith.addf %450, %453 : vector<128x128xf32>
    %c37_157 = arith.constant 37 : index
    %c0_158 = arith.constant 0 : index
    %455 = vector.load %arg2[%c37_157, %c0_158] : memref<64x128xf32, #tpu.memory_space<vmem>>, vector<1x128xf32>
    %456 = vector.broadcast %455 : vector<1x128xf32> to vector<128x128xf32>
    %457 = arith.mulf %456, %300 : vector<128x128xf32>
    %458 = arith.addf %454, %457 : vector<128x128xf32>
    %c38_159 = arith.constant 38 : index
    %c0_160 = arith.constant 0 : index
    %459 = vector.load %arg2[%c38_159, %c0_160] : memref<64x128xf32, #tpu.memory_space<vmem>>, vector<1x128xf32>
    %460 = vector.broadcast %459 : vector<1x128xf32> to vector<128x128xf32>
    %461 = arith.mulf %460, %301 : vector<128x128xf32>
    %462 = arith.addf %458, %461 : vector<128x128xf32>
    %c39_161 = arith.constant 39 : index
    %c0_162 = arith.constant 0 : index
    %463 = vector.load %arg2[%c39_161, %c0_162] : memref<64x128xf32, #tpu.memory_space<vmem>>, vector<1x128xf32>
    %464 = vector.broadcast %463 : vector<1x128xf32> to vector<128x128xf32>
    %465 = arith.mulf %464, %302 : vector<128x128xf32>
    %466 = arith.addf %462, %465 : vector<128x128xf32>
    %467 = vector.broadcast %303 : vector<128x1xf32> to vector<128x128xf32>
    %468 = arith.addf %466, %467 : vector<128x128xf32>
    %c40_163 = arith.constant 40 : index
    %c0_164 = arith.constant 0 : index
    %469 = vector.load %arg2[%c40_163, %c0_164] : memref<64x128xf32, #tpu.memory_space<vmem>>, vector<1x128xf32>
    %470 = vector.broadcast %469 : vector<1x128xf32> to vector<128x128xf32>
    %471 = arith.mulf %470, %295 : vector<128x128xf32>
    %c41_165 = arith.constant 41 : index
    %c0_166 = arith.constant 0 : index
    %472 = vector.load %arg2[%c41_165, %c0_166] : memref<64x128xf32, #tpu.memory_space<vmem>>, vector<1x128xf32>
    %473 = vector.broadcast %472 : vector<1x128xf32> to vector<128x128xf32>
    %474 = arith.mulf %473, %296 : vector<128x128xf32>
    %475 = arith.addf %471, %474 : vector<128x128xf32>
    %c42_167 = arith.constant 42 : index
    %c0_168 = arith.constant 0 : index
    %476 = vector.load %arg2[%c42_167, %c0_168] : memref<64x128xf32, #tpu.memory_space<vmem>>, vector<1x128xf32>
    %477 = vector.broadcast %476 : vector<1x128xf32> to vector<128x128xf32>
    %478 = arith.mulf %477, %297 : vector<128x128xf32>
    %479 = arith.addf %475, %478 : vector<128x128xf32>
    %c43_169 = arith.constant 43 : index
    %c0_170 = arith.constant 0 : index
    %480 = vector.load %arg2[%c43_169, %c0_170] : memref<64x128xf32, #tpu.memory_space<vmem>>, vector<1x128xf32>
    %481 = vector.broadcast %480 : vector<1x128xf32> to vector<128x128xf32>
    %482 = arith.mulf %481, %298 : vector<128x128xf32>
    %483 = arith.addf %479, %482 : vector<128x128xf32>
    %c44_171 = arith.constant 44 : index
    %c0_172 = arith.constant 0 : index
    %484 = vector.load %arg2[%c44_171, %c0_172] : memref<64x128xf32, #tpu.memory_space<vmem>>, vector<1x128xf32>
    %485 = vector.broadcast %484 : vector<1x128xf32> to vector<128x128xf32>
    %486 = arith.mulf %485, %299 : vector<128x128xf32>
    %487 = arith.addf %483, %486 : vector<128x128xf32>
    %c45_173 = arith.constant 45 : index
    %c0_174 = arith.constant 0 : index
    %488 = vector.load %arg2[%c45_173, %c0_174] : memref<64x128xf32, #tpu.memory_space<vmem>>, vector<1x128xf32>
    %489 = vector.broadcast %488 : vector<1x128xf32> to vector<128x128xf32>
    %490 = arith.mulf %489, %300 : vector<128x128xf32>
    %491 = arith.addf %487, %490 : vector<128x128xf32>
    %c46_175 = arith.constant 46 : index
    %c0_176 = arith.constant 0 : index
    %492 = vector.load %arg2[%c46_175, %c0_176] : memref<64x128xf32, #tpu.memory_space<vmem>>, vector<1x128xf32>
    %493 = vector.broadcast %492 : vector<1x128xf32> to vector<128x128xf32>
    %494 = arith.mulf %493, %301 : vector<128x128xf32>
    %495 = arith.addf %491, %494 : vector<128x128xf32>
    %c47_177 = arith.constant 47 : index
    %c0_178 = arith.constant 0 : index
    %496 = vector.load %arg2[%c47_177, %c0_178] : memref<64x128xf32, #tpu.memory_space<vmem>>, vector<1x128xf32>
    %497 = vector.broadcast %496 : vector<1x128xf32> to vector<128x128xf32>
    %498 = arith.mulf %497, %302 : vector<128x128xf32>
    %499 = arith.addf %495, %498 : vector<128x128xf32>
    %500 = vector.broadcast %303 : vector<128x1xf32> to vector<128x128xf32>
    %501 = arith.addf %499, %500 : vector<128x128xf32>
    %c48_179 = arith.constant 48 : index
    %c0_180 = arith.constant 0 : index
    %502 = vector.load %arg2[%c48_179, %c0_180] : memref<64x128xf32, #tpu.memory_space<vmem>>, vector<1x128xf32>
    %503 = vector.broadcast %502 : vector<1x128xf32> to vector<128x128xf32>
    %504 = arith.mulf %503, %295 : vector<128x128xf32>
    %c49_181 = arith.constant 49 : index
    %c0_182 = arith.constant 0 : index
    %505 = vector.load %arg2[%c49_181, %c0_182] : memref<64x128xf32, #tpu.memory_space<vmem>>, vector<1x128xf32>
    %506 = vector.broadcast %505 : vector<1x128xf32> to vector<128x128xf32>
    %507 = arith.mulf %506, %296 : vector<128x128xf32>
    %508 = arith.addf %504, %507 : vector<128x128xf32>
    %c50_183 = arith.constant 50 : index
    %c0_184 = arith.constant 0 : index
    %509 = vector.load %arg2[%c50_183, %c0_184] : memref<64x128xf32, #tpu.memory_space<vmem>>, vector<1x128xf32>
    %510 = vector.broadcast %509 : vector<1x128xf32> to vector<128x128xf32>
    %511 = arith.mulf %510, %297 : vector<128x128xf32>
    %512 = arith.addf %508, %511 : vector<128x128xf32>
    %c51_185 = arith.constant 51 : index
    %c0_186 = arith.constant 0 : index
    %513 = vector.load %arg2[%c51_185, %c0_186] : memref<64x128xf32, #tpu.memory_space<vmem>>, vector<1x128xf32>
    %514 = vector.broadcast %513 : vector<1x128xf32> to vector<128x128xf32>
    %515 = arith.mulf %514, %298 : vector<128x128xf32>
    %516 = arith.addf %512, %515 : vector<128x128xf32>
    %c52_187 = arith.constant 52 : index
    %c0_188 = arith.constant 0 : index
    %517 = vector.load %arg2[%c52_187, %c0_188] : memref<64x128xf32, #tpu.memory_space<vmem>>, vector<1x128xf32>
    %518 = vector.broadcast %517 : vector<1x128xf32> to vector<128x128xf32>
    %519 = arith.mulf %518, %299 : vector<128x128xf32>
    %520 = arith.addf %516, %519 : vector<128x128xf32>
    %c53_189 = arith.constant 53 : index
    %c0_190 = arith.constant 0 : index
    %521 = vector.load %arg2[%c53_189, %c0_190] : memref<64x128xf32, #tpu.memory_space<vmem>>, vector<1x128xf32>
    %522 = vector.broadcast %521 : vector<1x128xf32> to vector<128x128xf32>
    %523 = arith.mulf %522, %300 : vector<128x128xf32>
    %524 = arith.addf %520, %523 : vector<128x128xf32>
    %c54_191 = arith.constant 54 : index
    %c0_192 = arith.constant 0 : index
    %525 = vector.load %arg2[%c54_191, %c0_192] : memref<64x128xf32, #tpu.memory_space<vmem>>, vector<1x128xf32>
    %526 = vector.broadcast %525 : vector<1x128xf32> to vector<128x128xf32>
    %527 = arith.mulf %526, %301 : vector<128x128xf32>
    %528 = arith.addf %524, %527 : vector<128x128xf32>
    %c55_193 = arith.constant 55 : index
    %c0_194 = arith.constant 0 : index
    %529 = vector.load %arg2[%c55_193, %c0_194] : memref<64x128xf32, #tpu.memory_space<vmem>>, vector<1x128xf32>
    %530 = vector.broadcast %529 : vector<1x128xf32> to vector<128x128xf32>
    %531 = arith.mulf %530, %302 : vector<128x128xf32>
    %532 = arith.addf %528, %531 : vector<128x128xf32>
    %533 = vector.broadcast %303 : vector<128x1xf32> to vector<128x128xf32>
    %534 = arith.addf %532, %533 : vector<128x128xf32>
    %c56_195 = arith.constant 56 : index
    %c0_196 = arith.constant 0 : index
    %535 = vector.load %arg2[%c56_195, %c0_196] : memref<64x128xf32, #tpu.memory_space<vmem>>, vector<1x128xf32>
    %536 = vector.broadcast %535 : vector<1x128xf32> to vector<128x128xf32>
    %537 = arith.mulf %536, %295 : vector<128x128xf32>
    %c57_197 = arith.constant 57 : index
    %c0_198 = arith.constant 0 : index
    %538 = vector.load %arg2[%c57_197, %c0_198] : memref<64x128xf32, #tpu.memory_space<vmem>>, vector<1x128xf32>
    %539 = vector.broadcast %538 : vector<1x128xf32> to vector<128x128xf32>
    %540 = arith.mulf %539, %296 : vector<128x128xf32>
    %541 = arith.addf %537, %540 : vector<128x128xf32>
    %c58_199 = arith.constant 58 : index
    %c0_200 = arith.constant 0 : index
    %542 = vector.load %arg2[%c58_199, %c0_200] : memref<64x128xf32, #tpu.memory_space<vmem>>, vector<1x128xf32>
    %543 = vector.broadcast %542 : vector<1x128xf32> to vector<128x128xf32>
    %544 = arith.mulf %543, %297 : vector<128x128xf32>
    %545 = arith.addf %541, %544 : vector<128x128xf32>
    %c59_201 = arith.constant 59 : index
    %c0_202 = arith.constant 0 : index
    %546 = vector.load %arg2[%c59_201, %c0_202] : memref<64x128xf32, #tpu.memory_space<vmem>>, vector<1x128xf32>
    %547 = vector.broadcast %546 : vector<1x128xf32> to vector<128x128xf32>
    %548 = arith.mulf %547, %298 : vector<128x128xf32>
    %549 = arith.addf %545, %548 : vector<128x128xf32>
    %c60_203 = arith.constant 60 : index
    %c0_204 = arith.constant 0 : index
    %550 = vector.load %arg2[%c60_203, %c0_204] : memref<64x128xf32, #tpu.memory_space<vmem>>, vector<1x128xf32>
    %551 = vector.broadcast %550 : vector<1x128xf32> to vector<128x128xf32>
    %552 = arith.mulf %551, %299 : vector<128x128xf32>
    %553 = arith.addf %549, %552 : vector<128x128xf32>
    %c61_205 = arith.constant 61 : index
    %c0_206 = arith.constant 0 : index
    %554 = vector.load %arg2[%c61_205, %c0_206] : memref<64x128xf32, #tpu.memory_space<vmem>>, vector<1x128xf32>
    %555 = vector.broadcast %554 : vector<1x128xf32> to vector<128x128xf32>
    %556 = arith.mulf %555, %300 : vector<128x128xf32>
    %557 = arith.addf %553, %556 : vector<128x128xf32>
    %c62_207 = arith.constant 62 : index
    %c0_208 = arith.constant 0 : index
    %558 = vector.load %arg2[%c62_207, %c0_208] : memref<64x128xf32, #tpu.memory_space<vmem>>, vector<1x128xf32>
    %559 = vector.broadcast %558 : vector<1x128xf32> to vector<128x128xf32>
    %560 = arith.mulf %559, %301 : vector<128x128xf32>
    %561 = arith.addf %557, %560 : vector<128x128xf32>
    %c63_209 = arith.constant 63 : index
    %c0_210 = arith.constant 0 : index
    %562 = vector.load %arg2[%c63_209, %c0_210] : memref<64x128xf32, #tpu.memory_space<vmem>>, vector<1x128xf32>
    %563 = vector.broadcast %562 : vector<1x128xf32> to vector<128x128xf32>
    %564 = arith.mulf %563, %302 : vector<128x128xf32>
    %565 = arith.addf %561, %564 : vector<128x128xf32>
    %566 = vector.broadcast %303 : vector<128x1xf32> to vector<128x128xf32>
    %567 = arith.addf %565, %566 : vector<128x128xf32>
    %c0_211 = arith.constant 0 : index
    %c0_212 = arith.constant 0 : index
    %568 = vector.load %arg8[%c0_211, %c0_212] : memref<128x6xf32, #tpu.memory_space<vmem>>, vector<128x6xf32>
    %c0_213 = arith.constant 0 : index
    %c0_214 = arith.constant 0 : index
    %569 = vector.load %arg3[%c0_213, %c0_214] : memref<6x128xf32, #tpu.memory_space<vmem>>, vector<6x128xf32>
    %cst_215 = arith.constant dense<0.000000e+00> : vector<128x128xf32>
    %570 = tpu.matmul %568, %569, %cst_215 {dimension_numbers = #tpu.dot_dimension_numbers<[1], [0], [0], [1], [0, 0, 1, 1], [], []>} : vector<128x6xf32>, vector<6x128xf32>, vector<128x128xf32> -> vector<128x128xf32>
    %c0_216 = arith.constant 0 : index
    %c0_217 = arith.constant 0 : index
    %571 = vector.load %arg9[%c0_216, %c0_217] : memref<128x1xf32, #tpu.memory_space<vmem>>, vector<128x1xf32>
    %572 = vector.broadcast %571 : vector<128x1xf32> to vector<128x128xf32>
    %573 = arith.addf %570, %572 : vector<128x128xf32>
    %cst_218 = arith.constant 0.000000e+00 : f32
    %574 = vector.broadcast %cst_218 : f32 to vector<128x128xf32>
    %575 = arith.maximumf %573, %574 : vector<128x128xf32>
    %c0_219 = arith.constant 0 : index
    %c0_220 = arith.constant 0 : index
    %576 = vector.load %arg10[%c0_219, %c0_220] : memref<128x128xf32, #tpu.memory_space<vmem>>, vector<128x128xf32>
    %cst_221 = arith.constant dense<0.000000e+00> : vector<128x128xf32>
    %577 = tpu.matmul %576, %575, %cst_221 {dimension_numbers = #tpu.dot_dimension_numbers<[1], [0], [0], [1], [0, 0, 1, 1], [], []>} : vector<128x128xf32>, vector<128x128xf32>, vector<128x128xf32> -> vector<128x128xf32>
    %c0_222 = arith.constant 0 : index
    %c0_223 = arith.constant 0 : index
    %578 = vector.load %arg11[%c0_222, %c0_223] : memref<128x1xf32, #tpu.memory_space<vmem>>, vector<128x1xf32>
    %579 = vector.broadcast %578 : vector<128x1xf32> to vector<128x128xf32>
    %580 = arith.addf %577, %579 : vector<128x128xf32>
    %581 = arith.addf %336, %580 : vector<128x128xf32>
    %582 = arith.addf %369, %580 : vector<128x128xf32>
    %583 = arith.addf %402, %580 : vector<128x128xf32>
    %584 = arith.addf %435, %580 : vector<128x128xf32>
    %585 = arith.addf %468, %580 : vector<128x128xf32>
    %586 = arith.addf %501, %580 : vector<128x128xf32>
    %587 = arith.addf %534, %580 : vector<128x128xf32>
    %588 = arith.addf %567, %580 : vector<128x128xf32>
    %589 = tpu.concatenate %581, %582, %583, %584, %585, %586, %587, %588 in 1 : vector<128x128xf32>, vector<128x128xf32>, vector<128x128xf32>, vector<128x128xf32>, vector<128x128xf32>, vector<128x128xf32>, vector<128x128xf32>, vector<128x128xf32> -> vector<128x1024xf32>
    %c0_224 = arith.constant 0 : index
    %c0_225 = arith.constant 0 : index
    %590 = vector.load %arg12[%c0_224, %c0_225] : memref<128x128xf32, #tpu.memory_space<vmem>>, vector<128x128xf32>
    %cst_226 = arith.constant dense<0.000000e+00> : vector<128x1024xf32>
    %591 = tpu.matmul %590, %589, %cst_226 {dimension_numbers = #tpu.dot_dimension_numbers<[1], [0], [0], [1], [0, 0, 1, 1], [], []>} : vector<128x128xf32>, vector<128x1024xf32>, vector<128x1024xf32> -> vector<128x1024xf32>
    %c0_227 = arith.constant 0 : index
    %c0_228 = arith.constant 0 : index
    %592 = vector.load %arg13[%c0_227, %c0_228] : memref<128x1xf32, #tpu.memory_space<vmem>>, vector<128x1xf32>
    %593 = vector.broadcast %592 : vector<128x1xf32> to vector<128x1024xf32>
    %594 = arith.addf %591, %593 : vector<128x1024xf32>
    %cst_229 = arith.constant 0.000000e+00 : f32
    %595 = vector.broadcast %cst_229 : f32 to vector<128x1024xf32>
    %596 = arith.maximumf %594, %595 : vector<128x1024xf32>
    %597 = vector.extract_strided_slice %596 {offsets = [0, 0], sizes = [128, 128], strides = [1, 1]} : vector<128x1024xf32> to vector<128x128xf32>
    %598 = vector.extract_strided_slice %596 {offsets = [0, 128], sizes = [128, 128], strides = [1, 1]} : vector<128x1024xf32> to vector<128x128xf32>
    %599 = arith.addf %597, %598 : vector<128x128xf32>
    %600 = vector.extract_strided_slice %596 {offsets = [0, 256], sizes = [128, 128], strides = [1, 1]} : vector<128x1024xf32> to vector<128x128xf32>
    %601 = arith.addf %599, %600 : vector<128x128xf32>
    %602 = vector.extract_strided_slice %596 {offsets = [0, 384], sizes = [128, 128], strides = [1, 1]} : vector<128x1024xf32> to vector<128x128xf32>
    %603 = arith.addf %601, %602 : vector<128x128xf32>
    %604 = vector.extract_strided_slice %596 {offsets = [0, 512], sizes = [128, 128], strides = [1, 1]} : vector<128x1024xf32> to vector<128x128xf32>
    %605 = arith.addf %603, %604 : vector<128x128xf32>
    %606 = vector.extract_strided_slice %596 {offsets = [0, 640], sizes = [128, 128], strides = [1, 1]} : vector<128x1024xf32> to vector<128x128xf32>
    %607 = arith.addf %605, %606 : vector<128x128xf32>
    %608 = vector.extract_strided_slice %596 {offsets = [0, 768], sizes = [128, 128], strides = [1, 1]} : vector<128x1024xf32> to vector<128x128xf32>
    %609 = arith.addf %607, %608 : vector<128x128xf32>
    %610 = vector.extract_strided_slice %596 {offsets = [0, 896], sizes = [128, 128], strides = [1, 1]} : vector<128x1024xf32> to vector<128x128xf32>
    %611 = arith.addf %609, %610 : vector<128x128xf32>
    %cst_230 = arith.constant 1.250000e-01 : f32
    %612 = vector.broadcast %cst_230 : f32 to vector<128x128xf32>
    %613 = arith.mulf %611, %612 : vector<128x128xf32>
    %c0_231 = arith.constant 0 : index
    %c0_232 = arith.constant 0 : index
    %614 = vector.load %arg14[%c0_231, %c0_232] : memref<128x1xf32, #tpu.memory_space<vmem>>, vector<128x1xf32>
    %615 = vector.broadcast %614 : vector<128x1xf32> to vector<128x128xf32>
    %616 = arith.mulf %613, %615 : vector<128x128xf32>
    %cst_233 = arith.constant dense<0.000000e+00> : vector<128xf32>
    %617 = vector.multi_reduction <add>, %616, %cst_233 [0] : vector<128x128xf32> to vector<128xf32>
    %618 = vector.shape_cast %617 : vector<128xf32> to vector<1x128xf32>
    %c0_234 = arith.constant 0 : index
    %619 = memref.load %arg15[%c0_234] : memref<1xf32, #tpu.memory_space<smem>>
    %620 = vector.broadcast %619 : f32 to vector<1x128xf32>
    %621 = arith.addf %618, %620 : vector<1x128xf32>
    %c0_235 = arith.constant 0 : index
    %c0_236 = arith.constant 0 : index
    %622 = vector.load %arg16[%c0_235, %c0_236] : memref<1x128xf32, #tpu.memory_space<vmem>>, vector<1x128xf32>
    tpu.vector_store %arg16[%c0_235, %c0_236], %621 {strides = array<i32>} : memref<1x128xf32, #tpu.memory_space<vmem>>, vector<1x128xf32>,
    return
  }
  func.func @transform_0(%arg0: i32) -> (i32, i32) {
    %c0_i32 = arith.constant 0 : i32
    %c0_i32_0 = arith.constant 0 : i32
    return %c0_i32, %arg0 : i32, i32
  }
  func.func @transform_1(%arg0: i32) -> (i32, i32) {
    %c0_i32 = arith.constant 0 : i32
    %c0_i32_0 = arith.constant 0 : i32
    return %c0_i32, %arg0 : i32, i32
  }
  func.func @transform_2(%arg0: i32) -> (i32, i32) {
    %c0_i32 = arith.constant 0 : i32
    %c0_i32_0 = arith.constant 0 : i32
    return %c0_i32, %arg0 : i32, i32
  }
  func.func @transform_3(%arg0: i32) -> (i32, i32) {
    %c0_i32 = arith.constant 0 : i32
    %c0_i32_0 = arith.constant 0 : i32
    %c0_i32_1 = arith.constant 0 : i32
    return %c0_i32, %c0_i32_0 : i32, i32
  }
  func.func @transform_4(%arg0: i32) -> (i32, i32) {
    %c0_i32 = arith.constant 0 : i32
    %c0_i32_0 = arith.constant 0 : i32
    %c0_i32_1 = arith.constant 0 : i32
    return %c0_i32, %c0_i32_0 : i32, i32
  }
  func.func @transform_5(%arg0: i32) -> (i32, i32) {
    %c0_i32 = arith.constant 0 : i32
    %c0_i32_0 = arith.constant 0 : i32
    %c0_i32_1 = arith.constant 0 : i32
    return %c0_i32, %c0_i32_0 : i32, i32
  }
  func.func @transform_6(%arg0: i32) -> (i32, i32) {
    %c0_i32 = arith.constant 0 : i32
    %c0_i32_0 = arith.constant 0 : i32
    %c0_i32_1 = arith.constant 0 : i32
    return %c0_i32, %c0_i32_0 : i32, i32
  }
  func.func @transform_7(%arg0: i32) -> (i32, i32) {
    %c0_i32 = arith.constant 0 : i32
    %c0_i32_0 = arith.constant 0 : i32
    %c0_i32_1 = arith.constant 0 : i32
    return %c0_i32, %c0_i32_0 : i32, i32
  }
  func.func @transform_8(%arg0: i32) -> (i32, i32) {
    %c0_i32 = arith.constant 0 : i32
    %c0_i32_0 = arith.constant 0 : i32
    %c0_i32_1 = arith.constant 0 : i32
    return %c0_i32, %c0_i32_0 : i32, i32
  }
  func.func @transform_9(%arg0: i32) -> (i32, i32) {
    %c0_i32 = arith.constant 0 : i32
    %c0_i32_0 = arith.constant 0 : i32
    %c0_i32_1 = arith.constant 0 : i32
    return %c0_i32, %c0_i32_0 : i32, i32
  }
  func.func @transform_10(%arg0: i32) -> (i32, i32) {
    %c0_i32 = arith.constant 0 : i32
    %c0_i32_0 = arith.constant 0 : i32
    %c0_i32_1 = arith.constant 0 : i32
    return %c0_i32, %c0_i32_0 : i32, i32
  }
  func.func @transform_11(%arg0: i32) -> (i32, i32) {
    %c0_i32 = arith.constant 0 : i32
    %c0_i32_0 = arith.constant 0 : i32
    %c0_i32_1 = arith.constant 0 : i32
    return %c0_i32, %c0_i32_0 : i32, i32
  }
  func.func @transform_12(%arg0: i32) -> (i32, i32) {
    %c0_i32 = arith.constant 0 : i32
    %c0_i32_0 = arith.constant 0 : i32
    %c0_i32_1 = arith.constant 0 : i32
    return %c0_i32, %c0_i32_0 : i32, i32
  }
  func.func @transform_13(%arg0: i32) -> (i32, i32) {
    %c0_i32 = arith.constant 0 : i32
    %c0_i32_0 = arith.constant 0 : i32
    %c0_i32_1 = arith.constant 0 : i32
    return %c0_i32, %c0_i32_0 : i32, i32
  }
  func.func @transform_14(%arg0: i32) -> i32 {
    %c0_i32 = arith.constant 0 : i32
    %c0_i32_0 = arith.constant 0 : i32
    return %c0_i32 : i32
  }
  func.func @transform_15(%arg0: i32) -> (i32, i32) {
    %c0_i32 = arith.constant 0 : i32
    %c0_i32_0 = arith.constant 0 : i32
    return %c0_i32, %arg0 : i32, i32
  }
}

</mosaic_0001>

<llo_original>
// kernel: tpu_custom_call.1
$region0: #{tpu_custom_call.1}
  #allocation0 [shape = 'u32[]', space=smem, size = 0x4, offset = 0x4, fixed_abs, tag = 'smem constant byte address 0x4 - core index']
  #allocation1 [shape = 'u32[144,128]{1,0:T(1,128)}', space=vmem, size = 0x12000, scoped, tag = 'internal scratch']
  #allocation2 [shape = 'f32[1]{0:T(128)S(6)}', space=smem, size = 0x200, scoped, tag = 'scoped memory for tpu_custom_call.1']
  %s0 = inlined_call_operand.vmem [shape: f32[32,128], index: 0, kind: input, shape index: {}]
  %s1 = inlined_call_operand.vmem [shape: f32[64,128], index: 1, kind: input, shape index: {}]
  %s2 = inlined_call_operand.vmem [shape: f32[6,128], index: 2, kind: input, shape index: {}]
  %s3 = inlined_call_operand.vmem [shape: f32[1024,32], index: 3, kind: input, shape index: {}]
  %s4 = inlined_call_operand.vmem [shape: f32[128,1], index: 4, kind: input, shape index: {}]
  %s5 = inlined_call_operand.vmem [shape: f32[128,128], index: 5, kind: input, shape index: {}]
  %s6 = inlined_call_operand.vmem [shape: f32[128,1], index: 6, kind: input, shape index: {}]
  %s7 = inlined_call_operand.vmem [shape: f32[128,6], index: 7, kind: input, shape index: {}]
  %s8 = inlined_call_operand.vmem [shape: f32[128,1], index: 8, kind: input, shape index: {}]
  %s9 = inlined_call_operand.vmem [shape: f32[128,128], index: 9, kind: input, shape index: {}]
  %s10 = inlined_call_operand.vmem [shape: f32[128,1], index: 10, kind: input, shape index: {}]
  %s11 = inlined_call_operand.vmem [shape: f32[128,128], index: 11, kind: input, shape index: {}]
  %s12 = inlined_call_operand.vmem [shape: f32[128,1], index: 12, kind: input, shape index: {}]
  %s13 = inlined_call_operand.vmem [shape: f32[128,1], index: 13, kind: input, shape index: {}]
  %s14 = inlined_call_operand.<no memory space> [shape: f32[1], index: 14, kind: input, shape index: {}]
  %s15 = inlined_call_operand.hbm [shape: f32[1,128], index: 15, kind: output, shape index: {}]
  %s16 = sld [smem:[#allocation0]]
  $region70: #{tpu_custom_call.1} parent=0
    _
  %s18 = ssub.s32 1, %s16
  %s19 = scalar_select 0, %s18, %s16
  %20 = sst [smem:[#allocation2]] %s14
  $region1: #{tpu_custom_call.1} parent=0
    #allocation3 [shape = 'u8[512]{0}', space=vmem, size = 0x400, scoped, tag = 'output window, operand 0, single buffered']
    #allocation4 [shape = 's32[1]{0}', space=sflag, size = 0x4, scoped, tag = 'scoped memory for tpu_custom_call.1']
    %21 = vsyncpa [#allocation4], 0
    // Predicated region
    $region2: #{tpu_custom_call.1} parent=1 // pred_check
      _
    $region3: #{tpu_custom_call.1} parent=1 // pred_check_branch
      %23 = sbr.rel (0) target = $region5
    $region4: #{tpu_custom_call.1} parent=1 // pred_region
      _
    $region5: #{tpu_custom_call.1} parent=1 // pred_fallthru
      _
    // Predicated region
    $region6: #{tpu_custom_call.1} parent=1 // pred_check
      _
    $region7: #{tpu_custom_call.1} parent=1 // pred_check_branch
      %25 = sbr.rel (0) target = $region9
    $region8: #{tpu_custom_call.1} parent=1 // pred_region
      _
    $region9: #{tpu_custom_call.1} parent=1 // pred_fallthru
      _
    // Predicated region
    $region10: #{tpu_custom_call.1} parent=1 // pred_check
      _
    $region11: #{tpu_custom_call.1} parent=1 // pred_check_branch
      %27 = sbr.rel (0) target = $region13
    $region12: #{tpu_custom_call.1} parent=1 // pred_region
      _
    $region13: #{tpu_custom_call.1} parent=1 // pred_fallthru
      _
    // Predicated region
    $region14: #{tpu_custom_call.1} parent=1 // pred_check
      _
    $region15: #{tpu_custom_call.1} parent=1 // pred_check_branch
      %29 = sbr.rel (0) target = $region17
    $region16: #{tpu_custom_call.1} parent=1 // pred_region
      _
    $region17: #{tpu_custom_call.1} parent=1 // pred_fallthru
      _
    // Predicated region
    $region18: #{tpu_custom_call.1} parent=1 // pred_check
      _
    $region19: #{tpu_custom_call.1} parent=1 // pred_check_branch
      %31 = sbr.rel (0) target = $region21
    $region20: #{tpu_custom_call.1} parent=1 // pred_region
      _
    $region21: #{tpu_custom_call.1} parent=1 // pred_fallthru
      _
    // Predicated region
    $region22: #{tpu_custom_call.1} parent=1 // pred_check
      _
    $region23: #{tpu_custom_call.1} parent=1 // pred_check_branch
      %33 = sbr.rel (0) target = $region25
    $region24: #{tpu_custom_call.1} parent=1 // pred_region
      _
    $region25: #{tpu_custom_call.1} parent=1 // pred_fallthru
      _
    // Predicated region
    $region26: #{tpu_custom_call.1} parent=1 // pred_check
      _
    $region27: #{tpu_custom_call.1} parent=1 // pred_check_branch
      %35 = sbr.rel (0) target = $region29
    $region28: #{tpu_custom_call.1} parent=1 // pred_region
      _
    $region29: #{tpu_custom_call.1} parent=1 // pred_fallthru
      _
    // Predicated region
    $region30: #{tpu_custom_call.1} parent=1 // pred_check
      _
    $region31: #{tpu_custom_call.1} parent=1 // pred_check_branch
      %37 = sbr.rel (0) target = $region33
    $region32: #{tpu_custom_call.1} parent=1 // pred_region
      _
    $region33: #{tpu_custom_call.1} parent=1 // pred_fallthru
      _
    // Predicated region
    $region34: #{tpu_custom_call.1} parent=1 // pred_check
      _
    $region35: #{tpu_custom_call.1} parent=1 // pred_check_branch
      %39 = sbr.rel (0) target = $region37
    $region36: #{tpu_custom_call.1} parent=1 // pred_region
      _
    $region37: #{tpu_custom_call.1} parent=1 // pred_fallthru
      _
    // Predicated region
    $region38: #{tpu_custom_call.1} parent=1 // pred_check
      _
    $region39: #{tpu_custom_call.1} parent=1 // pred_check_branch
      %41 = sbr.rel (0) target = $region41
    $region40: #{tpu_custom_call.1} parent=1 // pred_region
      _
    $region41: #{tpu_custom_call.1} parent=1 // pred_fallthru
      _
    // Predicated region
    $region42: #{tpu_custom_call.1} parent=1 // pred_check
      _
    $region43: #{tpu_custom_call.1} parent=1 // pred_check_branch
      %43 = sbr.rel (0) target = $region45
    $region44: #{tpu_custom_call.1} parent=1 // pred_region
      _
    $region45: #{tpu_custom_call.1} parent=1 // pred_fallthru
      _
    // Predicated region
    $region46: #{tpu_custom_call.1} parent=1 // pred_check
      _
    $region47: #{tpu_custom_call.1} parent=1 // pred_check_branch
      %45 = sbr.rel (0) target = $region49
    $region48: #{tpu_custom_call.1} parent=1 // pred_region
      _
    $region49: #{tpu_custom_call.1} parent=1 // pred_fallthru
      _
    // Predicated region
    $region50: #{tpu_custom_call.1} parent=1 // pred_check
      _
    $region51: #{tpu_custom_call.1} parent=1 // pred_check_branch
      %47 = sbr.rel (0) target = $region53
    $region52: #{tpu_custom_call.1} parent=1 // pred_region
      _
    $region53: #{tpu_custom_call.1} parent=1 // pred_fallthru
      _
    // Predicated region
    $region54: #{tpu_custom_call.1} parent=1 // pred_check
      _
    $region55: #{tpu_custom_call.1} parent=1 // pred_check_branch
      %49 = sbr.rel (0) target = $region57
    $region56: #{tpu_custom_call.1} parent=1 // pred_region
      _
    $region57: #{tpu_custom_call.1} parent=1 // pred_fallthru
      _
    // Predicated region
    $region58: #{tpu_custom_call.1} parent=1 // pred_check
      _
    $region59: #{tpu_custom_call.1} parent=1 // pred_check_branch
      %51 = sbr.rel (0) target = $region61
    $region60: #{tpu_custom_call.1} parent=1 // pred_region
      _
    $region61: #{tpu_custom_call.1} parent=1 // pred_fallthru
      _
    %v52 = vld [vmem:[%s3] sm:$0xff]
    %v53 = vld [vmem:[%s3 + $0x8] sm:$0xff]
    %v54 = vld [vmem:[%s3 + $0x10] sm:$0xff]
    %v55 = vld [vmem:[%s3 + $0x18] sm:$0xff]
    %v56 = vld [vmem:[%s3 + $0x20] sm:$0xff]
    %v57 = vld [vmem:[%s3 + $0x28] sm:$0xff]
    %v58 = vld [vmem:[%s3 + $0x30] sm:$0xff]
    %v59 = vld [vmem:[%s3 + $0x38] sm:$0xff]
    %v60 = vld [vmem:[%s3 + $0x40] sm:$0xff]
    %v61 = vld [vmem:[%s3 + $0x48] sm:$0xff]
    %v62 = vld [vmem:[%s3 + $0x50] sm:$0xff]
    %v63 = vld [vmem:[%s3 + $0x58] sm:$0xff]
    %v64 = vld [vmem:[%s3 + $0x60] sm:$0xff]
    %v65 = vld [vmem:[%s3 + $0x68] sm:$0xff]
    %v66 = vld [vmem:[%s3 + $0x70] sm:$0xff]
    %v67 = vld [vmem:[%s3 + $0x78] sm:$0xff]
    %v68 = vld [vmem:[%s3 + $0x80] sm:$0xff]
    %v69 = vld [vmem:[%s3 + $0x88] sm:$0xff]
    %v70 = vld [vmem:[%s3 + $0x90] sm:$0xff]
    %v71 = vld [vmem:[%s3 + $0x98] sm:$0xff]
    %v72 = vld [vmem:[%s3 + $0xa0] sm:$0xff]
    %v73 = vld [vmem:[%s3 + $0xa8] sm:$0xff]
    %v74 = vld [vmem:[%s3 + $0xb0] sm:$0xff]
    %v75 = vld [vmem:[%s3 + $0xb8] sm:$0xff]
    %v76 = vld [vmem:[%s3 + $0xc0] sm:$0xff]
    %v77 = vld [vmem:[%s3 + $0xc8] sm:$0xff]
    %v78 = vld [vmem:[%s3 + $0xd0] sm:$0xff]
    %v79 = vld [vmem:[%s3 + $0xd8] sm:$0xff]
    %v80 = vld [vmem:[%s3 + $0xe0] sm:$0xff]
    %v81 = vld [vmem:[%s3 + $0xe8] sm:$0xff]
    %v82 = vld [vmem:[%s3 + $0xf0] sm:$0xff]
    %v83 = vld [vmem:[%s3 + $0xf8] sm:$0xff]
    %v84 = vld [vmem:[%s3 + $0x100] sm:$0xff]
    %v85 = vld [vmem:[%s3 + $0x108] sm:$0xff]
    %v86 = vld [vmem:[%s3 + $0x110] sm:$0xff]
    %v87 = vld [vmem:[%s3 + $0x118] sm:$0xff]
    %v88 = vld [vmem:[%s3 + $0x120] sm:$0xff]
    %v89 = vld [vmem:[%s3 + $0x128] sm:$0xff]
    %v90 = vld [vmem:[%s3 + $0x130] sm:$0xff]
    %v91 = vld [vmem:[%s3 + $0x138] sm:$0xff]
    %v92 = vld [vmem:[%s3 + $0x140] sm:$0xff]
    %v93 = vld [vmem:[%s3 + $0x148] sm:$0xff]
    %v94 = vld [vmem:[%s3 + $0x150] sm:$0xff]
    %v95 = vld [vmem:[%s3 + $0x158] sm:$0xff]
    %v96 = vld [vmem:[%s3 + $0x160] sm:$0xff]
    %v97 = vld [vmem:[%s3 + $0x168] sm:$0xff]
    %v98 = vld [vmem:[%s3 + $0x170] sm:$0xff]
    %v99 = vld [vmem:[%s3 + $0x178] sm:$0xff]
    %v100 = vld [vmem:[%s3 + $0x180] sm:$0xff]
    %v101 = vld [vmem:[%s3 + $0x188] sm:$0xff]
    %v102 = vld [vmem:[%s3 + $0x190] sm:$0xff]
    %v103 = vld [vmem:[%s3 + $0x198] sm:$0xff]
    %v104 = vld [vmem:[%s3 + $0x1a0] sm:$0xff]
    %v105 = vld [vmem:[%s3 + $0x1a8] sm:$0xff]
    %v106 = vld [vmem:[%s3 + $0x1b0] sm:$0xff]
    %v107 = vld [vmem:[%s3 + $0x1b8] sm:$0xff]
    %v108 = vld [vmem:[%s3 + $0x1c0] sm:$0xff]
    %v109 = vld [vmem:[%s3 + $0x1c8] sm:$0xff]
    %v110 = vld [vmem:[%s3 + $0x1d0] sm:$0xff]
    %v111 = vld [vmem:[%s3 + $0x1d8] sm:$0xff]
    %v112 = vld [vmem:[%s3 + $0x1e0] sm:$0xff]
    %v113 = vld [vmem:[%s3 + $0x1e8] sm:$0xff]
    %v114 = vld [vmem:[%s3 + $0x1f0] sm:$0xff]
    %v115 = vld [vmem:[%s3 + $0x1f8] sm:$0xff]
    %v116 = vld [vmem:[%s3 + $0x200] sm:$0xff]
    %v117 = vld [vmem:[%s3 + $0x208] sm:$0xff]
    %v118 = vld [vmem:[%s3 + $0x210] sm:$0xff]
    %v119 = vld [vmem:[%s3 + $0x218] sm:$0xff]
    %v120 = vld [vmem:[%s3 + $0x220] sm:$0xff]
    %v121 = vld [vmem:[%s3 + $0x228] sm:$0xff]
    %v122 = vld [vmem:[%s3 + $0x230] sm:$0xff]
    %v123 = vld [vmem:[%s3 + $0x238] sm:$0xff]
    %v124 = vld [vmem:[%s3 + $0x240] sm:$0xff]
    %v125 = vld [vmem:[%s3 + $0x248] sm:$0xff]
    %v126 = vld [vmem:[%s3 + $0x250] sm:$0xff]
    %v127 = vld [vmem:[%s3 + $0x258] sm:$0xff]
    %v128 = vld [vmem:[%s3 + $0x260] sm:$0xff]
    %v129 = vld [vmem:[%s3 + $0x268] sm:$0xff]
    %v130 = vld [vmem:[%s3 + $0x270] sm:$0xff]
    %v131 = vld [vmem:[%s3 + $0x278] sm:$0xff]
    %v132 = vld [vmem:[%s3 + $0x280] sm:$0xff]
    %v133 = vld [vmem:[%s3 + $0x288] sm:$0xff]
    %v134 = vld [vmem:[%s3 + $0x290] sm:$0xff]
    %v135 = vld [vmem:[%s3 + $0x298] sm:$0xff]
    %v136 = vld [vmem:[%s3 + $0x2a0] sm:$0xff]
    %v137 = vld [vmem:[%s3 + $0x2a8] sm:$0xff]
    %v138 = vld [vmem:[%s3 + $0x2b0] sm:$0xff]
    %v139 = vld [vmem:[%s3 + $0x2b8] sm:$0xff]
    %v140 = vld [vmem:[%s3 + $0x2c0] sm:$0xff]
    %v141 = vld [vmem:[%s3 + $0x2c8] sm:$0xff]
    %v142 = vld [vmem:[%s3 + $0x2d0] sm:$0xff]
    %v143 = vld [vmem:[%s3 + $0x2d8] sm:$0xff]
    %v144 = vld [vmem:[%s3 + $0x2e0] sm:$0xff]
    %v145 = vld [vmem:[%s3 + $0x2e8] sm:$0xff]
    %v146 = vld [vmem:[%s3 + $0x2f0] sm:$0xff]
    %v147 = vld [vmem:[%s3 + $0x2f8] sm:$0xff]
    %v148 = vld [vmem:[%s3 + $0x300] sm:$0xff]
    %v149 = vld [vmem:[%s3 + $0x308] sm:$0xff]
    %v150 = vld [vmem:[%s3 + $0x310] sm:$0xff]
    %v151 = vld [vmem:[%s3 + $0x318] sm:$0xff]
    %v152 = vld [vmem:[%s3 + $0x320] sm:$0xff]
    %v153 = vld [vmem:[%s3 + $0x328] sm:$0xff]
    %v154 = vld [vmem:[%s3 + $0x330] sm:$0xff]
    %v155 = vld [vmem:[%s3 + $0x338] sm:$0xff]
    %v156 = vld [vmem:[%s3 + $0x340] sm:$0xff]
    %v157 = vld [vmem:[%s3 + $0x348] sm:$0xff]
    %v158 = vld [vmem:[%s3 + $0x350] sm:$0xff]
    %v159 = vld [vmem:[%s3 + $0x358] sm:$0xff]
    %v160 = vld [vmem:[%s3 + $0x360] sm:$0xff]
    %v161 = vld [vmem:[%s3 + $0x368] sm:$0xff]
    %v162 = vld [vmem:[%s3 + $0x370] sm:$0xff]
    %v163 = vld [vmem:[%s3 + $0x378] sm:$0xff]
    %v164 = vld [vmem:[%s3 + $0x380] sm:$0xff]
    %v165 = vld [vmem:[%s3 + $0x388] sm:$0xff]
    %v166 = vld [vmem:[%s3 + $0x390] sm:$0xff]
    %v167 = vld [vmem:[%s3 + $0x398] sm:$0xff]
    %v168 = vld [vmem:[%s3 + $0x3a0] sm:$0xff]
    %v169 = vld [vmem:[%s3 + $0x3a8] sm:$0xff]
    %v170 = vld [vmem:[%s3 + $0x3b0] sm:$0xff]
    %v171 = vld [vmem:[%s3 + $0x3b8] sm:$0xff]
    %v172 = vld [vmem:[%s3 + $0x3c0] sm:$0xff]
    %v173 = vld [vmem:[%s3 + $0x3c8] sm:$0xff]
    %v174 = vld [vmem:[%s3 + $0x3d0] sm:$0xff]
    %v175 = vld [vmem:[%s3 + $0x3d8] sm:$0xff]
    %v176 = vld [vmem:[%s3 + $0x3e0] sm:$0xff]
    %v177 = vld [vmem:[%s3 + $0x3e8] sm:$0xff]
    %v178 = vld [vmem:[%s3 + $0x3f0] sm:$0xff]
    %v179 = vld [vmem:[%s3 + $0x3f8] sm:$0xff]
    %v180 = vld [vmem:[%s0] sm:$0xff]
    %v181 = vld [vmem:[%s0 + $0x8] sm:$0xff]
    %v182 = vld [vmem:[%s0 + $0x10] sm:$0xff]
    %v183 = vld [vmem:[%s0 + $0x18] sm:$0xff]
    %vm184 = vcmask 261120
    %v186 = vsel %vm184, %v52, 0
    %v189 = vsel %vm184, %v53, 0
    %v192 = vsel %vm184, %v54, 0
    %v195 = vsel %vm184, %v55, 0
    %v198 = vsel %vm184, %v56, 0
    %v201 = vsel %vm184, %v57, 0
    %v204 = vsel %vm184, %v58, 0
    %v207 = vsel %vm184, %v59, 0
    %v210 = vsel %vm184, %v60, 0
    %v213 = vsel %vm184, %v61, 0
    %v216 = vsel %vm184, %v62, 0
    %v219 = vsel %vm184, %v63, 0
    %v222 = vsel %vm184, %v64, 0
    %v225 = vsel %vm184, %v65, 0
    %v228 = vsel %vm184, %v66, 0
    %v231 = vsel %vm184, %v67, 0
    %v234 = vsel %vm184, %v68, 0
    %v237 = vsel %vm184, %v69, 0
    %v240 = vsel %vm184, %v70, 0
    %v243 = vsel %vm184, %v71, 0
    %v246 = vsel %vm184, %v72, 0
    %v249 = vsel %vm184, %v73, 0
    %v252 = vsel %vm184, %v74, 0
    %v255 = vsel %vm184, %v75, 0
    %v258 = vsel %vm184, %v76, 0
    %v261 = vsel %vm184, %v77, 0
    %v264 = vsel %vm184, %v78, 0
    %v267 = vsel %vm184, %v79, 0
    %v270 = vsel %vm184, %v80, 0
    %v273 = vsel %vm184, %v81, 0
    %v276 = vsel %vm184, %v82, 0
    %v279 = vsel %vm184, %v83, 0
    %v282 = vsel %vm184, %v84, 0
    %v285 = vsel %vm184, %v85, 0
    %v288 = vsel %vm184, %v86, 0
    %v291 = vsel %vm184, %v87, 0
    %v294 = vsel %vm184, %v88, 0
    %v297 = vsel %vm184, %v89, 0
    %v300 = vsel %vm184, %v90, 0
    %v303 = vsel %vm184, %v91, 0
    %v306 = vsel %vm184, %v92, 0
    %v309 = vsel %vm184, %v93, 0
    %v312 = vsel %vm184, %v94, 0
    %v315 = vsel %vm184, %v95, 0
    %v318 = vsel %vm184, %v96, 0
    %v321 = vsel %vm184, %v97, 0
    %v324 = vsel %vm184, %v98, 0
    %v327 = vsel %vm184, %v99, 0
    %v330 = vsel %vm184, %v100, 0
    %v333 = vsel %vm184, %v101, 0
    %v336 = vsel %vm184, %v102, 0
    %v339 = vsel %vm184, %v103, 0
    %v342 = vsel %vm184, %v104, 0
    %v345 = vsel %vm184, %v105, 0
    %v348 = vsel %vm184, %v106, 0
    %v351 = vsel %vm184, %v107, 0
    %v354 = vsel %vm184, %v108, 0
    %v357 = vsel %vm184, %v109, 0
    %v360 = vsel %vm184, %v110, 0
    %v363 = vsel %vm184, %v111, 0
    %v366 = vsel %vm184, %v112, 0
    %v369 = vsel %vm184, %v113, 0
    %v372 = vsel %vm184, %v114, 0
    %v375 = vsel %vm184, %v115, 0
    %v378 = vsel %vm184, %v116, 0
    %v381 = vsel %vm184, %v117, 0
    %v384 = vsel %vm184, %v118, 0
    %v387 = vsel %vm184, %v119, 0
    %v390 = vsel %vm184, %v120, 0
    %v393 = vsel %vm184, %v121, 0
    %v396 = vsel %vm184, %v122, 0
    %v399 = vsel %vm184, %v123, 0
    %v402 = vsel %vm184, %v124, 0
    %v405 = vsel %vm184, %v125, 0
    %v408 = vsel %vm184, %v126, 0
    %v411 = vsel %vm184, %v127, 0
    %v414 = vsel %vm184, %v128, 0
    %v417 = vsel %vm184, %v129, 0
    %v420 = vsel %vm184, %v130, 0
    %v423 = vsel %vm184, %v131, 0
    %v426 = vsel %vm184, %v132, 0
    %v429 = vsel %vm184, %v133, 0
    %v432 = vsel %vm184, %v134, 0
    %v435 = vsel %vm184, %v135, 0
    %v438 = vsel %vm184, %v136, 0
    %v441 = vsel %vm184, %v137, 0
    %v444 = vsel %vm184, %v138, 0
    %v447 = vsel %vm184, %v139, 0
    %v450 = vsel %vm184, %v140, 0
    %v453 = vsel %vm184, %v141, 0
    %v456 = vsel %vm184, %v142, 0
    %v459 = vsel %vm184, %v143, 0
    %v462 = vsel %vm184, %v144, 0
    %v465 = vsel %vm184, %v145, 0
    %v468 = vsel %vm184, %v146, 0
    %v471 = vsel %vm184, %v147, 0
    %v474 = vsel %vm184, %v148, 0
    %v477 = vsel %vm184, %v149, 0
    %v480 = vsel %vm184, %v150, 0
    %v483 = vsel %vm184, %v151, 0
    %v486 = vsel %vm184, %v152, 0
    %v489 = vsel %vm184, %v153, 0
    %v492 = vsel %vm184, %v154, 0
    %v495 = vsel %vm184, %v155, 0
    %v498 = vsel %vm184, %v156, 0
    %v501 = vsel %vm184, %v157, 0
    %v504 = vsel %vm184, %v158, 0
    %v507 = vsel %vm184, %v159, 0
    %v510 = vsel %vm184, %v160, 0
    %v513 = vsel %vm184, %v161, 0
    %v516 = vsel %vm184, %v162, 0
    %v519 = vsel %vm184, %v163, 0
    %v522 = vsel %vm184, %v164, 0
    %v525 = vsel %vm184, %v165, 0
    %v528 = vsel %vm184, %v166, 0
    %v531 = vsel %vm184, %v167, 0
    %v534 = vsel %vm184, %v168, 0
    %v537 = vsel %vm184, %v169, 0
    %v540 = vsel %vm184, %v170, 0
    %v543 = vsel %vm184, %v171, 0
    %v546 = vsel %vm184, %v172, 0
    %v549 = vsel %vm184, %v173, 0
    %v552 = vsel %vm184, %v174, 0
    %v555 = vsel %vm184, %v175, 0
    %v558 = vsel %vm184, %v176, 0
    %v561 = vsel %vm184, %v177, 0
    %v564 = vsel %vm184, %v178, 0
    %v567 = vsel %vm184, %v179, 0
    %569 = vmatprep.subr.mxu0 0.0
    %570 = vmatpush1.msra.mxu0 %v180
    %571 = vmatprep.subr.mxu0 0.0
    %572 = vmatpush1.msra.mxu0 %v181
    %573 = vmatprep.subr.mxu0 0.0
    %574 = vmatpush1.msra.mxu0 %v182
    %575 = vmatprep.subr.mxu0 0.0
    %576 = vmatpush1.msra.mxu0 %v183
    %577 = vmatprep.subr.mxu0 0.0
    %578 = vmatpush1.msra.mxu0 0.0
    %579 = vmatprep.subr.mxu0 0.0
    %580 = vmatpush1.msra.mxu0 0.0
    %581 = vmatprep.subr.mxu0 0.0
    %582 = vmatpush1.msra.mxu0 0.0
    %583 = vmatprep.subr.mxu0 0.0
    %584 = vmatpush1.msra.mxu0 0.0
    %585 = vmatprep.subr.mxu0 0.0
    %586 = vmatpush1.msra.mxu0 0.0
    %587 = vmatprep.subr.mxu0 0.0
    %588 = vmatpush1.msra.mxu0 0.0
    %589 = vmatprep.subr.mxu0 0.0
    %590 = vmatpush1.msra.mxu0 0.0
    %591 = vmatprep.subr.mxu0 0.0
    %592 = vmatpush1.msra.mxu0 0.0
    %593 = vmatprep.subr.mxu0 0.0
    %594 = vmatpush1.msra.mxu0 0.0
    %595 = vmatprep.subr.mxu0 0.0
    %596 = vmatpush1.msra.mxu0 0.0
    %597 = vmatprep.subr.mxu0 0.0
    %598 = vmatpush1.msra.mxu0 0.0
    %599 = vmatprep.subr.mxu0 0.0
    %600 = vmatpush1.msra.mxu0 0.0
    %601 = vmatprep.subr.mxu0 0.0
    %602 = vmatpush1.msra.mxu0 0.0
    %603 = vmatprep.subr.mxu0 0.0
    %604 = vmatpush1.msra.mxu0 0.0
    %605 = vmatprep.subr.mxu0 0.0
    %606 = vmatpush1.msra.mxu0 0.0
    %607 = vmatprep.subr.mxu0 0.0
    %608 = vmatpush1.msra.mxu0 0.0
    %609 = vmatprep.subr.mxu0 0.0
    %610 = vmatpush1.msra.mxu0 0.0
    %611 = vmatprep.subr.mxu0 0.0
    %612 = vmatpush1.msra.mxu0 0.0
    %613 = vmatprep.subr.mxu0 0.0
    %614 = vmatpush1.msra.mxu0 0.0
    %615 = vmatprep.subr.mxu0 0.0
    %616 = vmatpush1.msra.mxu0 0.0
    %617 = vmatprep.subr.mxu0 0.0
    %618 = vmatpush1.msra.mxu0 0.0
    %619 = vmatprep.subr.mxu0 0.0
    %620 = vmatpush1.msra.mxu0 0.0
    %621 = vmatprep.subr.mxu0 0.0
    %622 = vmatpush1.msra.mxu0 0.0
    %623 = vmatprep.subr.mxu0 0.0
    %624 = vmatpush1.msra.mxu0 0.0
    %625 = vmatprep.subr.mxu0 0.0
    %626 = vmatpush1.msra.mxu0 0.0
    %627 = vmatprep.subr.mxu0 0.0
    %628 = vmatpush1.msra.mxu0 0.0
    %629 = vmatprep.subr.mxu0 0.0
    %630 = vmatpush1.msra.mxu0 0.0
    %631 = vmatprep.subr.mxu0 0.0
    %632 = vmatpush1.msra.mxu0 0.0
    %633 = vmatprep.mubr.f32.mxu0 0.0
    %634 = vmatmul.mubr.f32.gmra.mrb[0].mxu0 %v186
    %v635 = vpop.f32.mrb[0].mxu0
    %v636 = vadd.f32 0.0, %v635
    %v637 = vpop.f32.mrb[0].mxu0
    %638 = vmatprep.mubr.f32.mxu0 0.0
    %639 = vmatmul.mubr.f32.gmra.mrb[0].mxu0 %v189
    %v640 = vpop.f32.mrb[0].mxu0
    %v641 = vadd.f32 0.0, %v640
    %v642 = vpop.f32.mrb[0].mxu0
    %643 = vmatprep.mubr.f32.mxu0 0.0
    %644 = vmatmul.mubr.f32.gmra.mrb[0].mxu0 %v192
    %v645 = vpop.f32.mrb[0].mxu0
    %v646 = vadd.f32 0.0, %v645
    %v647 = vpop.f32.mrb[0].mxu0
    %648 = vmatprep.mubr.f32.mxu0 0.0
    %649 = vmatmul.mubr.f32.gmra.mrb[0].mxu0 %v195
    %v650 = vpop.f32.mrb[0].mxu0
    %v651 = vadd.f32 0.0, %v650
    %v652 = vpop.f32.mrb[0].mxu0
    %653 = vmatprep.mubr.f32.mxu0 0.0
    %654 = vmatmul.mubr.f32.gmra.mrb[0].mxu0 %v198
    %v655 = vpop.f32.mrb[0].mxu0
    %v656 = vadd.f32 0.0, %v655
    %v657 = vpop.f32.mrb[0].mxu0
    %658 = vmatprep.mubr.f32.mxu0 0.0
    %659 = vmatmul.mubr.f32.gmra.mrb[0].mxu0 %v201
    %v660 = vpop.f32.mrb[0].mxu0
    %v661 = vadd.f32 0.0, %v660
    %v662 = vpop.f32.mrb[0].mxu0
    %663 = vmatprep.mubr.f32.mxu0 0.0
    %664 = vmatmul.mubr.f32.gmra.mrb[0].mxu0 %v204
    %v665 = vpop.f32.mrb[0].mxu0
    %v666 = vadd.f32 0.0, %v665
    %v667 = vpop.f32.mrb[0].mxu0
    %668 = vmatprep.mubr.f32.mxu0 0.0
    %669 = vmatmul.mubr.f32.gmra.mrb[0].mxu0 %v207
    %v670 = vpop.f32.mrb[0].mxu0
    %v671 = vadd.f32 0.0, %v670
    %v672 = vpop.f32.mrb[0].mxu0
    %673 = vmatprep.mubr.f32.mxu0 0.0
    %674 = vmatmul.mubr.f32.gmra.mrb[0].mxu0 %v210
    %v675 = vpop.f32.mrb[0].mxu0
    %v676 = vadd.f32 0.0, %v675
    %v677 = vpop.f32.mrb[0].mxu0
    %678 = vmatprep.mubr.f32.mxu0 0.0
    %679 = vmatmul.mubr.f32.gmra.mrb[0].mxu0 %v213
    %v680 = vpop.f32.mrb[0].mxu0
    %v681 = vadd.f32 0.0, %v680
    %v682 = vpop.f32.mrb[0].mxu0
    %683 = vmatprep.mubr.f32.mxu0 0.0
    %684 = vmatmul.mubr.f32.gmra.mrb[0].mxu0 %v216
    %v685 = vpop.f32.mrb[0].mxu0
    %v686 = vadd.f32 0.0, %v685
    %v687 = vpop.f32.mrb[0].mxu0
    %688 = vmatprep.mubr.f32.mxu0 0.0
    %689 = vmatmul.mubr.f32.gmra.mrb[0].mxu0 %v219
    %v690 = vpop.f32.mrb[0].mxu0
    %v691 = vadd.f32 0.0, %v690
    %v692 = vpop.f32.mrb[0].mxu0
    %693 = vmatprep.mubr.f32.mxu0 0.0
    %694 = vmatmul.mubr.f32.gmra.mrb[0].mxu0 %v222
    %v695 = vpop.f32.mrb[0].mxu0
    %v696 = vadd.f32 0.0, %v695
    %v697 = vpop.f32.mrb[0].mxu0
    %698 = vmatprep.mubr.f32.mxu0 0.0
    %699 = vmatmul.mubr.f32.gmra.mrb[0].mxu0 %v225
    %v700 = vpop.f32.mrb[0].mxu0
    %v701 = vadd.f32 0.0, %v700
    %v702 = vpop.f32.mrb[0].mxu0
    %703 = vmatprep.mubr.f32.mxu0 0.0
    %704 = vmatmul.mubr.f32.gmra.mrb[0].mxu0 %v228
    %v705 = vpop.f32.mrb[0].mxu0
    %v706 = vadd.f32 0.0, %v705
    %v707 = vpop.f32.mrb[0].mxu0
    %708 = vmatprep.mubr.f32.mxu0 0.0
    %709 = vmatmul.mubr.f32.gmra.mrb[0].mxu0 %v231
    %v710 = vpop.f32.mrb[0].mxu0
    %v711 = vadd.f32 0.0, %v710
    %v712 = vpop.f32.mrb[0].mxu0
    %713 = vmatprep.mubr.f32.mxu0 0.0
    %714 = vmatmul.mubr.f32.gmra.mrb[0].mxu0 %v234
    %v715 = vpop.f32.mrb[0].mxu0
    %v716 = vadd.f32 0.0, %v715
    %v717 = vpop.f32.mrb[0].mxu0
    %718 = vmatprep.mubr.f32.mxu0 0.0
    %719 = vmatmul.mubr.f32.gmra.mrb[0].mxu0 %v237
    %v720 = vpop.f32.mrb[0].mxu0
    %v721 = vadd.f32 0.0, %v720
    %v722 = vpop.f32.mrb[0].mxu0
    %723 = vmatprep.mubr.f32.mxu0 0.0
    %724 = vmatmul.mubr.f32.gmra.mrb[0].mxu0 %v240
    %v725 = vpop.f32.mrb[0].mxu0
    %v726 = vadd.f32 0.0, %v725
    %v727 = vpop.f32.mrb[0].mxu0
    %728 = vmatprep.mubr.f32.mxu0 0.0
    %729 = vmatmul.mubr.f32.gmra.mrb[0].mxu0 %v243
    %v730 = vpop.f32.mrb[0].mxu0
    %v731 = vadd.f32 0.0, %v730
    %v732 = vpop.f32.mrb[0].mxu0
    %733 = vmatprep.mubr.f32.mxu0 0.0
    %734 = vmatmul.mubr.f32.gmra.mrb[0].mxu0 %v246
    %v735 = vpop.f32.mrb[0].mxu0
    %v736 = vadd.f32 0.0, %v735
    %v737 = vpop.f32.mrb[0].mxu0
    %738 = vmatprep.mubr.f32.mxu0 0.0
    %739 = vmatmul.mubr.f32.gmra.mrb[0].mxu0 %v249
    %v740 = vpop.f32.mrb[0].mxu0
    %v741 = vadd.f32 0.0, %v740
    %v742 = vpop.f32.mrb[0].mxu0
    %743 = vmatprep.mubr.f32.mxu0 0.0
    %744 = vmatmul.mubr.f32.gmra.mrb[0].mxu0 %v252
    %v745 = vpop.f32.mrb[0].mxu0
    %v746 = vadd.f32 0.0, %v745
    %v747 = vpop.f32.mrb[0].mxu0
    %748 = vmatprep.mubr.f32.mxu0 0.0
    %749 = vmatmul.mubr.f32.gmra.mrb[0].mxu0 %v255
    %v750 = vpop.f32.mrb[0].mxu0
    %v751 = vadd.f32 0.0, %v750
    %v752 = vpop.f32.mrb[0].mxu0
    %753 = vmatprep.mubr.f32.mxu0 0.0
    %754 = vmatmul.mubr.f32.gmra.mrb[0].mxu0 %v258
    %v755 = vpop.f32.mrb[0].mxu0
    %v756 = vadd.f32 0.0, %v755
    %v757 = vpop.f32.mrb[0].mxu0
    %758 = vmatprep.mubr.f32.mxu0 0.0
    %759 = vmatmul.mubr.f32.gmra.mrb[0].mxu0 %v261
    %v760 = vpop.f32.mrb[0].mxu0
    %v761 = vadd.f32 0.0, %v760
    %v762 = vpop.f32.mrb[0].mxu0
    %763 = vmatprep.mubr.f32.mxu0 0.0
    %764 = vmatmul.mubr.f32.gmra.mrb[0].mxu0 %v264
    %v765 = vpop.f32.mrb[0].mxu0
    %v766 = vadd.f32 0.0, %v765
    %v767 = vpop.f32.mrb[0].mxu0
    %768 = vmatprep.mubr.f32.mxu0 0.0
    %769 = vmatmul.mubr.f32.gmra.mrb[0].mxu0 %v267
    %v770 = vpop.f32.mrb[0].mxu0
    %v771 = vadd.f32 0.0, %v770
    %v772 = vpop.f32.mrb[0].mxu0
    %773 = vmatprep.mubr.f32.mxu0 0.0
    %774 = vmatmul.mubr.f32.gmra.mrb[0].mxu0 %v270
    %v775 = vpop.f32.mrb[0].mxu0
    %v776 = vadd.f32 0.0, %v775
    %v777 = vpop.f32.mrb[0].mxu0
    %778 = vmatprep.mubr.f32.mxu0 0.0
    %779 = vmatmul.mubr.f32.gmra.mrb[0].mxu0 %v273
    %v780 = vpop.f32.mrb[0].mxu0
    %v781 = vadd.f32 0.0, %v780
    %v782 = vpop.f32.mrb[0].mxu0
    %783 = vmatprep.mubr.f32.mxu0 0.0
    %784 = vmatmul.mubr.f32.gmra.mrb[0].mxu0 %v276
    %v785 = vpop.f32.mrb[0].mxu0
    %v786 = vadd.f32 0.0, %v785
    %v787 = vpop.f32.mrb[0].mxu0
    %788 = vmatprep.mubr.f32.mxu0 0.0
    %789 = vmatmul.mubr.f32.gmra.mrb[0].mxu0 %v279
    %v790 = vpop.f32.mrb[0].mxu0
    %v791 = vadd.f32 0.0, %v790
    %v792 = vpop.f32.mrb[0].mxu0
    %793 = vmatprep.mubr.f32.mxu0 0.0
    %794 = vmatmul.mubr.f32.gmra.mrb[0].mxu0 %v282
    %v795 = vpop.f32.mrb[0].mxu0
    %v796 = vadd.f32 0.0, %v795
    %v797 = vpop.f32.mrb[0].mxu0
    %798 = vmatprep.mubr.f32.mxu0 0.0
    %799 = vmatmul.mubr.f32.gmra.mrb[0].mxu0 %v285
    %v800 = vpop.f32.mrb[0].mxu0
    %v801 = vadd.f32 0.0, %v800
    %v802 = vpop.f32.mrb[0].mxu0
    %803 = vmatprep.mubr.f32.mxu0 0.0
    %804 = vmatmul.mubr.f32.gmra.mrb[0].mxu0 %v288
    %v805 = vpop.f32.mrb[0].mxu0
    %v806 = vadd.f32 0.0, %v805
    %v807 = vpop.f32.mrb[0].mxu0
    %808 = vmatprep.mubr.f32.mxu0 0.0
    %809 = vmatmul.mubr.f32.gmra.mrb[0].mxu0 %v291
    %v810 = vpop.f32.mrb[0].mxu0
    %v811 = vadd.f32 0.0, %v810
    %v812 = vpop.f32.mrb[0].mxu0
    %813 = vmatprep.mubr.f32.mxu0 0.0
    %814 = vmatmul.mubr.f32.gmra.mrb[0].mxu0 %v294
    %v815 = vpop.f32.mrb[0].mxu0
    %v816 = vadd.f32 0.0, %v815
    %v817 = vpop.f32.mrb[0].mxu0
    %818 = vmatprep.mubr.f32.mxu0 0.0
    %819 = vmatmul.mubr.f32.gmra.mrb[0].mxu0 %v297
    %v820 = vpop.f32.mrb[0].mxu0
    %v821 = vadd.f32 0.0, %v820
    %v822 = vpop.f32.mrb[0].mxu0
    %823 = vmatprep.mubr.f32.mxu0 0.0
    %824 = vmatmul.mubr.f32.gmra.mrb[0].mxu0 %v300
    %v825 = vpop.f32.mrb[0].mxu0
    %v826 = vadd.f32 0.0, %v825
    %v827 = vpop.f32.mrb[0].mxu0
    %828 = vmatprep.mubr.f32.mxu0 0.0
    %829 = vmatmul.mubr.f32.gmra.mrb[0].mxu0 %v303
    %v830 = vpop.f32.mrb[0].mxu0
    %v831 = vadd.f32 0.0, %v830
    %v832 = vpop.f32.mrb[0].mxu0
    %833 = vmatprep.mubr.f32.mxu0 0.0
    %834 = vmatmul.mubr.f32.gmra.mrb[0].mxu0 %v306
    %v835 = vpop.f32.mrb[0].mxu0
    %v836 = vadd.f32 0.0, %v835
    %v837 = vpop.f32.mrb[0].mxu0
    %838 = vmatprep.mubr.f32.mxu0 0.0
    %839 = vmatmul.mubr.f32.gmra.mrb[0].mxu0 %v309
    %v840 = vpop.f32.mrb[0].mxu0
    %v841 = vadd.f32 0.0, %v840
    %v842 = vpop.f32.mrb[0].mxu0
    %843 = vmatprep.mubr.f32.mxu0 0.0
    %844 = vmatmul.mubr.f32.gmra.mrb[0].mxu0 %v312
    %v845 = vpop.f32.mrb[0].mxu0
    %v846 = vadd.f32 0.0, %v845
    %v847 = vpop.f32.mrb[0].mxu0
    %848 = vmatprep.mubr.f32.mxu0 0.0
    %849 = vmatmul.mubr.f32.gmra.mrb[0].mxu0 %v315
    %v850 = vpop.f32.mrb[0].mxu0
    %v851 = vadd.f32 0.0, %v850
    %v852 = vpop.f32.mrb[0].mxu0
    %853 = vmatprep.mubr.f32.mxu0 0.0
    %854 = vmatmul.mubr.f32.gmra.mrb[0].mxu0 %v318
    %v855 = vpop.f32.mrb[0].mxu0
    %v856 = vadd.f32 0.0, %v855
    %v857 = vpop.f32.mrb[0].mxu0
    %858 = vmatprep.mubr.f32.mxu0 0.0
    %859 = vmatmul.mubr.f32.gmra.mrb[0].mxu0 %v321
    %v860 = vpop.f32.mrb[0].mxu0
    %v861 = vadd.f32 0.0, %v860
    %v862 = vpop.f32.mrb[0].mxu0
    %863 = vmatprep.mubr.f32.mxu0 0.0
    %864 = vmatmul.mubr.f32.gmra.mrb[0].mxu0 %v324
    %v865 = vpop.f32.mrb[0].mxu0
    %v866 = vadd.f32 0.0, %v865
    %v867 = vpop.f32.mrb[0].mxu0
    %868 = vmatprep.mubr.f32.mxu0 0.0
    %869 = vmatmul.mubr.f32.gmra.mrb[0].mxu0 %v327
    %v870 = vpop.f32.mrb[0].mxu0
    %v871 = vadd.f32 0.0, %v870
    %v872 = vpop.f32.mrb[0].mxu0
    %873 = vmatprep.mubr.f32.mxu0 0.0
    %874 = vmatmul.mubr.f32.gmra.mrb[0].mxu0 %v330
    %v875 = vpop.f32.mrb[0].mxu0
    %v876 = vadd.f32 0.0, %v875
    %v877 = vpop.f32.mrb[0].mxu0
    %878 = vmatprep.mubr.f32.mxu0 0.0
    %879 = vmatmul.mubr.f32.gmra.mrb[0].mxu0 %v333
    %v880 = vpop.f32.mrb[0].mxu0
    %v881 = vadd.f32 0.0, %v880
    %v882 = vpop.f32.mrb[0].mxu0
    %883 = vmatprep.mubr.f32.mxu0 0.0
    %884 = vmatmul.mubr.f32.gmra.mrb[0].mxu0 %v336
    %v885 = vpop.f32.mrb[0].mxu0
    %v886 = vadd.f32 0.0, %v885
    %v887 = vpop.f32.mrb[0].mxu0
    %888 = vmatprep.mubr.f32.mxu0 0.0
    %889 = vmatmul.mubr.f32.gmra.mrb[0].mxu0 %v339
    %v890 = vpop.f32.mrb[0].mxu0
    %v891 = vadd.f32 0.0, %v890
    %v892 = vpop.f32.mrb[0].mxu0
    %893 = vmatprep.mubr.f32.mxu0 0.0
    %894 = vmatmul.mubr.f32.gmra.mrb[0].mxu0 %v342
    %v895 = vpop.f32.mrb[0].mxu0
    %v896 = vadd.f32 0.0, %v895
    %v897 = vpop.f32.mrb[0].mxu0
    %898 = vmatprep.mubr.f32.mxu0 0.0
    %899 = vmatmul.mubr.f32.gmra.mrb[0].mxu0 %v345
    %v900 = vpop.f32.mrb[0].mxu0
    %v901 = vadd.f32 0.0, %v900
    %v902 = vpop.f32.mrb[0].mxu0
    %903 = vmatprep.mubr.f32.mxu0 0.0
    %904 = vmatmul.mubr.f32.gmra.mrb[0].mxu0 %v348
    %v905 = vpop.f32.mrb[0].mxu0
    %v906 = vadd.f32 0.0, %v905
    %v907 = vpop.f32.mrb[0].mxu0
    %908 = vmatprep.mubr.f32.mxu0 0.0
    %909 = vmatmul.mubr.f32.gmra.mrb[0].mxu0 %v351
    %v910 = vpop.f32.mrb[0].mxu0
    %v911 = vadd.f32 0.0, %v910
    %v912 = vpop.f32.mrb[0].mxu0
    %913 = vmatprep.mubr.f32.mxu0 0.0
    %914 = vmatmul.mubr.f32.gmra.mrb[0].mxu0 %v354
    %v915 = vpop.f32.mrb[0].mxu0
    %v916 = vadd.f32 0.0, %v915
    %v917 = vpop.f32.mrb[0].mxu0
    %918 = vmatprep.mubr.f32.mxu0 0.0
    %919 = vmatmul.mubr.f32.gmra.mrb[0].mxu0 %v357
    %v920 = vpop.f32.mrb[0].mxu0
    %v921 = vadd.f32 0.0, %v920
    %v922 = vpop.f32.mrb[0].mxu0
    %923 = vmatprep.mubr.f32.mxu0 0.0
    %924 = vmatmul.mubr.f32.gmra.mrb[0].mxu0 %v360
    %v925 = vpop.f32.mrb[0].mxu0
    %v926 = vadd.f32 0.0, %v925
    %v927 = vpop.f32.mrb[0].mxu0
    %928 = vmatprep.mubr.f32.mxu0 0.0
    %929 = vmatmul.mubr.f32.gmra.mrb[0].mxu0 %v363
    %v930 = vpop.f32.mrb[0].mxu0
    %v931 = vadd.f32 0.0, %v930
    %v932 = vpop.f32.mrb[0].mxu0
    %933 = vmatprep.mubr.f32.mxu0 0.0
    %934 = vmatmul.mubr.f32.gmra.mrb[0].mxu0 %v366
    %v935 = vpop.f32.mrb[0].mxu0
    %v936 = vadd.f32 0.0, %v935
    %v937 = vpop.f32.mrb[0].mxu0
    %938 = vmatprep.mubr.f32.mxu0 0.0
    %939 = vmatmul.mubr.f32.gmra.mrb[0].mxu0 %v369
    %v940 = vpop.f32.mrb[0].mxu0
    %v941 = vadd.f32 0.0, %v940
    %v942 = vpop.f32.mrb[0].mxu0
    %943 = vmatprep.mubr.f32.mxu0 0.0
    %944 = vmatmul.mubr.f32.gmra.mrb[0].mxu0 %v372
    %v945 = vpop.f32.mrb[0].mxu0
    %v946 = vadd.f32 0.0, %v945
    %v947 = vpop.f32.mrb[0].mxu0
    %948 = vmatprep.mubr.f32.mxu0 0.0
    %949 = vmatmul.mubr.f32.gmra.mrb[0].mxu0 %v375
    %v950 = vpop.f32.mrb[0].mxu0
    %v951 = vadd.f32 0.0, %v950
    %v952 = vpop.f32.mrb[0].mxu0
    %953 = vmatprep.mubr.f32.mxu0 0.0
    %954 = vmatmul.mubr.f32.gmra.mrb[0].mxu0 %v378
    %v955 = vpop.f32.mrb[0].mxu0
    %v956 = vadd.f32 0.0, %v955
    %v957 = vpop.f32.mrb[0].mxu0
    %958 = vmatprep.mubr.f32.mxu0 0.0
    %959 = vmatmul.mubr.f32.gmra.mrb[0].mxu0 %v381
    %v960 = vpop.f32.mrb[0].mxu0
    %v961 = vadd.f32 0.0, %v960
    %v962 = vpop.f32.mrb[0].mxu0
    %963 = vmatprep.mubr.f32.mxu0 0.0
    %964 = vmatmul.mubr.f32.gmra.mrb[0].mxu0 %v384
    %v965 = vpop.f32.mrb[0].mxu0
    %v966 = vadd.f32 0.0, %v965
    %v967 = vpop.f32.mrb[0].mxu0
    %968 = vmatprep.mubr.f32.mxu0 0.0
    %969 = vmatmul.mubr.f32.gmra.mrb[0].mxu0 %v387
    %v970 = vpop.f32.mrb[0].mxu0
    %v971 = vadd.f32 0.0, %v970
    %v972 = vpop.f32.mrb[0].mxu0
    %973 = vmatprep.mubr.f32.mxu0 0.0
    %974 = vmatmul.mubr.f32.gmra.mrb[0].mxu0 %v390
    %v975 = vpop.f32.mrb[0].mxu0
    %v976 = vadd.f32 0.0, %v975
    %v977 = vpop.f32.mrb[0].mxu0
    %978 = vmatprep.mubr.f32.mxu0 0.0
    %979 = vmatmul.mubr.f32.gmra.mrb[0].mxu0 %v393
    %v980 = vpop.f32.mrb[0].mxu0
    %v981 = vadd.f32 0.0, %v980
    %v982 = vpop.f32.mrb[0].mxu0
    %983 = vmatprep.mubr.f32.mxu0 0.0
    %984 = vmatmul.mubr.f32.gmra.mrb[0].mxu0 %v396
    %v985 = vpop.f32.mrb[0].mxu0
    %v986 = vadd.f32 0.0, %v985
    %v987 = vpop.f32.mrb[0].mxu0
    %988 = vmatprep.mubr.f32.mxu0 0.0
    %989 = vmatmul.mubr.f32.gmra.mrb[0].mxu0 %v399
    %v990 = vpop.f32.mrb[0].mxu0
    %v991 = vadd.f32 0.0, %v990
    %v992 = vpop.f32.mrb[0].mxu0
    %993 = vmatprep.mubr.f32.mxu0 0.0
    %994 = vmatmul.mubr.f32.gmra.mrb[0].mxu0 %v402
    %v995 = vpop.f32.mrb[0].mxu0
    %v996 = vadd.f32 0.0, %v995
    %v997 = vpop.f32.mrb[0].mxu0
    %998 = vmatprep.mubr.f32.mxu0 0.0
    %999 = vmatmul.mubr.f32.gmra.mrb[0].mxu0 %v405
    %v1000 = vpop.f32.mrb[0].mxu0
    %v1001 = vadd.f32 0.0, %v1000
    %v1002 = vpop.f32.mrb[0].mxu0
    %1003 = vmatprep.mubr.f32.mxu0 0.0
    %1004 = vmatmul.mubr.f32.gmra.mrb[0].mxu0 %v408
    %v1005 = vpop.f32.mrb[0].mxu0
    %v1006 = vadd.f32 0.0, %v1005
    %v1007 = vpop.f32.mrb[0].mxu0
    %1008 = vmatprep.mubr.f32.mxu0 0.0
    %1009 = vmatmul.mubr.f32.gmra.mrb[0].mxu0 %v411
    %v1010 = vpop.f32.mrb[0].mxu0
    %v1011 = vadd.f32 0.0, %v1010
    %v1012 = vpop.f32.mrb[0].mxu0
    %1013 = vmatprep.mubr.f32.mxu0 0.0
    %1014 = vmatmul.mubr.f32.gmra.mrb[0].mxu0 %v414
    %v1015 = vpop.f32.mrb[0].mxu0
    %v1016 = vadd.f32 0.0, %v1015
    %v1017 = vpop.f32.mrb[0].mxu0
    %1018 = vmatprep.mubr.f32.mxu0 0.0
    %1019 = vmatmul.mubr.f32.gmra.mrb[0].mxu0 %v417
    %v1020 = vpop.f32.mrb[0].mxu0
    %v1021 = vadd.f32 0.0, %v1020
    %v1022 = vpop.f32.mrb[0].mxu0
    %1023 = vmatprep.mubr.f32.mxu0 0.0
    %1024 = vmatmul.mubr.f32.gmra.mrb[0].mxu0 %v420
    %v1025 = vpop.f32.mrb[0].mxu0
    %v1026 = vadd.f32 0.0, %v1025
    %v1027 = vpop.f32.mrb[0].mxu0
    %1028 = vmatprep.mubr.f32.mxu0 0.0
    %1029 = vmatmul.mubr.f32.gmra.mrb[0].mxu0 %v423
    %v1030 = vpop.f32.mrb[0].mxu0
    %v1031 = vadd.f32 0.0, %v1030
    %v1032 = vpop.f32.mrb[0].mxu0
    %1033 = vmatprep.mubr.f32.mxu0 0.0
    %1034 = vmatmul.mubr.f32.gmra.mrb[0].mxu0 %v426
    %v1035 = vpop.f32.mrb[0].mxu0
    %v1036 = vadd.f32 0.0, %v1035
    %v1037 = vpop.f32.mrb[0].mxu0
    %1038 = vmatprep.mubr.f32.mxu0 0.0
    %1039 = vmatmul.mubr.f32.gmra.mrb[0].mxu0 %v429
    %v1040 = vpop.f32.mrb[0].mxu0
    %v1041 = vadd.f32 0.0, %v1040
    %v1042 = vpop.f32.mrb[0].mxu0
    %1043 = vmatprep.mubr.f32.mxu0 0.0
    %1044 = vmatmul.mubr.f32.gmra.mrb[0].mxu0 %v432
    %v1045 = vpop.f32.mrb[0].mxu0
    %v1046 = vadd.f32 0.0, %v1045
    %v1047 = vpop.f32.mrb[0].mxu0
    %1048 = vmatprep.mubr.f32.mxu0 0.0
    %1049 = vmatmul.mubr.f32.gmra.mrb[0].mxu0 %v435
    %v1050 = vpop.f32.mrb[0].mxu0
    %v1051 = vadd.f32 0.0, %v1050
    %v1052 = vpop.f32.mrb[0].mxu0
    %1053 = vmatprep.mubr.f32.mxu0 0.0
    %1054 = vmatmul.mubr.f32.gmra.mrb[0].mxu0 %v438
    %v1055 = vpop.f32.mrb[0].mxu0
    %v1056 = vadd.f32 0.0, %v1055
    %v1057 = vpop.f32.mrb[0].mxu0
    %1058 = vmatprep.mubr.f32.mxu0 0.0
    %1059 = vmatmul.mubr.f32.gmra.mrb[0].mxu0 %v441
    %v1060 = vpop.f32.mrb[0].mxu0
    %v1061 = vadd.f32 0.0, %v1060
    %v1062 = vpop.f32.mrb[0].mxu0
    %1063 = vmatprep.mubr.f32.mxu0 0.0
    %1064 = vmatmul.mubr.f32.gmra.mrb[0].mxu0 %v444
    %v1065 = vpop.f32.mrb[0].mxu0
    %v1066 = vadd.f32 0.0, %v1065
    %v1067 = vpop.f32.mrb[0].mxu0
    %1068 = vmatprep.mubr.f32.mxu0 0.0
    %1069 = vmatmul.mubr.f32.gmra.mrb[0].mxu0 %v447
    %v1070 = vpop.f32.mrb[0].mxu0
    %v1071 = vadd.f32 0.0, %v1070
    %v1072 = vpop.f32.mrb[0].mxu0
    %1073 = vmatprep.mubr.f32.mxu0 0.0
    %1074 = vmatmul.mubr.f32.gmra.mrb[0].mxu0 %v450
    %v1075 = vpop.f32.mrb[0].mxu0
    %v1076 = vadd.f32 0.0, %v1075
    %v1077 = vpop.f32.mrb[0].mxu0
    %1078 = vmatprep.mubr.f32.mxu0 0.0
    %1079 = vmatmul.mubr.f32.gmra.mrb[0].mxu0 %v453
    %v1080 = vpop.f32.mrb[0].mxu0
    %v1081 = vadd.f32 0.0, %v1080
    %v1082 = vpop.f32.mrb[0].mxu0
    %1083 = vmatprep.mubr.f32.mxu0 0.0
    %1084 = vmatmul.mubr.f32.gmra.mrb[0].mxu0 %v456
    %v1085 = vpop.f32.mrb[0].mxu0
    %v1086 = vadd.f32 0.0, %v1085
    %v1087 = vpop.f32.mrb[0].mxu0
    %1088 = vmatprep.mubr.f32.mxu0 0.0
    %1089 = vmatmul.mubr.f32.gmra.mrb[0].mxu0 %v459
    %v1090 = vpop.f32.mrb[0].mxu0
    %v1091 = vadd.f32 0.0, %v1090
    %v1092 = vpop.f32.mrb[0].mxu0
    %1093 = vmatprep.mubr.f32.mxu0 0.0
    %1094 = vmatmul.mubr.f32.gmra.mrb[0].mxu0 %v462
    %v1095 = vpop.f32.mrb[0].mxu0
    %v1096 = vadd.f32 0.0, %v1095
    %v1097 = vpop.f32.mrb[0].mxu0
    %1098 = vmatprep.mubr.f32.mxu0 0.0
    %1099 = vmatmul.mubr.f32.gmra.mrb[0].mxu0 %v465
    %v1100 = vpop.f32.mrb[0].mxu0
    %v1101 = vadd.f32 0.0, %v1100
    %v1102 = vpop.f32.mrb[0].mxu0
    %1103 = vmatprep.mubr.f32.mxu0 0.0
    %1104 = vmatmul.mubr.f32.gmra.mrb[0].mxu0 %v468
    %v1105 = vpop.f32.mrb[0].mxu0
    %v1106 = vadd.f32 0.0, %v1105
    %v1107 = vpop.f32.mrb[0].mxu0
    %1108 = vmatprep.mubr.f32.mxu0 0.0
    %1109 = vmatmul.mubr.f32.gmra.mrb[0].mxu0 %v471
    %v1110 = vpop.f32.mrb[0].mxu0
    %v1111 = vadd.f32 0.0, %v1110
    %v1112 = vpop.f32.mrb[0].mxu0
    %1113 = vmatprep.mubr.f32.mxu0 0.0
    %1114 = vmatmul.mubr.f32.gmra.mrb[0].mxu0 %v474
    %v1115 = vpop.f32.mrb[0].mxu0
    %v1116 = vadd.f32 0.0, %v1115
    %v1117 = vpop.f32.mrb[0].mxu0
    %1118 = vmatprep.mubr.f32.mxu0 0.0
    %1119 = vmatmul.mubr.f32.gmra.mrb[0].mxu0 %v477
    %v1120 = vpop.f32.mrb[0].mxu0
    %v1121 = vadd.f32 0.0, %v1120
    %v1122 = vpop.f32.mrb[0].mxu0
    %1123 = vmatprep.mubr.f32.mxu0 0.0
    %1124 = vmatmul.mubr.f32.gmra.mrb[0].mxu0 %v480
    %v1125 = vpop.f32.mrb[0].mxu0
    %v1126 = vadd.f32 0.0, %v1125
    %v1127 = vpop.f32.mrb[0].mxu0
    %1128 = vmatprep.mubr.f32.mxu0 0.0
    %1129 = vmatmul.mubr.f32.gmra.mrb[0].mxu0 %v483
    %v1130 = vpop.f32.mrb[0].mxu0
    %v1131 = vadd.f32 0.0, %v1130
    %v1132 = vpop.f32.mrb[0].mxu0
    %1133 = vmatprep.mubr.f32.mxu0 0.0
    %1134 = vmatmul.mubr.f32.gmra.mrb[0].mxu0 %v486
    %v1135 = vpop.f32.mrb[0].mxu0
    %v1136 = vadd.f32 0.0, %v1135
    %v1137 = vpop.f32.mrb[0].mxu0
    %1138 = vmatprep.mubr.f32.mxu0 0.0
    %1139 = vmatmul.mubr.f32.gmra.mrb[0].mxu0 %v489
    %v1140 = vpop.f32.mrb[0].mxu0
    %v1141 = vadd.f32 0.0, %v1140
    %v1142 = vpop.f32.mrb[0].mxu0
    %1143 = vmatprep.mubr.f32.mxu0 0.0
    %1144 = vmatmul.mubr.f32.gmra.mrb[0].mxu0 %v492
    %v1145 = vpop.f32.mrb[0].mxu0
    %v1146 = vadd.f32 0.0, %v1145
    %v1147 = vpop.f32.mrb[0].mxu0
    %1148 = vmatprep.mubr.f32.mxu0 0.0
    %1149 = vmatmul.mubr.f32.gmra.mrb[0].mxu0 %v495
    %v1150 = vpop.f32.mrb[0].mxu0
    %v1151 = vadd.f32 0.0, %v1150
    %v1152 = vpop.f32.mrb[0].mxu0
    %1153 = vmatprep.mubr.f32.mxu0 0.0
    %1154 = vmatmul.mubr.f32.gmra.mrb[0].mxu0 %v498
    %v1155 = vpop.f32.mrb[0].mxu0
    %v1156 = vadd.f32 0.0, %v1155
    %v1157 = vpop.f32.mrb[0].mxu0
    %1158 = vmatprep.mubr.f32.mxu0 0.0
    %1159 = vmatmul.mubr.f32.gmra.mrb[0].mxu0 %v501
    %v1160 = vpop.f32.mrb[0].mxu0
    %v1161 = vadd.f32 0.0, %v1160
    %v1162 = vpop.f32.mrb[0].mxu0
    %1163 = vmatprep.mubr.f32.mxu0 0.0
    %1164 = vmatmul.mubr.f32.gmra.mrb[0].mxu0 %v504
    %v1165 = vpop.f32.mrb[0].mxu0
    %v1166 = vadd.f32 0.0, %v1165
    %v1167 = vpop.f32.mrb[0].mxu0
    %1168 = vmatprep.mubr.f32.mxu0 0.0
    %1169 = vmatmul.mubr.f32.gmra.mrb[0].mxu0 %v507
    %v1170 = vpop.f32.mrb[0].mxu0
    %v1171 = vadd.f32 0.0, %v1170
    %v1172 = vpop.f32.mrb[0].mxu0
    %1173 = vmatprep.mubr.f32.mxu0 0.0
    %1174 = vmatmul.mubr.f32.gmra.mrb[0].mxu0 %v510
    %v1175 = vpop.f32.mrb[0].mxu0
    %v1176 = vadd.f32 0.0, %v1175
    %v1177 = vpop.f32.mrb[0].mxu0
    %1178 = vmatprep.mubr.f32.mxu0 0.0
    %1179 = vmatmul.mubr.f32.gmra.mrb[0].mxu0 %v513
    %v1180 = vpop.f32.mrb[0].mxu0
    %v1181 = vadd.f32 0.0, %v1180
    %v1182 = vpop.f32.mrb[0].mxu0
    %1183 = vmatprep.mubr.f32.mxu0 0.0
    %1184 = vmatmul.mubr.f32.gmra.mrb[0].mxu0 %v516
    %v1185 = vpop.f32.mrb[0].mxu0
    %v1186 = vadd.f32 0.0, %v1185
    %v1187 = vpop.f32.mrb[0].mxu0
    %1188 = vmatprep.mubr.f32.mxu0 0.0
    %1189 = vmatmul.mubr.f32.gmra.mrb[0].mxu0 %v519
    %v1190 = vpop.f32.mrb[0].mxu0
    %v1191 = vadd.f32 0.0, %v1190
    %v1192 = vpop.f32.mrb[0].mxu0
    %1193 = vmatprep.mubr.f32.mxu0 0.0
    %1194 = vmatmul.mubr.f32.gmra.mrb[0].mxu0 %v522
    %v1195 = vpop.f32.mrb[0].mxu0
    %v1196 = vadd.f32 0.0, %v1195
    %v1197 = vpop.f32.mrb[0].mxu0
    %1198 = vmatprep.mubr.f32.mxu0 0.0
    %1199 = vmatmul.mubr.f32.gmra.mrb[0].mxu0 %v525
    %v1200 = vpop.f32.mrb[0].mxu0
    %v1201 = vadd.f32 0.0, %v1200
    %v1202 = vpop.f32.mrb[0].mxu0
    %1203 = vmatprep.mubr.f32.mxu0 0.0
    %1204 = vmatmul.mubr.f32.gmra.mrb[0].mxu0 %v528
    %v1205 = vpop.f32.mrb[0].mxu0
    %v1206 = vadd.f32 0.0, %v1205
    %v1207 = vpop.f32.mrb[0].mxu0
    %1208 = vmatprep.mubr.f32.mxu0 0.0
    %1209 = vmatmul.mubr.f32.gmra.mrb[0].mxu0 %v531
    %v1210 = vpop.f32.mrb[0].mxu0
    %v1211 = vadd.f32 0.0, %v1210
    %v1212 = vpop.f32.mrb[0].mxu0
    %1213 = vmatprep.mubr.f32.mxu0 0.0
    %1214 = vmatmul.mubr.f32.gmra.mrb[0].mxu0 %v534
    %v1215 = vpop.f32.mrb[0].mxu0
    %v1216 = vadd.f32 0.0, %v1215
    %v1217 = vpop.f32.mrb[0].mxu0
    %1218 = vmatprep.mubr.f32.mxu0 0.0
    %1219 = vmatmul.mubr.f32.gmra.mrb[0].mxu0 %v537
    %v1220 = vpop.f32.mrb[0].mxu0
    %v1221 = vadd.f32 0.0, %v1220
    %v1222 = vpop.f32.mrb[0].mxu0
    %1223 = vmatprep.mubr.f32.mxu0 0.0
    %1224 = vmatmul.mubr.f32.gmra.mrb[0].mxu0 %v540
    %v1225 = vpop.f32.mrb[0].mxu0
    %v1226 = vadd.f32 0.0, %v1225
    %v1227 = vpop.f32.mrb[0].mxu0
    %1228 = vmatprep.mubr.f32.mxu0 0.0
    %1229 = vmatmul.mubr.f32.gmra.mrb[0].mxu0 %v543
    %v1230 = vpop.f32.mrb[0].mxu0
    %v1231 = vadd.f32 0.0, %v1230
    %v1232 = vpop.f32.mrb[0].mxu0
    %1233 = vmatprep.mubr.f32.mxu0 0.0
    %1234 = vmatmul.mubr.f32.gmra.mrb[0].mxu0 %v546
    %v1235 = vpop.f32.mrb[0].mxu0
    %v1236 = vadd.f32 0.0, %v1235
    %v1237 = vpop.f32.mrb[0].mxu0
    %1238 = vmatprep.mubr.f32.mxu0 0.0
    %1239 = vmatmul.mubr.f32.gmra.mrb[0].mxu0 %v549
    %v1240 = vpop.f32.mrb[0].mxu0
    %v1241 = vadd.f32 0.0, %v1240
    %v1242 = vpop.f32.mrb[0].mxu0
    %1243 = vmatprep.mubr.f32.mxu0 0.0
    %1244 = vmatmul.mubr.f32.gmra.mrb[0].mxu0 %v552
    %v1245 = vpop.f32.mrb[0].mxu0
    %v1246 = vadd.f32 0.0, %v1245
    %v1247 = vpop.f32.mrb[0].mxu0
    %1248 = vmatprep.mubr.f32.mxu0 0.0
    %1249 = vmatmul.mubr.f32.gmra.mrb[0].mxu0 %v555
    %v1250 = vpop.f32.mrb[0].mxu0
    %v1251 = vadd.f32 0.0, %v1250
    %v1252 = vpop.f32.mrb[0].mxu0
    %1253 = vmatprep.mubr.f32.mxu0 0.0
    %1254 = vmatmul.mubr.f32.gmra.mrb[0].mxu0 %v558
    %v1255 = vpop.f32.mrb[0].mxu0
    %v1256 = vadd.f32 0.0, %v1255
    %v1257 = vpop.f32.mrb[0].mxu0
    %1258 = vmatprep.mubr.f32.mxu0 0.0
    %1259 = vmatmul.mubr.f32.gmra.mrb[0].mxu0 %v561
    %v1260 = vpop.f32.mrb[0].mxu0
    %v1261 = vadd.f32 0.0, %v1260
    %v1262 = vpop.f32.mrb[0].mxu0
    %1263 = vmatprep.mubr.f32.mxu0 0.0
    %1264 = vmatmul.mubr.f32.gmra.mrb[0].mxu0 %v564
    %v1265 = vpop.f32.mrb[0].mxu0
    %v1266 = vadd.f32 0.0, %v1265
    %v1267 = vpop.f32.mrb[0].mxu0
    %1268 = vmatprep.mubr.f32.mxu0 0.0
    %1269 = vmatmul.mubr.f32.gmra.mrb[0].mxu0 %v567
    %v1270 = vpop.f32.mrb[0].mxu0
    %v1271 = vadd.f32 0.0, %v1270
    %v1272 = vpop.f32.mrb[0].mxu0
    %1273 = vdwg.mxu0
    %v1274 = vld [vmem:[%s4] sm:$0xff]
    %v1275 = vld [vmem:[%s4 + $0x8] sm:$0xff]
    %v1276 = vld [vmem:[%s4 + $0x10] sm:$0xff]
    %v1277 = vld [vmem:[%s4 + $0x18] sm:$0xff]
    %v1278 = vld [vmem:[%s4 + $0x20] sm:$0xff]
    %v1279 = vld [vmem:[%s4 + $0x28] sm:$0xff]
    %v1280 = vld [vmem:[%s4 + $0x30] sm:$0xff]
    %v1281 = vld [vmem:[%s4 + $0x38] sm:$0xff]
    %v1282 = vld [vmem:[%s4 + $0x40] sm:$0xff]
    %v1283 = vld [vmem:[%s4 + $0x48] sm:$0xff]
    %v1284 = vld [vmem:[%s4 + $0x50] sm:$0xff]
    %v1285 = vld [vmem:[%s4 + $0x58] sm:$0xff]
    %v1286 = vld [vmem:[%s4 + $0x60] sm:$0xff]
    %v1287 = vld [vmem:[%s4 + $0x68] sm:$0xff]
    %v1288 = vld [vmem:[%s4 + $0x70] sm:$0xff]
    %v1289 = vld [vmem:[%s4 + $0x78] sm:$0xff]
    %v1290 = vld [vmem:[%s1] sm:$0x1]
    %v1291 = vlaneseq
    %v1292 = vshrl.u32 %v1291, 7
    %v1293 = vsub.s32 0, %v1292
    %v1294 = vrot.slane %v1290, %v1293
    %v1295 = vmul.f32 %v1294, %v636
    %v1296 = vmul.f32 %v1294, %v641
    %v1297 = vmul.f32 %v1294, %v646
    %v1298 = vmul.f32 %v1294, %v651
    %v1299 = vmul.f32 %v1294, %v656
    %v1300 = vmul.f32 %v1294, %v661
    %v1301 = vmul.f32 %v1294, %v666
    %v1302 = vmul.f32 %v1294, %v671
    %v1303 = vmul.f32 %v1294, %v676
    %v1304 = vmul.f32 %v1294, %v681
    %v1305 = vmul.f32 %v1294, %v686
    %v1306 = vmul.f32 %v1294, %v691
    %v1307 = vmul.f32 %v1294, %v696
    %v1308 = vmul.f32 %v1294, %v701
    %v1309 = vmul.f32 %v1294, %v706
    %v1310 = vmul.f32 %v1294, %v711
    %v1311 = vld [vmem:[%s1 + $0x1] sm:$0x1]
    %v1312 = vlaneseq
    %v1313 = vshrl.u32 %v1312, 7
    %v1314 = vsub.s32 0, %v1313
    %v1315 = vrot.slane %v1311, %v1314
    %v1316 = vmul.f32 %v1315, %v716
    %v1317 = vmul.f32 %v1315, %v721
    %v1318 = vmul.f32 %v1315, %v726
    %v1319 = vmul.f32 %v1315, %v731
    %v1320 = vmul.f32 %v1315, %v736
    %v1321 = vmul.f32 %v1315, %v741
    %v1322 = vmul.f32 %v1315, %v746
    %v1323 = vmul.f32 %v1315, %v751
    %v1324 = vmul.f32 %v1315, %v756
    %v1325 = vmul.f32 %v1315, %v761
    %v1326 = vmul.f32 %v1315, %v766
    %v1327 = vmul.f32 %v1315, %v771
    %v1328 = vmul.f32 %v1315, %v776
    %v1329 = vmul.f32 %v1315, %v781
    %v1330 = vmul.f32 %v1315, %v786
    %v1331 = vmul.f32 %v1315, %v791
    %v1332 = vadd.f32 %v1295, %v1316
    %v1333 = vadd.f32 %v1296, %v1317
    %v1334 = vadd.f32 %v1297, %v1318
    %v1335 = vadd.f32 %v1298, %v1319
    %v1336 = vadd.f32 %v1299, %v1320
    %v1337 = vadd.f32 %v1300, %v1321
    %v1338 = vadd.f32 %v1301, %v1322
    %v1339 = vadd.f32 %v1302, %v1323
    %v1340 = vadd.f32 %v1303, %v1324
    %v1341 = vadd.f32 %v1304, %v1325
    %v1342 = vadd.f32 %v1305, %v1326
    %v1343 = vadd.f32 %v1306, %v1327
    %v1344 = vadd.f32 %v1307, %v1328
    %v1345 = vadd.f32 %v1308, %v1329
    %v1346 = vadd.f32 %v1309, %v1330
    %v1347 = vadd.f32 %v1310, %v1331
    %v1348 = vld [vmem:[%s1 + $0x2] sm:$0x1]
    %v1349 = vlaneseq
    %v1350 = vshrl.u32 %v1349, 7
    %v1351 = vsub.s32 0, %v1350
    %v1352 = vrot.slane %v1348, %v1351
    %v1353 = vmul.f32 %v1352, %v796
    %v1354 = vmul.f32 %v1352, %v801
    %v1355 = vmul.f32 %v1352, %v806
    %v1356 = vmul.f32 %v1352, %v811
    %v1357 = vmul.f32 %v1352, %v816
    %v1358 = vmul.f32 %v1352, %v821
    %v1359 = vmul.f32 %v1352, %v826
    %v1360 = vmul.f32 %v1352, %v831
    %v1361 = vmul.f32 %v1352, %v836
    %v1362 = vmul.f32 %v1352, %v841
    %v1363 = vmul.f32 %v1352, %v846
    %v1364 = vmul.f32 %v1352, %v851
    %v1365 = vmul.f32 %v1352, %v856
    %v1366 = vmul.f32 %v1352, %v861
    %v1367 = vmul.f32 %v1352, %v866
    %v1368 = vmul.f32 %v1352, %v871
    %v1369 = vadd.f32 %v1332, %v1353
    %v1370 = vadd.f32 %v1333, %v1354
    %v1371 = vadd.f32 %v1334, %v1355
    %v1372 = vadd.f32 %v1335, %v1356
    %v1373 = vadd.f32 %v1336, %v1357
    %v1374 = vadd.f32 %v1337, %v1358
    %v1375 = vadd.f32 %v1338, %v1359
    %v1376 = vadd.f32 %v1339, %v1360
    %v1377 = vadd.f32 %v1340, %v1361
    %v1378 = vadd.f32 %v1341, %v1362
    %v1379 = vadd.f32 %v1342, %v1363
    %v1380 = vadd.f32 %v1343, %v1364
    %v1381 = vadd.f32 %v1344, %v1365
    %v1382 = vadd.f32 %v1345, %v1366
    %v1383 = vadd.f32 %v1346, %v1367
    %v1384 = vadd.f32 %v1347, %v1368
    %v1385 = vld [vmem:[%s1 + $0x3] sm:$0x1]
    %v1386 = vlaneseq
    %v1387 = vshrl.u32 %v1386, 7
    %v1388 = vsub.s32 0, %v1387
    %v1389 = vrot.slane %v1385, %v1388
    %v1390 = vmul.f32 %v1389, %v876
    %v1391 = vmul.f32 %v1389, %v881
    %v1392 = vmul.f32 %v1389, %v886
    %v1393 = vmul.f32 %v1389, %v891
    %v1394 = vmul.f32 %v1389, %v896
    %v1395 = vmul.f32 %v1389, %v901
    %v1396 = vmul.f32 %v1389, %v906
    %v1397 = vmul.f32 %v1389, %v911
    %v1398 = vmul.f32 %v1389, %v916
    %v1399 = vmul.f32 %v1389, %v921
    %v1400 = vmul.f32 %v1389, %v926
    %v1401 = vmul.f32 %v1389, %v931
    %v1402 = vmul.f32 %v1389, %v936
    %v1403 = vmul.f32 %v1389, %v941
    %v1404 = vmul.f32 %v1389, %v946
    %v1405 = vmul.f32 %v1389, %v951
    %v1406 = vadd.f32 %v1369, %v1390
    %v1407 = vadd.f32 %v1370, %v1391
    %v1408 = vadd.f32 %v1371, %v1392
    %v1409 = vadd.f32 %v1372, %v1393
    %v1410 = vadd.f32 %v1373, %v1394
    %v1411 = vadd.f32 %v1374, %v1395
    %v1412 = vadd.f32 %v1375, %v1396
    %v1413 = vadd.f32 %v1376, %v1397
    %v1414 = vadd.f32 %v1377, %v1398
    %v1415 = vadd.f32 %v1378, %v1399
    %v1416 = vadd.f32 %v1379, %v1400
    %v1417 = vadd.f32 %v1380, %v1401
    %v1418 = vadd.f32 %v1381, %v1402
    %v1419 = vadd.f32 %v1382, %v1403
    %v1420 = vadd.f32 %v1383, %v1404
    %v1421 = vadd.f32 %v1384, %v1405
    %v1422 = vld [vmem:[%s1 + $0x4] sm:$0x1]
    %v1423 = vlaneseq
    %v1424 = vshrl.u32 %v1423, 7
    %v1425 = vsub.s32 0, %v1424
    %v1426 = vrot.slane %v1422, %v1425
    %v1427 = vmul.f32 %v1426, %v956
    %v1428 = vmul.f32 %v1426, %v961
    %v1429 = vmul.f32 %v1426, %v966
    %v1430 = vmul.f32 %v1426, %v971
    %v1431 = vmul.f32 %v1426, %v976
    %v1432 = vmul.f32 %v1426, %v981
    %v1433 = vmul.f32 %v1426, %v986
    %v1434 = vmul.f32 %v1426, %v991
    %v1435 = vmul.f32 %v1426, %v996
    %v1436 = vmul.f32 %v1426, %v1001
    %v1437 = vmul.f32 %v1426, %v1006
    %v1438 = vmul.f32 %v1426, %v1011
    %v1439 = vmul.f32 %v1426, %v1016
    %v1440 = vmul.f32 %v1426, %v1021
    %v1441 = vmul.f32 %v1426, %v1026
    %v1442 = vmul.f32 %v1426, %v1031
    %v1443 = vadd.f32 %v1406, %v1427
    %v1444 = vadd.f32 %v1407, %v1428
    %v1445 = vadd.f32 %v1408, %v1429
    %v1446 = vadd.f32 %v1409, %v1430
    %v1447 = vadd.f32 %v1410, %v1431
    %v1448 = vadd.f32 %v1411, %v1432
    %v1449 = vadd.f32 %v1412, %v1433
    %v1450 = vadd.f32 %v1413, %v1434
    %v1451 = vadd.f32 %v1414, %v1435
    %v1452 = vadd.f32 %v1415, %v1436
    %v1453 = vadd.f32 %v1416, %v1437
    %v1454 = vadd.f32 %v1417, %v1438
    %v1455 = vadd.f32 %v1418, %v1439
    %v1456 = vadd.f32 %v1419, %v1440
    %v1457 = vadd.f32 %v1420, %v1441
    %v1458 = vadd.f32 %v1421, %v1442
    %v1459 = vld [vmem:[%s1 + $0x5] sm:$0x1]
    %v1460 = vlaneseq
    %v1461 = vshrl.u32 %v1460, 7
    %v1462 = vsub.s32 0, %v1461
    %v1463 = vrot.slane %v1459, %v1462
    %v1464 = vmul.f32 %v1463, %v1036
    %v1465 = vmul.f32 %v1463, %v1041
    %v1466 = vmul.f32 %v1463, %v1046
    %v1467 = vmul.f32 %v1463, %v1051
    %v1468 = vmul.f32 %v1463, %v1056
    %v1469 = vmul.f32 %v1463, %v1061
    %v1470 = vmul.f32 %v1463, %v1066
    %v1471 = vmul.f32 %v1463, %v1071
    %v1472 = vmul.f32 %v1463, %v1076
    %v1473 = vmul.f32 %v1463, %v1081
    %v1474 = vmul.f32 %v1463, %v1086
    %v1475 = vmul.f32 %v1463, %v1091
    %v1476 = vmul.f32 %v1463, %v1096
    %v1477 = vmul.f32 %v1463, %v1101
    %v1478 = vmul.f32 %v1463, %v1106
    %v1479 = vmul.f32 %v1463, %v1111
    %v1480 = vadd.f32 %v1443, %v1464
    %v1481 = vadd.f32 %v1444, %v1465
    %v1482 = vadd.f32 %v1445, %v1466
    %v1483 = vadd.f32 %v1446, %v1467
    %v1484 = vadd.f32 %v1447, %v1468
    %v1485 = vadd.f32 %v1448, %v1469
    %v1486 = vadd.f32 %v1449, %v1470
    %v1487 = vadd.f32 %v1450, %v1471
    %v1488 = vadd.f32 %v1451, %v1472
    %v1489 = vadd.f32 %v1452, %v1473
    %v1490 = vadd.f32 %v1453, %v1474
    %v1491 = vadd.f32 %v1454, %v1475
    %v1492 = vadd.f32 %v1455, %v1476
    %v1493 = vadd.f32 %v1456, %v1477
    %v1494 = vadd.f32 %v1457, %v1478
    %v1495 = vadd.f32 %v1458, %v1479
    %v1496 = vld [vmem:[%s1 + $0x6] sm:$0x1]
    %v1497 = vlaneseq
    %v1498 = vshrl.u32 %v1497, 7
    %v1499 = vsub.s32 0, %v1498
    %v1500 = vrot.slane %v1496, %v1499
    %v1501 = vmul.f32 %v1500, %v1116
    %v1502 = vmul.f32 %v1500, %v1121
    %v1503 = vmul.f32 %v1500, %v1126
    %v1504 = vmul.f32 %v1500, %v1131
    %v1505 = vmul.f32 %v1500, %v1136
    %v1506 = vmul.f32 %v1500, %v1141
    %v1507 = vmul.f32 %v1500, %v1146
    %v1508 = vmul.f32 %v1500, %v1151
    %v1509 = vmul.f32 %v1500, %v1156
    %v1510 = vmul.f32 %v1500, %v1161
    %v1511 = vmul.f32 %v1500, %v1166
    %v1512 = vmul.f32 %v1500, %v1171
    %v1513 = vmul.f32 %v1500, %v1176
    %v1514 = vmul.f32 %v1500, %v1181
    %v1515 = vmul.f32 %v1500, %v1186
    %v1516 = vmul.f32 %v1500, %v1191
    %v1517 = vadd.f32 %v1480, %v1501
    %v1518 = vadd.f32 %v1481, %v1502
    %v1519 = vadd.f32 %v1482, %v1503
    %v1520 = vadd.f32 %v1483, %v1504
    %v1521 = vadd.f32 %v1484, %v1505
    %v1522 = vadd.f32 %v1485, %v1506
    %v1523 = vadd.f32 %v1486, %v1507
    %v1524 = vadd.f32 %v1487, %v1508
    %v1525 = vadd.f32 %v1488, %v1509
    %v1526 = vadd.f32 %v1489, %v1510
    %v1527 = vadd.f32 %v1490, %v1511
    %v1528 = vadd.f32 %v1491, %v1512
    %v1529 = vadd.f32 %v1492, %v1513
    %v1530 = vadd.f32 %v1493, %v1514
    %v1531 = vadd.f32 %v1494, %v1515
    %v1532 = vadd.f32 %v1495, %v1516
    %v1533 = vld [vmem:[%s1 + $0x7] sm:$0x1]
    %v1534 = vlaneseq
    %v1535 = vshrl.u32 %v1534, 7
    %v1536 = vsub.s32 0, %v1535
    %v1537 = vrot.slane %v1533, %v1536
    %v1538 = vmul.f32 %v1537, %v1196
    %v1539 = vmul.f32 %v1537, %v1201
    %v1540 = vmul.f32 %v1537, %v1206
    %v1541 = vmul.f32 %v1537, %v1211
    %v1542 = vmul.f32 %v1537, %v1216
    %v1543 = vmul.f32 %v1537, %v1221
    %v1544 = vmul.f32 %v1537, %v1226
    %v1545 = vmul.f32 %v1537, %v1231
    %v1546 = vmul.f32 %v1537, %v1236
    %v1547 = vmul.f32 %v1537, %v1241
    %v1548 = vmul.f32 %v1537, %v1246
    %v1549 = vmul.f32 %v1537, %v1251
    %v1550 = vmul.f32 %v1537, %v1256
    %v1551 = vmul.f32 %v1537, %v1261
    %v1552 = vmul.f32 %v1537, %v1266
    %v1553 = vmul.f32 %v1537, %v1271
    %v1554 = vadd.f32 %v1517, %v1538
    %v1555 = vadd.f32 %v1518, %v1539
    %v1556 = vadd.f32 %v1519, %v1540
    %v1557 = vadd.f32 %v1520, %v1541
    %v1558 = vadd.f32 %v1521, %v1542
    %v1559 = vadd.f32 %v1522, %v1543
    %v1560 = vadd.f32 %v1523, %v1544
    %v1561 = vadd.f32 %v1524, %v1545
    %v1562 = vadd.f32 %v1525, %v1546
    %v1563 = vadd.f32 %v1526, %v1547
    %v1564 = vadd.f32 %v1527, %v1548
    %v1565 = vadd.f32 %v1528, %v1549
    %v1566 = vadd.f32 %v1529, %v1550
    %v1567 = vadd.f32 %v1530, %v1551
    %v1568 = vadd.f32 %v1531, %v1552
    %v1569 = vadd.f32 %v1532, %v1553
    %1571 = vset.pattern.permute.xlu0 0
    %1572 = vperm.xlu0 %1571, %v1274
    %v1573 = vpop.permute.xlu0 %1572
    %1576 = vset.pattern.permute.xlu0 0
    %1577 = vperm.xlu0 %1576, %v1275
    %v1578 = vpop.permute.xlu0 %1577
    %1581 = vset.pattern.permute.xlu0 0
    %1582 = vperm.xlu0 %1581, %v1276
    %v1583 = vpop.permute.xlu0 %1582
    %1586 = vset.pattern.permute.xlu0 0
    %1587 = vperm.xlu0 %1586, %v1277
    %v1588 = vpop.permute.xlu0 %1587
    %1591 = vset.pattern.permute.xlu0 0
    %1592 = vperm.xlu0 %1591, %v1278
    %v1593 = vpop.permute.xlu0 %1592
    %1596 = vset.pattern.permute.xlu0 0
    %1597 = vperm.xlu0 %1596, %v1279
    %v1598 = vpop.permute.xlu0 %1597
    %1601 = vset.pattern.permute.xlu0 0
    %1602 = vperm.xlu0 %1601, %v1280
    %v1603 = vpop.permute.xlu0 %1602
    %1606 = vset.pattern.permute.xlu0 0
    %1607 = vperm.xlu0 %1606, %v1281
    %v1608 = vpop.permute.xlu0 %1607
    %1611 = vset.pattern.permute.xlu0 0
    %1612 = vperm.xlu0 %1611, %v1282
    %v1613 = vpop.permute.xlu0 %1612
    %1616 = vset.pattern.permute.xlu0 0
    %1617 = vperm.xlu0 %1616, %v1283
    %v1618 = vpop.permute.xlu0 %1617
    %1621 = vset.pattern.permute.xlu0 0
    %1622 = vperm.xlu0 %1621, %v1284
    %v1623 = vpop.permute.xlu0 %1622
    %1626 = vset.pattern.permute.xlu0 0
    %1627 = vperm.xlu0 %1626, %v1285
    %v1628 = vpop.permute.xlu0 %1627
    %1631 = vset.pattern.permute.xlu0 0
    %1632 = vperm.xlu0 %1631, %v1286
    %v1633 = vpop.permute.xlu0 %1632
    %1636 = vset.pattern.permute.xlu0 0
    %1637 = vperm.xlu0 %1636, %v1287
    %v1638 = vpop.permute.xlu0 %1637
    %1641 = vset.pattern.permute.xlu0 0
    %1642 = vperm.xlu0 %1641, %v1288
    %v1643 = vpop.permute.xlu0 %1642
    %1646 = vset.pattern.permute.xlu0 0
    %1647 = vperm.xlu0 %1646, %v1289
    %v1648 = vpop.permute.xlu0 %1647
    %v1650 = vadd.f32 %v1554, %v1573
    %v1651 = vadd.f32 %v1555, %v1578
    %v1652 = vadd.f32 %v1556, %v1583
    %v1653 = vadd.f32 %v1557, %v1588
    %v1654 = vadd.f32 %v1558, %v1593
    %v1655 = vadd.f32 %v1559, %v1598
    %v1656 = vadd.f32 %v1560, %v1603
    %v1657 = vadd.f32 %v1561, %v1608
    %v1658 = vadd.f32 %v1562, %v1613
    %v1659 = vadd.f32 %v1563, %v1618
    %v1660 = vadd.f32 %v1564, %v1623
    %v1661 = vadd.f32 %v1565, %v1628
    %v1662 = vadd.f32 %v1566, %v1633
    %v1663 = vadd.f32 %v1567, %v1638
    %v1664 = vadd.f32 %v1568, %v1643
    %v1665 = vadd.f32 %v1569, %v1648
    %v1666 = vmax.f32 %v1650, 0.0
    %v1667 = vmax.f32 %v1651, 0.0
    %v1668 = vmax.f32 %v1652, 0.0
    %v1669 = vmax.f32 %v1653, 0.0
    %v1670 = vmax.f32 %v1654, 0.0
    %v1671 = vmax.f32 %v1655, 0.0
    %v1672 = vmax.f32 %v1656, 0.0
    %v1673 = vmax.f32 %v1657, 0.0
    %v1674 = vmax.f32 %v1658, 0.0
    %v1675 = vmax.f32 %v1659, 0.0
    %v1676 = vmax.f32 %v1660, 0.0
    %v1677 = vmax.f32 %v1661, 0.0
    %v1678 = vmax.f32 %v1662, 0.0
    %v1679 = vmax.f32 %v1663, 0.0
    %v1680 = vmax.f32 %v1664, 0.0
    %v1681 = vmax.f32 %v1665, 0.0
    %v1682 = vld [vmem:[%s1 + $0x8] sm:$0x1]
    %v1683 = vlaneseq
    %v1684 = vshrl.u32 %v1683, 7
    %v1685 = vsub.s32 0, %v1684
    %v1686 = vrot.slane %v1682, %v1685
    %v1687 = vmul.f32 %v1686, %v636
    %v1688 = vmul.f32 %v1686, %v641
    %v1689 = vmul.f32 %v1686, %v646
    %v1690 = vmul.f32 %v1686, %v651
    %v1691 = vmul.f32 %v1686, %v656
    %v1692 = vmul.f32 %v1686, %v661
    %v1693 = vmul.f32 %v1686, %v666
    %v1694 = vmul.f32 %v1686, %v671
    %v1695 = vmul.f32 %v1686, %v676
    %v1696 = vmul.f32 %v1686, %v681
    %v1697 = vmul.f32 %v1686, %v686
    %v1698 = vmul.f32 %v1686, %v691
    %v1699 = vmul.f32 %v1686, %v696
    %v1700 = vmul.f32 %v1686, %v701
    %v1701 = vmul.f32 %v1686, %v706
    %v1702 = vmul.f32 %v1686, %v711
    %v1703 = vld [vmem:[%s1 + $0x9] sm:$0x1]
    %v1704 = vlaneseq
    %v1705 = vshrl.u32 %v1704, 7
    %v1706 = vsub.s32 0, %v1705
    %v1707 = vrot.slane %v1703, %v1706
    %v1708 = vmul.f32 %v1707, %v716
    %v1709 = vmul.f32 %v1707, %v721
    %v1710 = vmul.f32 %v1707, %v726
    %v1711 = vmul.f32 %v1707, %v731
    %v1712 = vmul.f32 %v1707, %v736
    %v1713 = vmul.f32 %v1707, %v741
    %v1714 = vmul.f32 %v1707, %v746
    %v1715 = vmul.f32 %v1707, %v751
    %v1716 = vmul.f32 %v1707, %v756
    %v1717 = vmul.f32 %v1707, %v761
    %v1718 = vmul.f32 %v1707, %v766
    %v1719 = vmul.f32 %v1707, %v771
    %v1720 = vmul.f32 %v1707, %v776
    %v1721 = vmul.f32 %v1707, %v781
    %v1722 = vmul.f32 %v1707, %v786
    %v1723 = vmul.f32 %v1707, %v791
    %v1724 = vadd.f32 %v1687, %v1708
    %v1725 = vadd.f32 %v1688, %v1709
    %v1726 = vadd.f32 %v1689, %v1710
    %v1727 = vadd.f32 %v1690, %v1711
    %v1728 = vadd.f32 %v1691, %v1712
    %v1729 = vadd.f32 %v1692, %v1713
    %v1730 = vadd.f32 %v1693, %v1714
    %v1731 = vadd.f32 %v1694, %v1715
    %v1732 = vadd.f32 %v1695, %v1716
    %v1733 = vadd.f32 %v1696, %v1717
    %v1734 = vadd.f32 %v1697, %v1718
    %v1735 = vadd.f32 %v1698, %v1719
    %v1736 = vadd.f32 %v1699, %v1720
    %v1737 = vadd.f32 %v1700, %v1721
    %v1738 = vadd.f32 %v1701, %v1722
    %v1739 = vadd.f32 %v1702, %v1723
    %v1740 = vld [vmem:[%s1 + $0xa] sm:$0x1]
    %v1741 = vlaneseq
    %v1742 = vshrl.u32 %v1741, 7
    %v1743 = vsub.s32 0, %v1742
    %v1744 = vrot.slane %v1740, %v1743
    %v1745 = vmul.f32 %v1744, %v796
    %v1746 = vmul.f32 %v1744, %v801
    %v1747 = vmul.f32 %v1744, %v806
    %v1748 = vmul.f32 %v1744, %v811
    %v1749 = vmul.f32 %v1744, %v816
    %v1750 = vmul.f32 %v1744, %v821
    %v1751 = vmul.f32 %v1744, %v826
    %v1752 = vmul.f32 %v1744, %v831
    %v1753 = vmul.f32 %v1744, %v836
    %v1754 = vmul.f32 %v1744, %v841
    %v1755 = vmul.f32 %v1744, %v846
    %v1756 = vmul.f32 %v1744, %v851
    %v1757 = vmul.f32 %v1744, %v856
    %v1758 = vmul.f32 %v1744, %v861
    %v1759 = vmul.f32 %v1744, %v866
    %v1760 = vmul.f32 %v1744, %v871
    %v1761 = vadd.f32 %v1724, %v1745
    %v1762 = vadd.f32 %v1725, %v1746
    %v1763 = vadd.f32 %v1726, %v1747
    %v1764 = vadd.f32 %v1727, %v1748
    %v1765 = vadd.f32 %v1728, %v1749
    %v1766 = vadd.f32 %v1729, %v1750
    %v1767 = vadd.f32 %v1730, %v1751
    %v1768 = vadd.f32 %v1731, %v1752
    %v1769 = vadd.f32 %v1732, %v1753
    %v1770 = vadd.f32 %v1733, %v1754
    %v1771 = vadd.f32 %v1734, %v1755
    %v1772 = vadd.f32 %v1735, %v1756
    %v1773 = vadd.f32 %v1736, %v1757
    %v1774 = vadd.f32 %v1737, %v1758
    %v1775 = vadd.f32 %v1738, %v1759
    %v1776 = vadd.f32 %v1739, %v1760
    %v1777 = vld [vmem:[%s1 + $0xb] sm:$0x1]
    %v1778 = vlaneseq
    %v1779 = vshrl.u32 %v1778, 7
    %v1780 = vsub.s32 0, %v1779
    %v1781 = vrot.slane %v1777, %v1780
    %v1782 = vmul.f32 %v1781, %v876
    %v1783 = vmul.f32 %v1781, %v881
    %v1784 = vmul.f32 %v1781, %v886
    %v1785 = vmul.f32 %v1781, %v891
    %v1786 = vmul.f32 %v1781, %v896
    %v1787 = vmul.f32 %v1781, %v901
    %v1788 = vmul.f32 %v1781, %v906
    %v1789 = vmul.f32 %v1781, %v911
    %v1790 = vmul.f32 %v1781, %v916
    %v1791 = vmul.f32 %v1781, %v921
    %v1792 = vmul.f32 %v1781, %v926
    %v1793 = vmul.f32 %v1781, %v931
    %v1794 = vmul.f32 %v1781, %v936
    %v1795 = vmul.f32 %v1781, %v941
    %v1796 = vmul.f32 %v1781, %v946
    %v1797 = vmul.f32 %v1781, %v951
    %v1798 = vadd.f32 %v1761, %v1782
    %v1799 = vadd.f32 %v1762, %v1783
    %v1800 = vadd.f32 %v1763, %v1784
    %v1801 = vadd.f32 %v1764, %v1785
    %v1802 = vadd.f32 %v1765, %v1786
    %v1803 = vadd.f32 %v1766, %v1787
    %v1804 = vadd.f32 %v1767, %v1788
    %v1805 = vadd.f32 %v1768, %v1789
    %v1806 = vadd.f32 %v1769, %v1790
    %v1807 = vadd.f32 %v1770, %v1791
    %v1808 = vadd.f32 %v1771, %v1792
    %v1809 = vadd.f32 %v1772, %v1793
    %v1810 = vadd.f32 %v1773, %v1794
    %v1811 = vadd.f32 %v1774, %v1795
    %v1812 = vadd.f32 %v1775, %v1796
    %v1813 = vadd.f32 %v1776, %v1797
    %v1814 = vld [vmem:[%s1 + $0xc] sm:$0x1]
    %v1815 = vlaneseq
    %v1816 = vshrl.u32 %v1815, 7
    %v1817 = vsub.s32 0, %v1816
    %v1818 = vrot.slane %v1814, %v1817
    %v1819 = vmul.f32 %v1818, %v956
    %v1820 = vmul.f32 %v1818, %v961
    %v1821 = vmul.f32 %v1818, %v966
    %v1822 = vmul.f32 %v1818, %v971
    %v1823 = vmul.f32 %v1818, %v976
    %v1824 = vmul.f32 %v1818, %v981
    %v1825 = vmul.f32 %v1818, %v986
    %v1826 = vmul.f32 %v1818, %v991
    %v1827 = vmul.f32 %v1818, %v996
    %v1828 = vmul.f32 %v1818, %v1001
    %v1829 = vmul.f32 %v1818, %v1006
    %v1830 = vmul.f32 %v1818, %v1011
    %v1831 = vmul.f32 %v1818, %v1016
    %v1832 = vmul.f32 %v1818, %v1021
    %v1833 = vmul.f32 %v1818, %v1026
    %v1834 = vmul.f32 %v1818, %v1031
    %v1835 = vadd.f32 %v1798, %v1819
    %v1836 = vadd.f32 %v1799, %v1820
    %v1837 = vadd.f32 %v1800, %v1821
    %v1838 = vadd.f32 %v1801, %v1822
    %v1839 = vadd.f32 %v1802, %v1823
    %v1840 = vadd.f32 %v1803, %v1824
    %v1841 = vadd.f32 %v1804, %v1825
    %v1842 = vadd.f32 %v1805, %v1826
    %v1843 = vadd.f32 %v1806, %v1827
    %v1844 = vadd.f32 %v1807, %v1828
    %v1845 = vadd.f32 %v1808, %v1829
    %v1846 = vadd.f32 %v1809, %v1830
    %v1847 = vadd.f32 %v1810, %v1831
    %v1848 = vadd.f32 %v1811, %v1832
    %v1849 = vadd.f32 %v1812, %v1833
    %v1850 = vadd.f32 %v1813, %v1834
    %v1851 = vld [vmem:[%s1 + $0xd] sm:$0x1]
    %v1852 = vlaneseq
    %v1853 = vshrl.u32 %v1852, 7
    %v1854 = vsub.s32 0, %v1853
    %v1855 = vrot.slane %v1851, %v1854
    %v1856 = vmul.f32 %v1855, %v1036
    %v1857 = vmul.f32 %v1855, %v1041
    %v1858 = vmul.f32 %v1855, %v1046
    %v1859 = vmul.f32 %v1855, %v1051
    %v1860 = vmul.f32 %v1855, %v1056
    %v1861 = vmul.f32 %v1855, %v1061
    %v1862 = vmul.f32 %v1855, %v1066
    %v1863 = vmul.f32 %v1855, %v1071
    %v1864 = vmul.f32 %v1855, %v1076
    %v1865 = vmul.f32 %v1855, %v1081
    %v1866 = vmul.f32 %v1855, %v1086
    %v1867 = vmul.f32 %v1855, %v1091
    %v1868 = vmul.f32 %v1855, %v1096
    %v1869 = vmul.f32 %v1855, %v1101
    %v1870 = vmul.f32 %v1855, %v1106
    %v1871 = vmul.f32 %v1855, %v1111
    %v1872 = vadd.f32 %v1835, %v1856
    %v1873 = vadd.f32 %v1836, %v1857
    %v1874 = vadd.f32 %v1837, %v1858
    %v1875 = vadd.f32 %v1838, %v1859
    %v1876 = vadd.f32 %v1839, %v1860
    %v1877 = vadd.f32 %v1840, %v1861
    %v1878 = vadd.f32 %v1841, %v1862
    %v1879 = vadd.f32 %v1842, %v1863
    %v1880 = vadd.f32 %v1843, %v1864
    %v1881 = vadd.f32 %v1844, %v1865
    %v1882 = vadd.f32 %v1845, %v1866
    %v1883 = vadd.f32 %v1846, %v1867
    %v1884 = vadd.f32 %v1847, %v1868
    %v1885 = vadd.f32 %v1848, %v1869
    %v1886 = vadd.f32 %v1849, %v1870
    %v1887 = vadd.f32 %v1850, %v1871
    %v1888 = vld [vmem:[%s1 + $0xe] sm:$0x1]
    %v1889 = vlaneseq
    %v1890 = vshrl.u32 %v1889, 7
    %v1891 = vsub.s32 0, %v1890
    %v1892 = vrot.slane %v1888, %v1891
    %v1893 = vmul.f32 %v1892, %v1116
    %v1894 = vmul.f32 %v1892, %v1121
    %v1895 = vmul.f32 %v1892, %v1126
    %v1896 = vmul.f32 %v1892, %v1131
    %v1897 = vmul.f32 %v1892, %v1136
    %v1898 = vmul.f32 %v1892, %v1141
    %v1899 = vmul.f32 %v1892, %v1146
    %v1900 = vmul.f32 %v1892, %v1151
    %v1901 = vmul.f32 %v1892, %v1156
    %v1902 = vmul.f32 %v1892, %v1161
    %v1903 = vmul.f32 %v1892, %v1166
    %v1904 = vmul.f32 %v1892, %v1171
    %v1905 = vmul.f32 %v1892, %v1176
    %v1906 = vmul.f32 %v1892, %v1181
    %v1907 = vmul.f32 %v1892, %v1186
    %v1908 = vmul.f32 %v1892, %v1191
    %v1909 = vadd.f32 %v1872, %v1893
    %v1910 = vadd.f32 %v1873, %v1894
    %v1911 = vadd.f32 %v1874, %v1895
    %v1912 = vadd.f32 %v1875, %v1896
    %v1913 = vadd.f32 %v1876, %v1897
    %v1914 = vadd.f32 %v1877, %v1898
    %v1915 = vadd.f32 %v1878, %v1899
    %v1916 = vadd.f32 %v1879, %v1900
    %v1917 = vadd.f32 %v1880, %v1901
    %v1918 = vadd.f32 %v1881, %v1902
    %v1919 = vadd.f32 %v1882, %v1903
    %v1920 = vadd.f32 %v1883, %v1904
    %v1921 = vadd.f32 %v1884, %v1905
    %v1922 = vadd.f32 %v1885, %v1906
    %v1923 = vadd.f32 %v1886, %v1907
    %v1924 = vadd.f32 %v1887, %v1908
    %v1925 = vld [vmem:[%s1 + $0xf] sm:$0x1]
    %v1926 = vlaneseq
    %v1927 = vshrl.u32 %v1926, 7
    %v1928 = vsub.s32 0, %v1927
    %v1929 = vrot.slane %v1925, %v1928
    %v1930 = vmul.f32 %v1929, %v1196
    %v1931 = vmul.f32 %v1929, %v1201
    %v1932 = vmul.f32 %v1929, %v1206
    %v1933 = vmul.f32 %v1929, %v1211
    %v1934 = vmul.f32 %v1929, %v1216
    %v1935 = vmul.f32 %v1929, %v1221
    %v1936 = vmul.f32 %v1929, %v1226
    %v1937 = vmul.f32 %v1929, %v1231
    %v1938 = vmul.f32 %v1929, %v1236
    %v1939 = vmul.f32 %v1929, %v1241
    %v1940 = vmul.f32 %v1929, %v1246
    %v1941 = vmul.f32 %v1929, %v1251
    %v1942 = vmul.f32 %v1929, %v1256
    %v1943 = vmul.f32 %v1929, %v1261
    %v1944 = vmul.f32 %v1929, %v1266
    %v1945 = vmul.f32 %v1929, %v1271
    %v1946 = vadd.f32 %v1909, %v1930
    %v1947 = vadd.f32 %v1910, %v1931
    %v1948 = vadd.f32 %v1911, %v1932
    %v1949 = vadd.f32 %v1912, %v1933
    %v1950 = vadd.f32 %v1913, %v1934
    %v1951 = vadd.f32 %v1914, %v1935
    %v1952 = vadd.f32 %v1915, %v1936
    %v1953 = vadd.f32 %v1916, %v1937
    %v1954 = vadd.f32 %v1917, %v1938
    %v1955 = vadd.f32 %v1918, %v1939
    %v1956 = vadd.f32 %v1919, %v1940
    %v1957 = vadd.f32 %v1920, %v1941
    %v1958 = vadd.f32 %v1921, %v1942
    %v1959 = vadd.f32 %v1922, %v1943
    %v1960 = vadd.f32 %v1923, %v1944
    %v1961 = vadd.f32 %v1924, %v1945
    %v1962 = vadd.f32 %v1946, %v1573
    %v1963 = vadd.f32 %v1947, %v1578
    %v1964 = vadd.f32 %v1948, %v1583
    %v1965 = vadd.f32 %v1949, %v1588
    %v1966 = vadd.f32 %v1950, %v1593
    %v1967 = vadd.f32 %v1951, %v1598
    %v1968 = vadd.f32 %v1952, %v1603
    %v1969 = vadd.f32 %v1953, %v1608
    %v1970 = vadd.f32 %v1954, %v1613
    %v1971 = vadd.f32 %v1955, %v1618
    %v1972 = vadd.f32 %v1956, %v1623
    %v1973 = vadd.f32 %v1957, %v1628
    %v1974 = vadd.f32 %v1958, %v1633
    %v1975 = vadd.f32 %v1959, %v1638
    %v1976 = vadd.f32 %v1960, %v1643
    %v1977 = vadd.f32 %v1961, %v1648
    %v1978 = vmax.f32 %v1962, 0.0
    %v1979 = vmax.f32 %v1963, 0.0
    %v1980 = vmax.f32 %v1964, 0.0
    %v1981 = vmax.f32 %v1965, 0.0
    %v1982 = vmax.f32 %v1966, 0.0
    %v1983 = vmax.f32 %v1967, 0.0
    %v1984 = vmax.f32 %v1968, 0.0
    %v1985 = vmax.f32 %v1969, 0.0
    %v1986 = vmax.f32 %v1970, 0.0
    %v1987 = vmax.f32 %v1971, 0.0
    %v1988 = vmax.f32 %v1972, 0.0
    %v1989 = vmax.f32 %v1973, 0.0
    %v1990 = vmax.f32 %v1974, 0.0
    %v1991 = vmax.f32 %v1975, 0.0
    %v1992 = vmax.f32 %v1976, 0.0
    %v1993 = vmax.f32 %v1977, 0.0
    %v1994 = vld [vmem:[%s1 + $0x10] sm:$0x1]
    %v1995 = vlaneseq
    %v1996 = vshrl.u32 %v1995, 7
    %v1997 = vsub.s32 0, %v1996
    %v1998 = vrot.slane %v1994, %v1997
    %v1999 = vmul.f32 %v1998, %v636
    %v2000 = vmul.f32 %v1998, %v641
    %v2001 = vmul.f32 %v1998, %v646
    %v2002 = vmul.f32 %v1998, %v651
    %v2003 = vmul.f32 %v1998, %v656
    %v2004 = vmul.f32 %v1998, %v661
    %v2005 = vmul.f32 %v1998, %v666
    %v2006 = vmul.f32 %v1998, %v671
    %v2007 = vmul.f32 %v1998, %v676
    %v2008 = vmul.f32 %v1998, %v681
    %v2009 = vmul.f32 %v1998, %v686
    %v2010 = vmul.f32 %v1998, %v691
    %v2011 = vmul.f32 %v1998, %v696
    %v2012 = vmul.f32 %v1998, %v701
    %v2013 = vmul.f32 %v1998, %v706
    %v2014 = vmul.f32 %v1998, %v711
    %v2015 = vld [vmem:[%s1 + $0x11] sm:$0x1]
    %v2016 = vlaneseq
    %v2017 = vshrl.u32 %v2016, 7
    %v2018 = vsub.s32 0, %v2017
    %v2019 = vrot.slane %v2015, %v2018
    %v2020 = vmul.f32 %v2019, %v716
    %v2021 = vmul.f32 %v2019, %v721
    %v2022 = vmul.f32 %v2019, %v726
    %v2023 = vmul.f32 %v2019, %v731
    %v2024 = vmul.f32 %v2019, %v736
    %v2025 = vmul.f32 %v2019, %v741
    %v2026 = vmul.f32 %v2019, %v746
    %v2027 = vmul.f32 %v2019, %v751
    %v2028 = vmul.f32 %v2019, %v756
    %v2029 = vmul.f32 %v2019, %v761
    %v2030 = vmul.f32 %v2019, %v766
    %v2031 = vmul.f32 %v2019, %v771
    %v2032 = vmul.f32 %v2019, %v776
    %v2033 = vmul.f32 %v2019, %v781
    %v2034 = vmul.f32 %v2019, %v786
    %v2035 = vmul.f32 %v2019, %v791
    %v2036 = vadd.f32 %v1999, %v2020
    %v2037 = vadd.f32 %v2000, %v2021
    %v2038 = vadd.f32 %v2001, %v2022
    %v2039 = vadd.f32 %v2002, %v2023
    %v2040 = vadd.f32 %v2003, %v2024
    %v2041 = vadd.f32 %v2004, %v2025
    %v2042 = vadd.f32 %v2005, %v2026
    %v2043 = vadd.f32 %v2006, %v2027
    %v2044 = vadd.f32 %v2007, %v2028
    %v2045 = vadd.f32 %v2008, %v2029
    %v2046 = vadd.f32 %v2009, %v2030
    %v2047 = vadd.f32 %v2010, %v2031
    %v2048 = vadd.f32 %v2011, %v2032
    %v2049 = vadd.f32 %v2012, %v2033
    %v2050 = vadd.f32 %v2013, %v2034
    %v2051 = vadd.f32 %v2014, %v2035
    %v2052 = vld [vmem:[%s1 + $0x12] sm:$0x1]
    %v2053 = vlaneseq
    %v2054 = vshrl.u32 %v2053, 7
    %v2055 = vsub.s32 0, %v2054
    %v2056 = vrot.slane %v2052, %v2055
    %v2057 = vmul.f32 %v2056, %v796
    %v2058 = vmul.f32 %v2056, %v801
    %v2059 = vmul.f32 %v2056, %v806
    %v2060 = vmul.f32 %v2056, %v811
    %v2061 = vmul.f32 %v2056, %v816
    %v2062 = vmul.f32 %v2056, %v821
    %v2063 = vmul.f32 %v2056, %v826
    %v2064 = vmul.f32 %v2056, %v831
    %v2065 = vmul.f32 %v2056, %v836
    %v2066 = vmul.f32 %v2056, %v841
    %v2067 = vmul.f32 %v2056, %v846
    %v2068 = vmul.f32 %v2056, %v851
    %v2069 = vmul.f32 %v2056, %v856
    %v2070 = vmul.f32 %v2056, %v861
    %v2071 = vmul.f32 %v2056, %v866
    %v2072 = vmul.f32 %v2056, %v871
    %v2073 = vadd.f32 %v2036, %v2057
    %v2074 = vadd.f32 %v2037, %v2058
    %v2075 = vadd.f32 %v2038, %v2059
    %v2076 = vadd.f32 %v2039, %v2060
    %v2077 = vadd.f32 %v2040, %v2061
    %v2078 = vadd.f32 %v2041, %v2062
    %v2079 = vadd.f32 %v2042, %v2063
    %v2080 = vadd.f32 %v2043, %v2064
    %v2081 = vadd.f32 %v2044, %v2065
    %v2082 = vadd.f32 %v2045, %v2066
    %v2083 = vadd.f32 %v2046, %v2067
    %v2084 = vadd.f32 %v2047, %v2068
    %v2085 = vadd.f32 %v2048, %v2069
    %v2086 = vadd.f32 %v2049, %v2070
    %v2087 = vadd.f32 %v2050, %v2071
    %v2088 = vadd.f32 %v2051, %v2072
    %v2089 = vld [vmem:[%s1 + $0x13] sm:$0x1]
    %v2090 = vlaneseq
    %v2091 = vshrl.u32 %v2090, 7
    %v2092 = vsub.s32 0, %v2091
    %v2093 = vrot.slane %v2089, %v2092
    %v2094 = vmul.f32 %v2093, %v876
    %v2095 = vmul.f32 %v2093, %v881
    %v2096 = vmul.f32 %v2093, %v886
    %v2097 = vmul.f32 %v2093, %v891
    %v2098 = vmul.f32 %v2093, %v896
    %v2099 = vmul.f32 %v2093, %v901
    %v2100 = vmul.f32 %v2093, %v906
    %v2101 = vmul.f32 %v2093, %v911
    %v2102 = vmul.f32 %v2093, %v916
    %v2103 = vmul.f32 %v2093, %v921
    %v2104 = vmul.f32 %v2093, %v926
    %v2105 = vmul.f32 %v2093, %v931
    %v2106 = vmul.f32 %v2093, %v936
    %v2107 = vmul.f32 %v2093, %v941
    %v2108 = vmul.f32 %v2093, %v946
    %v2109 = vmul.f32 %v2093, %v951
    %v2110 = vadd.f32 %v2073, %v2094
    %v2111 = vadd.f32 %v2074, %v2095
    %v2112 = vadd.f32 %v2075, %v2096
    %v2113 = vadd.f32 %v2076, %v2097
    %v2114 = vadd.f32 %v2077, %v2098
    %v2115 = vadd.f32 %v2078, %v2099
    %v2116 = vadd.f32 %v2079, %v2100
    %v2117 = vadd.f32 %v2080, %v2101
    %v2118 = vadd.f32 %v2081, %v2102
    %v2119 = vadd.f32 %v2082, %v2103
    %v2120 = vadd.f32 %v2083, %v2104
    %v2121 = vadd.f32 %v2084, %v2105
    %v2122 = vadd.f32 %v2085, %v2106
    %v2123 = vadd.f32 %v2086, %v2107
    %v2124 = vadd.f32 %v2087, %v2108
    %v2125 = vadd.f32 %v2088, %v2109
    %v2126 = vld [vmem:[%s1 + $0x14] sm:$0x1]
    %v2127 = vlaneseq
    %v2128 = vshrl.u32 %v2127, 7
    %v2129 = vsub.s32 0, %v2128
    %v2130 = vrot.slane %v2126, %v2129
    %v2131 = vmul.f32 %v2130, %v956
    %v2132 = vmul.f32 %v2130, %v961
    %v2133 = vmul.f32 %v2130, %v966
    %v2134 = vmul.f32 %v2130, %v971
    %v2135 = vmul.f32 %v2130, %v976
    %v2136 = vmul.f32 %v2130, %v981
    %v2137 = vmul.f32 %v2130, %v986
    %v2138 = vmul.f32 %v2130, %v991
    %v2139 = vmul.f32 %v2130, %v996
    %v2140 = vmul.f32 %v2130, %v1001
    %v2141 = vmul.f32 %v2130, %v1006
    %v2142 = vmul.f32 %v2130, %v1011
    %v2143 = vmul.f32 %v2130, %v1016
    %v2144 = vmul.f32 %v2130, %v1021
    %v2145 = vmul.f32 %v2130, %v1026
    %v2146 = vmul.f32 %v2130, %v1031
    %v2147 = vadd.f32 %v2110, %v2131
    %v2148 = vadd.f32 %v2111, %v2132
    %v2149 = vadd.f32 %v2112, %v2133
    %v2150 = vadd.f32 %v2113, %v2134
    %v2151 = vadd.f32 %v2114, %v2135
    %v2152 = vadd.f32 %v2115, %v2136
    %v2153 = vadd.f32 %v2116, %v2137
    %v2154 = vadd.f32 %v2117, %v2138
    %v2155 = vadd.f32 %v2118, %v2139
    %v2156 = vadd.f32 %v2119, %v2140
    %v2157 = vadd.f32 %v2120, %v2141
    %v2158 = vadd.f32 %v2121, %v2142
    %v2159 = vadd.f32 %v2122, %v2143
    %v2160 = vadd.f32 %v2123, %v2144
    %v2161 = vadd.f32 %v2124, %v2145
    %v2162 = vadd.f32 %v2125, %v2146
    %v2163 = vld [vmem:[%s1 + $0x15] sm:$0x1]
    %v2164 = vlaneseq
    %v2165 = vshrl.u32 %v2164, 7
    %v2166 = vsub.s32 0, %v2165
    %v2167 = vrot.slane %v2163, %v2166
    %v2168 = vmul.f32 %v2167, %v1036
    %v2169 = vmul.f32 %v2167, %v1041
    %v2170 = vmul.f32 %v2167, %v1046
    %v2171 = vmul.f32 %v2167, %v1051
    %v2172 = vmul.f32 %v2167, %v1056
    %v2173 = vmul.f32 %v2167, %v1061
    %v2174 = vmul.f32 %v2167, %v1066
    %v2175 = vmul.f32 %v2167, %v1071
    %v2176 = vmul.f32 %v2167, %v1076
    %v2177 = vmul.f32 %v2167, %v1081
    %v2178 = vmul.f32 %v2167, %v1086
    %v2179 = vmul.f32 %v2167, %v1091
    %v2180 = vmul.f32 %v2167, %v1096
    %v2181 = vmul.f32 %v2167, %v1101
    %v2182 = vmul.f32 %v2167, %v1106
    %v2183 = vmul.f32 %v2167, %v1111
    %v2184 = vadd.f32 %v2147, %v2168
    %v2185 = vadd.f32 %v2148, %v2169
    %v2186 = vadd.f32 %v2149, %v2170
    %v2187 = vadd.f32 %v2150, %v2171
    %v2188 = vadd.f32 %v2151, %v2172
    %v2189 = vadd.f32 %v2152, %v2173
    %v2190 = vadd.f32 %v2153, %v2174
    %v2191 = vadd.f32 %v2154, %v2175
    %v2192 = vadd.f32 %v2155, %v2176
    %v2193 = vadd.f32 %v2156, %v2177
    %v2194 = vadd.f32 %v2157, %v2178
    %v2195 = vadd.f32 %v2158, %v2179
    %v2196 = vadd.f32 %v2159, %v2180
    %v2197 = vadd.f32 %v2160, %v2181
    %v2198 = vadd.f32 %v2161, %v2182
    %v2199 = vadd.f32 %v2162, %v2183
    %v2200 = vld [vmem:[%s1 + $0x16] sm:$0x1]
    %v2201 = vlaneseq
    %v2202 = vshrl.u32 %v2201, 7
    %v2203 = vsub.s32 0, %v2202
    %v2204 = vrot.slane %v2200, %v2203
    %v2205 = vmul.f32 %v2204, %v1116
    %v2206 = vmul.f32 %v2204, %v1121
    %v2207 = vmul.f32 %v2204, %v1126
    %v2208 = vmul.f32 %v2204, %v1131
    %v2209 = vmul.f32 %v2204, %v1136
    %v2210 = vmul.f32 %v2204, %v1141
    %v2211 = vmul.f32 %v2204, %v1146
    %v2212 = vmul.f32 %v2204, %v1151
    %v2213 = vmul.f32 %v2204, %v1156
    %v2214 = vmul.f32 %v2204, %v1161
    %v2215 = vmul.f32 %v2204, %v1166
    %v2216 = vmul.f32 %v2204, %v1171
    %v2217 = vmul.f32 %v2204, %v1176
    %v2218 = vmul.f32 %v2204, %v1181
    %v2219 = vmul.f32 %v2204, %v1186
    %v2220 = vmul.f32 %v2204, %v1191
    %v2221 = vadd.f32 %v2184, %v2205
    %v2222 = vadd.f32 %v2185, %v2206
    %v2223 = vadd.f32 %v2186, %v2207
    %v2224 = vadd.f32 %v2187, %v2208
    %v2225 = vadd.f32 %v2188, %v2209
    %v2226 = vadd.f32 %v2189, %v2210
    %v2227 = vadd.f32 %v2190, %v2211
    %v2228 = vadd.f32 %v2191, %v2212
    %v2229 = vadd.f32 %v2192, %v2213
    %v2230 = vadd.f32 %v2193, %v2214
    %v2231 = vadd.f32 %v2194, %v2215
    %v2232 = vadd.f32 %v2195, %v2216
    %v2233 = vadd.f32 %v2196, %v2217
    %v2234 = vadd.f32 %v2197, %v2218
    %v2235 = vadd.f32 %v2198, %v2219
    %v2236 = vadd.f32 %v2199, %v2220
    %v2237 = vld [vmem:[%s1 + $0x17] sm:$0x1]
    %v2238 = vlaneseq
    %v2239 = vshrl.u32 %v2238, 7
    %v2240 = vsub.s32 0, %v2239
    %v2241 = vrot.slane %v2237, %v2240
    %v2242 = vmul.f32 %v2241, %v1196
    %v2243 = vmul.f32 %v2241, %v1201
    %v2244 = vmul.f32 %v2241, %v1206
    %v2245 = vmul.f32 %v2241, %v1211
    %v2246 = vmul.f32 %v2241, %v1216
    %v2247 = vmul.f32 %v2241, %v1221
    %v2248 = vmul.f32 %v2241, %v1226
    %v2249 = vmul.f32 %v2241, %v1231
    %v2250 = vmul.f32 %v2241, %v1236
    %v2251 = vmul.f32 %v2241, %v1241
    %v2252 = vmul.f32 %v2241, %v1246
    %v2253 = vmul.f32 %v2241, %v1251
    %v2254 = vmul.f32 %v2241, %v1256
    %v2255 = vmul.f32 %v2241, %v1261
    %v2256 = vmul.f32 %v2241, %v1266
    %v2257 = vmul.f32 %v2241, %v1271
    %v2258 = vadd.f32 %v2221, %v2242
    %v2259 = vadd.f32 %v2222, %v2243
    %v2260 = vadd.f32 %v2223, %v2244
    %v2261 = vadd.f32 %v2224, %v2245
    %v2262 = vadd.f32 %v2225, %v2246
    %v2263 = vadd.f32 %v2226, %v2247
    %v2264 = vadd.f32 %v2227, %v2248
    %v2265 = vadd.f32 %v2228, %v2249
    %v2266 = vadd.f32 %v2229, %v2250
    %v2267 = vadd.f32 %v2230, %v2251
    %v2268 = vadd.f32 %v2231, %v2252
    %v2269 = vadd.f32 %v2232, %v2253
    %v2270 = vadd.f32 %v2233, %v2254
    %v2271 = vadd.f32 %v2234, %v2255
    %v2272 = vadd.f32 %v2235, %v2256
    %v2273 = vadd.f32 %v2236, %v2257
    %v2274 = vadd.f32 %v2258, %v1573
    %v2275 = vadd.f32 %v2259, %v1578
    %v2276 = vadd.f32 %v2260, %v1583
    %v2277 = vadd.f32 %v2261, %v1588
    %v2278 = vadd.f32 %v2262, %v1593
    %v2279 = vadd.f32 %v2263, %v1598
    %v2280 = vadd.f32 %v2264, %v1603
    %v2281 = vadd.f32 %v2265, %v1608
    %v2282 = vadd.f32 %v2266, %v1613
    %v2283 = vadd.f32 %v2267, %v1618
    %v2284 = vadd.f32 %v2268, %v1623
    %v2285 = vadd.f32 %v2269, %v1628
    %v2286 = vadd.f32 %v2270, %v1633
    %v2287 = vadd.f32 %v2271, %v1638
    %v2288 = vadd.f32 %v2272, %v1643
    %v2289 = vadd.f32 %v2273, %v1648
    %v2290 = vmax.f32 %v2274, 0.0
    %v2291 = vmax.f32 %v2275, 0.0
    %v2292 = vmax.f32 %v2276, 0.0
    %v2293 = vmax.f32 %v2277, 0.0
    %v2294 = vmax.f32 %v2278, 0.0
    %v2295 = vmax.f32 %v2279, 0.0
    %v2296 = vmax.f32 %v2280, 0.0
    %v2297 = vmax.f32 %v2281, 0.0
    %v2298 = vmax.f32 %v2282, 0.0
    %v2299 = vmax.f32 %v2283, 0.0
    %v2300 = vmax.f32 %v2284, 0.0
    %v2301 = vmax.f32 %v2285, 0.0
    %v2302 = vmax.f32 %v2286, 0.0
    %v2303 = vmax.f32 %v2287, 0.0
    %v2304 = vmax.f32 %v2288, 0.0
    %v2305 = vmax.f32 %v2289, 0.0
    %v2306 = vld [vmem:[%s1 + $0x18] sm:$0x1]
    %v2307 = vlaneseq
    %v2308 = vshrl.u32 %v2307, 7
    %v2309 = vsub.s32 0, %v2308
    %v2310 = vrot.slane %v2306, %v2309
    %v2311 = vmul.f32 %v2310, %v636
    %v2312 = vmul.f32 %v2310, %v641
    %v2313 = vmul.f32 %v2310, %v646
    %v2314 = vmul.f32 %v2310, %v651
    %v2315 = vmul.f32 %v2310, %v656
    %v2316 = vmul.f32 %v2310, %v661
    %v2317 = vmul.f32 %v2310, %v666
    %v2318 = vmul.f32 %v2310, %v671
    %v2319 = vmul.f32 %v2310, %v676
    %v2320 = vmul.f32 %v2310, %v681
    %v2321 = vmul.f32 %v2310, %v686
    %v2322 = vmul.f32 %v2310, %v691
    %v2323 = vmul.f32 %v2310, %v696
    %v2324 = vmul.f32 %v2310, %v701
    %v2325 = vmul.f32 %v2310, %v706
    %v2326 = vmul.f32 %v2310, %v711
    %v2327 = vld [vmem:[%s1 + $0x19] sm:$0x1]
    %v2328 = vlaneseq
    %v2329 = vshrl.u32 %v2328, 7
    %v2330 = vsub.s32 0, %v2329
    %v2331 = vrot.slane %v2327, %v2330
    %v2332 = vmul.f32 %v2331, %v716
    %v2333 = vmul.f32 %v2331, %v721
    %v2334 = vmul.f32 %v2331, %v726
    %v2335 = vmul.f32 %v2331, %v731
    %v2336 = vmul.f32 %v2331, %v736
    %v2337 = vmul.f32 %v2331, %v741
    %v2338 = vmul.f32 %v2331, %v746
    %v2339 = vmul.f32 %v2331, %v751
    %v2340 = vmul.f32 %v2331, %v756
    %v2341 = vmul.f32 %v2331, %v761
    %v2342 = vmul.f32 %v2331, %v766
    %v2343 = vmul.f32 %v2331, %v771
    %v2344 = vmul.f32 %v2331, %v776
    %v2345 = vmul.f32 %v2331, %v781
    %v2346 = vmul.f32 %v2331, %v786
    %v2347 = vmul.f32 %v2331, %v791
    %v2348 = vadd.f32 %v2311, %v2332
    %v2349 = vadd.f32 %v2312, %v2333
    %v2350 = vadd.f32 %v2313, %v2334
    %v2351 = vadd.f32 %v2314, %v2335
    %v2352 = vadd.f32 %v2315, %v2336
    %v2353 = vadd.f32 %v2316, %v2337
    %v2354 = vadd.f32 %v2317, %v2338
    %v2355 = vadd.f32 %v2318, %v2339
    %v2356 = vadd.f32 %v2319, %v2340
    %v2357 = vadd.f32 %v2320, %v2341
    %v2358 = vadd.f32 %v2321, %v2342
    %v2359 = vadd.f32 %v2322, %v2343
    %v2360 = vadd.f32 %v2323, %v2344
    %v2361 = vadd.f32 %v2324, %v2345
    %v2362 = vadd.f32 %v2325, %v2346
    %v2363 = vadd.f32 %v2326, %v2347
    %v2364 = vld [vmem:[%s1 + $0x1a] sm:$0x1]
    %v2365 = vlaneseq
    %v2366 = vshrl.u32 %v2365, 7
    %v2367 = vsub.s32 0, %v2366
    %v2368 = vrot.slane %v2364, %v2367
    %v2369 = vmul.f32 %v2368, %v796
    %v2370 = vmul.f32 %v2368, %v801
    %v2371 = vmul.f32 %v2368, %v806
    %v2372 = vmul.f32 %v2368, %v811
    %v2373 = vmul.f32 %v2368, %v816
    %v2374 = vmul.f32 %v2368, %v821
    %v2375 = vmul.f32 %v2368, %v826
    %v2376 = vmul.f32 %v2368, %v831
    %v2377 = vmul.f32 %v2368, %v836
    %v2378 = vmul.f32 %v2368, %v841
    %v2379 = vmul.f32 %v2368, %v846
    %v2380 = vmul.f32 %v2368, %v851
    %v2381 = vmul.f32 %v2368, %v856
    %v2382 = vmul.f32 %v2368, %v861
    %v2383 = vmul.f32 %v2368, %v866
    %v2384 = vmul.f32 %v2368, %v871
    %v2385 = vadd.f32 %v2348, %v2369
    %v2386 = vadd.f32 %v2349, %v2370
    %v2387 = vadd.f32 %v2350, %v2371
    %v2388 = vadd.f32 %v2351, %v2372
    %v2389 = vadd.f32 %v2352, %v2373
    %v2390 = vadd.f32 %v2353, %v2374
    %v2391 = vadd.f32 %v2354, %v2375
    %v2392 = vadd.f32 %v2355, %v2376
    %v2393 = vadd.f32 %v2356, %v2377
    %v2394 = vadd.f32 %v2357, %v2378
    %v2395 = vadd.f32 %v2358, %v2379
    %v2396 = vadd.f32 %v2359, %v2380
    %v2397 = vadd.f32 %v2360, %v2381
    %v2398 = vadd.f32 %v2361, %v2382
    %v2399 = vadd.f32 %v2362, %v2383
    %v2400 = vadd.f32 %v2363, %v2384
    %v2401 = vld [vmem:[%s1 + $0x1b] sm:$0x1]
    %v2402 = vlaneseq
    %v2403 = vshrl.u32 %v2402, 7
    %v2404 = vsub.s32 0, %v2403
    %v2405 = vrot.slane %v2401, %v2404
    %v2406 = vmul.f32 %v2405, %v876
    %v2407 = vmul.f32 %v2405, %v881
    %v2408 = vmul.f32 %v2405, %v886
    %v2409 = vmul.f32 %v2405, %v891
    %v2410 = vmul.f32 %v2405, %v896
    %v2411 = vmul.f32 %v2405, %v901
    %v2412 = vmul.f32 %v2405, %v906
    %v2413 = vmul.f32 %v2405, %v911
    %v2414 = vmul.f32 %v2405, %v916
    %v2415 = vmul.f32 %v2405, %v921
    %v2416 = vmul.f32 %v2405, %v926
    %v2417 = vmul.f32 %v2405, %v931
    %v2418 = vmul.f32 %v2405, %v936
    %v2419 = vmul.f32 %v2405, %v941
    %v2420 = vmul.f32 %v2405, %v946
    %v2421 = vmul.f32 %v2405, %v951
    %v2422 = vadd.f32 %v2385, %v2406
    %v2423 = vadd.f32 %v2386, %v2407
    %v2424 = vadd.f32 %v2387, %v2408
    %v2425 = vadd.f32 %v2388, %v2409
    %v2426 = vadd.f32 %v2389, %v2410
    %v2427 = vadd.f32 %v2390, %v2411
    %v2428 = vadd.f32 %v2391, %v2412
    %v2429 = vadd.f32 %v2392, %v2413
    %v2430 = vadd.f32 %v2393, %v2414
    %v2431 = vadd.f32 %v2394, %v2415
    %v2432 = vadd.f32 %v2395, %v2416
    %v2433 = vadd.f32 %v2396, %v2417
    %v2434 = vadd.f32 %v2397, %v2418
    %v2435 = vadd.f32 %v2398, %v2419
    %v2436 = vadd.f32 %v2399, %v2420
    %v2437 = vadd.f32 %v2400, %v2421
    %v2438 = vld [vmem:[%s1 + $0x1c] sm:$0x1]
    %v2439 = vlaneseq
    %v2440 = vshrl.u32 %v2439, 7
    %v2441 = vsub.s32 0, %v2440
    %v2442 = vrot.slane %v2438, %v2441
    %v2443 = vmul.f32 %v2442, %v956
    %v2444 = vmul.f32 %v2442, %v961
    %v2445 = vmul.f32 %v2442, %v966
    %v2446 = vmul.f32 %v2442, %v971
    %v2447 = vmul.f32 %v2442, %v976
    %v2448 = vmul.f32 %v2442, %v981
    %v2449 = vmul.f32 %v2442, %v986
    %v2450 = vmul.f32 %v2442, %v991
    %v2451 = vmul.f32 %v2442, %v996
    %v2452 = vmul.f32 %v2442, %v1001
    %v2453 = vmul.f32 %v2442, %v1006
    %v2454 = vmul.f32 %v2442, %v1011
    %v2455 = vmul.f32 %v2442, %v1016
    %v2456 = vmul.f32 %v2442, %v1021
    %v2457 = vmul.f32 %v2442, %v1026
    %v2458 = vmul.f32 %v2442, %v1031
    %v2459 = vadd.f32 %v2422, %v2443
    %v2460 = vadd.f32 %v2423, %v2444
    %v2461 = vadd.f32 %v2424, %v2445
    %v2462 = vadd.f32 %v2425, %v2446
    %v2463 = vadd.f32 %v2426, %v2447
    %v2464 = vadd.f32 %v2427, %v2448
    %v2465 = vadd.f32 %v2428, %v2449
    %v2466 = vadd.f32 %v2429, %v2450
    %v2467 = vadd.f32 %v2430, %v2451
    %v2468 = vadd.f32 %v2431, %v2452
    %v2469 = vadd.f32 %v2432, %v2453
    %v2470 = vadd.f32 %v2433, %v2454
    %v2471 = vadd.f32 %v2434, %v2455
    %v2472 = vadd.f32 %v2435, %v2456
    %v2473 = vadd.f32 %v2436, %v2457
    %v2474 = vadd.f32 %v2437, %v2458
    %v2475 = vld [vmem:[%s1 + $0x1d] sm:$0x1]
    %v2476 = vlaneseq
    %v2477 = vshrl.u32 %v2476, 7
    %v2478 = vsub.s32 0, %v2477
    %v2479 = vrot.slane %v2475, %v2478
    %v2480 = vmul.f32 %v2479, %v1036
    %v2481 = vmul.f32 %v2479, %v1041
    %v2482 = vmul.f32 %v2479, %v1046
    %v2483 = vmul.f32 %v2479, %v1051
    %v2484 = vmul.f32 %v2479, %v1056
    %v2485 = vmul.f32 %v2479, %v1061
    %v2486 = vmul.f32 %v2479, %v1066
    %v2487 = vmul.f32 %v2479, %v1071
    %v2488 = vmul.f32 %v2479, %v1076
    %v2489 = vmul.f32 %v2479, %v1081
    %v2490 = vmul.f32 %v2479, %v1086
    %v2491 = vmul.f32 %v2479, %v1091
    %v2492 = vmul.f32 %v2479, %v1096
    %v2493 = vmul.f32 %v2479, %v1101
    %v2494 = vmul.f32 %v2479, %v1106
    %v2495 = vmul.f32 %v2479, %v1111
    %v2496 = vadd.f32 %v2459, %v2480
    %v2497 = vadd.f32 %v2460, %v2481
    %v2498 = vadd.f32 %v2461, %v2482
    %v2499 = vadd.f32 %v2462, %v2483
    %v2500 = vadd.f32 %v2463, %v2484
    %v2501 = vadd.f32 %v2464, %v2485
    %v2502 = vadd.f32 %v2465, %v2486
    %v2503 = vadd.f32 %v2466, %v2487
    %v2504 = vadd.f32 %v2467, %v2488
    %v2505 = vadd.f32 %v2468, %v2489
    %v2506 = vadd.f32 %v2469, %v2490
    %v2507 = vadd.f32 %v2470, %v2491
    %v2508 = vadd.f32 %v2471, %v2492
    %v2509 = vadd.f32 %v2472, %v2493
    %v2510 = vadd.f32 %v2473, %v2494
    %v2511 = vadd.f32 %v2474, %v2495
    %v2512 = vld [vmem:[%s1 + $0x1e] sm:$0x1]
    %v2513 = vlaneseq
    %v2514 = vshrl.u32 %v2513, 7
    %v2515 = vsub.s32 0, %v2514
    %v2516 = vrot.slane %v2512, %v2515
    %v2517 = vmul.f32 %v2516, %v1116
    %v2518 = vmul.f32 %v2516, %v1121
    %v2519 = vmul.f32 %v2516, %v1126
    %v2520 = vmul.f32 %v2516, %v1131
    %v2521 = vmul.f32 %v2516, %v1136
    %v2522 = vmul.f32 %v2516, %v1141
    %v2523 = vmul.f32 %v2516, %v1146
    %v2524 = vmul.f32 %v2516, %v1151
    %v2525 = vmul.f32 %v2516, %v1156
    %v2526 = vmul.f32 %v2516, %v1161
    %v2527 = vmul.f32 %v2516, %v1166
    %v2528 = vmul.f32 %v2516, %v1171
    %v2529 = vmul.f32 %v2516, %v1176
    %v2530 = vmul.f32 %v2516, %v1181
    %v2531 = vmul.f32 %v2516, %v1186
    %v2532 = vmul.f32 %v2516, %v1191
    %v2533 = vadd.f32 %v2496, %v2517
    %v2534 = vadd.f32 %v2497, %v2518
    %v2535 = vadd.f32 %v2498, %v2519
    %v2536 = vadd.f32 %v2499, %v2520
    %v2537 = vadd.f32 %v2500, %v2521
    %v2538 = vadd.f32 %v2501, %v2522
    %v2539 = vadd.f32 %v2502, %v2523
    %v2540 = vadd.f32 %v2503, %v2524
    %v2541 = vadd.f32 %v2504, %v2525
    %v2542 = vadd.f32 %v2505, %v2526
    %v2543 = vadd.f32 %v2506, %v2527
    %v2544 = vadd.f32 %v2507, %v2528
    %v2545 = vadd.f32 %v2508, %v2529
    %v2546 = vadd.f32 %v2509, %v2530
    %v2547 = vadd.f32 %v2510, %v2531
    %v2548 = vadd.f32 %v2511, %v2532
    %v2549 = vld [vmem:[%s1 + $0x1f] sm:$0x1]
    %v2550 = vlaneseq
    %v2551 = vshrl.u32 %v2550, 7
    %v2552 = vsub.s32 0, %v2551
    %v2553 = vrot.slane %v2549, %v2552
    %v2554 = vmul.f32 %v2553, %v1196
    %v2555 = vmul.f32 %v2553, %v1201
    %v2556 = vmul.f32 %v2553, %v1206
    %v2557 = vmul.f32 %v2553, %v1211
    %v2558 = vmul.f32 %v2553, %v1216
    %v2559 = vmul.f32 %v2553, %v1221
    %v2560 = vmul.f32 %v2553, %v1226
    %v2561 = vmul.f32 %v2553, %v1231
    %v2562 = vmul.f32 %v2553, %v1236
    %v2563 = vmul.f32 %v2553, %v1241
    %v2564 = vmul.f32 %v2553, %v1246
    %v2565 = vmul.f32 %v2553, %v1251
    %v2566 = vmul.f32 %v2553, %v1256
    %v2567 = vmul.f32 %v2553, %v1261
    %v2568 = vmul.f32 %v2553, %v1266
    %v2569 = vmul.f32 %v2553, %v1271
    %v2570 = vadd.f32 %v2533, %v2554
    %v2571 = vadd.f32 %v2534, %v2555
    %v2572 = vadd.f32 %v2535, %v2556
    %v2573 = vadd.f32 %v2536, %v2557
    %v2574 = vadd.f32 %v2537, %v2558
    %v2575 = vadd.f32 %v2538, %v2559
    %v2576 = vadd.f32 %v2539, %v2560
    %v2577 = vadd.f32 %v2540, %v2561
    %v2578 = vadd.f32 %v2541, %v2562
    %v2579 = vadd.f32 %v2542, %v2563
    %v2580 = vadd.f32 %v2543, %v2564
    %v2581 = vadd.f32 %v2544, %v2565
    %v2582 = vadd.f32 %v2545, %v2566
    %v2583 = vadd.f32 %v2546, %v2567
    %v2584 = vadd.f32 %v2547, %v2568
    %v2585 = vadd.f32 %v2548, %v2569
    %v2586 = vadd.f32 %v2570, %v1573
    %v2587 = vadd.f32 %v2571, %v1578
    %v2588 = vadd.f32 %v2572, %v1583
    %v2589 = vadd.f32 %v2573, %v1588
    %v2590 = vadd.f32 %v2574, %v1593
    %v2591 = vadd.f32 %v2575, %v1598
    %v2592 = vadd.f32 %v2576, %v1603
    %v2593 = vadd.f32 %v2577, %v1608
    %v2594 = vadd.f32 %v2578, %v1613
    %v2595 = vadd.f32 %v2579, %v1618
    %v2596 = vadd.f32 %v2580, %v1623
    %v2597 = vadd.f32 %v2581, %v1628
    %v2598 = vadd.f32 %v2582, %v1633
    %v2599 = vadd.f32 %v2583, %v1638
    %v2600 = vadd.f32 %v2584, %v1643
    %v2601 = vadd.f32 %v2585, %v1648
    %v2602 = vmax.f32 %v2586, 0.0
    %v2603 = vmax.f32 %v2587, 0.0
    %v2604 = vmax.f32 %v2588, 0.0
    %v2605 = vmax.f32 %v2589, 0.0
    %v2606 = vmax.f32 %v2590, 0.0
    %v2607 = vmax.f32 %v2591, 0.0
    %v2608 = vmax.f32 %v2592, 0.0
    %v2609 = vmax.f32 %v2593, 0.0
    %v2610 = vmax.f32 %v2594, 0.0
    %v2611 = vmax.f32 %v2595, 0.0
    %v2612 = vmax.f32 %v2596, 0.0
    %v2613 = vmax.f32 %v2597, 0.0
    %v2614 = vmax.f32 %v2598, 0.0
    %v2615 = vmax.f32 %v2599, 0.0
    %v2616 = vmax.f32 %v2600, 0.0
    %v2617 = vmax.f32 %v2601, 0.0
    %v2618 = vld [vmem:[%s1 + $0x20] sm:$0x1]
    %v2619 = vlaneseq
    %v2620 = vshrl.u32 %v2619, 7
    %v2621 = vsub.s32 0, %v2620
    %v2622 = vrot.slane %v2618, %v2621
    %v2623 = vmul.f32 %v2622, %v636
    %v2624 = vmul.f32 %v2622, %v641
    %v2625 = vmul.f32 %v2622, %v646
    %v2626 = vmul.f32 %v2622, %v651
    %v2627 = vmul.f32 %v2622, %v656
    %v2628 = vmul.f32 %v2622, %v661
    %v2629 = vmul.f32 %v2622, %v666
    %v2630 = vmul.f32 %v2622, %v671
    %v2631 = vmul.f32 %v2622, %v676
    %v2632 = vmul.f32 %v2622, %v681
    %v2633 = vmul.f32 %v2622, %v686
    %v2634 = vmul.f32 %v2622, %v691
    %v2635 = vmul.f32 %v2622, %v696
    %v2636 = vmul.f32 %v2622, %v701
    %v2637 = vmul.f32 %v2622, %v706
    %v2638 = vmul.f32 %v2622, %v711
    %v2639 = vld [vmem:[%s1 + $0x21] sm:$0x1]
    %v2640 = vlaneseq
    %v2641 = vshrl.u32 %v2640, 7
    %v2642 = vsub.s32 0, %v2641
    %v2643 = vrot.slane %v2639, %v2642
    %v2644 = vmul.f32 %v2643, %v716
    %v2645 = vmul.f32 %v2643, %v721
    %v2646 = vmul.f32 %v2643, %v726
    %v2647 = vmul.f32 %v2643, %v731
    %v2648 = vmul.f32 %v2643, %v736
    %v2649 = vmul.f32 %v2643, %v741
    %v2650 = vmul.f32 %v2643, %v746
    %v2651 = vmul.f32 %v2643, %v751
    %v2652 = vmul.f32 %v2643, %v756
    %v2653 = vmul.f32 %v2643, %v761
    %v2654 = vmul.f32 %v2643, %v766
    %v2655 = vmul.f32 %v2643, %v771
    %v2656 = vmul.f32 %v2643, %v776
    %v2657 = vmul.f32 %v2643, %v781
    %v2658 = vmul.f32 %v2643, %v786
    %v2659 = vmul.f32 %v2643, %v791
    %v2660 = vadd.f32 %v2623, %v2644
    %v2661 = vadd.f32 %v2624, %v2645
    %v2662 = vadd.f32 %v2625, %v2646
    %v2663 = vadd.f32 %v2626, %v2647
    %v2664 = vadd.f32 %v2627, %v2648
    %v2665 = vadd.f32 %v2628, %v2649
    %v2666 = vadd.f32 %v2629, %v2650
    %v2667 = vadd.f32 %v2630, %v2651
    %v2668 = vadd.f32 %v2631, %v2652
    %v2669 = vadd.f32 %v2632, %v2653
    %v2670 = vadd.f32 %v2633, %v2654
    %v2671 = vadd.f32 %v2634, %v2655
    %v2672 = vadd.f32 %v2635, %v2656
    %v2673 = vadd.f32 %v2636, %v2657
    %v2674 = vadd.f32 %v2637, %v2658
    %v2675 = vadd.f32 %v2638, %v2659
    %v2676 = vld [vmem:[%s1 + $0x22] sm:$0x1]
    %v2677 = vlaneseq
    %v2678 = vshrl.u32 %v2677, 7
    %v2679 = vsub.s32 0, %v2678
    %v2680 = vrot.slane %v2676, %v2679
    %v2681 = vmul.f32 %v2680, %v796
    %v2682 = vmul.f32 %v2680, %v801
    %v2683 = vmul.f32 %v2680, %v806
    %v2684 = vmul.f32 %v2680, %v811
    %v2685 = vmul.f32 %v2680, %v816
    %v2686 = vmul.f32 %v2680, %v821
    %v2687 = vmul.f32 %v2680, %v826
    %v2688 = vmul.f32 %v2680, %v831
    %v2689 = vmul.f32 %v2680, %v836
    %v2690 = vmul.f32 %v2680, %v841
    %v2691 = vmul.f32 %v2680, %v846
    %v2692 = vmul.f32 %v2680, %v851
    %v2693 = vmul.f32 %v2680, %v856
    %v2694 = vmul.f32 %v2680, %v861
    %v2695 = vmul.f32 %v2680, %v866
    %v2696 = vmul.f32 %v2680, %v871
    %v2697 = vadd.f32 %v2660, %v2681
    %v2698 = vadd.f32 %v2661, %v2682
    %v2699 = vadd.f32 %v2662, %v2683
    %v2700 = vadd.f32 %v2663, %v2684
    %v2701 = vadd.f32 %v2664, %v2685
    %v2702 = vadd.f32 %v2665, %v2686
    %v2703 = vadd.f32 %v2666, %v2687
    %v2704 = vadd.f32 %v2667, %v2688
    %v2705 = vadd.f32 %v2668, %v2689
    %v2706 = vadd.f32 %v2669, %v2690
    %v2707 = vadd.f32 %v2670, %v2691
    %v2708 = vadd.f32 %v2671, %v2692
    %v2709 = vadd.f32 %v2672, %v2693
    %v2710 = vadd.f32 %v2673, %v2694
    %v2711 = vadd.f32 %v2674, %v2695
    %v2712 = vadd.f32 %v2675, %v2696
    %v2713 = vld [vmem:[%s1 + $0x23] sm:$0x1]
    %v2714 = vlaneseq
    %v2715 = vshrl.u32 %v2714, 7
    %v2716 = vsub.s32 0, %v2715
    %v2717 = vrot.slane %v2713, %v2716
    %v2718 = vmul.f32 %v2717, %v876
    %v2719 = vmul.f32 %v2717, %v881
    %v2720 = vmul.f32 %v2717, %v886
    %v2721 = vmul.f32 %v2717, %v891
    %v2722 = vmul.f32 %v2717, %v896
    %v2723 = vmul.f32 %v2717, %v901
    %v2724 = vmul.f32 %v2717, %v906
    %v2725 = vmul.f32 %v2717, %v911
    %v2726 = vmul.f32 %v2717, %v916
    %v2727 = vmul.f32 %v2717, %v921
    %v2728 = vmul.f32 %v2717, %v926
    %v2729 = vmul.f32 %v2717, %v931
    %v2730 = vmul.f32 %v2717, %v936
    %v2731 = vmul.f32 %v2717, %v941
    %v2732 = vmul.f32 %v2717, %v946
    %v2733 = vmul.f32 %v2717, %v951
    %v2734 = vadd.f32 %v2697, %v2718
    %v2735 = vadd.f32 %v2698, %v2719
    %v2736 = vadd.f32 %v2699, %v2720
    %v2737 = vadd.f32 %v2700, %v2721
    %v2738 = vadd.f32 %v2701, %v2722
    %v2739 = vadd.f32 %v2702, %v2723
    %v2740 = vadd.f32 %v2703, %v2724
    %v2741 = vadd.f32 %v2704, %v2725
    %v2742 = vadd.f32 %v2705, %v2726
    %v2743 = vadd.f32 %v2706, %v2727
    %v2744 = vadd.f32 %v2707, %v2728
    %v2745 = vadd.f32 %v2708, %v2729
    %v2746 = vadd.f32 %v2709, %v2730
    %v2747 = vadd.f32 %v2710, %v2731
    %v2748 = vadd.f32 %v2711, %v2732
    %v2749 = vadd.f32 %v2712, %v2733
    %v2750 = vld [vmem:[%s1 + $0x24] sm:$0x1]
    %v2751 = vlaneseq
    %v2752 = vshrl.u32 %v2751, 7
    %v2753 = vsub.s32 0, %v2752
    %v2754 = vrot.slane %v2750, %v2753
    %v2755 = vmul.f32 %v2754, %v956
    %v2756 = vmul.f32 %v2754, %v961
    %v2757 = vmul.f32 %v2754, %v966
    %v2758 = vmul.f32 %v2754, %v971
    %v2759 = vmul.f32 %v2754, %v976
    %v2760 = vmul.f32 %v2754, %v981
    %v2761 = vmul.f32 %v2754, %v986
    %v2762 = vmul.f32 %v2754, %v991
    %v2763 = vmul.f32 %v2754, %v996
    %v2764 = vmul.f32 %v2754, %v1001
    %v2765 = vmul.f32 %v2754, %v1006
    %v2766 = vmul.f32 %v2754, %v1011
    %v2767 = vmul.f32 %v2754, %v1016
    %v2768 = vmul.f32 %v2754, %v1021
    %v2769 = vmul.f32 %v2754, %v1026
    %v2770 = vmul.f32 %v2754, %v1031
    %v2771 = vadd.f32 %v2734, %v2755
    %v2772 = vadd.f32 %v2735, %v2756
    %v2773 = vadd.f32 %v2736, %v2757
    %v2774 = vadd.f32 %v2737, %v2758
    %v2775 = vadd.f32 %v2738, %v2759
    %v2776 = vadd.f32 %v2739, %v2760
    %v2777 = vadd.f32 %v2740, %v2761
    %v2778 = vadd.f32 %v2741, %v2762
    %v2779 = vadd.f32 %v2742, %v2763
    %v2780 = vadd.f32 %v2743, %v2764
    %v2781 = vadd.f32 %v2744, %v2765
    %v2782 = vadd.f32 %v2745, %v2766
    %v2783 = vadd.f32 %v2746, %v2767
    %v2784 = vadd.f32 %v2747, %v2768
    %v2785 = vadd.f32 %v2748, %v2769
    %v2786 = vadd.f32 %v2749, %v2770
    %v2787 = vld [vmem:[%s1 + $0x25] sm:$0x1]
    %v2788 = vlaneseq
    %v2789 = vshrl.u32 %v2788, 7
    %v2790 = vsub.s32 0, %v2789
    %v2791 = vrot.slane %v2787, %v2790
    %v2792 = vmul.f32 %v2791, %v1036
    %v2793 = vmul.f32 %v2791, %v1041
    %v2794 = vmul.f32 %v2791, %v1046
    %v2795 = vmul.f32 %v2791, %v1051
    %v2796 = vmul.f32 %v2791, %v1056
    %v2797 = vmul.f32 %v2791, %v1061
    %v2798 = vmul.f32 %v2791, %v1066
    %v2799 = vmul.f32 %v2791, %v1071
    %v2800 = vmul.f32 %v2791, %v1076
    %v2801 = vmul.f32 %v2791, %v1081
    %v2802 = vmul.f32 %v2791, %v1086
    %v2803 = vmul.f32 %v2791, %v1091
    %v2804 = vmul.f32 %v2791, %v1096
    %v2805 = vmul.f32 %v2791, %v1101
    %v2806 = vmul.f32 %v2791, %v1106
    %v2807 = vmul.f32 %v2791, %v1111
    %v2808 = vadd.f32 %v2771, %v2792
    %v2809 = vadd.f32 %v2772, %v2793
    %v2810 = vadd.f32 %v2773, %v2794
    %v2811 = vadd.f32 %v2774, %v2795
    %v2812 = vadd.f32 %v2775, %v2796
    %v2813 = vadd.f32 %v2776, %v2797
    %v2814 = vadd.f32 %v2777, %v2798
    %v2815 = vadd.f32 %v2778, %v2799
    %v2816 = vadd.f32 %v2779, %v2800
    %v2817 = vadd.f32 %v2780, %v2801
    %v2818 = vadd.f32 %v2781, %v2802
    %v2819 = vadd.f32 %v2782, %v2803
    %v2820 = vadd.f32 %v2783, %v2804
    %v2821 = vadd.f32 %v2784, %v2805
    %v2822 = vadd.f32 %v2785, %v2806
    %v2823 = vadd.f32 %v2786, %v2807
    %v2824 = vld [vmem:[%s1 + $0x26] sm:$0x1]
    %v2825 = vlaneseq
    %v2826 = vshrl.u32 %v2825, 7
    %v2827 = vsub.s32 0, %v2826
    %v2828 = vrot.slane %v2824, %v2827
    %v2829 = vmul.f32 %v2828, %v1116
    %v2830 = vmul.f32 %v2828, %v1121
    %v2831 = vmul.f32 %v2828, %v1126
    %v2832 = vmul.f32 %v2828, %v1131
    %v2833 = vmul.f32 %v2828, %v1136
    %v2834 = vmul.f32 %v2828, %v1141
    %v2835 = vmul.f32 %v2828, %v1146
    %v2836 = vmul.f32 %v2828, %v1151
    %v2837 = vmul.f32 %v2828, %v1156
    %v2838 = vmul.f32 %v2828, %v1161
    %v2839 = vmul.f32 %v2828, %v1166
    %v2840 = vmul.f32 %v2828, %v1171
    %v2841 = vmul.f32 %v2828, %v1176
    %v2842 = vmul.f32 %v2828, %v1181
    %v2843 = vmul.f32 %v2828, %v1186
    %v2844 = vmul.f32 %v2828, %v1191
    %v2845 = vadd.f32 %v2808, %v2829
    %v2846 = vadd.f32 %v2809, %v2830
    %v2847 = vadd.f32 %v2810, %v2831
    %v2848 = vadd.f32 %v2811, %v2832
    %v2849 = vadd.f32 %v2812, %v2833
    %v2850 = vadd.f32 %v2813, %v2834
    %v2851 = vadd.f32 %v2814, %v2835
    %v2852 = vadd.f32 %v2815, %v2836
    %v2853 = vadd.f32 %v2816, %v2837
    %v2854 = vadd.f32 %v2817, %v2838
    %v2855 = vadd.f32 %v2818, %v2839
    %v2856 = vadd.f32 %v2819, %v2840
    %v2857 = vadd.f32 %v2820, %v2841
    %v2858 = vadd.f32 %v2821, %v2842
    %v2859 = vadd.f32 %v2822, %v2843
    %v2860 = vadd.f32 %v2823, %v2844
    %v2861 = vld [vmem:[%s1 + $0x27] sm:$0x1]
    %v2862 = vlaneseq
    %v2863 = vshrl.u32 %v2862, 7
    %v2864 = vsub.s32 0, %v2863
    %v2865 = vrot.slane %v2861, %v2864
    %v2866 = vmul.f32 %v2865, %v1196
    %v2867 = vmul.f32 %v2865, %v1201
    %v2868 = vmul.f32 %v2865, %v1206
    %v2869 = vmul.f32 %v2865, %v1211
    %v2870 = vmul.f32 %v2865, %v1216
    %v2871 = vmul.f32 %v2865, %v1221
    %v2872 = vmul.f32 %v2865, %v1226
    %v2873 = vmul.f32 %v2865, %v1231
    %v2874 = vmul.f32 %v2865, %v1236
    %v2875 = vmul.f32 %v2865, %v1241
    %v2876 = vmul.f32 %v2865, %v1246
    %v2877 = vmul.f32 %v2865, %v1251
    %v2878 = vmul.f32 %v2865, %v1256
    %v2879 = vmul.f32 %v2865, %v1261
    %v2880 = vmul.f32 %v2865, %v1266
    %v2881 = vmul.f32 %v2865, %v1271
    %v2882 = vadd.f32 %v2845, %v2866
    %v2883 = vadd.f32 %v2846, %v2867
    %v2884 = vadd.f32 %v2847, %v2868
    %v2885 = vadd.f32 %v2848, %v2869
    %v2886 = vadd.f32 %v2849, %v2870
    %v2887 = vadd.f32 %v2850, %v2871
    %v2888 = vadd.f32 %v2851, %v2872
    %v2889 = vadd.f32 %v2852, %v2873
    %v2890 = vadd.f32 %v2853, %v2874
    %v2891 = vadd.f32 %v2854, %v2875
    %v2892 = vadd.f32 %v2855, %v2876
    %v2893 = vadd.f32 %v2856, %v2877
    %v2894 = vadd.f32 %v2857, %v2878
    %v2895 = vadd.f32 %v2858, %v2879
    %v2896 = vadd.f32 %v2859, %v2880
    %v2897 = vadd.f32 %v2860, %v2881
    %v2898 = vadd.f32 %v2882, %v1573
    %v2899 = vadd.f32 %v2883, %v1578
    %v2900 = vadd.f32 %v2884, %v1583
    %v2901 = vadd.f32 %v2885, %v1588
    %v2902 = vadd.f32 %v2886, %v1593
    %v2903 = vadd.f32 %v2887, %v1598
    %v2904 = vadd.f32 %v2888, %v1603
    %v2905 = vadd.f32 %v2889, %v1608
    %v2906 = vadd.f32 %v2890, %v1613
    %v2907 = vadd.f32 %v2891, %v1618
    %v2908 = vadd.f32 %v2892, %v1623
    %v2909 = vadd.f32 %v2893, %v1628
    %v2910 = vadd.f32 %v2894, %v1633
    %v2911 = vadd.f32 %v2895, %v1638
    %v2912 = vadd.f32 %v2896, %v1643
    %v2913 = vadd.f32 %v2897, %v1648
    %v2914 = vmax.f32 %v2898, 0.0
    %v2915 = vmax.f32 %v2899, 0.0
    %v2916 = vmax.f32 %v2900, 0.0
    %v2917 = vmax.f32 %v2901, 0.0
    %v2918 = vmax.f32 %v2902, 0.0
    %v2919 = vmax.f32 %v2903, 0.0
    %v2920 = vmax.f32 %v2904, 0.0
    %v2921 = vmax.f32 %v2905, 0.0
    %v2922 = vmax.f32 %v2906, 0.0
    %v2923 = vmax.f32 %v2907, 0.0
    %v2924 = vmax.f32 %v2908, 0.0
    %v2925 = vmax.f32 %v2909, 0.0
    %v2926 = vmax.f32 %v2910, 0.0
    %v2927 = vmax.f32 %v2911, 0.0
    %v2928 = vmax.f32 %v2912, 0.0
    %v2929 = vmax.f32 %v2913, 0.0
    %v2930 = vld [vmem:[%s1 + $0x28] sm:$0x1]
    %v2931 = vlaneseq
    %v2932 = vshrl.u32 %v2931, 7
    %v2933 = vsub.s32 0, %v2932
    %v2934 = vrot.slane %v2930, %v2933
    %v2935 = vmul.f32 %v2934, %v636
    %v2936 = vmul.f32 %v2934, %v641
    %v2937 = vmul.f32 %v2934, %v646
    %v2938 = vmul.f32 %v2934, %v651
    %v2939 = vmul.f32 %v2934, %v656
    %v2940 = vmul.f32 %v2934, %v661
    %v2941 = vmul.f32 %v2934, %v666
    %v2942 = vmul.f32 %v2934, %v671
    %v2943 = vmul.f32 %v2934, %v676
    %v2944 = vmul.f32 %v2934, %v681
    %v2945 = vmul.f32 %v2934, %v686
    %v2946 = vmul.f32 %v2934, %v691
    %v2947 = vmul.f32 %v2934, %v696
    %v2948 = vmul.f32 %v2934, %v701
    %v2949 = vmul.f32 %v2934, %v706
    %v2950 = vmul.f32 %v2934, %v711
    %v2951 = vld [vmem:[%s1 + $0x29] sm:$0x1]
    %v2952 = vlaneseq
    %v2953 = vshrl.u32 %v2952, 7
    %v2954 = vsub.s32 0, %v2953
    %v2955 = vrot.slane %v2951, %v2954
    %v2956 = vmul.f32 %v2955, %v716
    %v2957 = vmul.f32 %v2955, %v721
    %v2958 = vmul.f32 %v2955, %v726
    %v2959 = vmul.f32 %v2955, %v731
    %v2960 = vmul.f32 %v2955, %v736
    %v2961 = vmul.f32 %v2955, %v741
    %v2962 = vmul.f32 %v2955, %v746
    %v2963 = vmul.f32 %v2955, %v751
    %v2964 = vmul.f32 %v2955, %v756
    %v2965 = vmul.f32 %v2955, %v761
    %v2966 = vmul.f32 %v2955, %v766
    %v2967 = vmul.f32 %v2955, %v771
    %v2968 = vmul.f32 %v2955, %v776
    %v2969 = vmul.f32 %v2955, %v781
    %v2970 = vmul.f32 %v2955, %v786
    %v2971 = vmul.f32 %v2955, %v791
    %v2972 = vadd.f32 %v2935, %v2956
    %v2973 = vadd.f32 %v2936, %v2957
    %v2974 = vadd.f32 %v2937, %v2958
    %v2975 = vadd.f32 %v2938, %v2959
    %v2976 = vadd.f32 %v2939, %v2960
    %v2977 = vadd.f32 %v2940, %v2961
    %v2978 = vadd.f32 %v2941, %v2962
    %v2979 = vadd.f32 %v2942, %v2963
    %v2980 = vadd.f32 %v2943, %v2964
    %v2981 = vadd.f32 %v2944, %v2965
    %v2982 = vadd.f32 %v2945, %v2966
    %v2983 = vadd.f32 %v2946, %v2967
    %v2984 = vadd.f32 %v2947, %v2968
    %v2985 = vadd.f32 %v2948, %v2969
    %v2986 = vadd.f32 %v2949, %v2970
    %v2987 = vadd.f32 %v2950, %v2971
    %v2988 = vld [vmem:[%s1 + $0x2a] sm:$0x1]
    %v2989 = vlaneseq
    %v2990 = vshrl.u32 %v2989, 7
    %v2991 = vsub.s32 0, %v2990
    %v2992 = vrot.slane %v2988, %v2991
    %v2993 = vmul.f32 %v2992, %v796
    %v2994 = vmul.f32 %v2992, %v801
    %v2995 = vmul.f32 %v2992, %v806
    %v2996 = vmul.f32 %v2992, %v811
    %v2997 = vmul.f32 %v2992, %v816
    %v2998 = vmul.f32 %v2992, %v821
    %v2999 = vmul.f32 %v2992, %v826
    %v3000 = vmul.f32 %v2992, %v831
    %v3001 = vmul.f32 %v2992, %v836
    %v3002 = vmul.f32 %v2992, %v841
    %v3003 = vmul.f32 %v2992, %v846
    %v3004 = vmul.f32 %v2992, %v851
    %v3005 = vmul.f32 %v2992, %v856
    %v3006 = vmul.f32 %v2992, %v861
    %v3007 = vmul.f32 %v2992, %v866
    %v3008 = vmul.f32 %v2992, %v871
    %v3009 = vadd.f32 %v2972, %v2993
    %v3010 = vadd.f32 %v2973, %v2994
    %v3011 = vadd.f32 %v2974, %v2995
    %v3012 = vadd.f32 %v2975, %v2996
    %v3013 = vadd.f32 %v2976, %v2997
    %v3014 = vadd.f32 %v2977, %v2998
    %v3015 = vadd.f32 %v2978, %v2999
    %v3016 = vadd.f32 %v2979, %v3000
    %v3017 = vadd.f32 %v2980, %v3001
    %v3018 = vadd.f32 %v2981, %v3002
    %v3019 = vadd.f32 %v2982, %v3003
    %v3020 = vadd.f32 %v2983, %v3004
    %v3021 = vadd.f32 %v2984, %v3005
    %v3022 = vadd.f32 %v2985, %v3006
    %v3023 = vadd.f32 %v2986, %v3007
    %v3024 = vadd.f32 %v2987, %v3008
    %v3025 = vld [vmem:[%s1 + $0x2b] sm:$0x1]
    %v3026 = vlaneseq
    %v3027 = vshrl.u32 %v3026, 7
    %v3028 = vsub.s32 0, %v3027
    %v3029 = vrot.slane %v3025, %v3028
    %v3030 = vmul.f32 %v3029, %v876
    %v3031 = vmul.f32 %v3029, %v881
    %v3032 = vmul.f32 %v3029, %v886
    %v3033 = vmul.f32 %v3029, %v891
    %v3034 = vmul.f32 %v3029, %v896
    %v3035 = vmul.f32 %v3029, %v901
    %v3036 = vmul.f32 %v3029, %v906
    %v3037 = vmul.f32 %v3029, %v911
    %v3038 = vmul.f32 %v3029, %v916
    %v3039 = vmul.f32 %v3029, %v921
    %v3040 = vmul.f32 %v3029, %v926
    %v3041 = vmul.f32 %v3029, %v931
    %v3042 = vmul.f32 %v3029, %v936
    %v3043 = vmul.f32 %v3029, %v941
    %v3044 = vmul.f32 %v3029, %v946
    %v3045 = vmul.f32 %v3029, %v951
    %v3046 = vadd.f32 %v3009, %v3030
    %v3047 = vadd.f32 %v3010, %v3031
    %v3048 = vadd.f32 %v3011, %v3032
    %v3049 = vadd.f32 %v3012, %v3033
    %v3050 = vadd.f32 %v3013, %v3034
    %v3051 = vadd.f32 %v3014, %v3035
    %v3052 = vadd.f32 %v3015, %v3036
    %v3053 = vadd.f32 %v3016, %v3037
    %v3054 = vadd.f32 %v3017, %v3038
    %v3055 = vadd.f32 %v3018, %v3039
    %v3056 = vadd.f32 %v3019, %v3040
    %v3057 = vadd.f32 %v3020, %v3041
    %v3058 = vadd.f32 %v3021, %v3042
    %v3059 = vadd.f32 %v3022, %v3043
    %v3060 = vadd.f32 %v3023, %v3044
    %v3061 = vadd.f32 %v3024, %v3045
    %v3062 = vld [vmem:[%s1 + $0x2c] sm:$0x1]
    %v3063 = vlaneseq
    %v3064 = vshrl.u32 %v3063, 7
    %v3065 = vsub.s32 0, %v3064
    %v3066 = vrot.slane %v3062, %v3065
    %v3067 = vmul.f32 %v3066, %v956
    %v3068 = vmul.f32 %v3066, %v961
    %v3069 = vmul.f32 %v3066, %v966
    %v3070 = vmul.f32 %v3066, %v971
    %v3071 = vmul.f32 %v3066, %v976
    %v3072 = vmul.f32 %v3066, %v981
    %v3073 = vmul.f32 %v3066, %v986
    %v3074 = vmul.f32 %v3066, %v991
    %v3075 = vmul.f32 %v3066, %v996
    %v3076 = vmul.f32 %v3066, %v1001
    %v3077 = vmul.f32 %v3066, %v1006
    %v3078 = vmul.f32 %v3066, %v1011
    %v3079 = vmul.f32 %v3066, %v1016
    %v3080 = vmul.f32 %v3066, %v1021
    %v3081 = vmul.f32 %v3066, %v1026
    %v3082 = vmul.f32 %v3066, %v1031
    %v3083 = vadd.f32 %v3046, %v3067
    %v3084 = vadd.f32 %v3047, %v3068
    %v3085 = vadd.f32 %v3048, %v3069
    %v3086 = vadd.f32 %v3049, %v3070
    %v3087 = vadd.f32 %v3050, %v3071
    %v3088 = vadd.f32 %v3051, %v3072
    %v3089 = vadd.f32 %v3052, %v3073
    %v3090 = vadd.f32 %v3053, %v3074
    %v3091 = vadd.f32 %v3054, %v3075
    %v3092 = vadd.f32 %v3055, %v3076
    %v3093 = vadd.f32 %v3056, %v3077
    %v3094 = vadd.f32 %v3057, %v3078
    %v3095 = vadd.f32 %v3058, %v3079
    %v3096 = vadd.f32 %v3059, %v3080
    %v3097 = vadd.f32 %v3060, %v3081
    %v3098 = vadd.f32 %v3061, %v3082
    %v3099 = vld [vmem:[%s1 + $0x2d] sm:$0x1]
    %v3100 = vlaneseq
    %v3101 = vshrl.u32 %v3100, 7
    %v3102 = vsub.s32 0, %v3101
    %v3103 = vrot.slane %v3099, %v3102
    %v3104 = vmul.f32 %v3103, %v1036
    %v3105 = vmul.f32 %v3103, %v1041
    %v3106 = vmul.f32 %v3103, %v1046
    %v3107 = vmul.f32 %v3103, %v1051
    %v3108 = vmul.f32 %v3103, %v1056
    %v3109 = vmul.f32 %v3103, %v1061
    %v3110 = vmul.f32 %v3103, %v1066
    %v3111 = vmul.f32 %v3103, %v1071
    %v3112 = vmul.f32 %v3103, %v1076
    %v3113 = vmul.f32 %v3103, %v1081
    %v3114 = vmul.f32 %v3103, %v1086
    %v3115 = vmul.f32 %v3103, %v1091
    %v3116 = vmul.f32 %v3103, %v1096
    %v3117 = vmul.f32 %v3103, %v1101
    %v3118 = vmul.f32 %v3103, %v1106
    %v3119 = vmul.f32 %v3103, %v1111
    %v3120 = vadd.f32 %v3083, %v3104
    %v3121 = vadd.f32 %v3084, %v3105
    %v3122 = vadd.f32 %v3085, %v3106
    %v3123 = vadd.f32 %v3086, %v3107
    %v3124 = vadd.f32 %v3087, %v3108
    %v3125 = vadd.f32 %v3088, %v3109
    %v3126 = vadd.f32 %v3089, %v3110
    %v3127 = vadd.f32 %v3090, %v3111
    %v3128 = vadd.f32 %v3091, %v3112
    %v3129 = vadd.f32 %v3092, %v3113
    %v3130 = vadd.f32 %v3093, %v3114
    %v3131 = vadd.f32 %v3094, %v3115
    %v3132 = vadd.f32 %v3095, %v3116
    %v3133 = vadd.f32 %v3096, %v3117
    %v3134 = vadd.f32 %v3097, %v3118
    %v3135 = vadd.f32 %v3098, %v3119
    %v3136 = vld [vmem:[%s1 + $0x2e] sm:$0x1]
    %v3137 = vlaneseq
    %v3138 = vshrl.u32 %v3137, 7
    %v3139 = vsub.s32 0, %v3138
    %v3140 = vrot.slane %v3136, %v3139
    %v3141 = vmul.f32 %v3140, %v1116
    %v3142 = vmul.f32 %v3140, %v1121
    %v3143 = vmul.f32 %v3140, %v1126
    %v3144 = vmul.f32 %v3140, %v1131
    %v3145 = vmul.f32 %v3140, %v1136
    %v3146 = vmul.f32 %v3140, %v1141
    %v3147 = vmul.f32 %v3140, %v1146
    %v3148 = vmul.f32 %v3140, %v1151
    %v3149 = vmul.f32 %v3140, %v1156
    %v3150 = vmul.f32 %v3140, %v1161
    %v3151 = vmul.f32 %v3140, %v1166
    %v3152 = vmul.f32 %v3140, %v1171
    %v3153 = vmul.f32 %v3140, %v1176
    %v3154 = vmul.f32 %v3140, %v1181
    %v3155 = vmul.f32 %v3140, %v1186
    %v3156 = vmul.f32 %v3140, %v1191
    %v3157 = vadd.f32 %v3120, %v3141
    %v3158 = vadd.f32 %v3121, %v3142
    %v3159 = vadd.f32 %v3122, %v3143
    %v3160 = vadd.f32 %v3123, %v3144
    %v3161 = vadd.f32 %v3124, %v3145
    %v3162 = vadd.f32 %v3125, %v3146
    %v3163 = vadd.f32 %v3126, %v3147
    %v3164 = vadd.f32 %v3127, %v3148
    %v3165 = vadd.f32 %v3128, %v3149
    %v3166 = vadd.f32 %v3129, %v3150
    %v3167 = vadd.f32 %v3130, %v3151
    %v3168 = vadd.f32 %v3131, %v3152
    %v3169 = vadd.f32 %v3132, %v3153
    %v3170 = vadd.f32 %v3133, %v3154
    %v3171 = vadd.f32 %v3134, %v3155
    %v3172 = vadd.f32 %v3135, %v3156
    %v3173 = vld [vmem:[%s1 + $0x2f] sm:$0x1]
    %v3174 = vlaneseq
    %v3175 = vshrl.u32 %v3174, 7
    %v3176 = vsub.s32 0, %v3175
    %v3177 = vrot.slane %v3173, %v3176
    %v3178 = vmul.f32 %v3177, %v1196
    %v3179 = vmul.f32 %v3177, %v1201
    %v3180 = vmul.f32 %v3177, %v1206
    %v3181 = vmul.f32 %v3177, %v1211
    %v3182 = vmul.f32 %v3177, %v1216
    %v3183 = vmul.f32 %v3177, %v1221
    %v3184 = vmul.f32 %v3177, %v1226
    %v3185 = vmul.f32 %v3177, %v1231
    %v3186 = vmul.f32 %v3177, %v1236
    %v3187 = vmul.f32 %v3177, %v1241
    %v3188 = vmul.f32 %v3177, %v1246
    %v3189 = vmul.f32 %v3177, %v1251
    %v3190 = vmul.f32 %v3177, %v1256
    %v3191 = vmul.f32 %v3177, %v1261
    %v3192 = vmul.f32 %v3177, %v1266
    %v3193 = vmul.f32 %v3177, %v1271
    %v3194 = vadd.f32 %v3157, %v3178
    %v3195 = vadd.f32 %v3158, %v3179
    %v3196 = vadd.f32 %v3159, %v3180
    %v3197 = vadd.f32 %v3160, %v3181
    %v3198 = vadd.f32 %v3161, %v3182
    %v3199 = vadd.f32 %v3162, %v3183
    %v3200 = vadd.f32 %v3163, %v3184
    %v3201 = vadd.f32 %v3164, %v3185
    %v3202 = vadd.f32 %v3165, %v3186
    %v3203 = vadd.f32 %v3166, %v3187
    %v3204 = vadd.f32 %v3167, %v3188
    %v3205 = vadd.f32 %v3168, %v3189
    %v3206 = vadd.f32 %v3169, %v3190
    %v3207 = vadd.f32 %v3170, %v3191
    %v3208 = vadd.f32 %v3171, %v3192
    %v3209 = vadd.f32 %v3172, %v3193
    %v3210 = vadd.f32 %v3194, %v1573
    %v3211 = vadd.f32 %v3195, %v1578
    %v3212 = vadd.f32 %v3196, %v1583
    %v3213 = vadd.f32 %v3197, %v1588
    %v3214 = vadd.f32 %v3198, %v1593
    %v3215 = vadd.f32 %v3199, %v1598
    %v3216 = vadd.f32 %v3200, %v1603
    %v3217 = vadd.f32 %v3201, %v1608
    %v3218 = vadd.f32 %v3202, %v1613
    %v3219 = vadd.f32 %v3203, %v1618
    %v3220 = vadd.f32 %v3204, %v1623
    %v3221 = vadd.f32 %v3205, %v1628
    %v3222 = vadd.f32 %v3206, %v1633
    %v3223 = vadd.f32 %v3207, %v1638
    %v3224 = vadd.f32 %v3208, %v1643
    %v3225 = vadd.f32 %v3209, %v1648
    %v3226 = vmax.f32 %v3210, 0.0
    %v3227 = vmax.f32 %v3211, 0.0
    %v3228 = vmax.f32 %v3212, 0.0
    %v3229 = vmax.f32 %v3213, 0.0
    %v3230 = vmax.f32 %v3214, 0.0
    %v3231 = vmax.f32 %v3215, 0.0
    %v3232 = vmax.f32 %v3216, 0.0
    %v3233 = vmax.f32 %v3217, 0.0
    %v3234 = vmax.f32 %v3218, 0.0
    %v3235 = vmax.f32 %v3219, 0.0
    %v3236 = vmax.f32 %v3220, 0.0
    %v3237 = vmax.f32 %v3221, 0.0
    %v3238 = vmax.f32 %v3222, 0.0
    %v3239 = vmax.f32 %v3223, 0.0
    %v3240 = vmax.f32 %v3224, 0.0
    %v3241 = vmax.f32 %v3225, 0.0
    %v3242 = vld [vmem:[%s1 + $0x30] sm:$0x1]
    %v3243 = vlaneseq
    %v3244 = vshrl.u32 %v3243, 7
    %v3245 = vsub.s32 0, %v3244
    %v3246 = vrot.slane %v3242, %v3245
    %v3247 = vmul.f32 %v3246, %v636
    %v3248 = vmul.f32 %v3246, %v641
    %v3249 = vmul.f32 %v3246, %v646
    %v3250 = vmul.f32 %v3246, %v651
    %v3251 = vmul.f32 %v3246, %v656
    %v3252 = vmul.f32 %v3246, %v661
    %v3253 = vmul.f32 %v3246, %v666
    %v3254 = vmul.f32 %v3246, %v671
    %v3255 = vmul.f32 %v3246, %v676
    %v3256 = vmul.f32 %v3246, %v681
    %v3257 = vmul.f32 %v3246, %v686
    %v3258 = vmul.f32 %v3246, %v691
    %v3259 = vmul.f32 %v3246, %v696
    %v3260 = vmul.f32 %v3246, %v701
    %v3261 = vmul.f32 %v3246, %v706
    %v3262 = vmul.f32 %v3246, %v711
    %v3263 = vld [vmem:[%s1 + $0x31] sm:$0x1]
    %v3264 = vlaneseq
    %v3265 = vshrl.u32 %v3264, 7
    %v3266 = vsub.s32 0, %v3265
    %v3267 = vrot.slane %v3263, %v3266
    %v3268 = vmul.f32 %v3267, %v716
    %v3269 = vmul.f32 %v3267, %v721
    %v3270 = vmul.f32 %v3267, %v726
    %v3271 = vmul.f32 %v3267, %v731
    %v3272 = vmul.f32 %v3267, %v736
    %v3273 = vmul.f32 %v3267, %v741
    %v3274 = vmul.f32 %v3267, %v746
    %v3275 = vmul.f32 %v3267, %v751
    %v3276 = vmul.f32 %v3267, %v756
    %v3277 = vmul.f32 %v3267, %v761
    %v3278 = vmul.f32 %v3267, %v766
    %v3279 = vmul.f32 %v3267, %v771
    %v3280 = vmul.f32 %v3267, %v776
    %v3281 = vmul.f32 %v3267, %v781
    %v3282 = vmul.f32 %v3267, %v786
    %v3283 = vmul.f32 %v3267, %v791
    %v3284 = vadd.f32 %v3247, %v3268
    %v3285 = vadd.f32 %v3248, %v3269
    %v3286 = vadd.f32 %v3249, %v3270
    %v3287 = vadd.f32 %v3250, %v3271
    %v3288 = vadd.f32 %v3251, %v3272
    %v3289 = vadd.f32 %v3252, %v3273
    %v3290 = vadd.f32 %v3253, %v3274
    %v3291 = vadd.f32 %v3254, %v3275
    %v3292 = vadd.f32 %v3255, %v3276
    %v3293 = vadd.f32 %v3256, %v3277
    %v3294 = vadd.f32 %v3257, %v3278
    %v3295 = vadd.f32 %v3258, %v3279
    %v3296 = vadd.f32 %v3259, %v3280
    %v3297 = vadd.f32 %v3260, %v3281
    %v3298 = vadd.f32 %v3261, %v3282
    %v3299 = vadd.f32 %v3262, %v3283
    %v3300 = vld [vmem:[%s1 + $0x32] sm:$0x1]
    %v3301 = vlaneseq
    %v3302 = vshrl.u32 %v3301, 7
    %v3303 = vsub.s32 0, %v3302
    %v3304 = vrot.slane %v3300, %v3303
    %v3305 = vmul.f32 %v3304, %v796
    %v3306 = vmul.f32 %v3304, %v801
    %v3307 = vmul.f32 %v3304, %v806
    %v3308 = vmul.f32 %v3304, %v811
    %v3309 = vmul.f32 %v3304, %v816
    %v3310 = vmul.f32 %v3304, %v821
    %v3311 = vmul.f32 %v3304, %v826
    %v3312 = vmul.f32 %v3304, %v831
    %v3313 = vmul.f32 %v3304, %v836
    %v3314 = vmul.f32 %v3304, %v841
    %v3315 = vmul.f32 %v3304, %v846
    %v3316 = vmul.f32 %v3304, %v851
    %v3317 = vmul.f32 %v3304, %v856
    %v3318 = vmul.f32 %v3304, %v861
    %v3319 = vmul.f32 %v3304, %v866
    %v3320 = vmul.f32 %v3304, %v871
    %v3321 = vadd.f32 %v3284, %v3305
    %v3322 = vadd.f32 %v3285, %v3306
    %v3323 = vadd.f32 %v3286, %v3307
    %v3324 = vadd.f32 %v3287, %v3308
    %v3325 = vadd.f32 %v3288, %v3309
    %v3326 = vadd.f32 %v3289, %v3310
    %v3327 = vadd.f32 %v3290, %v3311
    %v3328 = vadd.f32 %v3291, %v3312
    %v3329 = vadd.f32 %v3292, %v3313
    %v3330 = vadd.f32 %v3293, %v3314
    %v3331 = vadd.f32 %v3294, %v3315
    %v3332 = vadd.f32 %v3295, %v3316
    %v3333 = vadd.f32 %v3296, %v3317
    %v3334 = vadd.f32 %v3297, %v3318
    %v3335 = vadd.f32 %v3298, %v3319
    %v3336 = vadd.f32 %v3299, %v3320
    %v3337 = vld [vmem:[%s1 + $0x33] sm:$0x1]
    %v3338 = vlaneseq
    %v3339 = vshrl.u32 %v3338, 7
    %v3340 = vsub.s32 0, %v3339
    %v3341 = vrot.slane %v3337, %v3340
    %v3342 = vmul.f32 %v3341, %v876
    %v3343 = vmul.f32 %v3341, %v881
    %v3344 = vmul.f32 %v3341, %v886
    %v3345 = vmul.f32 %v3341, %v891
    %v3346 = vmul.f32 %v3341, %v896
    %v3347 = vmul.f32 %v3341, %v901
    %v3348 = vmul.f32 %v3341, %v906
    %v3349 = vmul.f32 %v3341, %v911
    %v3350 = vmul.f32 %v3341, %v916
    %v3351 = vmul.f32 %v3341, %v921
    %v3352 = vmul.f32 %v3341, %v926
    %v3353 = vmul.f32 %v3341, %v931
    %v3354 = vmul.f32 %v3341, %v936
    %v3355 = vmul.f32 %v3341, %v941
    %v3356 = vmul.f32 %v3341, %v946
    %v3357 = vmul.f32 %v3341, %v951
    %v3358 = vadd.f32 %v3321, %v3342
    %v3359 = vadd.f32 %v3322, %v3343
    %v3360 = vadd.f32 %v3323, %v3344
    %v3361 = vadd.f32 %v3324, %v3345
    %v3362 = vadd.f32 %v3325, %v3346
    %v3363 = vadd.f32 %v3326, %v3347
    %v3364 = vadd.f32 %v3327, %v3348
    %v3365 = vadd.f32 %v3328, %v3349
    %v3366 = vadd.f32 %v3329, %v3350
    %v3367 = vadd.f32 %v3330, %v3351
    %v3368 = vadd.f32 %v3331, %v3352
    %v3369 = vadd.f32 %v3332, %v3353
    %v3370 = vadd.f32 %v3333, %v3354
    %v3371 = vadd.f32 %v3334, %v3355
    %v3372 = vadd.f32 %v3335, %v3356
    %v3373 = vadd.f32 %v3336, %v3357
    %v3374 = vld [vmem:[%s1 + $0x34] sm:$0x1]
    %v3375 = vlaneseq
    %v3376 = vshrl.u32 %v3375, 7
    %v3377 = vsub.s32 0, %v3376
    %v3378 = vrot.slane %v3374, %v3377
    %v3379 = vmul.f32 %v3378, %v956
    %v3380 = vmul.f32 %v3378, %v961
    %v3381 = vmul.f32 %v3378, %v966
    %v3382 = vmul.f32 %v3378, %v971
    %v3383 = vmul.f32 %v3378, %v976
    %v3384 = vmul.f32 %v3378, %v981
    %v3385 = vmul.f32 %v3378, %v986
    %v3386 = vmul.f32 %v3378, %v991
    %v3387 = vmul.f32 %v3378, %v996
    %v3388 = vmul.f32 %v3378, %v1001
    %v3389 = vmul.f32 %v3378, %v1006
    %v3390 = vmul.f32 %v3378, %v1011
    %v3391 = vmul.f32 %v3378, %v1016
    %v3392 = vmul.f32 %v3378, %v1021
    %v3393 = vmul.f32 %v3378, %v1026
    %v3394 = vmul.f32 %v3378, %v1031
    %v3395 = vadd.f32 %v3358, %v3379
    %v3396 = vadd.f32 %v3359, %v3380
    %v3397 = vadd.f32 %v3360, %v3381
    %v3398 = vadd.f32 %v3361, %v3382
    %v3399 = vadd.f32 %v3362, %v3383
    %v3400 = vadd.f32 %v3363, %v3384
    %v3401 = vadd.f32 %v3364, %v3385
    %v3402 = vadd.f32 %v3365, %v3386
    %v3403 = vadd.f32 %v3366, %v3387
    %v3404 = vadd.f32 %v3367, %v3388
    %v3405 = vadd.f32 %v3368, %v3389
    %v3406 = vadd.f32 %v3369, %v3390
    %v3407 = vadd.f32 %v3370, %v3391
    %v3408 = vadd.f32 %v3371, %v3392
    %v3409 = vadd.f32 %v3372, %v3393
    %v3410 = vadd.f32 %v3373, %v3394
    %v3411 = vld [vmem:[%s1 + $0x35] sm:$0x1]
    %v3412 = vlaneseq
    %v3413 = vshrl.u32 %v3412, 7
    %v3414 = vsub.s32 0, %v3413
    %v3415 = vrot.slane %v3411, %v3414
    %v3416 = vmul.f32 %v3415, %v1036
    %v3417 = vmul.f32 %v3415, %v1041
    %v3418 = vmul.f32 %v3415, %v1046
    %v3419 = vmul.f32 %v3415, %v1051
    %v3420 = vmul.f32 %v3415, %v1056
    %v3421 = vmul.f32 %v3415, %v1061
    %v3422 = vmul.f32 %v3415, %v1066
    %v3423 = vmul.f32 %v3415, %v1071
    %v3424 = vmul.f32 %v3415, %v1076
    %v3425 = vmul.f32 %v3415, %v1081
    %v3426 = vmul.f32 %v3415, %v1086
    %v3427 = vmul.f32 %v3415, %v1091
    %v3428 = vmul.f32 %v3415, %v1096
    %v3429 = vmul.f32 %v3415, %v1101
    %v3430 = vmul.f32 %v3415, %v1106
    %v3431 = vmul.f32 %v3415, %v1111
    %v3432 = vadd.f32 %v3395, %v3416
    %v3433 = vadd.f32 %v3396, %v3417
    %v3434 = vadd.f32 %v3397, %v3418
    %v3435 = vadd.f32 %v3398, %v3419
    %v3436 = vadd.f32 %v3399, %v3420
    %v3437 = vadd.f32 %v3400, %v3421
    %v3438 = vadd.f32 %v3401, %v3422
    %v3439 = vadd.f32 %v3402, %v3423
    %v3440 = vadd.f32 %v3403, %v3424
    %v3441 = vadd.f32 %v3404, %v3425
    %v3442 = vadd.f32 %v3405, %v3426
    %v3443 = vadd.f32 %v3406, %v3427
    %v3444 = vadd.f32 %v3407, %v3428
    %v3445 = vadd.f32 %v3408, %v3429
    %v3446 = vadd.f32 %v3409, %v3430
    %v3447 = vadd.f32 %v3410, %v3431
    %v3448 = vld [vmem:[%s1 + $0x36] sm:$0x1]
    %v3449 = vlaneseq
    %v3450 = vshrl.u32 %v3449, 7
    %v3451 = vsub.s32 0, %v3450
    %v3452 = vrot.slane %v3448, %v3451
    %v3453 = vmul.f32 %v3452, %v1116
    %v3454 = vmul.f32 %v3452, %v1121
    %v3455 = vmul.f32 %v3452, %v1126
    %v3456 = vmul.f32 %v3452, %v1131
    %v3457 = vmul.f32 %v3452, %v1136
    %v3458 = vmul.f32 %v3452, %v1141
    %v3459 = vmul.f32 %v3452, %v1146
    %v3460 = vmul.f32 %v3452, %v1151
    %v3461 = vmul.f32 %v3452, %v1156
    %v3462 = vmul.f32 %v3452, %v1161
    %v3463 = vmul.f32 %v3452, %v1166
    %v3464 = vmul.f32 %v3452, %v1171
    %v3465 = vmul.f32 %v3452, %v1176
    %v3466 = vmul.f32 %v3452, %v1181
    %v3467 = vmul.f32 %v3452, %v1186
    %v3468 = vmul.f32 %v3452, %v1191
    %v3469 = vadd.f32 %v3432, %v3453
    %v3470 = vadd.f32 %v3433, %v3454
    %v3471 = vadd.f32 %v3434, %v3455
    %v3472 = vadd.f32 %v3435, %v3456
    %v3473 = vadd.f32 %v3436, %v3457
    %v3474 = vadd.f32 %v3437, %v3458
    %v3475 = vadd.f32 %v3438, %v3459
    %v3476 = vadd.f32 %v3439, %v3460
    %v3477 = vadd.f32 %v3440, %v3461
    %v3478 = vadd.f32 %v3441, %v3462
    %v3479 = vadd.f32 %v3442, %v3463
    %v3480 = vadd.f32 %v3443, %v3464
    %v3481 = vadd.f32 %v3444, %v3465
    %v3482 = vadd.f32 %v3445, %v3466
    %v3483 = vadd.f32 %v3446, %v3467
    %v3484 = vadd.f32 %v3447, %v3468
    %v3485 = vld [vmem:[%s1 + $0x37] sm:$0x1]
    %v3486 = vlaneseq
    %v3487 = vshrl.u32 %v3486, 7
    %v3488 = vsub.s32 0, %v3487
    %v3489 = vrot.slane %v3485, %v3488
    %v3490 = vmul.f32 %v3489, %v1196
    %v3491 = vmul.f32 %v3489, %v1201
    %v3492 = vmul.f32 %v3489, %v1206
    %v3493 = vmul.f32 %v3489, %v1211
    %v3494 = vmul.f32 %v3489, %v1216
    %v3495 = vmul.f32 %v3489, %v1221
    %v3496 = vmul.f32 %v3489, %v1226
    %v3497 = vmul.f32 %v3489, %v1231
    %v3498 = vmul.f32 %v3489, %v1236
    %v3499 = vmul.f32 %v3489, %v1241
    %v3500 = vmul.f32 %v3489, %v1246
    %v3501 = vmul.f32 %v3489, %v1251
    %v3502 = vmul.f32 %v3489, %v1256
    %v3503 = vmul.f32 %v3489, %v1261
    %v3504 = vmul.f32 %v3489, %v1266
    %v3505 = vmul.f32 %v3489, %v1271
    %v3506 = vadd.f32 %v3469, %v3490
    %v3507 = vadd.f32 %v3470, %v3491
    %v3508 = vadd.f32 %v3471, %v3492
    %v3509 = vadd.f32 %v3472, %v3493
    %v3510 = vadd.f32 %v3473, %v3494
    %v3511 = vadd.f32 %v3474, %v3495
    %v3512 = vadd.f32 %v3475, %v3496
    %v3513 = vadd.f32 %v3476, %v3497
    %v3514 = vadd.f32 %v3477, %v3498
    %v3515 = vadd.f32 %v3478, %v3499
    %v3516 = vadd.f32 %v3479, %v3500
    %v3517 = vadd.f32 %v3480, %v3501
    %v3518 = vadd.f32 %v3481, %v3502
    %v3519 = vadd.f32 %v3482, %v3503
    %v3520 = vadd.f32 %v3483, %v3504
    %v3521 = vadd.f32 %v3484, %v3505
    %v3522 = vadd.f32 %v3506, %v1573
    %v3523 = vadd.f32 %v3507, %v1578
    %v3524 = vadd.f32 %v3508, %v1583
    %v3525 = vadd.f32 %v3509, %v1588
    %v3526 = vadd.f32 %v3510, %v1593
    %v3527 = vadd.f32 %v3511, %v1598
    %v3528 = vadd.f32 %v3512, %v1603
    %v3529 = vadd.f32 %v3513, %v1608
    %v3530 = vadd.f32 %v3514, %v1613
    %v3531 = vadd.f32 %v3515, %v1618
    %v3532 = vadd.f32 %v3516, %v1623
    %v3533 = vadd.f32 %v3517, %v1628
    %v3534 = vadd.f32 %v3518, %v1633
    %v3535 = vadd.f32 %v3519, %v1638
    %v3536 = vadd.f32 %v3520, %v1643
    %v3537 = vadd.f32 %v3521, %v1648
    %v3538 = vmax.f32 %v3522, 0.0
    %v3539 = vmax.f32 %v3523, 0.0
    %v3540 = vmax.f32 %v3524, 0.0
    %v3541 = vmax.f32 %v3525, 0.0
    %v3542 = vmax.f32 %v3526, 0.0
    %v3543 = vmax.f32 %v3527, 0.0
    %v3544 = vmax.f32 %v3528, 0.0
    %v3545 = vmax.f32 %v3529, 0.0
    %v3546 = vmax.f32 %v3530, 0.0
    %v3547 = vmax.f32 %v3531, 0.0
    %v3548 = vmax.f32 %v3532, 0.0
    %v3549 = vmax.f32 %v3533, 0.0
    %v3550 = vmax.f32 %v3534, 0.0
    %v3551 = vmax.f32 %v3535, 0.0
    %v3552 = vmax.f32 %v3536, 0.0
    %v3553 = vmax.f32 %v3537, 0.0
    %v3554 = vld [vmem:[%s1 + $0x38] sm:$0x1]
    %v3555 = vlaneseq
    %v3556 = vshrl.u32 %v3555, 7
    %v3557 = vsub.s32 0, %v3556
    %v3558 = vrot.slane %v3554, %v3557
    %v3559 = vmul.f32 %v3558, %v636
    %v3560 = vmul.f32 %v3558, %v641
    %v3561 = vmul.f32 %v3558, %v646
    %v3562 = vmul.f32 %v3558, %v651
    %v3563 = vmul.f32 %v3558, %v656
    %v3564 = vmul.f32 %v3558, %v661
    %v3565 = vmul.f32 %v3558, %v666
    %v3566 = vmul.f32 %v3558, %v671
    %v3567 = vmul.f32 %v3558, %v676
    %v3568 = vmul.f32 %v3558, %v681
    %v3569 = vmul.f32 %v3558, %v686
    %v3570 = vmul.f32 %v3558, %v691
    %v3571 = vmul.f32 %v3558, %v696
    %v3572 = vmul.f32 %v3558, %v701
    %v3573 = vmul.f32 %v3558, %v706
    %v3574 = vmul.f32 %v3558, %v711
    %v3575 = vld [vmem:[%s1 + $0x39] sm:$0x1]
    %v3576 = vlaneseq
    %v3577 = vshrl.u32 %v3576, 7
    %v3578 = vsub.s32 0, %v3577
    %v3579 = vrot.slane %v3575, %v3578
    %v3580 = vmul.f32 %v3579, %v716
    %v3581 = vmul.f32 %v3579, %v721
    %v3582 = vmul.f32 %v3579, %v726
    %v3583 = vmul.f32 %v3579, %v731
    %v3584 = vmul.f32 %v3579, %v736
    %v3585 = vmul.f32 %v3579, %v741
    %v3586 = vmul.f32 %v3579, %v746
    %v3587 = vmul.f32 %v3579, %v751
    %v3588 = vmul.f32 %v3579, %v756
    %v3589 = vmul.f32 %v3579, %v761
    %v3590 = vmul.f32 %v3579, %v766
    %v3591 = vmul.f32 %v3579, %v771
    %v3592 = vmul.f32 %v3579, %v776
    %v3593 = vmul.f32 %v3579, %v781
    %v3594 = vmul.f32 %v3579, %v786
    %v3595 = vmul.f32 %v3579, %v791
    %v3596 = vadd.f32 %v3559, %v3580
    %v3597 = vadd.f32 %v3560, %v3581
    %v3598 = vadd.f32 %v3561, %v3582
    %v3599 = vadd.f32 %v3562, %v3583
    %v3600 = vadd.f32 %v3563, %v3584
    %v3601 = vadd.f32 %v3564, %v3585
    %v3602 = vadd.f32 %v3565, %v3586
    %v3603 = vadd.f32 %v3566, %v3587
    %v3604 = vadd.f32 %v3567, %v3588
    %v3605 = vadd.f32 %v3568, %v3589
    %v3606 = vadd.f32 %v3569, %v3590
    %v3607 = vadd.f32 %v3570, %v3591
    %v3608 = vadd.f32 %v3571, %v3592
    %v3609 = vadd.f32 %v3572, %v3593
    %v3610 = vadd.f32 %v3573, %v3594
    %v3611 = vadd.f32 %v3574, %v3595
    %v3612 = vld [vmem:[%s1 + $0x3a] sm:$0x1]
    %v3613 = vlaneseq
    %v3614 = vshrl.u32 %v3613, 7
    %v3615 = vsub.s32 0, %v3614
    %v3616 = vrot.slane %v3612, %v3615
    %v3617 = vmul.f32 %v3616, %v796
    %v3618 = vmul.f32 %v3616, %v801
    %v3619 = vmul.f32 %v3616, %v806
    %v3620 = vmul.f32 %v3616, %v811
    %v3621 = vmul.f32 %v3616, %v816
    %v3622 = vmul.f32 %v3616, %v821
    %v3623 = vmul.f32 %v3616, %v826
    %v3624 = vmul.f32 %v3616, %v831
    %v3625 = vmul.f32 %v3616, %v836
    %v3626 = vmul.f32 %v3616, %v841
    %v3627 = vmul.f32 %v3616, %v846
    %v3628 = vmul.f32 %v3616, %v851
    %v3629 = vmul.f32 %v3616, %v856
    %v3630 = vmul.f32 %v3616, %v861
    %v3631 = vmul.f32 %v3616, %v866
    %v3632 = vmul.f32 %v3616, %v871
    %v3633 = vadd.f32 %v3596, %v3617
    %v3634 = vadd.f32 %v3597, %v3618
    %v3635 = vadd.f32 %v3598, %v3619
    %v3636 = vadd.f32 %v3599, %v3620
    %v3637 = vadd.f32 %v3600, %v3621
    %v3638 = vadd.f32 %v3601, %v3622
    %v3639 = vadd.f32 %v3602, %v3623
    %v3640 = vadd.f32 %v3603, %v3624
    %v3641 = vadd.f32 %v3604, %v3625
    %v3642 = vadd.f32 %v3605, %v3626
    %v3643 = vadd.f32 %v3606, %v3627
    %v3644 = vadd.f32 %v3607, %v3628
    %v3645 = vadd.f32 %v3608, %v3629
    %v3646 = vadd.f32 %v3609, %v3630
    %v3647 = vadd.f32 %v3610, %v3631
    %v3648 = vadd.f32 %v3611, %v3632
    %v3649 = vld [vmem:[%s1 + $0x3b] sm:$0x1]
    %v3650 = vlaneseq
    %v3651 = vshrl.u32 %v3650, 7
    %v3652 = vsub.s32 0, %v3651
    %v3653 = vrot.slane %v3649, %v3652
    %v3654 = vmul.f32 %v3653, %v876
    %v3655 = vmul.f32 %v3653, %v881
    %v3656 = vmul.f32 %v3653, %v886
    %v3657 = vmul.f32 %v3653, %v891
    %v3658 = vmul.f32 %v3653, %v896
    %v3659 = vmul.f32 %v3653, %v901
    %v3660 = vmul.f32 %v3653, %v906
    %v3661 = vmul.f32 %v3653, %v911
    %v3662 = vmul.f32 %v3653, %v916
    %v3663 = vmul.f32 %v3653, %v921
    %v3664 = vmul.f32 %v3653, %v926
    %v3665 = vmul.f32 %v3653, %v931
    %v3666 = vmul.f32 %v3653, %v936
    %v3667 = vmul.f32 %v3653, %v941
    %v3668 = vmul.f32 %v3653, %v946
    %v3669 = vmul.f32 %v3653, %v951
    %v3670 = vadd.f32 %v3633, %v3654
    %v3671 = vadd.f32 %v3634, %v3655
    %v3672 = vadd.f32 %v3635, %v3656
    %v3673 = vadd.f32 %v3636, %v3657
    %v3674 = vadd.f32 %v3637, %v3658
    %v3675 = vadd.f32 %v3638, %v3659
    %v3676 = vadd.f32 %v3639, %v3660
    %v3677 = vadd.f32 %v3640, %v3661
    %v3678 = vadd.f32 %v3641, %v3662
    %v3679 = vadd.f32 %v3642, %v3663
    %v3680 = vadd.f32 %v3643, %v3664
    %v3681 = vadd.f32 %v3644, %v3665
    %v3682 = vadd.f32 %v3645, %v3666
    %v3683 = vadd.f32 %v3646, %v3667
    %v3684 = vadd.f32 %v3647, %v3668
    %v3685 = vadd.f32 %v3648, %v3669
    %v3686 = vld [vmem:[%s1 + $0x3c] sm:$0x1]
    %v3687 = vlaneseq
    %v3688 = vshrl.u32 %v3687, 7
    %v3689 = vsub.s32 0, %v3688
    %v3690 = vrot.slane %v3686, %v3689
    %v3691 = vmul.f32 %v3690, %v956
    %v3692 = vmul.f32 %v3690, %v961
    %v3693 = vmul.f32 %v3690, %v966
    %v3694 = vmul.f32 %v3690, %v971
    %v3695 = vmul.f32 %v3690, %v976
    %v3696 = vmul.f32 %v3690, %v981
    %v3697 = vmul.f32 %v3690, %v986
    %v3698 = vmul.f32 %v3690, %v991
    %v3699 = vmul.f32 %v3690, %v996
    %v3700 = vmul.f32 %v3690, %v1001
    %v3701 = vmul.f32 %v3690, %v1006
    %v3702 = vmul.f32 %v3690, %v1011
    %v3703 = vmul.f32 %v3690, %v1016
    %v3704 = vmul.f32 %v3690, %v1021
    %v3705 = vmul.f32 %v3690, %v1026
    %v3706 = vmul.f32 %v3690, %v1031
    %v3707 = vadd.f32 %v3670, %v3691
    %v3708 = vadd.f32 %v3671, %v3692
    %v3709 = vadd.f32 %v3672, %v3693
    %v3710 = vadd.f32 %v3673, %v3694
    %v3711 = vadd.f32 %v3674, %v3695
    %v3712 = vadd.f32 %v3675, %v3696
    %v3713 = vadd.f32 %v3676, %v3697
    %v3714 = vadd.f32 %v3677, %v3698
    %v3715 = vadd.f32 %v3678, %v3699
    %v3716 = vadd.f32 %v3679, %v3700
    %v3717 = vadd.f32 %v3680, %v3701
    %v3718 = vadd.f32 %v3681, %v3702
    %v3719 = vadd.f32 %v3682, %v3703
    %v3720 = vadd.f32 %v3683, %v3704
    %v3721 = vadd.f32 %v3684, %v3705
    %v3722 = vadd.f32 %v3685, %v3706
    %v3723 = vld [vmem:[%s1 + $0x3d] sm:$0x1]
    %v3724 = vlaneseq
    %v3725 = vshrl.u32 %v3724, 7
    %v3726 = vsub.s32 0, %v3725
    %v3727 = vrot.slane %v3723, %v3726
    %v3728 = vmul.f32 %v3727, %v1036
    %v3729 = vmul.f32 %v3727, %v1041
    %v3730 = vmul.f32 %v3727, %v1046
    %v3731 = vmul.f32 %v3727, %v1051
    %v3732 = vmul.f32 %v3727, %v1056
    %v3733 = vmul.f32 %v3727, %v1061
    %v3734 = vmul.f32 %v3727, %v1066
    %v3735 = vmul.f32 %v3727, %v1071
    %v3736 = vmul.f32 %v3727, %v1076
    %v3737 = vmul.f32 %v3727, %v1081
    %v3738 = vmul.f32 %v3727, %v1086
    %v3739 = vmul.f32 %v3727, %v1091
    %v3740 = vmul.f32 %v3727, %v1096
    %v3741 = vmul.f32 %v3727, %v1101
    %v3742 = vmul.f32 %v3727, %v1106
    %v3743 = vmul.f32 %v3727, %v1111
    %v3744 = vadd.f32 %v3707, %v3728
    %v3745 = vadd.f32 %v3708, %v3729
    %v3746 = vadd.f32 %v3709, %v3730
    %v3747 = vadd.f32 %v3710, %v3731
    %v3748 = vadd.f32 %v3711, %v3732
    %v3749 = vadd.f32 %v3712, %v3733
    %v3750 = vadd.f32 %v3713, %v3734
    %v3751 = vadd.f32 %v3714, %v3735
    %v3752 = vadd.f32 %v3715, %v3736
    %v3753 = vadd.f32 %v3716, %v3737
    %v3754 = vadd.f32 %v3717, %v3738
    %v3755 = vadd.f32 %v3718, %v3739
    %v3756 = vadd.f32 %v3719, %v3740
    %v3757 = vadd.f32 %v3720, %v3741
    %v3758 = vadd.f32 %v3721, %v3742
    %v3759 = vadd.f32 %v3722, %v3743
    %v3760 = vld [vmem:[%s1 + $0x3e] sm:$0x1]
    %v3761 = vlaneseq
    %v3762 = vshrl.u32 %v3761, 7
    %v3763 = vsub.s32 0, %v3762
    %v3764 = vrot.slane %v3760, %v3763
    %v3765 = vmul.f32 %v3764, %v1116
    %v3766 = vmul.f32 %v3764, %v1121
    %v3767 = vmul.f32 %v3764, %v1126
    %v3768 = vmul.f32 %v3764, %v1131
    %v3769 = vmul.f32 %v3764, %v1136
    %v3770 = vmul.f32 %v3764, %v1141
    %v3771 = vmul.f32 %v3764, %v1146
    %v3772 = vmul.f32 %v3764, %v1151
    %v3773 = vmul.f32 %v3764, %v1156
    %v3774 = vmul.f32 %v3764, %v1161
    %v3775 = vmul.f32 %v3764, %v1166
    %v3776 = vmul.f32 %v3764, %v1171
    %v3777 = vmul.f32 %v3764, %v1176
    %v3778 = vmul.f32 %v3764, %v1181
    %v3779 = vmul.f32 %v3764, %v1186
    %v3780 = vmul.f32 %v3764, %v1191
    %v3781 = vadd.f32 %v3744, %v3765
    %v3782 = vadd.f32 %v3745, %v3766
    %v3783 = vadd.f32 %v3746, %v3767
    %v3784 = vadd.f32 %v3747, %v3768
    %v3785 = vadd.f32 %v3748, %v3769
    %v3786 = vadd.f32 %v3749, %v3770
    %v3787 = vadd.f32 %v3750, %v3771
    %v3788 = vadd.f32 %v3751, %v3772
    %v3789 = vadd.f32 %v3752, %v3773
    %v3790 = vadd.f32 %v3753, %v3774
    %v3791 = vadd.f32 %v3754, %v3775
    %v3792 = vadd.f32 %v3755, %v3776
    %v3793 = vadd.f32 %v3756, %v3777
    %v3794 = vadd.f32 %v3757, %v3778
    %v3795 = vadd.f32 %v3758, %v3779
    %v3796 = vadd.f32 %v3759, %v3780
    %v3797 = vld [vmem:[%s1 + $0x3f] sm:$0x1]
    %v3798 = vlaneseq
    %v3799 = vshrl.u32 %v3798, 7
    %v3800 = vsub.s32 0, %v3799
    %v3801 = vrot.slane %v3797, %v3800
    %v3802 = vmul.f32 %v3801, %v1196
    %v3803 = vmul.f32 %v3801, %v1201
    %v3804 = vmul.f32 %v3801, %v1206
    %v3805 = vmul.f32 %v3801, %v1211
    %v3806 = vmul.f32 %v3801, %v1216
    %v3807 = vmul.f32 %v3801, %v1221
    %v3808 = vmul.f32 %v3801, %v1226
    %v3809 = vmul.f32 %v3801, %v1231
    %v3810 = vmul.f32 %v3801, %v1236
    %v3811 = vmul.f32 %v3801, %v1241
    %v3812 = vmul.f32 %v3801, %v1246
    %v3813 = vmul.f32 %v3801, %v1251
    %v3814 = vmul.f32 %v3801, %v1256
    %v3815 = vmul.f32 %v3801, %v1261
    %v3816 = vmul.f32 %v3801, %v1266
    %v3817 = vmul.f32 %v3801, %v1271
    %v3818 = vadd.f32 %v3781, %v3802
    %v3819 = vadd.f32 %v3782, %v3803
    %v3820 = vadd.f32 %v3783, %v3804
    %v3821 = vadd.f32 %v3784, %v3805
    %v3822 = vadd.f32 %v3785, %v3806
    %v3823 = vadd.f32 %v3786, %v3807
    %v3824 = vadd.f32 %v3787, %v3808
    %v3825 = vadd.f32 %v3788, %v3809
    %v3826 = vadd.f32 %v3789, %v3810
    %v3827 = vadd.f32 %v3790, %v3811
    %v3828 = vadd.f32 %v3791, %v3812
    %v3829 = vadd.f32 %v3792, %v3813
    %v3830 = vadd.f32 %v3793, %v3814
    %v3831 = vadd.f32 %v3794, %v3815
    %v3832 = vadd.f32 %v3795, %v3816
    %v3833 = vadd.f32 %v3796, %v3817
    %v3834 = vadd.f32 %v3818, %v1573
    %v3835 = vadd.f32 %v3819, %v1578
    %v3836 = vadd.f32 %v3820, %v1583
    %v3837 = vadd.f32 %v3821, %v1588
    %v3838 = vadd.f32 %v3822, %v1593
    %v3839 = vadd.f32 %v3823, %v1598
    %v3840 = vadd.f32 %v3824, %v1603
    %v3841 = vadd.f32 %v3825, %v1608
    %v3842 = vadd.f32 %v3826, %v1613
    %v3843 = vadd.f32 %v3827, %v1618
    %v3844 = vadd.f32 %v3828, %v1623
    %v3845 = vadd.f32 %v3829, %v1628
    %v3846 = vadd.f32 %v3830, %v1633
    %v3847 = vadd.f32 %v3831, %v1638
    %v3848 = vadd.f32 %v3832, %v1643
    %v3849 = vadd.f32 %v3833, %v1648
    %v3850 = vmax.f32 %v3834, 0.0
    %v3851 = vmax.f32 %v3835, 0.0
    %v3852 = vmax.f32 %v3836, 0.0
    %v3853 = vmax.f32 %v3837, 0.0
    %v3854 = vmax.f32 %v3838, 0.0
    %v3855 = vmax.f32 %v3839, 0.0
    %v3856 = vmax.f32 %v3840, 0.0
    %v3857 = vmax.f32 %v3841, 0.0
    %v3858 = vmax.f32 %v3842, 0.0
    %v3859 = vmax.f32 %v3843, 0.0
    %v3860 = vmax.f32 %v3844, 0.0
    %v3861 = vmax.f32 %v3845, 0.0
    %v3862 = vmax.f32 %v3846, 0.0
    %v3863 = vmax.f32 %v3847, 0.0
    %v3864 = vmax.f32 %v3848, 0.0
    %v3865 = vmax.f32 %v3849, 0.0
    %v3866 = vld [vmem:[%s5] sm:$0xff]
    %v3867 = vld [vmem:[%s5 + $0x8] sm:$0xff]
    %v3868 = vld [vmem:[%s5 + $0x10] sm:$0xff]
    %v3869 = vld [vmem:[%s5 + $0x18] sm:$0xff]
    %v3870 = vld [vmem:[%s5 + $0x20] sm:$0xff]
    %v3871 = vld [vmem:[%s5 + $0x28] sm:$0xff]
    %v3872 = vld [vmem:[%s5 + $0x30] sm:$0xff]
    %v3873 = vld [vmem:[%s5 + $0x38] sm:$0xff]
    %v3874 = vld [vmem:[%s5 + $0x40] sm:$0xff]
    %v3875 = vld [vmem:[%s5 + $0x48] sm:$0xff]
    %v3876 = vld [vmem:[%s5 + $0x50] sm:$0xff]
    %v3877 = vld [vmem:[%s5 + $0x58] sm:$0xff]
    %v3878 = vld [vmem:[%s5 + $0x60] sm:$0xff]
    %v3879 = vld [vmem:[%s5 + $0x68] sm:$0xff]
    %v3880 = vld [vmem:[%s5 + $0x70] sm:$0xff]
    %v3881 = vld [vmem:[%s5 + $0x78] sm:$0xff]
    %3882 = vmatprep.subr.mxu0 %v1978
    %3883 = vmatpush1.msra.mxu0 %v1666
    %3884 = vmatprep.subr.mxu0 %v1979
    %3885 = vmatpush1.msra.mxu0 %v1667
    %3886 = vmatprep.subr.mxu0 %v1980
    %3887 = vmatpush1.msra.mxu0 %v1668
    %3888 = vmatprep.subr.mxu0 %v1981
    %3889 = vmatpush1.msra.mxu0 %v1669
    %3890 = vmatprep.subr.mxu0 %v1982
    %3891 = vmatpush1.msra.mxu0 %v1670
    %3892 = vmatprep.subr.mxu0 %v1983
    %3893 = vmatpush1.msra.mxu0 %v1671
    %3894 = vmatprep.subr.mxu0 %v1984
    %3895 = vmatpush1.msra.mxu0 %v1672
    %3896 = vmatprep.subr.mxu0 %v1985
    %3897 = vmatpush1.msra.mxu0 %v1673
    %3898 = vmatprep.subr.mxu0 %v1986
    %3899 = vmatpush1.msra.mxu0 %v1674
    %3900 = vmatprep.subr.mxu0 %v1987
    %3901 = vmatpush1.msra.mxu0 %v1675
    %3902 = vmatprep.subr.mxu0 %v1988
    %3903 = vmatpush1.msra.mxu0 %v1676
    %3904 = vmatprep.subr.mxu0 %v1989
    %3905 = vmatpush1.msra.mxu0 %v1677
    %3906 = vmatprep.subr.mxu0 %v1990
    %3907 = vmatpush1.msra.mxu0 %v1678
    %3908 = vmatprep.subr.mxu0 %v1991
    %3909 = vmatpush1.msra.mxu0 %v1679
    %3910 = vmatprep.subr.mxu0 %v1992
    %3911 = vmatpush1.msra.mxu0 %v1680
    %3912 = vmatprep.subr.mxu0 %v1993
    %3913 = vmatpush1.msra.mxu0 %v1681
    %3914 = vmatprep.subr.mxu0 0.0
    %3915 = vmatpush1.msra.mxu0 0.0
    %3916 = vmatprep.subr.mxu0 0.0
    %3917 = vmatpush1.msra.mxu0 0.0
    %3918 = vmatprep.subr.mxu0 0.0
    %3919 = vmatpush1.msra.mxu0 0.0
    %3920 = vmatprep.subr.mxu0 0.0
    %3921 = vmatpush1.msra.mxu0 0.0
    %3922 = vmatprep.subr.mxu0 0.0
    %3923 = vmatpush1.msra.mxu0 0.0
    %3924 = vmatprep.subr.mxu0 0.0
    %3925 = vmatpush1.msra.mxu0 0.0
    %3926 = vmatprep.subr.mxu0 0.0
    %3927 = vmatpush1.msra.mxu0 0.0
    %3928 = vmatprep.subr.mxu0 0.0
    %3929 = vmatpush1.msra.mxu0 0.0
    %3930 = vmatprep.subr.mxu0 0.0
    %3931 = vmatpush1.msra.mxu0 0.0
    %3932 = vmatprep.subr.mxu0 0.0
    %3933 = vmatpush1.msra.mxu0 0.0
    %3934 = vmatprep.subr.mxu0 0.0
    %3935 = vmatpush1.msra.mxu0 0.0
    %3936 = vmatprep.subr.mxu0 0.0
    %3937 = vmatpush1.msra.mxu0 0.0
    %3938 = vmatprep.subr.mxu0 0.0
    %3939 = vmatpush1.msra.mxu0 0.0
    %3940 = vmatprep.subr.mxu0 0.0
    %3941 = vmatpush1.msra.mxu0 0.0
    %3942 = vmatprep.subr.mxu0 0.0
    %3943 = vmatpush1.msra.mxu0 0.0
    %3944 = vmatprep.subr.mxu0 0.0
    %3945 = vmatpush1.msra.mxu0 0.0
    %3946 = vmatprep.mubr.f32.mxu0 0.0
    %3947 = vmatmul.mubr.f32.gmra.mrb[0].mxu0 %v3866
    %v3948 = vpop.f32.mrb[0].mxu0
    %v3949 = vadd.f32 0.0, %v3948
    %v3950 = vpop.f32.mrb[0].mxu0
    %v3951 = vadd.f32 0.0, %v3950
    %3952 = vmatprep.mubr.f32.mxu0 0.0
    %3953 = vmatmul.mubr.f32.gmra.mrb[0].mxu0 %v3867
    %v3954 = vpop.f32.mrb[0].mxu0
    %v3955 = vadd.f32 0.0, %v3954
    %v3956 = vpop.f32.mrb[0].mxu0
    %v3957 = vadd.f32 0.0, %v3956
    %3958 = vmatprep.mubr.f32.mxu0 0.0
    %3959 = vmatmul.mubr.f32.gmra.mrb[0].mxu0 %v3868
    %v3960 = vpop.f32.mrb[0].mxu0
    %v3961 = vadd.f32 0.0, %v3960
    %v3962 = vpop.f32.mrb[0].mxu0
    %v3963 = vadd.f32 0.0, %v3962
    %3964 = vmatprep.mubr.f32.mxu0 0.0
    %3965 = vmatmul.mubr.f32.gmra.mrb[0].mxu0 %v3869
    %v3966 = vpop.f32.mrb[0].mxu0
    %v3967 = vadd.f32 0.0, %v3966
    %v3968 = vpop.f32.mrb[0].mxu0
    %v3969 = vadd.f32 0.0, %v3968
    %3970 = vmatprep.mubr.f32.mxu0 0.0
    %3971 = vmatmul.mubr.f32.gmra.mrb[0].mxu0 %v3870
    %v3972 = vpop.f32.mrb[0].mxu0
    %v3973 = vadd.f32 0.0, %v3972
    %v3974 = vpop.f32.mrb[0].mxu0
    %v3975 = vadd.f32 0.0, %v3974
    %3976 = vmatprep.mubr.f32.mxu0 0.0
    %3977 = vmatmul.mubr.f32.gmra.mrb[0].mxu0 %v3871
    %v3978 = vpop.f32.mrb[0].mxu0
    %v3979 = vadd.f32 0.0, %v3978
    %v3980 = vpop.f32.mrb[0].mxu0
    %v3981 = vadd.f32 0.0, %v3980
    %3982 = vmatprep.mubr.f32.mxu0 0.0
    %3983 = vmatmul.mubr.f32.gmra.mrb[0].mxu0 %v3872
    %v3984 = vpop.f32.mrb[0].mxu0
    %v3985 = vadd.f32 0.0, %v3984
    %v3986 = vpop.f32.mrb[0].mxu0
    %v3987 = vadd.f32 0.0, %v3986
    %3988 = vmatprep.mubr.f32.mxu0 0.0
    %3989 = vmatmul.mubr.f32.gmra.mrb[0].mxu0 %v3873
    %v3990 = vpop.f32.mrb[0].mxu0
    %v3991 = vadd.f32 0.0, %v3990
    %v3992 = vpop.f32.mrb[0].mxu0
    %v3993 = vadd.f32 0.0, %v3992
    %3994 = vmatprep.mubr.f32.mxu0 0.0
    %3995 = vmatmul.mubr.f32.gmra.mrb[0].mxu0 %v3874
    %v3996 = vpop.f32.mrb[0].mxu0
    %v3997 = vadd.f32 0.0, %v3996
    %v3998 = vpop.f32.mrb[0].mxu0
    %v3999 = vadd.f32 0.0, %v3998
    %4000 = vmatprep.mubr.f32.mxu0 0.0
    %4001 = vmatmul.mubr.f32.gmra.mrb[0].mxu0 %v3875
    %v4002 = vpop.f32.mrb[0].mxu0
    %v4003 = vadd.f32 0.0, %v4002
    %v4004 = vpop.f32.mrb[0].mxu0
    %v4005 = vadd.f32 0.0, %v4004
    %4006 = vmatprep.mubr.f32.mxu0 0.0
    %4007 = vmatmul.mubr.f32.gmra.mrb[0].mxu0 %v3876
    %v4008 = vpop.f32.mrb[0].mxu0
    %v4009 = vadd.f32 0.0, %v4008
    %v4010 = vpop.f32.mrb[0].mxu0
    %v4011 = vadd.f32 0.0, %v4010
    %4012 = vmatprep.mubr.f32.mxu0 0.0
    %4013 = vmatmul.mubr.f32.gmra.mrb[0].mxu0 %v3877
    %v4014 = vpop.f32.mrb[0].mxu0
    %v4015 = vadd.f32 0.0, %v4014
    %v4016 = vpop.f32.mrb[0].mxu0
    %v4017 = vadd.f32 0.0, %v4016
    %4018 = vmatprep.mubr.f32.mxu0 0.0
    %4019 = vmatmul.mubr.f32.gmra.mrb[0].mxu0 %v3878
    %v4020 = vpop.f32.mrb[0].mxu0
    %v4021 = vadd.f32 0.0, %v4020
    %v4022 = vpop.f32.mrb[0].mxu0
    %v4023 = vadd.f32 0.0, %v4022
    %4024 = vmatprep.mubr.f32.mxu0 0.0
    %4025 = vmatmul.mubr.f32.gmra.mrb[0].mxu0 %v3879
    %v4026 = vpop.f32.mrb[0].mxu0
    %v4027 = vadd.f32 0.0, %v4026
    %v4028 = vpop.f32.mrb[0].mxu0
    %v4029 = vadd.f32 0.0, %v4028
    %4030 = vmatprep.mubr.f32.mxu0 0.0
    %4031 = vmatmul.mubr.f32.gmra.mrb[0].mxu0 %v3880
    %v4032 = vpop.f32.mrb[0].mxu0
    %v4033 = vadd.f32 0.0, %v4032
    %v4034 = vpop.f32.mrb[0].mxu0
    %v4035 = vadd.f32 0.0, %v4034
    %4036 = vmatprep.mubr.f32.mxu0 0.0
    %4037 = vmatmul.mubr.f32.gmra.mrb[0].mxu0 %v3881
    %v4038 = vpop.f32.mrb[0].mxu0
    %v4039 = vadd.f32 0.0, %v4038
    %v4040 = vpop.f32.mrb[0].mxu0
    %v4041 = vadd.f32 0.0, %v4040
    %4042 = vdwg.mxu0
    %4043 = vmatprep.subr.mxu0 %v2602
    %4044 = vmatpush1.msra.mxu0 %v2290
    %4045 = vmatprep.subr.mxu0 %v2603
    %4046 = vmatpush1.msra.mxu0 %v2291
    %4047 = vmatprep.subr.mxu0 %v2604
    %4048 = vmatpush1.msra.mxu0 %v2292
    %4049 = vmatprep.subr.mxu0 %v2605
    %4050 = vmatpush1.msra.mxu0 %v2293
    %4051 = vmatprep.subr.mxu0 %v2606
    %4052 = vmatpush1.msra.mxu0 %v2294
    %4053 = vmatprep.subr.mxu0 %v2607
    %4054 = vmatpush1.msra.mxu0 %v2295
    %4055 = vmatprep.subr.mxu0 %v2608
    %4056 = vmatpush1.msra.mxu0 %v2296
    %4057 = vmatprep.subr.mxu0 %v2609
    %4058 = vmatpush1.msra.mxu0 %v2297
    %4059 = vmatprep.subr.mxu0 %v2610
    %4060 = vmatpush1.msra.mxu0 %v2298
    %4061 = vmatprep.subr.mxu0 %v2611
    %4062 = vmatpush1.msra.mxu0 %v2299
    %4063 = vmatprep.subr.mxu0 %v2612
    %4064 = vmatpush1.msra.mxu0 %v2300
    %4065 = vmatprep.subr.mxu0 %v2613
    %4066 = vmatpush1.msra.mxu0 %v2301
    %4067 = vmatprep.subr.mxu0 %v2614
    %4068 = vmatpush1.msra.mxu0 %v2302
    %4069 = vmatprep.subr.mxu0 %v2615
    %4070 = vmatpush1.msra.mxu0 %v2303
    %4071 = vmatprep.subr.mxu0 %v2616
    %4072 = vmatpush1.msra.mxu0 %v2304
    %4073 = vmatprep.subr.mxu0 %v2617
    %4074 = vmatpush1.msra.mxu0 %v2305
    %4075 = vmatprep.subr.mxu0 0.0
    %4076 = vmatpush1.msra.mxu0 0.0
    %4077 = vmatprep.subr.mxu0 0.0
    %4078 = vmatpush1.msra.mxu0 0.0
    %4079 = vmatprep.subr.mxu0 0.0
    %4080 = vmatpush1.msra.mxu0 0.0
    %4081 = vmatprep.subr.mxu0 0.0
    %4082 = vmatpush1.msra.mxu0 0.0
    %4083 = vmatprep.subr.mxu0 0.0
    %4084 = vmatpush1.msra.mxu0 0.0
    %4085 = vmatprep.subr.mxu0 0.0
    %4086 = vmatpush1.msra.mxu0 0.0
    %4087 = vmatprep.subr.mxu0 0.0
    %4088 = vmatpush1.msra.mxu0 0.0
    %4089 = vmatprep.subr.mxu0 0.0
    %4090 = vmatpush1.msra.mxu0 0.0
    %4091 = vmatprep.subr.mxu0 0.0
    %4092 = vmatpush1.msra.mxu0 0.0
    %4093 = vmatprep.subr.mxu0 0.0
    %4094 = vmatpush1.msra.mxu0 0.0
    %4095 = vmatprep.subr.mxu0 0.0
    %4096 = vmatpush1.msra.mxu0 0.0
    %4097 = vmatprep.subr.mxu0 0.0
    %4098 = vmatpush1.msra.mxu0 0.0
    %4099 = vmatprep.subr.mxu0 0.0
    %4100 = vmatpush1.msra.mxu0 0.0
    %4101 = vmatprep.subr.mxu0 0.0
    %4102 = vmatpush1.msra.mxu0 0.0
    %4103 = vmatprep.subr.mxu0 0.0
    %4104 = vmatpush1.msra.mxu0 0.0
    %4105 = vmatprep.subr.mxu0 0.0
    %4106 = vmatpush1.msra.mxu0 0.0
    %4107 = vmatprep.mubr.f32.mxu0 0.0
    %4108 = vmatmul.mubr.f32.gmra.mrb[0].mxu0 %v3866
    %v4109 = vpop.f32.mrb[0].mxu0
    %v4110 = vadd.f32 0.0, %v4109
    %v4111 = vpop.f32.mrb[0].mxu0
    %v4112 = vadd.f32 0.0, %v4111
    %4113 = vmatprep.mubr.f32.mxu0 0.0
    %4114 = vmatmul.mubr.f32.gmra.mrb[0].mxu0 %v3867
    %v4115 = vpop.f32.mrb[0].mxu0
    %v4116 = vadd.f32 0.0, %v4115
    %v4117 = vpop.f32.mrb[0].mxu0
    %v4118 = vadd.f32 0.0, %v4117
    %4119 = vmatprep.mubr.f32.mxu0 0.0
    %4120 = vmatmul.mubr.f32.gmra.mrb[0].mxu0 %v3868
    %v4121 = vpop.f32.mrb[0].mxu0
    %v4122 = vadd.f32 0.0, %v4121
    %v4123 = vpop.f32.mrb[0].mxu0
    %v4124 = vadd.f32 0.0, %v4123
    %4125 = vmatprep.mubr.f32.mxu0 0.0
    %4126 = vmatmul.mubr.f32.gmra.mrb[0].mxu0 %v3869
    %v4127 = vpop.f32.mrb[0].mxu0
    %v4128 = vadd.f32 0.0, %v4127
    %v4129 = vpop.f32.mrb[0].mxu0
    %v4130 = vadd.f32 0.0, %v4129
    %4131 = vmatprep.mubr.f32.mxu0 0.0
    %4132 = vmatmul.mubr.f32.gmra.mrb[0].mxu0 %v3870
    %v4133 = vpop.f32.mrb[0].mxu0
    %v4134 = vadd.f32 0.0, %v4133
    %v4135 = vpop.f32.mrb[0].mxu0
    %v4136 = vadd.f32 0.0, %v4135
    %4137 = vmatprep.mubr.f32.mxu0 0.0
    %4138 = vmatmul.mubr.f32.gmra.mrb[0].mxu0 %v3871
    %v4139 = vpop.f32.mrb[0].mxu0
    %v4140 = vadd.f32 0.0, %v4139
    %v4141 = vpop.f32.mrb[0].mxu0
    %v4142 = vadd.f32 0.0, %v4141
    %4143 = vmatprep.mubr.f32.mxu0 0.0
    %4144 = vmatmul.mubr.f32.gmra.mrb[0].mxu0 %v3872
    %v4145 = vpop.f32.mrb[0].mxu0
    %v4146 = vadd.f32 0.0, %v4145
    %v4147 = vpop.f32.mrb[0].mxu0
    %v4148 = vadd.f32 0.0, %v4147
    %4149 = vmatprep.mubr.f32.mxu0 0.0
    %4150 = vmatmul.mubr.f32.gmra.mrb[0].mxu0 %v3873
    %v4151 = vpop.f32.mrb[0].mxu0
    %v4152 = vadd.f32 0.0, %v4151
    %v4153 = vpop.f32.mrb[0].mxu0
    %v4154 = vadd.f32 0.0, %v4153
    %4155 = vmatprep.mubr.f32.mxu0 0.0
    %4156 = vmatmul.mubr.f32.gmra.mrb[0].mxu0 %v3874
    %v4157 = vpop.f32.mrb[0].mxu0
    %v4158 = vadd.f32 0.0, %v4157
    %v4159 = vpop.f32.mrb[0].mxu0
    %v4160 = vadd.f32 0.0, %v4159
    %4161 = vmatprep.mubr.f32.mxu0 0.0
    %4162 = vmatmul.mubr.f32.gmra.mrb[0].mxu0 %v3875
    %v4163 = vpop.f32.mrb[0].mxu0
    %v4164 = vadd.f32 0.0, %v4163
    %v4165 = vpop.f32.mrb[0].mxu0
    %v4166 = vadd.f32 0.0, %v4165
    %4167 = vmatprep.mubr.f32.mxu0 0.0
    %4168 = vmatmul.mubr.f32.gmra.mrb[0].mxu0 %v3876
    %v4169 = vpop.f32.mrb[0].mxu0
    %v4170 = vadd.f32 0.0, %v4169
    %v4171 = vpop.f32.mrb[0].mxu0
    %v4172 = vadd.f32 0.0, %v4171
    %4173 = vmatprep.mubr.f32.mxu0 0.0
    %4174 = vmatmul.mubr.f32.gmra.mrb[0].mxu0 %v3877
    %v4175 = vpop.f32.mrb[0].mxu0
    %v4176 = vadd.f32 0.0, %v4175
    %v4177 = vpop.f32.mrb[0].mxu0
    %v4178 = vadd.f32 0.0, %v4177
    %4179 = vmatprep.mubr.f32.mxu0 0.0
    %4180 = vmatmul.mubr.f32.gmra.mrb[0].mxu0 %v3878
    %v4181 = vpop.f32.mrb[0].mxu0
    %v4182 = vadd.f32 0.0, %v4181
    %v4183 = vpop.f32.mrb[0].mxu0
    %v4184 = vadd.f32 0.0, %v4183
    %4185 = vmatprep.mubr.f32.mxu0 0.0
    %4186 = vmatmul.mubr.f32.gmra.mrb[0].mxu0 %v3879
    %v4187 = vpop.f32.mrb[0].mxu0
    %v4188 = vadd.f32 0.0, %v4187
    %v4189 = vpop.f32.mrb[0].mxu0
    %v4190 = vadd.f32 0.0, %v4189
    %4191 = vmatprep.mubr.f32.mxu0 0.0
    %4192 = vmatmul.mubr.f32.gmra.mrb[0].mxu0 %v3880
    %v4193 = vpop.f32.mrb[0].mxu0
    %v4194 = vadd.f32 0.0, %v4193
    %v4195 = vpop.f32.mrb[0].mxu0
    %v4196 = vadd.f32 0.0, %v4195
    %4197 = vmatprep.mubr.f32.mxu0 0.0
    %4198 = vmatmul.mubr.f32.gmra.mrb[0].mxu0 %v3881
    %v4199 = vpop.f32.mrb[0].mxu0
    %v4200 = vadd.f32 0.0, %v4199
    %v4201 = vpop.f32.mrb[0].mxu0
    %v4202 = vadd.f32 0.0, %v4201
    %4203 = vdwg.mxu0
    %4204 = vmatprep.subr.mxu0 %v3226
    %4205 = vmatpush1.msra.mxu0 %v2914
    %4206 = vmatprep.subr.mxu0 %v3227
    %4207 = vmatpush1.msra.mxu0 %v2915
    %4208 = vmatprep.subr.mxu0 %v3228
    %4209 = vmatpush1.msra.mxu0 %v2916
    %4210 = vmatprep.subr.mxu0 %v3229
    %4211 = vmatpush1.msra.mxu0 %v2917
    %4212 = vmatprep.subr.mxu0 %v3230
    %4213 = vmatpush1.msra.mxu0 %v2918
    %4214 = vmatprep.subr.mxu0 %v3231
    %4215 = vmatpush1.msra.mxu0 %v2919
    %4216 = vmatprep.subr.mxu0 %v3232
    %4217 = vmatpush1.msra.mxu0 %v2920
    %4218 = vmatprep.subr.mxu0 %v3233
    %4219 = vmatpush1.msra.mxu0 %v2921
    %4220 = vmatprep.subr.mxu0 %v3234
    %4221 = vmatpush1.msra.mxu0 %v2922
    %4222 = vmatprep.subr.mxu0 %v3235
    %4223 = vmatpush1.msra.mxu0 %v2923
    %4224 = vmatprep.subr.mxu0 %v3236
    %4225 = vmatpush1.msra.mxu0 %v2924
    %4226 = vmatprep.subr.mxu0 %v3237
    %4227 = vmatpush1.msra.mxu0 %v2925
    %4228 = vmatprep.subr.mxu0 %v3238
    %4229 = vmatpush1.msra.mxu0 %v2926
    %4230 = vmatprep.subr.mxu0 %v3239
    %4231 = vmatpush1.msra.mxu0 %v2927
    %4232 = vmatprep.subr.mxu0 %v3240
    %4233 = vmatpush1.msra.mxu0 %v2928
    %4234 = vmatprep.subr.mxu0 %v3241
    %4235 = vmatpush1.msra.mxu0 %v2929
    %4236 = vmatprep.subr.mxu0 0.0
    %4237 = vmatpush1.msra.mxu0 0.0
    %4238 = vmatprep.subr.mxu0 0.0
    %4239 = vmatpush1.msra.mxu0 0.0
    %4240 = vmatprep.subr.mxu0 0.0
    %4241 = vmatpush1.msra.mxu0 0.0
    %4242 = vmatprep.subr.mxu0 0.0
    %4243 = vmatpush1.msra.mxu0 0.0
    %4244 = vmatprep.subr.mxu0 0.0
    %4245 = vmatpush1.msra.mxu0 0.0
    %4246 = vmatprep.subr.mxu0 0.0
    %4247 = vmatpush1.msra.mxu0 0.0
    %4248 = vmatprep.subr.mxu0 0.0
    %4249 = vmatpush1.msra.mxu0 0.0
    %4250 = vmatprep.subr.mxu0 0.0
    %4251 = vmatpush1.msra.mxu0 0.0
    %4252 = vmatprep.subr.mxu0 0.0
    %4253 = vmatpush1.msra.mxu0 0.0
    %4254 = vmatprep.subr.mxu0 0.0
    %4255 = vmatpush1.msra.mxu0 0.0
    %4256 = vmatprep.subr.mxu0 0.0
    %4257 = vmatpush1.msra.mxu0 0.0
    %4258 = vmatprep.subr.mxu0 0.0
    %4259 = vmatpush1.msra.mxu0 0.0
    %4260 = vmatprep.subr.mxu0 0.0
    %4261 = vmatpush1.msra.mxu0 0.0
    %4262 = vmatprep.subr.mxu0 0.0
    %4263 = vmatpush1.msra.mxu0 0.0
    %4264 = vmatprep.subr.mxu0 0.0
    %4265 = vmatpush1.msra.mxu0 0.0
    %4266 = vmatprep.subr.mxu0 0.0
    %4267 = vmatpush1.msra.mxu0 0.0
    %4268 = vmatprep.mubr.f32.mxu0 0.0
    %4269 = vmatmul.mubr.f32.gmra.mrb[0].mxu0 %v3866
    %v4270 = vpop.f32.mrb[0].mxu0
    %v4271 = vadd.f32 0.0, %v4270
    %v4272 = vpop.f32.mrb[0].mxu0
    %v4273 = vadd.f32 0.0, %v4272
    %4274 = vmatprep.mubr.f32.mxu0 0.0
    %4275 = vmatmul.mubr.f32.gmra.mrb[0].mxu0 %v3867
    %v4276 = vpop.f32.mrb[0].mxu0
    %v4277 = vadd.f32 0.0, %v4276
    %v4278 = vpop.f32.mrb[0].mxu0
    %v4279 = vadd.f32 0.0, %v4278
    %4280 = vmatprep.mubr.f32.mxu0 0.0
    %4281 = vmatmul.mubr.f32.gmra.mrb[0].mxu0 %v3868
    %v4282 = vpop.f32.mrb[0].mxu0
    %v4283 = vadd.f32 0.0, %v4282
    %v4284 = vpop.f32.mrb[0].mxu0
    %v4285 = vadd.f32 0.0, %v4284
    %4286 = vmatprep.mubr.f32.mxu0 0.0
    %4287 = vmatmul.mubr.f32.gmra.mrb[0].mxu0 %v3869
    %v4288 = vpop.f32.mrb[0].mxu0
    %v4289 = vadd.f32 0.0, %v4288
    %v4290 = vpop.f32.mrb[0].mxu0
    %v4291 = vadd.f32 0.0, %v4290
    %4292 = vmatprep.mubr.f32.mxu0 0.0
    %4293 = vmatmul.mubr.f32.gmra.mrb[0].mxu0 %v3870
    %v4294 = vpop.f32.mrb[0].mxu0
    %v4295 = vadd.f32 0.0, %v4294
    %v4296 = vpop.f32.mrb[0].mxu0
    %v4297 = vadd.f32 0.0, %v4296
    %4298 = vmatprep.mubr.f32.mxu0 0.0
    %4299 = vmatmul.mubr.f32.gmra.mrb[0].mxu0 %v3871
    %v4300 = vpop.f32.mrb[0].mxu0
    %v4301 = vadd.f32 0.0, %v4300
    %v4302 = vpop.f32.mrb[0].mxu0
    %v4303 = vadd.f32 0.0, %v4302
    %4304 = vmatprep.mubr.f32.mxu0 0.0
    %4305 = vmatmul.mubr.f32.gmra.mrb[0].mxu0 %v3872
    %v4306 = vpop.f32.mrb[0].mxu0
    %v4307 = vadd.f32 0.0, %v4306
    %v4308 = vpop.f32.mrb[0].mxu0
    %v4309 = vadd.f32 0.0, %v4308
    %4310 = vmatprep.mubr.f32.mxu0 0.0
    %4311 = vmatmul.mubr.f32.gmra.mrb[0].mxu0 %v3873
    %v4312 = vpop.f32.mrb[0].mxu0
    %v4313 = vadd.f32 0.0, %v4312
    %v4314 = vpop.f32.mrb[0].mxu0
    %v4315 = vadd.f32 0.0, %v4314
    %4316 = vmatprep.mubr.f32.mxu0 0.0
    %4317 = vmatmul.mubr.f32.gmra.mrb[0].mxu0 %v3874
    %v4318 = vpop.f32.mrb[0].mxu0
    %v4319 = vadd.f32 0.0, %v4318
    %v4320 = vpop.f32.mrb[0].mxu0
    %v4321 = vadd.f32 0.0, %v4320
    %4322 = vmatprep.mubr.f32.mxu0 0.0
    %4323 = vmatmul.mubr.f32.gmra.mrb[0].mxu0 %v3875
    %v4324 = vpop.f32.mrb[0].mxu0
    %v4325 = vadd.f32 0.0, %v4324
    %v4326 = vpop.f32.mrb[0].mxu0
    %v4327 = vadd.f32 0.0, %v4326
    %4328 = vmatprep.mubr.f32.mxu0 0.0
    %4329 = vmatmul.mubr.f32.gmra.mrb[0].mxu0 %v3876
    %v4330 = vpop.f32.mrb[0].mxu0
    %v4331 = vadd.f32 0.0, %v4330
    %v4332 = vpop.f32.mrb[0].mxu0
    %v4333 = vadd.f32 0.0, %v4332
    %4334 = vmatprep.mubr.f32.mxu0 0.0
    %4335 = vmatmul.mubr.f32.gmra.mrb[0].mxu0 %v3877
    %v4336 = vpop.f32.mrb[0].mxu0
    %v4337 = vadd.f32 0.0, %v4336
    %v4338 = vpop.f32.mrb[0].mxu0
    %v4339 = vadd.f32 0.0, %v4338
    %4340 = vmatprep.mubr.f32.mxu0 0.0
    %4341 = vmatmul.mubr.f32.gmra.mrb[0].mxu0 %v3878
    %v4342 = vpop.f32.mrb[0].mxu0
    %v4343 = vadd.f32 0.0, %v4342
    %v4344 = vpop.f32.mrb[0].mxu0
    %v4345 = vadd.f32 0.0, %v4344
    %4346 = vmatprep.mubr.f32.mxu0 0.0
    %4347 = vmatmul.mubr.f32.gmra.mrb[0].mxu0 %v3879
    %v4348 = vpop.f32.mrb[0].mxu0
    %v4349 = vadd.f32 0.0, %v4348
    %v4350 = vpop.f32.mrb[0].mxu0
    %v4351 = vadd.f32 0.0, %v4350
    %4352 = vmatprep.mubr.f32.mxu0 0.0
    %4353 = vmatmul.mubr.f32.gmra.mrb[0].mxu0 %v3880
    %v4354 = vpop.f32.mrb[0].mxu0
    %v4355 = vadd.f32 0.0, %v4354
    %v4356 = vpop.f32.mrb[0].mxu0
    %v4357 = vadd.f32 0.0, %v4356
    %4358 = vmatprep.mubr.f32.mxu0 0.0
    %4359 = vmatmul.mubr.f32.gmra.mrb[0].mxu0 %v3881
    %v4360 = vpop.f32.mrb[0].mxu0
    %v4361 = vadd.f32 0.0, %v4360
    %v4362 = vpop.f32.mrb[0].mxu0
    %v4363 = vadd.f32 0.0, %v4362
    %4364 = vdwg.mxu0
    %4365 = vmatprep.subr.mxu0 %v3850
    %4366 = vmatpush1.msra.mxu0 %v3538
    %4367 = vmatprep.subr.mxu0 %v3851
    %4368 = vmatpush1.msra.mxu0 %v3539
    %4369 = vmatprep.subr.mxu0 %v3852
    %4370 = vmatpush1.msra.mxu0 %v3540
    %4371 = vmatprep.subr.mxu0 %v3853
    %4372 = vmatpush1.msra.mxu0 %v3541
    %4373 = vmatprep.subr.mxu0 %v3854
    %4374 = vmatpush1.msra.mxu0 %v3542
    %4375 = vmatprep.subr.mxu0 %v3855
    %4376 = vmatpush1.msra.mxu0 %v3543
    %4377 = vmatprep.subr.mxu0 %v3856
    %4378 = vmatpush1.msra.mxu0 %v3544
    %4379 = vmatprep.subr.mxu0 %v3857
    %4380 = vmatpush1.msra.mxu0 %v3545
    %4381 = vmatprep.subr.mxu0 %v3858
    %4382 = vmatpush1.msra.mxu0 %v3546
    %4383 = vmatprep.subr.mxu0 %v3859
    %4384 = vmatpush1.msra.mxu0 %v3547
    %4385 = vmatprep.subr.mxu0 %v3860
    %4386 = vmatpush1.msra.mxu0 %v3548
    %4387 = vmatprep.subr.mxu0 %v3861
    %4388 = vmatpush1.msra.mxu0 %v3549
    %4389 = vmatprep.subr.mxu0 %v3862
    %4390 = vmatpush1.msra.mxu0 %v3550
    %4391 = vmatprep.subr.mxu0 %v3863
    %4392 = vmatpush1.msra.mxu0 %v3551
    %4393 = vmatprep.subr.mxu0 %v3864
    %4394 = vmatpush1.msra.mxu0 %v3552
    %4395 = vmatprep.subr.mxu0 %v3865
    %4396 = vmatpush1.msra.mxu0 %v3553
    %4397 = vmatprep.subr.mxu0 0.0
    %4398 = vmatpush1.msra.mxu0 0.0
    %4399 = vmatprep.subr.mxu0 0.0
    %4400 = vmatpush1.msra.mxu0 0.0
    %4401 = vmatprep.subr.mxu0 0.0
    %4402 = vmatpush1.msra.mxu0 0.0
    %4403 = vmatprep.subr.mxu0 0.0
    %4404 = vmatpush1.msra.mxu0 0.0
    %4405 = vmatprep.subr.mxu0 0.0
    %4406 = vmatpush1.msra.mxu0 0.0
    %4407 = vmatprep.subr.mxu0 0.0
    %4408 = vmatpush1.msra.mxu0 0.0
    %4409 = vmatprep.subr.mxu0 0.0
    %4410 = vmatpush1.msra.mxu0 0.0
    %4411 = vmatprep.subr.mxu0 0.0
    %4412 = vmatpush1.msra.mxu0 0.0
    %4413 = vmatprep.subr.mxu0 0.0
    %4414 = vmatpush1.msra.mxu0 0.0
    %4415 = vmatprep.subr.mxu0 0.0
    %4416 = vmatpush1.msra.mxu0 0.0
    %4417 = vmatprep.subr.mxu0 0.0
    %4418 = vmatpush1.msra.mxu0 0.0
    %4419 = vmatprep.subr.mxu0 0.0
    %4420 = vmatpush1.msra.mxu0 0.0
    %4421 = vmatprep.subr.mxu0 0.0
    %4422 = vmatpush1.msra.mxu0 0.0
    %4423 = vmatprep.subr.mxu0 0.0
    %4424 = vmatpush1.msra.mxu0 0.0
    %4425 = vmatprep.subr.mxu0 0.0
    %4426 = vmatpush1.msra.mxu0 0.0
    %4427 = vmatprep.subr.mxu0 0.0
    %4428 = vmatpush1.msra.mxu0 0.0
    %4429 = vmatprep.mubr.f32.mxu0 0.0
    %4430 = vmatmul.mubr.f32.gmra.mrb[0].mxu0 %v3866
    %v4431 = vpop.f32.mrb[0].mxu0
    %v4432 = vadd.f32 0.0, %v4431
    %v4433 = vpop.f32.mrb[0].mxu0
    %v4434 = vadd.f32 0.0, %v4433
    %4435 = vmatprep.mubr.f32.mxu0 0.0
    %4436 = vmatmul.mubr.f32.gmra.mrb[0].mxu0 %v3867
    %v4437 = vpop.f32.mrb[0].mxu0
    %v4438 = vadd.f32 0.0, %v4437
    %v4439 = vpop.f32.mrb[0].mxu0
    %v4440 = vadd.f32 0.0, %v4439
    %4441 = vmatprep.mubr.f32.mxu0 0.0
    %4442 = vmatmul.mubr.f32.gmra.mrb[0].mxu0 %v3868
    %v4443 = vpop.f32.mrb[0].mxu0
    %v4444 = vadd.f32 0.0, %v4443
    %v4445 = vpop.f32.mrb[0].mxu0
    %v4446 = vadd.f32 0.0, %v4445
    %4447 = vmatprep.mubr.f32.mxu0 0.0
    %4448 = vmatmul.mubr.f32.gmra.mrb[0].mxu0 %v3869
    %v4449 = vpop.f32.mrb[0].mxu0
    %v4450 = vadd.f32 0.0, %v4449
    %v4451 = vpop.f32.mrb[0].mxu0
    %v4452 = vadd.f32 0.0, %v4451
    %4453 = vmatprep.mubr.f32.mxu0 0.0
    %4454 = vmatmul.mubr.f32.gmra.mrb[0].mxu0 %v3870
    %v4455 = vpop.f32.mrb[0].mxu0
    %v4456 = vadd.f32 0.0, %v4455
    %v4457 = vpop.f32.mrb[0].mxu0
    %v4458 = vadd.f32 0.0, %v4457
    %4459 = vmatprep.mubr.f32.mxu0 0.0
    %4460 = vmatmul.mubr.f32.gmra.mrb[0].mxu0 %v3871
    %v4461 = vpop.f32.mrb[0].mxu0
    %v4462 = vadd.f32 0.0, %v4461
    %v4463 = vpop.f32.mrb[0].mxu0
    %v4464 = vadd.f32 0.0, %v4463
    %4465 = vmatprep.mubr.f32.mxu0 0.0
    %4466 = vmatmul.mubr.f32.gmra.mrb[0].mxu0 %v3872
    %v4467 = vpop.f32.mrb[0].mxu0
    %v4468 = vadd.f32 0.0, %v4467
    %v4469 = vpop.f32.mrb[0].mxu0
    %v4470 = vadd.f32 0.0, %v4469
    %4471 = vmatprep.mubr.f32.mxu0 0.0
    %4472 = vmatmul.mubr.f32.gmra.mrb[0].mxu0 %v3873
    %v4473 = vpop.f32.mrb[0].mxu0
    %v4474 = vadd.f32 0.0, %v4473
    %v4475 = vpop.f32.mrb[0].mxu0
    %v4476 = vadd.f32 0.0, %v4475
    %4477 = vmatprep.mubr.f32.mxu0 0.0
    %4478 = vmatmul.mubr.f32.gmra.mrb[0].mxu0 %v3874
    %v4479 = vpop.f32.mrb[0].mxu0
    %v4480 = vadd.f32 0.0, %v4479
    %v4481 = vpop.f32.mrb[0].mxu0
    %v4482 = vadd.f32 0.0, %v4481
    %4483 = vmatprep.mubr.f32.mxu0 0.0
    %4484 = vmatmul.mubr.f32.gmra.mrb[0].mxu0 %v3875
    %v4485 = vpop.f32.mrb[0].mxu0
    %v4486 = vadd.f32 0.0, %v4485
    %v4487 = vpop.f32.mrb[0].mxu0
    %v4488 = vadd.f32 0.0, %v4487
    %4489 = vmatprep.mubr.f32.mxu0 0.0
    %4490 = vmatmul.mubr.f32.gmra.mrb[0].mxu0 %v3876
    %v4491 = vpop.f32.mrb[0].mxu0
    %v4492 = vadd.f32 0.0, %v4491
    %v4493 = vpop.f32.mrb[0].mxu0
    %v4494 = vadd.f32 0.0, %v4493
    %4495 = vmatprep.mubr.f32.mxu0 0.0
    %4496 = vmatmul.mubr.f32.gmra.mrb[0].mxu0 %v3877
    %v4497 = vpop.f32.mrb[0].mxu0
    %v4498 = vadd.f32 0.0, %v4497
    %v4499 = vpop.f32.mrb[0].mxu0
    %v4500 = vadd.f32 0.0, %v4499
    %4501 = vmatprep.mubr.f32.mxu0 0.0
    %4502 = vmatmul.mubr.f32.gmra.mrb[0].mxu0 %v3878
    %v4503 = vpop.f32.mrb[0].mxu0
    %v4504 = vadd.f32 0.0, %v4503
    %v4505 = vpop.f32.mrb[0].mxu0
    %v4506 = vadd.f32 0.0, %v4505
    %4507 = vmatprep.mubr.f32.mxu0 0.0
    %4508 = vmatmul.mubr.f32.gmra.mrb[0].mxu0 %v3879
    %v4509 = vpop.f32.mrb[0].mxu0
    %v4510 = vadd.f32 0.0, %v4509
    %v4511 = vpop.f32.mrb[0].mxu0
    %v4512 = vadd.f32 0.0, %v4511
    %4513 = vmatprep.mubr.f32.mxu0 0.0
    %4514 = vmatmul.mubr.f32.gmra.mrb[0].mxu0 %v3880
    %v4515 = vpop.f32.mrb[0].mxu0
    %v4516 = vadd.f32 0.0, %v4515
    %v4517 = vpop.f32.mrb[0].mxu0
    %v4518 = vadd.f32 0.0, %v4517
    %4519 = vmatprep.mubr.f32.mxu0 0.0
    %4520 = vmatmul.mubr.f32.gmra.mrb[0].mxu0 %v3881
    %v4521 = vpop.f32.mrb[0].mxu0
    %v4522 = vadd.f32 0.0, %v4521
    %v4523 = vpop.f32.mrb[0].mxu0
    %v4524 = vadd.f32 0.0, %v4523
    %4525 = vdwg.mxu0
    %v4526 = vld [vmem:[%s6] sm:$0xff]
    %v4527 = vld [vmem:[%s6 + $0x8] sm:$0xff]
    %v4528 = vld [vmem:[%s6 + $0x10] sm:$0xff]
    %v4529 = vld [vmem:[%s6 + $0x18] sm:$0xff]
    %v4530 = vld [vmem:[%s6 + $0x20] sm:$0xff]
    %v4531 = vld [vmem:[%s6 + $0x28] sm:$0xff]
    %v4532 = vld [vmem:[%s6 + $0x30] sm:$0xff]
    %v4533 = vld [vmem:[%s6 + $0x38] sm:$0xff]
    %v4534 = vld [vmem:[%s6 + $0x40] sm:$0xff]
    %v4535 = vld [vmem:[%s6 + $0x48] sm:$0xff]
    %v4536 = vld [vmem:[%s6 + $0x50] sm:$0xff]
    %v4537 = vld [vmem:[%s6 + $0x58] sm:$0xff]
    %v4538 = vld [vmem:[%s6 + $0x60] sm:$0xff]
    %v4539 = vld [vmem:[%s6 + $0x68] sm:$0xff]
    %v4540 = vld [vmem:[%s6 + $0x70] sm:$0xff]
    %v4541 = vld [vmem:[%s6 + $0x78] sm:$0xff]
    %v4542 = vmul.f32 %v1294, %v3949
    %v4543 = vmul.f32 %v1294, %v3955
    %v4544 = vmul.f32 %v1294, %v3961
    %v4545 = vmul.f32 %v1294, %v3967
    %v4546 = vmul.f32 %v1294, %v3973
    %v4547 = vmul.f32 %v1294, %v3979
    %v4548 = vmul.f32 %v1294, %v3985
    %v4549 = vmul.f32 %v1294, %v3991
    %v4550 = vmul.f32 %v1294, %v3997
    %v4551 = vmul.f32 %v1294, %v4003
    %v4552 = vmul.f32 %v1294, %v4009
    %v4553 = vmul.f32 %v1294, %v4015
    %v4554 = vmul.f32 %v1294, %v4021
    %v4555 = vmul.f32 %v1294, %v4027
    %v4556 = vmul.f32 %v1294, %v4033
    %v4557 = vmul.f32 %v1294, %v4039
    %v4558 = vmul.f32 %v1315, %v3951
    %v4559 = vmul.f32 %v1315, %v3957
    %v4560 = vmul.f32 %v1315, %v3963
    %v4561 = vmul.f32 %v1315, %v3969
    %v4562 = vmul.f32 %v1315, %v3975
    %v4563 = vmul.f32 %v1315, %v3981
    %v4564 = vmul.f32 %v1315, %v3987
    %v4565 = vmul.f32 %v1315, %v3993
    %v4566 = vmul.f32 %v1315, %v3999
    %v4567 = vmul.f32 %v1315, %v4005
    %v4568 = vmul.f32 %v1315, %v4011
    %v4569 = vmul.f32 %v1315, %v4017
    %v4570 = vmul.f32 %v1315, %v4023
    %v4571 = vmul.f32 %v1315, %v4029
    %v4572 = vmul.f32 %v1315, %v4035
    %v4573 = vmul.f32 %v1315, %v4041
    %v4574 = vadd.f32 %v4542, %v4558
    %v4575 = vadd.f32 %v4543, %v4559
    %v4576 = vadd.f32 %v4544, %v4560
    %v4577 = vadd.f32 %v4545, %v4561
    %v4578 = vadd.f32 %v4546, %v4562
    %v4579 = vadd.f32 %v4547, %v4563
    %v4580 = vadd.f32 %v4548, %v4564
    %v4581 = vadd.f32 %v4549, %v4565
    %v4582 = vadd.f32 %v4550, %v4566
    %v4583 = vadd.f32 %v4551, %v4567
    %v4584 = vadd.f32 %v4552, %v4568
    %v4585 = vadd.f32 %v4553, %v4569
    %v4586 = vadd.f32 %v4554, %v4570
    %v4587 = vadd.f32 %v4555, %v4571
    %v4588 = vadd.f32 %v4556, %v4572
    %v4589 = vadd.f32 %v4557, %v4573
    %v4590 = vmul.f32 %v1352, %v4110
    %v4591 = vmul.f32 %v1352, %v4116
    %v4592 = vmul.f32 %v1352, %v4122
    %v4593 = vmul.f32 %v1352, %v4128
    %v4594 = vmul.f32 %v1352, %v4134
    %v4595 = vmul.f32 %v1352, %v4140
    %v4596 = vmul.f32 %v1352, %v4146
    %v4597 = vmul.f32 %v1352, %v4152
    %v4598 = vmul.f32 %v1352, %v4158
    %v4599 = vmul.f32 %v1352, %v4164
    %v4600 = vmul.f32 %v1352, %v4170
    %v4601 = vmul.f32 %v1352, %v4176
    %v4602 = vmul.f32 %v1352, %v4182
    %v4603 = vmul.f32 %v1352, %v4188
    %v4604 = vmul.f32 %v1352, %v4194
    %v4605 = vmul.f32 %v1352, %v4200
    %v4606 = vadd.f32 %v4574, %v4590
    %v4607 = vadd.f32 %v4575, %v4591
    %v4608 = vadd.f32 %v4576, %v4592
    %v4609 = vadd.f32 %v4577, %v4593
    %v4610 = vadd.f32 %v4578, %v4594
    %v4611 = vadd.f32 %v4579, %v4595
    %v4612 = vadd.f32 %v4580, %v4596
    %v4613 = vadd.f32 %v4581, %v4597
    %v4614 = vadd.f32 %v4582, %v4598
    %v4615 = vadd.f32 %v4583, %v4599
    %v4616 = vadd.f32 %v4584, %v4600
    %v4617 = vadd.f32 %v4585, %v4601
    %v4618 = vadd.f32 %v4586, %v4602
    %v4619 = vadd.f32 %v4587, %v4603
    %v4620 = vadd.f32 %v4588, %v4604
    %v4621 = vadd.f32 %v4589, %v4605
    %v4622 = vmul.f32 %v1389, %v4112
    %v4623 = vmul.f32 %v1389, %v4118
    %v4624 = vmul.f32 %v1389, %v4124
    %v4625 = vmul.f32 %v1389, %v4130
    %v4626 = vmul.f32 %v1389, %v4136
    %v4627 = vmul.f32 %v1389, %v4142
    %v4628 = vmul.f32 %v1389, %v4148
    %v4629 = vmul.f32 %v1389, %v4154
    %v4630 = vmul.f32 %v1389, %v4160
    %v4631 = vmul.f32 %v1389, %v4166
    %v4632 = vmul.f32 %v1389, %v4172
    %v4633 = vmul.f32 %v1389, %v4178
    %v4634 = vmul.f32 %v1389, %v4184
    %v4635 = vmul.f32 %v1389, %v4190
    %v4636 = vmul.f32 %v1389, %v4196
    %v4637 = vmul.f32 %v1389, %v4202
    %v4638 = vadd.f32 %v4606, %v4622
    %v4639 = vadd.f32 %v4607, %v4623
    %v4640 = vadd.f32 %v4608, %v4624
    %v4641 = vadd.f32 %v4609, %v4625
    %v4642 = vadd.f32 %v4610, %v4626
    %v4643 = vadd.f32 %v4611, %v4627
    %v4644 = vadd.f32 %v4612, %v4628
    %v4645 = vadd.f32 %v4613, %v4629
    %v4646 = vadd.f32 %v4614, %v4630
    %v4647 = vadd.f32 %v4615, %v4631
    %v4648 = vadd.f32 %v4616, %v4632
    %v4649 = vadd.f32 %v4617, %v4633
    %v4650 = vadd.f32 %v4618, %v4634
    %v4651 = vadd.f32 %v4619, %v4635
    %v4652 = vadd.f32 %v4620, %v4636
    %v4653 = vadd.f32 %v4621, %v4637
    %v4654 = vmul.f32 %v1426, %v4271
    %v4655 = vmul.f32 %v1426, %v4277
    %v4656 = vmul.f32 %v1426, %v4283
    %v4657 = vmul.f32 %v1426, %v4289
    %v4658 = vmul.f32 %v1426, %v4295
    %v4659 = vmul.f32 %v1426, %v4301
    %v4660 = vmul.f32 %v1426, %v4307
    %v4661 = vmul.f32 %v1426, %v4313
    %v4662 = vmul.f32 %v1426, %v4319
    %v4663 = vmul.f32 %v1426, %v4325
    %v4664 = vmul.f32 %v1426, %v4331
    %v4665 = vmul.f32 %v1426, %v4337
    %v4666 = vmul.f32 %v1426, %v4343
    %v4667 = vmul.f32 %v1426, %v4349
    %v4668 = vmul.f32 %v1426, %v4355
    %v4669 = vmul.f32 %v1426, %v4361
    %v4670 = vadd.f32 %v4638, %v4654
    %v4671 = vadd.f32 %v4639, %v4655
    %v4672 = vadd.f32 %v4640, %v4656
    %v4673 = vadd.f32 %v4641, %v4657
    %v4674 = vadd.f32 %v4642, %v4658
    %v4675 = vadd.f32 %v4643, %v4659
    %v4676 = vadd.f32 %v4644, %v4660
    %v4677 = vadd.f32 %v4645, %v4661
    %v4678 = vadd.f32 %v4646, %v4662
    %v4679 = vadd.f32 %v4647, %v4663
    %v4680 = vadd.f32 %v4648, %v4664
    %v4681 = vadd.f32 %v4649, %v4665
    %v4682 = vadd.f32 %v4650, %v4666
    %v4683 = vadd.f32 %v4651, %v4667
    %v4684 = vadd.f32 %v4652, %v4668
    %v4685 = vadd.f32 %v4653, %v4669
    %v4686 = vmul.f32 %v1463, %v4273
    %v4687 = vmul.f32 %v1463, %v4279
    %v4688 = vmul.f32 %v1463, %v4285
    %v4689 = vmul.f32 %v1463, %v4291
    %v4690 = vmul.f32 %v1463, %v4297
    %v4691 = vmul.f32 %v1463, %v4303
    %v4692 = vmul.f32 %v1463, %v4309
    %v4693 = vmul.f32 %v1463, %v4315
    %v4694 = vmul.f32 %v1463, %v4321
    %v4695 = vmul.f32 %v1463, %v4327
    %v4696 = vmul.f32 %v1463, %v4333
    %v4697 = vmul.f32 %v1463, %v4339
    %v4698 = vmul.f32 %v1463, %v4345
    %v4699 = vmul.f32 %v1463, %v4351
    %v4700 = vmul.f32 %v1463, %v4357
    %v4701 = vmul.f32 %v1463, %v4363
    %v4702 = vadd.f32 %v4670, %v4686
    %v4703 = vadd.f32 %v4671, %v4687
    %v4704 = vadd.f32 %v4672, %v4688
    %v4705 = vadd.f32 %v4673, %v4689
    %v4706 = vadd.f32 %v4674, %v4690
    %v4707 = vadd.f32 %v4675, %v4691
    %v4708 = vadd.f32 %v4676, %v4692
    %v4709 = vadd.f32 %v4677, %v4693
    %v4710 = vadd.f32 %v4678, %v4694
    %v4711 = vadd.f32 %v4679, %v4695
    %v4712 = vadd.f32 %v4680, %v4696
    %v4713 = vadd.f32 %v4681, %v4697
    %v4714 = vadd.f32 %v4682, %v4698
    %v4715 = vadd.f32 %v4683, %v4699
    %v4716 = vadd.f32 %v4684, %v4700
    %v4717 = vadd.f32 %v4685, %v4701
    %v4718 = vmul.f32 %v1500, %v4432
    %v4719 = vmul.f32 %v1500, %v4438
    %v4720 = vmul.f32 %v1500, %v4444
    %v4721 = vmul.f32 %v1500, %v4450
    %v4722 = vmul.f32 %v1500, %v4456
    %v4723 = vmul.f32 %v1500, %v4462
    %v4724 = vmul.f32 %v1500, %v4468
    %v4725 = vmul.f32 %v1500, %v4474
    %v4726 = vmul.f32 %v1500, %v4480
    %v4727 = vmul.f32 %v1500, %v4486
    %v4728 = vmul.f32 %v1500, %v4492
    %v4729 = vmul.f32 %v1500, %v4498
    %v4730 = vmul.f32 %v1500, %v4504
    %v4731 = vmul.f32 %v1500, %v4510
    %v4732 = vmul.f32 %v1500, %v4516
    %v4733 = vmul.f32 %v1500, %v4522
    %v4734 = vadd.f32 %v4702, %v4718
    %v4735 = vadd.f32 %v4703, %v4719
    %v4736 = vadd.f32 %v4704, %v4720
    %v4737 = vadd.f32 %v4705, %v4721
    %v4738 = vadd.f32 %v4706, %v4722
    %v4739 = vadd.f32 %v4707, %v4723
    %v4740 = vadd.f32 %v4708, %v4724
    %v4741 = vadd.f32 %v4709, %v4725
    %v4742 = vadd.f32 %v4710, %v4726
    %v4743 = vadd.f32 %v4711, %v4727
    %v4744 = vadd.f32 %v4712, %v4728
    %v4745 = vadd.f32 %v4713, %v4729
    %v4746 = vadd.f32 %v4714, %v4730
    %v4747 = vadd.f32 %v4715, %v4731
    %v4748 = vadd.f32 %v4716, %v4732
    %v4749 = vadd.f32 %v4717, %v4733
    %v4750 = vmul.f32 %v1537, %v4434
    %v4751 = vmul.f32 %v1537, %v4440
    %v4752 = vmul.f32 %v1537, %v4446
    %v4753 = vmul.f32 %v1537, %v4452
    %v4754 = vmul.f32 %v1537, %v4458
    %v4755 = vmul.f32 %v1537, %v4464
    %v4756 = vmul.f32 %v1537, %v4470
    %v4757 = vmul.f32 %v1537, %v4476
    %v4758 = vmul.f32 %v1537, %v4482
    %v4759 = vmul.f32 %v1537, %v4488
    %v4760 = vmul.f32 %v1537, %v4494
    %v4761 = vmul.f32 %v1537, %v4500
    %v4762 = vmul.f32 %v1537, %v4506
    %v4763 = vmul.f32 %v1537, %v4512
    %v4764 = vmul.f32 %v1537, %v4518
    %v4765 = vmul.f32 %v1537, %v4524
    %v4766 = vadd.f32 %v4734, %v4750
    %v4767 = vadd.f32 %v4735, %v4751
    %v4768 = vadd.f32 %v4736, %v4752
    %v4769 = vadd.f32 %v4737, %v4753
    %v4770 = vadd.f32 %v4738, %v4754
    %v4771 = vadd.f32 %v4739, %v4755
    %v4772 = vadd.f32 %v4740, %v4756
    %v4773 = vadd.f32 %v4741, %v4757
    %v4774 = vadd.f32 %v4742, %v4758
    %v4775 = vadd.f32 %v4743, %v4759
    %v4776 = vadd.f32 %v4744, %v4760
    %v4777 = vadd.f32 %v4745, %v4761
    %v4778 = vadd.f32 %v4746, %v4762
    %v4779 = vadd.f32 %v4747, %v4763
    %v4780 = vadd.f32 %v4748, %v4764
    %v4781 = vadd.f32 %v4749, %v4765
    %4783 = vset.pattern.permute.xlu0 0
    %4784 = vperm.xlu0 %4783, %v4526
    %v4785 = vpop.permute.xlu0 %4784
    %4788 = vset.pattern.permute.xlu0 0
    %4789 = vperm.xlu0 %4788, %v4527
    %v4790 = vpop.permute.xlu0 %4789
    %4793 = vset.pattern.permute.xlu0 0
    %4794 = vperm.xlu0 %4793, %v4528
    %v4795 = vpop.permute.xlu0 %4794
    %4798 = vset.pattern.permute.xlu0 0
    %4799 = vperm.xlu0 %4798, %v4529
    %v4800 = vpop.permute.xlu0 %4799
    %4803 = vset.pattern.permute.xlu0 0
    %4804 = vperm.xlu0 %4803, %v4530
    %v4805 = vpop.permute.xlu0 %4804
    %4808 = vset.pattern.permute.xlu0 0
    %4809 = vperm.xlu0 %4808, %v4531
    %v4810 = vpop.permute.xlu0 %4809
    %4813 = vset.pattern.permute.xlu0 0
    %4814 = vperm.xlu0 %4813, %v4532
    %v4815 = vpop.permute.xlu0 %4814
    %4818 = vset.pattern.permute.xlu0 0
    %4819 = vperm.xlu0 %4818, %v4533
    %v4820 = vpop.permute.xlu0 %4819
    %4823 = vset.pattern.permute.xlu0 0
    %4824 = vperm.xlu0 %4823, %v4534
    %v4825 = vpop.permute.xlu0 %4824
    %4828 = vset.pattern.permute.xlu0 0
    %4829 = vperm.xlu0 %4828, %v4535
    %v4830 = vpop.permute.xlu0 %4829
    %4833 = vset.pattern.permute.xlu0 0
    %4834 = vperm.xlu0 %4833, %v4536
    %v4835 = vpop.permute.xlu0 %4834
    %4838 = vset.pattern.permute.xlu0 0
    %4839 = vperm.xlu0 %4838, %v4537
    %v4840 = vpop.permute.xlu0 %4839
    %4843 = vset.pattern.permute.xlu0 0
    %4844 = vperm.xlu0 %4843, %v4538
    %v4845 = vpop.permute.xlu0 %4844
    %4848 = vset.pattern.permute.xlu0 0
    %4849 = vperm.xlu0 %4848, %v4539
    %v4850 = vpop.permute.xlu0 %4849
    %4853 = vset.pattern.permute.xlu0 0
    %4854 = vperm.xlu0 %4853, %v4540
    %v4855 = vpop.permute.xlu0 %4854
    %4858 = vset.pattern.permute.xlu0 0
    %4859 = vperm.xlu0 %4858, %v4541
    %v4860 = vpop.permute.xlu0 %4859
    %v4862 = vadd.f32 %v4766, %v4785
    %v4863 = vadd.f32 %v4767, %v4790
    %v4864 = vadd.f32 %v4768, %v4795
    %v4865 = vadd.f32 %v4769, %v4800
    %v4866 = vadd.f32 %v4770, %v4805
    %v4867 = vadd.f32 %v4771, %v4810
    %v4868 = vadd.f32 %v4772, %v4815
    %v4869 = vadd.f32 %v4773, %v4820
    %v4870 = vadd.f32 %v4774, %v4825
    %v4871 = vadd.f32 %v4775, %v4830
    %v4872 = vadd.f32 %v4776, %v4835
    %v4873 = vadd.f32 %v4777, %v4840
    %v4874 = vadd.f32 %v4778, %v4845
    %v4875 = vadd.f32 %v4779, %v4850
    %v4876 = vadd.f32 %v4780, %v4855
    %v4877 = vadd.f32 %v4781, %v4860
    %v4878 = vmul.f32 %v1686, %v3949
    %v4879 = vmul.f32 %v1686, %v3955
    %v4880 = vmul.f32 %v1686, %v3961
    %v4881 = vmul.f32 %v1686, %v3967
    %v4882 = vmul.f32 %v1686, %v3973
    %v4883 = vmul.f32 %v1686, %v3979
    %v4884 = vmul.f32 %v1686, %v3985
    %v4885 = vmul.f32 %v1686, %v3991
    %v4886 = vmul.f32 %v1686, %v3997
    %v4887 = vmul.f32 %v1686, %v4003
    %v4888 = vmul.f32 %v1686, %v4009
    %v4889 = vmul.f32 %v1686, %v4015
    %v4890 = vmul.f32 %v1686, %v4021
    %v4891 = vmul.f32 %v1686, %v4027
    %v4892 = vmul.f32 %v1686, %v4033
    %v4893 = vmul.f32 %v1686, %v4039
    %v4894 = vmul.f32 %v1707, %v3951
    %v4895 = vmul.f32 %v1707, %v3957
    %v4896 = vmul.f32 %v1707, %v3963
    %v4897 = vmul.f32 %v1707, %v3969
    %v4898 = vmul.f32 %v1707, %v3975
    %v4899 = vmul.f32 %v1707, %v3981
    %v4900 = vmul.f32 %v1707, %v3987
    %v4901 = vmul.f32 %v1707, %v3993
    %v4902 = vmul.f32 %v1707, %v3999
    %v4903 = vmul.f32 %v1707, %v4005
    %v4904 = vmul.f32 %v1707, %v4011
    %v4905 = vmul.f32 %v1707, %v4017
    %v4906 = vmul.f32 %v1707, %v4023
    %v4907 = vmul.f32 %v1707, %v4029
    %v4908 = vmul.f32 %v1707, %v4035
    %v4909 = vmul.f32 %v1707, %v4041
    %v4910 = vadd.f32 %v4878, %v4894
    %v4911 = vadd.f32 %v4879, %v4895
    %v4912 = vadd.f32 %v4880, %v4896
    %v4913 = vadd.f32 %v4881, %v4897
    %v4914 = vadd.f32 %v4882, %v4898
    %v4915 = vadd.f32 %v4883, %v4899
    %v4916 = vadd.f32 %v4884, %v4900
    %v4917 = vadd.f32 %v4885, %v4901
    %v4918 = vadd.f32 %v4886, %v4902
    %v4919 = vadd.f32 %v4887, %v4903
    %v4920 = vadd.f32 %v4888, %v4904
    %v4921 = vadd.f32 %v4889, %v4905
    %v4922 = vadd.f32 %v4890, %v4906
    %v4923 = vadd.f32 %v4891, %v4907
    %v4924 = vadd.f32 %v4892, %v4908
    %v4925 = vadd.f32 %v4893, %v4909
    %v4926 = vmul.f32 %v1744, %v4110
    %v4927 = vmul.f32 %v1744, %v4116
    %v4928 = vmul.f32 %v1744, %v4122
    %v4929 = vmul.f32 %v1744, %v4128
    %v4930 = vmul.f32 %v1744, %v4134
    %v4931 = vmul.f32 %v1744, %v4140
    %v4932 = vmul.f32 %v1744, %v4146
    %v4933 = vmul.f32 %v1744, %v4152
    %v4934 = vmul.f32 %v1744, %v4158
    %v4935 = vmul.f32 %v1744, %v4164
    %v4936 = vmul.f32 %v1744, %v4170
    %v4937 = vmul.f32 %v1744, %v4176
    %v4938 = vmul.f32 %v1744, %v4182
    %v4939 = vmul.f32 %v1744, %v4188
    %v4940 = vmul.f32 %v1744, %v4194
    %v4941 = vmul.f32 %v1744, %v4200
    %v4942 = vadd.f32 %v4910, %v4926
    %v4943 = vadd.f32 %v4911, %v4927
    %v4944 = vadd.f32 %v4912, %v4928
    %v4945 = vadd.f32 %v4913, %v4929
    %v4946 = vadd.f32 %v4914, %v4930
    %v4947 = vadd.f32 %v4915, %v4931
    %v4948 = vadd.f32 %v4916, %v4932
    %v4949 = vadd.f32 %v4917, %v4933
    %v4950 = vadd.f32 %v4918, %v4934
    %v4951 = vadd.f32 %v4919, %v4935
    %v4952 = vadd.f32 %v4920, %v4936
    %v4953 = vadd.f32 %v4921, %v4937
    %v4954 = vadd.f32 %v4922, %v4938
    %v4955 = vadd.f32 %v4923, %v4939
    %v4956 = vadd.f32 %v4924, %v4940
    %v4957 = vadd.f32 %v4925, %v4941
    %v4958 = vmul.f32 %v1781, %v4112
    %v4959 = vmul.f32 %v1781, %v4118
    %v4960 = vmul.f32 %v1781, %v4124
    %v4961 = vmul.f32 %v1781, %v4130
    %v4962 = vmul.f32 %v1781, %v4136
    %v4963 = vmul.f32 %v1781, %v4142
    %v4964 = vmul.f32 %v1781, %v4148
    %v4965 = vmul.f32 %v1781, %v4154
    %v4966 = vmul.f32 %v1781, %v4160
    %v4967 = vmul.f32 %v1781, %v4166
    %v4968 = vmul.f32 %v1781, %v4172
    %v4969 = vmul.f32 %v1781, %v4178
    %v4970 = vmul.f32 %v1781, %v4184
    %v4971 = vmul.f32 %v1781, %v4190
    %v4972 = vmul.f32 %v1781, %v4196
    %v4973 = vmul.f32 %v1781, %v4202
    %v4974 = vadd.f32 %v4942, %v4958
    %v4975 = vadd.f32 %v4943, %v4959
    %v4976 = vadd.f32 %v4944, %v4960
    %v4977 = vadd.f32 %v4945, %v4961
    %v4978 = vadd.f32 %v4946, %v4962
    %v4979 = vadd.f32 %v4947, %v4963
    %v4980 = vadd.f32 %v4948, %v4964
    %v4981 = vadd.f32 %v4949, %v4965
    %v4982 = vadd.f32 %v4950, %v4966
    %v4983 = vadd.f32 %v4951, %v4967
    %v4984 = vadd.f32 %v4952, %v4968
    %v4985 = vadd.f32 %v4953, %v4969
    %v4986 = vadd.f32 %v4954, %v4970
    %v4987 = vadd.f32 %v4955, %v4971
    %v4988 = vadd.f32 %v4956, %v4972
    %v4989 = vadd.f32 %v4957, %v4973
    %v4990 = vmul.f32 %v1818, %v4271
    %v4991 = vmul.f32 %v1818, %v4277
    %v4992 = vmul.f32 %v1818, %v4283
    %v4993 = vmul.f32 %v1818, %v4289
    %v4994 = vmul.f32 %v1818, %v4295
    %v4995 = vmul.f32 %v1818, %v4301
    %v4996 = vmul.f32 %v1818, %v4307
    %v4997 = vmul.f32 %v1818, %v4313
    %v4998 = vmul.f32 %v1818, %v4319
    %v4999 = vmul.f32 %v1818, %v4325
    %v5000 = vmul.f32 %v1818, %v4331
    %v5001 = vmul.f32 %v1818, %v4337
    %v5002 = vmul.f32 %v1818, %v4343
    %v5003 = vmul.f32 %v1818, %v4349
    %v5004 = vmul.f32 %v1818, %v4355
    %v5005 = vmul.f32 %v1818, %v4361
    %v5006 = vadd.f32 %v4974, %v4990
    %v5007 = vadd.f32 %v4975, %v4991
    %v5008 = vadd.f32 %v4976, %v4992
    %v5009 = vadd.f32 %v4977, %v4993
    %v5010 = vadd.f32 %v4978, %v4994
    %v5011 = vadd.f32 %v4979, %v4995
    %v5012 = vadd.f32 %v4980, %v4996
    %v5013 = vadd.f32 %v4981, %v4997
    %v5014 = vadd.f32 %v4982, %v4998
    %v5015 = vadd.f32 %v4983, %v4999
    %v5016 = vadd.f32 %v4984, %v5000
    %v5017 = vadd.f32 %v4985, %v5001
    %v5018 = vadd.f32 %v4986, %v5002
    %v5019 = vadd.f32 %v4987, %v5003
    %v5020 = vadd.f32 %v4988, %v5004
    %v5021 = vadd.f32 %v4989, %v5005
    %v5022 = vmul.f32 %v1855, %v4273
    %v5023 = vmul.f32 %v1855, %v4279
    %v5024 = vmul.f32 %v1855, %v4285
    %v5025 = vmul.f32 %v1855, %v4291
    %v5026 = vmul.f32 %v1855, %v4297
    %v5027 = vmul.f32 %v1855, %v4303
    %v5028 = vmul.f32 %v1855, %v4309
    %v5029 = vmul.f32 %v1855, %v4315
    %v5030 = vmul.f32 %v1855, %v4321
    %v5031 = vmul.f32 %v1855, %v4327
    %v5032 = vmul.f32 %v1855, %v4333
    %v5033 = vmul.f32 %v1855, %v4339
    %v5034 = vmul.f32 %v1855, %v4345
    %v5035 = vmul.f32 %v1855, %v4351
    %v5036 = vmul.f32 %v1855, %v4357
    %v5037 = vmul.f32 %v1855, %v4363
    %v5038 = vadd.f32 %v5006, %v5022
    %v5039 = vadd.f32 %v5007, %v5023
    %v5040 = vadd.f32 %v5008, %v5024
    %v5041 = vadd.f32 %v5009, %v5025
    %v5042 = vadd.f32 %v5010, %v5026
    %v5043 = vadd.f32 %v5011, %v5027
    %v5044 = vadd.f32 %v5012, %v5028
    %v5045 = vadd.f32 %v5013, %v5029
    %v5046 = vadd.f32 %v5014, %v5030
    %v5047 = vadd.f32 %v5015, %v5031
    %v5048 = vadd.f32 %v5016, %v5032
    %v5049 = vadd.f32 %v5017, %v5033
    %v5050 = vadd.f32 %v5018, %v5034
    %v5051 = vadd.f32 %v5019, %v5035
    %v5052 = vadd.f32 %v5020, %v5036
    %v5053 = vadd.f32 %v5021, %v5037
    %v5054 = vmul.f32 %v1892, %v4432
    %v5055 = vmul.f32 %v1892, %v4438
    %v5056 = vmul.f32 %v1892, %v4444
    %v5057 = vmul.f32 %v1892, %v4450
    %v5058 = vmul.f32 %v1892, %v4456
    %v5059 = vmul.f32 %v1892, %v4462
    %v5060 = vmul.f32 %v1892, %v4468
    %v5061 = vmul.f32 %v1892, %v4474
    %v5062 = vmul.f32 %v1892, %v4480
    %v5063 = vmul.f32 %v1892, %v4486
    %v5064 = vmul.f32 %v1892, %v4492
    %v5065 = vmul.f32 %v1892, %v4498
    %v5066 = vmul.f32 %v1892, %v4504
    %v5067 = vmul.f32 %v1892, %v4510
    %v5068 = vmul.f32 %v1892, %v4516
    %v5069 = vmul.f32 %v1892, %v4522
    %v5070 = vadd.f32 %v5038, %v5054
    %v5071 = vadd.f32 %v5039, %v5055
    %v5072 = vadd.f32 %v5040, %v5056
    %v5073 = vadd.f32 %v5041, %v5057
    %v5074 = vadd.f32 %v5042, %v5058
    %v5075 = vadd.f32 %v5043, %v5059
    %v5076 = vadd.f32 %v5044, %v5060
    %v5077 = vadd.f32 %v5045, %v5061
    %v5078 = vadd.f32 %v5046, %v5062
    %v5079 = vadd.f32 %v5047, %v5063
    %v5080 = vadd.f32 %v5048, %v5064
    %v5081 = vadd.f32 %v5049, %v5065
    %v5082 = vadd.f32 %v5050, %v5066
    %v5083 = vadd.f32 %v5051, %v5067
    %v5084 = vadd.f32 %v5052, %v5068
    %v5085 = vadd.f32 %v5053, %v5069
    %v5086 = vmul.f32 %v1929, %v4434
    %v5087 = vmul.f32 %v1929, %v4440
    %v5088 = vmul.f32 %v1929, %v4446
    %v5089 = vmul.f32 %v1929, %v4452
    %v5090 = vmul.f32 %v1929, %v4458
    %v5091 = vmul.f32 %v1929, %v4464
    %v5092 = vmul.f32 %v1929, %v4470
    %v5093 = vmul.f32 %v1929, %v4476
    %v5094 = vmul.f32 %v1929, %v4482
    %v5095 = vmul.f32 %v1929, %v4488
    %v5096 = vmul.f32 %v1929, %v4494
    %v5097 = vmul.f32 %v1929, %v4500
    %v5098 = vmul.f32 %v1929, %v4506
    %v5099 = vmul.f32 %v1929, %v4512
    %v5100 = vmul.f32 %v1929, %v4518
    %v5101 = vmul.f32 %v1929, %v4524
    %v5102 = vadd.f32 %v5070, %v5086
    %v5103 = vadd.f32 %v5071, %v5087
    %v5104 = vadd.f32 %v5072, %v5088
    %v5105 = vadd.f32 %v5073, %v5089
    %v5106 = vadd.f32 %v5074, %v5090
    %v5107 = vadd.f32 %v5075, %v5091
    %v5108 = vadd.f32 %v5076, %v5092
    %v5109 = vadd.f32 %v5077, %v5093
    %v5110 = vadd.f32 %v5078, %v5094
    %v5111 = vadd.f32 %v5079, %v5095
    %v5112 = vadd.f32 %v5080, %v5096
    %v5113 = vadd.f32 %v5081, %v5097
    %v5114 = vadd.f32 %v5082, %v5098
    %v5115 = vadd.f32 %v5083, %v5099
    %v5116 = vadd.f32 %v5084, %v5100
    %v5117 = vadd.f32 %v5085, %v5101
    %v5118 = vadd.f32 %v5102, %v4785
    %v5119 = vadd.f32 %v5103, %v4790
    %v5120 = vadd.f32 %v5104, %v4795
    %v5121 = vadd.f32 %v5105, %v4800
    %v5122 = vadd.f32 %v5106, %v4805
    %v5123 = vadd.f32 %v5107, %v4810
    %v5124 = vadd.f32 %v5108, %v4815
    %v5125 = vadd.f32 %v5109, %v4820
    %v5126 = vadd.f32 %v5110, %v4825
    %v5127 = vadd.f32 %v5111, %v4830
    %v5128 = vadd.f32 %v5112, %v4835
    %v5129 = vadd.f32 %v5113, %v4840
    %v5130 = vadd.f32 %v5114, %v4845
    %v5131 = vadd.f32 %v5115, %v4850
    %v5132 = vadd.f32 %v5116, %v4855
    %v5133 = vadd.f32 %v5117, %v4860
    %v5134 = vmul.f32 %v1998, %v3949
    %v5135 = vmul.f32 %v1998, %v3955
    %v5136 = vmul.f32 %v1998, %v3961
    %v5137 = vmul.f32 %v1998, %v3967
    %v5138 = vmul.f32 %v1998, %v3973
    %v5139 = vmul.f32 %v1998, %v3979
    %v5140 = vmul.f32 %v1998, %v3985
    %v5141 = vmul.f32 %v1998, %v3991
    %v5142 = vmul.f32 %v1998, %v3997
    %v5143 = vmul.f32 %v1998, %v4003
    %v5144 = vmul.f32 %v1998, %v4009
    %v5145 = vmul.f32 %v1998, %v4015
    %v5146 = vmul.f32 %v1998, %v4021
    %v5147 = vmul.f32 %v1998, %v4027
    %v5148 = vmul.f32 %v1998, %v4033
    %v5149 = vmul.f32 %v1998, %v4039
    %v5150 = vmul.f32 %v2019, %v3951
    %v5151 = vmul.f32 %v2019, %v3957
    %v5152 = vmul.f32 %v2019, %v3963
    %v5153 = vmul.f32 %v2019, %v3969
    %v5154 = vmul.f32 %v2019, %v3975
    %v5155 = vmul.f32 %v2019, %v3981
    %v5156 = vmul.f32 %v2019, %v3987
    %v5157 = vmul.f32 %v2019, %v3993
    %v5158 = vmul.f32 %v2019, %v3999
    %v5159 = vmul.f32 %v2019, %v4005
    %v5160 = vmul.f32 %v2019, %v4011
    %v5161 = vmul.f32 %v2019, %v4017
    %v5162 = vmul.f32 %v2019, %v4023
    %v5163 = vmul.f32 %v2019, %v4029
    %v5164 = vmul.f32 %v2019, %v4035
    %v5165 = vmul.f32 %v2019, %v4041
    %v5166 = vadd.f32 %v5134, %v5150
    %v5167 = vadd.f32 %v5135, %v5151
    %v5168 = vadd.f32 %v5136, %v5152
    %v5169 = vadd.f32 %v5137, %v5153
    %v5170 = vadd.f32 %v5138, %v5154
    %v5171 = vadd.f32 %v5139, %v5155
    %v5172 = vadd.f32 %v5140, %v5156
    %v5173 = vadd.f32 %v5141, %v5157
    %v5174 = vadd.f32 %v5142, %v5158
    %v5175 = vadd.f32 %v5143, %v5159
    %v5176 = vadd.f32 %v5144, %v5160
    %v5177 = vadd.f32 %v5145, %v5161
    %v5178 = vadd.f32 %v5146, %v5162
    %v5179 = vadd.f32 %v5147, %v5163
    %v5180 = vadd.f32 %v5148, %v5164
    %v5181 = vadd.f32 %v5149, %v5165
    %v5182 = vmul.f32 %v2056, %v4110
    %v5183 = vmul.f32 %v2056, %v4116
    %v5184 = vmul.f32 %v2056, %v4122
    %v5185 = vmul.f32 %v2056, %v4128
    %v5186 = vmul.f32 %v2056, %v4134
    %v5187 = vmul.f32 %v2056, %v4140
    %v5188 = vmul.f32 %v2056, %v4146
    %v5189 = vmul.f32 %v2056, %v4152
    %v5190 = vmul.f32 %v2056, %v4158
    %v5191 = vmul.f32 %v2056, %v4164
    %v5192 = vmul.f32 %v2056, %v4170
    %v5193 = vmul.f32 %v2056, %v4176
    %v5194 = vmul.f32 %v2056, %v4182
    %v5195 = vmul.f32 %v2056, %v4188
    %v5196 = vmul.f32 %v2056, %v4194
    %v5197 = vmul.f32 %v2056, %v4200
    %v5198 = vadd.f32 %v5166, %v5182
    %v5199 = vadd.f32 %v5167, %v5183
    %v5200 = vadd.f32 %v5168, %v5184
    %v5201 = vadd.f32 %v5169, %v5185
    %v5202 = vadd.f32 %v5170, %v5186
    %v5203 = vadd.f32 %v5171, %v5187
    %v5204 = vadd.f32 %v5172, %v5188
    %v5205 = vadd.f32 %v5173, %v5189
    %v5206 = vadd.f32 %v5174, %v5190
    %v5207 = vadd.f32 %v5175, %v5191
    %v5208 = vadd.f32 %v5176, %v5192
    %v5209 = vadd.f32 %v5177, %v5193
    %v5210 = vadd.f32 %v5178, %v5194
    %v5211 = vadd.f32 %v5179, %v5195
    %v5212 = vadd.f32 %v5180, %v5196
    %v5213 = vadd.f32 %v5181, %v5197
    %v5214 = vmul.f32 %v2093, %v4112
    %v5215 = vmul.f32 %v2093, %v4118
    %v5216 = vmul.f32 %v2093, %v4124
    %v5217 = vmul.f32 %v2093, %v4130
    %v5218 = vmul.f32 %v2093, %v4136
    %v5219 = vmul.f32 %v2093, %v4142
    %v5220 = vmul.f32 %v2093, %v4148
    %v5221 = vmul.f32 %v2093, %v4154
    %v5222 = vmul.f32 %v2093, %v4160
    %v5223 = vmul.f32 %v2093, %v4166
    %v5224 = vmul.f32 %v2093, %v4172
    %v5225 = vmul.f32 %v2093, %v4178
    %v5226 = vmul.f32 %v2093, %v4184
    %v5227 = vmul.f32 %v2093, %v4190
    %v5228 = vmul.f32 %v2093, %v4196
    %v5229 = vmul.f32 %v2093, %v4202
    %v5230 = vadd.f32 %v5198, %v5214
    %v5231 = vadd.f32 %v5199, %v5215
    %v5232 = vadd.f32 %v5200, %v5216
    %v5233 = vadd.f32 %v5201, %v5217
    %v5234 = vadd.f32 %v5202, %v5218
    %v5235 = vadd.f32 %v5203, %v5219
    %v5236 = vadd.f32 %v5204, %v5220
    %v5237 = vadd.f32 %v5205, %v5221
    %v5238 = vadd.f32 %v5206, %v5222
    %v5239 = vadd.f32 %v5207, %v5223
    %v5240 = vadd.f32 %v5208, %v5224
    %v5241 = vadd.f32 %v5209, %v5225
    %v5242 = vadd.f32 %v5210, %v5226
    %v5243 = vadd.f32 %v5211, %v5227
    %v5244 = vadd.f32 %v5212, %v5228
    %v5245 = vadd.f32 %v5213, %v5229
    %v5246 = vmul.f32 %v2130, %v4271
    %v5247 = vmul.f32 %v2130, %v4277
    %v5248 = vmul.f32 %v2130, %v4283
    %v5249 = vmul.f32 %v2130, %v4289
    %v5250 = vmul.f32 %v2130, %v4295
    %v5251 = vmul.f32 %v2130, %v4301
    %v5252 = vmul.f32 %v2130, %v4307
    %v5253 = vmul.f32 %v2130, %v4313
    %v5254 = vmul.f32 %v2130, %v4319
    %v5255 = vmul.f32 %v2130, %v4325
    %v5256 = vmul.f32 %v2130, %v4331
    %v5257 = vmul.f32 %v2130, %v4337
    %v5258 = vmul.f32 %v2130, %v4343
    %v5259 = vmul.f32 %v2130, %v4349
    %v5260 = vmul.f32 %v2130, %v4355
    %v5261 = vmul.f32 %v2130, %v4361
    %v5262 = vadd.f32 %v5230, %v5246
    %v5263 = vadd.f32 %v5231, %v5247
    %v5264 = vadd.f32 %v5232, %v5248
    %v5265 = vadd.f32 %v5233, %v5249
    %v5266 = vadd.f32 %v5234, %v5250
    %v5267 = vadd.f32 %v5235, %v5251
    %v5268 = vadd.f32 %v5236, %v5252
    %v5269 = vadd.f32 %v5237, %v5253
    %v5270 = vadd.f32 %v5238, %v5254
    %v5271 = vadd.f32 %v5239, %v5255
    %v5272 = vadd.f32 %v5240, %v5256
    %v5273 = vadd.f32 %v5241, %v5257
    %v5274 = vadd.f32 %v5242, %v5258
    %v5275 = vadd.f32 %v5243, %v5259
    %v5276 = vadd.f32 %v5244, %v5260
    %v5277 = vadd.f32 %v5245, %v5261
    %v5278 = vmul.f32 %v2167, %v4273
    %v5279 = vmul.f32 %v2167, %v4279
    %v5280 = vmul.f32 %v2167, %v4285
    %v5281 = vmul.f32 %v2167, %v4291
    %v5282 = vmul.f32 %v2167, %v4297
    %v5283 = vmul.f32 %v2167, %v4303
    %v5284 = vmul.f32 %v2167, %v4309
    %v5285 = vmul.f32 %v2167, %v4315
    %v5286 = vmul.f32 %v2167, %v4321
    %v5287 = vmul.f32 %v2167, %v4327
    %v5288 = vmul.f32 %v2167, %v4333
    %v5289 = vmul.f32 %v2167, %v4339
    %v5290 = vmul.f32 %v2167, %v4345
    %v5291 = vmul.f32 %v2167, %v4351
    %v5292 = vmul.f32 %v2167, %v4357
    %v5293 = vmul.f32 %v2167, %v4363
    %v5294 = vadd.f32 %v5262, %v5278
    %v5295 = vadd.f32 %v5263, %v5279
    %v5296 = vadd.f32 %v5264, %v5280
    %v5297 = vadd.f32 %v5265, %v5281
    %v5298 = vadd.f32 %v5266, %v5282
    %v5299 = vadd.f32 %v5267, %v5283
    %v5300 = vadd.f32 %v5268, %v5284
    %v5301 = vadd.f32 %v5269, %v5285
    %v5302 = vadd.f32 %v5270, %v5286
    %v5303 = vadd.f32 %v5271, %v5287
    %v5304 = vadd.f32 %v5272, %v5288
    %v5305 = vadd.f32 %v5273, %v5289
    %v5306 = vadd.f32 %v5274, %v5290
    %v5307 = vadd.f32 %v5275, %v5291
    %v5308 = vadd.f32 %v5276, %v5292
    %v5309 = vadd.f32 %v5277, %v5293
    %v5310 = vmul.f32 %v2204, %v4432
    %v5311 = vmul.f32 %v2204, %v4438
    %v5312 = vmul.f32 %v2204, %v4444
    %v5313 = vmul.f32 %v2204, %v4450
    %v5314 = vmul.f32 %v2204, %v4456
    %v5315 = vmul.f32 %v2204, %v4462
    %v5316 = vmul.f32 %v2204, %v4468
    %v5317 = vmul.f32 %v2204, %v4474
    %v5318 = vmul.f32 %v2204, %v4480
    %v5319 = vmul.f32 %v2204, %v4486
    %v5320 = vmul.f32 %v2204, %v4492
    %v5321 = vmul.f32 %v2204, %v4498
    %v5322 = vmul.f32 %v2204, %v4504
    %v5323 = vmul.f32 %v2204, %v4510
    %v5324 = vmul.f32 %v2204, %v4516
    %v5325 = vmul.f32 %v2204, %v4522
    %v5326 = vadd.f32 %v5294, %v5310
    %v5327 = vadd.f32 %v5295, %v5311
    %v5328 = vadd.f32 %v5296, %v5312
    %v5329 = vadd.f32 %v5297, %v5313
    %v5330 = vadd.f32 %v5298, %v5314
    %v5331 = vadd.f32 %v5299, %v5315
    %v5332 = vadd.f32 %v5300, %v5316
    %v5333 = vadd.f32 %v5301, %v5317
    %v5334 = vadd.f32 %v5302, %v5318
    %v5335 = vadd.f32 %v5303, %v5319
    %v5336 = vadd.f32 %v5304, %v5320
    %v5337 = vadd.f32 %v5305, %v5321
    %v5338 = vadd.f32 %v5306, %v5322
    %v5339 = vadd.f32 %v5307, %v5323
    %v5340 = vadd.f32 %v5308, %v5324
    %v5341 = vadd.f32 %v5309, %v5325
    %v5342 = vmul.f32 %v2241, %v4434
    %v5343 = vmul.f32 %v2241, %v4440
    %v5344 = vmul.f32 %v2241, %v4446
    %v5345 = vmul.f32 %v2241, %v4452
    %v5346 = vmul.f32 %v2241, %v4458
    %v5347 = vmul.f32 %v2241, %v4464
    %v5348 = vmul.f32 %v2241, %v4470
    %v5349 = vmul.f32 %v2241, %v4476
    %v5350 = vmul.f32 %v2241, %v4482
    %v5351 = vmul.f32 %v2241, %v4488
    %v5352 = vmul.f32 %v2241, %v4494
    %v5353 = vmul.f32 %v2241, %v4500
    %v5354 = vmul.f32 %v2241, %v4506
    %v5355 = vmul.f32 %v2241, %v4512
    %v5356 = vmul.f32 %v2241, %v4518
    %v5357 = vmul.f32 %v2241, %v4524
    %v5358 = vadd.f32 %v5326, %v5342
    %v5359 = vadd.f32 %v5327, %v5343
    %v5360 = vadd.f32 %v5328, %v5344
    %v5361 = vadd.f32 %v5329, %v5345
    %v5362 = vadd.f32 %v5330, %v5346
    %v5363 = vadd.f32 %v5331, %v5347
    %v5364 = vadd.f32 %v5332, %v5348
    %v5365 = vadd.f32 %v5333, %v5349
    %v5366 = vadd.f32 %v5334, %v5350
    %v5367 = vadd.f32 %v5335, %v5351
    %v5368 = vadd.f32 %v5336, %v5352
    %v5369 = vadd.f32 %v5337, %v5353
    %v5370 = vadd.f32 %v5338, %v5354
    %v5371 = vadd.f32 %v5339, %v5355
    %v5372 = vadd.f32 %v5340, %v5356
    %v5373 = vadd.f32 %v5341, %v5357
    %v5374 = vadd.f32 %v5358, %v4785
    %v5375 = vadd.f32 %v5359, %v4790
    %v5376 = vadd.f32 %v5360, %v4795
    %v5377 = vadd.f32 %v5361, %v4800
    %v5378 = vadd.f32 %v5362, %v4805
    %v5379 = vadd.f32 %v5363, %v4810
    %v5380 = vadd.f32 %v5364, %v4815
    %v5381 = vadd.f32 %v5365, %v4820
    %v5382 = vadd.f32 %v5366, %v4825
    %v5383 = vadd.f32 %v5367, %v4830
    %v5384 = vadd.f32 %v5368, %v4835
    %v5385 = vadd.f32 %v5369, %v4840
    %v5386 = vadd.f32 %v5370, %v4845
    %v5387 = vadd.f32 %v5371, %v4850
    %v5388 = vadd.f32 %v5372, %v4855
    %v5389 = vadd.f32 %v5373, %v4860
    %v5390 = vmul.f32 %v2310, %v3949
    %v5391 = vmul.f32 %v2310, %v3955
    %v5392 = vmul.f32 %v2310, %v3961
    %v5393 = vmul.f32 %v2310, %v3967
    %v5394 = vmul.f32 %v2310, %v3973
    %v5395 = vmul.f32 %v2310, %v3979
    %v5396 = vmul.f32 %v2310, %v3985
    %v5397 = vmul.f32 %v2310, %v3991
    %v5398 = vmul.f32 %v2310, %v3997
    %v5399 = vmul.f32 %v2310, %v4003
    %v5400 = vmul.f32 %v2310, %v4009
    %v5401 = vmul.f32 %v2310, %v4015
    %v5402 = vmul.f32 %v2310, %v4021
    %v5403 = vmul.f32 %v2310, %v4027
    %v5404 = vmul.f32 %v2310, %v4033
    %v5405 = vmul.f32 %v2310, %v4039
    %v5406 = vmul.f32 %v2331, %v3951
    %v5407 = vmul.f32 %v2331, %v3957
    %v5408 = vmul.f32 %v2331, %v3963
    %v5409 = vmul.f32 %v2331, %v3969
    %v5410 = vmul.f32 %v2331, %v3975
    %v5411 = vmul.f32 %v2331, %v3981
    %v5412 = vmul.f32 %v2331, %v3987
    %v5413 = vmul.f32 %v2331, %v3993
    %v5414 = vmul.f32 %v2331, %v3999
    %v5415 = vmul.f32 %v2331, %v4005
    %v5416 = vmul.f32 %v2331, %v4011
    %v5417 = vmul.f32 %v2331, %v4017
    %v5418 = vmul.f32 %v2331, %v4023
    %v5419 = vmul.f32 %v2331, %v4029
    %v5420 = vmul.f32 %v2331, %v4035
    %v5421 = vmul.f32 %v2331, %v4041
    %v5422 = vadd.f32 %v5390, %v5406
    %v5423 = vadd.f32 %v5391, %v5407
    %v5424 = vadd.f32 %v5392, %v5408
    %v5425 = vadd.f32 %v5393, %v5409
    %v5426 = vadd.f32 %v5394, %v5410
    %v5427 = vadd.f32 %v5395, %v5411
    %v5428 = vadd.f32 %v5396, %v5412
    %v5429 = vadd.f32 %v5397, %v5413
    %v5430 = vadd.f32 %v5398, %v5414
    %v5431 = vadd.f32 %v5399, %v5415
    %v5432 = vadd.f32 %v5400, %v5416
    %v5433 = vadd.f32 %v5401, %v5417
    %v5434 = vadd.f32 %v5402, %v5418
    %v5435 = vadd.f32 %v5403, %v5419
    %v5436 = vadd.f32 %v5404, %v5420
    %v5437 = vadd.f32 %v5405, %v5421
    %v5438 = vmul.f32 %v2368, %v4110
    %v5439 = vmul.f32 %v2368, %v4116
    %v5440 = vmul.f32 %v2368, %v4122
    %v5441 = vmul.f32 %v2368, %v4128
    %v5442 = vmul.f32 %v2368, %v4134
    %v5443 = vmul.f32 %v2368, %v4140
    %v5444 = vmul.f32 %v2368, %v4146
    %v5445 = vmul.f32 %v2368, %v4152
    %v5446 = vmul.f32 %v2368, %v4158
    %v5447 = vmul.f32 %v2368, %v4164
    %v5448 = vmul.f32 %v2368, %v4170
    %v5449 = vmul.f32 %v2368, %v4176
    %v5450 = vmul.f32 %v2368, %v4182
    %v5451 = vmul.f32 %v2368, %v4188
    %v5452 = vmul.f32 %v2368, %v4194
    %v5453 = vmul.f32 %v2368, %v4200
    %v5454 = vadd.f32 %v5422, %v5438
    %v5455 = vadd.f32 %v5423, %v5439
    %v5456 = vadd.f32 %v5424, %v5440
    %v5457 = vadd.f32 %v5425, %v5441
    %v5458 = vadd.f32 %v5426, %v5442
    %v5459 = vadd.f32 %v5427, %v5443
    %v5460 = vadd.f32 %v5428, %v5444
    %v5461 = vadd.f32 %v5429, %v5445
    %v5462 = vadd.f32 %v5430, %v5446
    %v5463 = vadd.f32 %v5431, %v5447
    %v5464 = vadd.f32 %v5432, %v5448
    %v5465 = vadd.f32 %v5433, %v5449
    %v5466 = vadd.f32 %v5434, %v5450
    %v5467 = vadd.f32 %v5435, %v5451
    %v5468 = vadd.f32 %v5436, %v5452
    %v5469 = vadd.f32 %v5437, %v5453
    %v5470 = vmul.f32 %v2405, %v4112
    %v5471 = vmul.f32 %v2405, %v4118
    %v5472 = vmul.f32 %v2405, %v4124
    %v5473 = vmul.f32 %v2405, %v4130
    %v5474 = vmul.f32 %v2405, %v4136
    %v5475 = vmul.f32 %v2405, %v4142
    %v5476 = vmul.f32 %v2405, %v4148
    %v5477 = vmul.f32 %v2405, %v4154
    %v5478 = vmul.f32 %v2405, %v4160
    %v5479 = vmul.f32 %v2405, %v4166
    %v5480 = vmul.f32 %v2405, %v4172
    %v5481 = vmul.f32 %v2405, %v4178
    %v5482 = vmul.f32 %v2405, %v4184
    %v5483 = vmul.f32 %v2405, %v4190
    %v5484 = vmul.f32 %v2405, %v4196
    %v5485 = vmul.f32 %v2405, %v4202
    %v5486 = vadd.f32 %v5454, %v5470
    %v5487 = vadd.f32 %v5455, %v5471
    %v5488 = vadd.f32 %v5456, %v5472
    %v5489 = vadd.f32 %v5457, %v5473
    %v5490 = vadd.f32 %v5458, %v5474
    %v5491 = vadd.f32 %v5459, %v5475
    %v5492 = vadd.f32 %v5460, %v5476
    %v5493 = vadd.f32 %v5461, %v5477
    %v5494 = vadd.f32 %v5462, %v5478
    %v5495 = vadd.f32 %v5463, %v5479
    %v5496 = vadd.f32 %v5464, %v5480
    %v5497 = vadd.f32 %v5465, %v5481
    %v5498 = vadd.f32 %v5466, %v5482
    %v5499 = vadd.f32 %v5467, %v5483
    %v5500 = vadd.f32 %v5468, %v5484
    %v5501 = vadd.f32 %v5469, %v5485
    %v5502 = vmul.f32 %v2442, %v4271
    %v5503 = vmul.f32 %v2442, %v4277
    %v5504 = vmul.f32 %v2442, %v4283
    %v5505 = vmul.f32 %v2442, %v4289
    %v5506 = vmul.f32 %v2442, %v4295
    %v5507 = vmul.f32 %v2442, %v4301
    %v5508 = vmul.f32 %v2442, %v4307
    %v5509 = vmul.f32 %v2442, %v4313
    %v5510 = vmul.f32 %v2442, %v4319
    %v5511 = vmul.f32 %v2442, %v4325
    %v5512 = vmul.f32 %v2442, %v4331
    %v5513 = vmul.f32 %v2442, %v4337
    %v5514 = vmul.f32 %v2442, %v4343
    %v5515 = vmul.f32 %v2442, %v4349
    %v5516 = vmul.f32 %v2442, %v4355
    %v5517 = vmul.f32 %v2442, %v4361
    %v5518 = vadd.f32 %v5486, %v5502
    %v5519 = vadd.f32 %v5487, %v5503
    %v5520 = vadd.f32 %v5488, %v5504
    %v5521 = vadd.f32 %v5489, %v5505
    %v5522 = vadd.f32 %v5490, %v5506
    %v5523 = vadd.f32 %v5491, %v5507
    %v5524 = vadd.f32 %v5492, %v5508
    %v5525 = vadd.f32 %v5493, %v5509
    %v5526 = vadd.f32 %v5494, %v5510
    %v5527 = vadd.f32 %v5495, %v5511
    %v5528 = vadd.f32 %v5496, %v5512
    %v5529 = vadd.f32 %v5497, %v5513
    %v5530 = vadd.f32 %v5498, %v5514
    %v5531 = vadd.f32 %v5499, %v5515
    %v5532 = vadd.f32 %v5500, %v5516
    %v5533 = vadd.f32 %v5501, %v5517
    %v5534 = vmul.f32 %v2479, %v4273
    %v5535 = vmul.f32 %v2479, %v4279
    %v5536 = vmul.f32 %v2479, %v4285
    %v5537 = vmul.f32 %v2479, %v4291
    %v5538 = vmul.f32 %v2479, %v4297
    %v5539 = vmul.f32 %v2479, %v4303
    %v5540 = vmul.f32 %v2479, %v4309
    %v5541 = vmul.f32 %v2479, %v4315
    %v5542 = vmul.f32 %v2479, %v4321
    %v5543 = vmul.f32 %v2479, %v4327
    %v5544 = vmul.f32 %v2479, %v4333
    %v5545 = vmul.f32 %v2479, %v4339
    %v5546 = vmul.f32 %v2479, %v4345
    %v5547 = vmul.f32 %v2479, %v4351
    %v5548 = vmul.f32 %v2479, %v4357
    %v5549 = vmul.f32 %v2479, %v4363
    %v5550 = vadd.f32 %v5518, %v5534
    %v5551 = vadd.f32 %v5519, %v5535
    %v5552 = vadd.f32 %v5520, %v5536
    %v5553 = vadd.f32 %v5521, %v5537
    %v5554 = vadd.f32 %v5522, %v5538
    %v5555 = vadd.f32 %v5523, %v5539
    %v5556 = vadd.f32 %v5524, %v5540
    %v5557 = vadd.f32 %v5525, %v5541
    %v5558 = vadd.f32 %v5526, %v5542
    %v5559 = vadd.f32 %v5527, %v5543
    %v5560 = vadd.f32 %v5528, %v5544
    %v5561 = vadd.f32 %v5529, %v5545
    %v5562 = vadd.f32 %v5530, %v5546
    %v5563 = vadd.f32 %v5531, %v5547
    %v5564 = vadd.f32 %v5532, %v5548
    %v5565 = vadd.f32 %v5533, %v5549
    %v5566 = vmul.f32 %v2516, %v4432
    %v5567 = vmul.f32 %v2516, %v4438
    %v5568 = vmul.f32 %v2516, %v4444
    %v5569 = vmul.f32 %v2516, %v4450
    %v5570 = vmul.f32 %v2516, %v4456
    %v5571 = vmul.f32 %v2516, %v4462
    %v5572 = vmul.f32 %v2516, %v4468
    %v5573 = vmul.f32 %v2516, %v4474
    %v5574 = vmul.f32 %v2516, %v4480
    %v5575 = vmul.f32 %v2516, %v4486
    %v5576 = vmul.f32 %v2516, %v4492
    %v5577 = vmul.f32 %v2516, %v4498
    %v5578 = vmul.f32 %v2516, %v4504
    %v5579 = vmul.f32 %v2516, %v4510
    %v5580 = vmul.f32 %v2516, %v4516
    %v5581 = vmul.f32 %v2516, %v4522
    %v5582 = vadd.f32 %v5550, %v5566
    %v5583 = vadd.f32 %v5551, %v5567
    %v5584 = vadd.f32 %v5552, %v5568
    %v5585 = vadd.f32 %v5553, %v5569
    %v5586 = vadd.f32 %v5554, %v5570
    %v5587 = vadd.f32 %v5555, %v5571
    %v5588 = vadd.f32 %v5556, %v5572
    %v5589 = vadd.f32 %v5557, %v5573
    %v5590 = vadd.f32 %v5558, %v5574
    %v5591 = vadd.f32 %v5559, %v5575
    %v5592 = vadd.f32 %v5560, %v5576
    %v5593 = vadd.f32 %v5561, %v5577
    %v5594 = vadd.f32 %v5562, %v5578
    %v5595 = vadd.f32 %v5563, %v5579
    %v5596 = vadd.f32 %v5564, %v5580
    %v5597 = vadd.f32 %v5565, %v5581
    %v5598 = vmul.f32 %v2553, %v4434
    %v5599 = vmul.f32 %v2553, %v4440
    %v5600 = vmul.f32 %v2553, %v4446
    %v5601 = vmul.f32 %v2553, %v4452
    %v5602 = vmul.f32 %v2553, %v4458
    %v5603 = vmul.f32 %v2553, %v4464
    %v5604 = vmul.f32 %v2553, %v4470
    %v5605 = vmul.f32 %v2553, %v4476
    %v5606 = vmul.f32 %v2553, %v4482
    %v5607 = vmul.f32 %v2553, %v4488
    %v5608 = vmul.f32 %v2553, %v4494
    %v5609 = vmul.f32 %v2553, %v4500
    %v5610 = vmul.f32 %v2553, %v4506
    %v5611 = vmul.f32 %v2553, %v4512
    %v5612 = vmul.f32 %v2553, %v4518
    %v5613 = vmul.f32 %v2553, %v4524
    %v5614 = vadd.f32 %v5582, %v5598
    %v5615 = vadd.f32 %v5583, %v5599
    %v5616 = vadd.f32 %v5584, %v5600
    %v5617 = vadd.f32 %v5585, %v5601
    %v5618 = vadd.f32 %v5586, %v5602
    %v5619 = vadd.f32 %v5587, %v5603
    %v5620 = vadd.f32 %v5588, %v5604
    %v5621 = vadd.f32 %v5589, %v5605
    %v5622 = vadd.f32 %v5590, %v5606
    %v5623 = vadd.f32 %v5591, %v5607
    %v5624 = vadd.f32 %v5592, %v5608
    %v5625 = vadd.f32 %v5593, %v5609
    %v5626 = vadd.f32 %v5594, %v5610
    %v5627 = vadd.f32 %v5595, %v5611
    %v5628 = vadd.f32 %v5596, %v5612
    %v5629 = vadd.f32 %v5597, %v5613
    %v5630 = vadd.f32 %v5614, %v4785
    %v5631 = vadd.f32 %v5615, %v4790
    %v5632 = vadd.f32 %v5616, %v4795
    %v5633 = vadd.f32 %v5617, %v4800
    %v5634 = vadd.f32 %v5618, %v4805
    %v5635 = vadd.f32 %v5619, %v4810
    %v5636 = vadd.f32 %v5620, %v4815
    %v5637 = vadd.f32 %v5621, %v4820
    %v5638 = vadd.f32 %v5622, %v4825
    %v5639 = vadd.f32 %v5623, %v4830
    %v5640 = vadd.f32 %v5624, %v4835
    %v5641 = vadd.f32 %v5625, %v4840
    %v5642 = vadd.f32 %v5626, %v4845
    %v5643 = vadd.f32 %v5627, %v4850
    %v5644 = vadd.f32 %v5628, %v4855
    %v5645 = vadd.f32 %v5629, %v4860
    %v5646 = vmul.f32 %v2622, %v3949
    %v5647 = vmul.f32 %v2622, %v3955
    %v5648 = vmul.f32 %v2622, %v3961
    %v5649 = vmul.f32 %v2622, %v3967
    %v5650 = vmul.f32 %v2622, %v3973
    %v5651 = vmul.f32 %v2622, %v3979
    %v5652 = vmul.f32 %v2622, %v3985
    %v5653 = vmul.f32 %v2622, %v3991
    %v5654 = vmul.f32 %v2622, %v3997
    %v5655 = vmul.f32 %v2622, %v4003
    %v5656 = vmul.f32 %v2622, %v4009
    %v5657 = vmul.f32 %v2622, %v4015
    %v5658 = vmul.f32 %v2622, %v4021
    %v5659 = vmul.f32 %v2622, %v4027
    %v5660 = vmul.f32 %v2622, %v4033
    %v5661 = vmul.f32 %v2622, %v4039
    %v5662 = vmul.f32 %v2643, %v3951
    %v5663 = vmul.f32 %v2643, %v3957
    %v5664 = vmul.f32 %v2643, %v3963
    %v5665 = vmul.f32 %v2643, %v3969
    %v5666 = vmul.f32 %v2643, %v3975
    %v5667 = vmul.f32 %v2643, %v3981
    %v5668 = vmul.f32 %v2643, %v3987
    %v5669 = vmul.f32 %v2643, %v3993
    %v5670 = vmul.f32 %v2643, %v3999
    %v5671 = vmul.f32 %v2643, %v4005
    %v5672 = vmul.f32 %v2643, %v4011
    %v5673 = vmul.f32 %v2643, %v4017
    %v5674 = vmul.f32 %v2643, %v4023
    %v5675 = vmul.f32 %v2643, %v4029
    %v5676 = vmul.f32 %v2643, %v4035
    %v5677 = vmul.f32 %v2643, %v4041
    %v5678 = vadd.f32 %v5646, %v5662
    %v5679 = vadd.f32 %v5647, %v5663
    %v5680 = vadd.f32 %v5648, %v5664
    %v5681 = vadd.f32 %v5649, %v5665
    %v5682 = vadd.f32 %v5650, %v5666
    %v5683 = vadd.f32 %v5651, %v5667
    %v5684 = vadd.f32 %v5652, %v5668
    %v5685 = vadd.f32 %v5653, %v5669
    %v5686 = vadd.f32 %v5654, %v5670
    %v5687 = vadd.f32 %v5655, %v5671
    %v5688 = vadd.f32 %v5656, %v5672
    %v5689 = vadd.f32 %v5657, %v5673
    %v5690 = vadd.f32 %v5658, %v5674
    %v5691 = vadd.f32 %v5659, %v5675
    %v5692 = vadd.f32 %v5660, %v5676
    %v5693 = vadd.f32 %v5661, %v5677
    %v5694 = vmul.f32 %v2680, %v4110
    %v5695 = vmul.f32 %v2680, %v4116
    %v5696 = vmul.f32 %v2680, %v4122
    %v5697 = vmul.f32 %v2680, %v4128
    %v5698 = vmul.f32 %v2680, %v4134
    %v5699 = vmul.f32 %v2680, %v4140
    %v5700 = vmul.f32 %v2680, %v4146
    %v5701 = vmul.f32 %v2680, %v4152
    %v5702 = vmul.f32 %v2680, %v4158
    %v5703 = vmul.f32 %v2680, %v4164
    %v5704 = vmul.f32 %v2680, %v4170
    %v5705 = vmul.f32 %v2680, %v4176
    %v5706 = vmul.f32 %v2680, %v4182
    %v5707 = vmul.f32 %v2680, %v4188
    %v5708 = vmul.f32 %v2680, %v4194
    %v5709 = vmul.f32 %v2680, %v4200
    %v5710 = vadd.f32 %v5678, %v5694
    %v5711 = vadd.f32 %v5679, %v5695
    %v5712 = vadd.f32 %v5680, %v5696
    %v5713 = vadd.f32 %v5681, %v5697
    %v5714 = vadd.f32 %v5682, %v5698
    %v5715 = vadd.f32 %v5683, %v5699
    %v5716 = vadd.f32 %v5684, %v5700
    %v5717 = vadd.f32 %v5685, %v5701
    %v5718 = vadd.f32 %v5686, %v5702
    %v5719 = vadd.f32 %v5687, %v5703
    %v5720 = vadd.f32 %v5688, %v5704
    %v5721 = vadd.f32 %v5689, %v5705
    %v5722 = vadd.f32 %v5690, %v5706
    %v5723 = vadd.f32 %v5691, %v5707
    %v5724 = vadd.f32 %v5692, %v5708
    %v5725 = vadd.f32 %v5693, %v5709
    %v5726 = vmul.f32 %v2717, %v4112
    %v5727 = vmul.f32 %v2717, %v4118
    %v5728 = vmul.f32 %v2717, %v4124
    %v5729 = vmul.f32 %v2717, %v4130
    %v5730 = vmul.f32 %v2717, %v4136
    %v5731 = vmul.f32 %v2717, %v4142
    %v5732 = vmul.f32 %v2717, %v4148
    %v5733 = vmul.f32 %v2717, %v4154
    %v5734 = vmul.f32 %v2717, %v4160
    %v5735 = vmul.f32 %v2717, %v4166
    %v5736 = vmul.f32 %v2717, %v4172
    %v5737 = vmul.f32 %v2717, %v4178
    %v5738 = vmul.f32 %v2717, %v4184
    %v5739 = vmul.f32 %v2717, %v4190
    %v5740 = vmul.f32 %v2717, %v4196
    %v5741 = vmul.f32 %v2717, %v4202
    %v5742 = vadd.f32 %v5710, %v5726
    %v5743 = vadd.f32 %v5711, %v5727
    %v5744 = vadd.f32 %v5712, %v5728
    %v5745 = vadd.f32 %v5713, %v5729
    %v5746 = vadd.f32 %v5714, %v5730
    %v5747 = vadd.f32 %v5715, %v5731
    %v5748 = vadd.f32 %v5716, %v5732
    %v5749 = vadd.f32 %v5717, %v5733
    %v5750 = vadd.f32 %v5718, %v5734
    %v5751 = vadd.f32 %v5719, %v5735
    %v5752 = vadd.f32 %v5720, %v5736
    %v5753 = vadd.f32 %v5721, %v5737
    %v5754 = vadd.f32 %v5722, %v5738
    %v5755 = vadd.f32 %v5723, %v5739
    %v5756 = vadd.f32 %v5724, %v5740
    %v5757 = vadd.f32 %v5725, %v5741
    %v5758 = vmul.f32 %v2754, %v4271
    %v5759 = vmul.f32 %v2754, %v4277
    %v5760 = vmul.f32 %v2754, %v4283
    %v5761 = vmul.f32 %v2754, %v4289
    %v5762 = vmul.f32 %v2754, %v4295
    %v5763 = vmul.f32 %v2754, %v4301
    %v5764 = vmul.f32 %v2754, %v4307
    %v5765 = vmul.f32 %v2754, %v4313
    %v5766 = vmul.f32 %v2754, %v4319
    %v5767 = vmul.f32 %v2754, %v4325
    %v5768 = vmul.f32 %v2754, %v4331
    %v5769 = vmul.f32 %v2754, %v4337
    %v5770 = vmul.f32 %v2754, %v4343
    %v5771 = vmul.f32 %v2754, %v4349
    %v5772 = vmul.f32 %v2754, %v4355
    %v5773 = vmul.f32 %v2754, %v4361
    %v5774 = vadd.f32 %v5742, %v5758
    %v5775 = vadd.f32 %v5743, %v5759
    %v5776 = vadd.f32 %v5744, %v5760
    %v5777 = vadd.f32 %v5745, %v5761
    %v5778 = vadd.f32 %v5746, %v5762
    %v5779 = vadd.f32 %v5747, %v5763
    %v5780 = vadd.f32 %v5748, %v5764
    %v5781 = vadd.f32 %v5749, %v5765
    %v5782 = vadd.f32 %v5750, %v5766
    %v5783 = vadd.f32 %v5751, %v5767
    %v5784 = vadd.f32 %v5752, %v5768
    %v5785 = vadd.f32 %v5753, %v5769
    %v5786 = vadd.f32 %v5754, %v5770
    %v5787 = vadd.f32 %v5755, %v5771
    %v5788 = vadd.f32 %v5756, %v5772
    %v5789 = vadd.f32 %v5757, %v5773
    %v5790 = vmul.f32 %v2791, %v4273
    %v5791 = vmul.f32 %v2791, %v4279
    %v5792 = vmul.f32 %v2791, %v4285
    %v5793 = vmul.f32 %v2791, %v4291
    %v5794 = vmul.f32 %v2791, %v4297
    %v5795 = vmul.f32 %v2791, %v4303
    %v5796 = vmul.f32 %v2791, %v4309
    %v5797 = vmul.f32 %v2791, %v4315
    %v5798 = vmul.f32 %v2791, %v4321
    %v5799 = vmul.f32 %v2791, %v4327
    %v5800 = vmul.f32 %v2791, %v4333
    %v5801 = vmul.f32 %v2791, %v4339
    %v5802 = vmul.f32 %v2791, %v4345
    %v5803 = vmul.f32 %v2791, %v4351
    %v5804 = vmul.f32 %v2791, %v4357
    %v5805 = vmul.f32 %v2791, %v4363
    %v5806 = vadd.f32 %v5774, %v5790
    %v5807 = vadd.f32 %v5775, %v5791
    %v5808 = vadd.f32 %v5776, %v5792
    %v5809 = vadd.f32 %v5777, %v5793
    %v5810 = vadd.f32 %v5778, %v5794
    %v5811 = vadd.f32 %v5779, %v5795
    %v5812 = vadd.f32 %v5780, %v5796
    %v5813 = vadd.f32 %v5781, %v5797
    %v5814 = vadd.f32 %v5782, %v5798
    %v5815 = vadd.f32 %v5783, %v5799
    %v5816 = vadd.f32 %v5784, %v5800
    %v5817 = vadd.f32 %v5785, %v5801
    %v5818 = vadd.f32 %v5786, %v5802
    %v5819 = vadd.f32 %v5787, %v5803
    %v5820 = vadd.f32 %v5788, %v5804
    %v5821 = vadd.f32 %v5789, %v5805
    %v5822 = vmul.f32 %v2828, %v4432
    %v5823 = vmul.f32 %v2828, %v4438
    %v5824 = vmul.f32 %v2828, %v4444
    %v5825 = vmul.f32 %v2828, %v4450
    %v5826 = vmul.f32 %v2828, %v4456
    %v5827 = vmul.f32 %v2828, %v4462
    %v5828 = vmul.f32 %v2828, %v4468
    %v5829 = vmul.f32 %v2828, %v4474
    %v5830 = vmul.f32 %v2828, %v4480
    %v5831 = vmul.f32 %v2828, %v4486
    %v5832 = vmul.f32 %v2828, %v4492
    %v5833 = vmul.f32 %v2828, %v4498
    %v5834 = vmul.f32 %v2828, %v4504
    %v5835 = vmul.f32 %v2828, %v4510
    %v5836 = vmul.f32 %v2828, %v4516
    %v5837 = vmul.f32 %v2828, %v4522
    %v5838 = vadd.f32 %v5806, %v5822
    %v5839 = vadd.f32 %v5807, %v5823
    %v5840 = vadd.f32 %v5808, %v5824
    %v5841 = vadd.f32 %v5809, %v5825
    %v5842 = vadd.f32 %v5810, %v5826
    %v5843 = vadd.f32 %v5811, %v5827
    %v5844 = vadd.f32 %v5812, %v5828
    %v5845 = vadd.f32 %v5813, %v5829
    %v5846 = vadd.f32 %v5814, %v5830
    %v5847 = vadd.f32 %v5815, %v5831
    %v5848 = vadd.f32 %v5816, %v5832
    %v5849 = vadd.f32 %v5817, %v5833
    %v5850 = vadd.f32 %v5818, %v5834
    %v5851 = vadd.f32 %v5819, %v5835
    %v5852 = vadd.f32 %v5820, %v5836
    %v5853 = vadd.f32 %v5821, %v5837
    %v5854 = vmul.f32 %v2865, %v4434
    %v5855 = vmul.f32 %v2865, %v4440
    %v5856 = vmul.f32 %v2865, %v4446
    %v5857 = vmul.f32 %v2865, %v4452
    %v5858 = vmul.f32 %v2865, %v4458
    %v5859 = vmul.f32 %v2865, %v4464
    %v5860 = vmul.f32 %v2865, %v4470
    %v5861 = vmul.f32 %v2865, %v4476
    %v5862 = vmul.f32 %v2865, %v4482
    %v5863 = vmul.f32 %v2865, %v4488
    %v5864 = vmul.f32 %v2865, %v4494
    %v5865 = vmul.f32 %v2865, %v4500
    %v5866 = vmul.f32 %v2865, %v4506
    %v5867 = vmul.f32 %v2865, %v4512
    %v5868 = vmul.f32 %v2865, %v4518
    %v5869 = vmul.f32 %v2865, %v4524
    %v5870 = vadd.f32 %v5838, %v5854
    %v5871 = vadd.f32 %v5839, %v5855
    %v5872 = vadd.f32 %v5840, %v5856
    %v5873 = vadd.f32 %v5841, %v5857
    %v5874 = vadd.f32 %v5842, %v5858
    %v5875 = vadd.f32 %v5843, %v5859
    %v5876 = vadd.f32 %v5844, %v5860
    %v5877 = vadd.f32 %v5845, %v5861
    %v5878 = vadd.f32 %v5846, %v5862
    %v5879 = vadd.f32 %v5847, %v5863
    %v5880 = vadd.f32 %v5848, %v5864
    %v5881 = vadd.f32 %v5849, %v5865
    %v5882 = vadd.f32 %v5850, %v5866
    %v5883 = vadd.f32 %v5851, %v5867
    %v5884 = vadd.f32 %v5852, %v5868
    %v5885 = vadd.f32 %v5853, %v5869
    %v5886 = vadd.f32 %v5870, %v4785
    %v5887 = vadd.f32 %v5871, %v4790
    %v5888 = vadd.f32 %v5872, %v4795
    %v5889 = vadd.f32 %v5873, %v4800
    %v5890 = vadd.f32 %v5874, %v4805
    %v5891 = vadd.f32 %v5875, %v4810
    %v5892 = vadd.f32 %v5876, %v4815
    %v5893 = vadd.f32 %v5877, %v4820
    %v5894 = vadd.f32 %v5878, %v4825
    %v5895 = vadd.f32 %v5879, %v4830
    %v5896 = vadd.f32 %v5880, %v4835
    %v5897 = vadd.f32 %v5881, %v4840
    %v5898 = vadd.f32 %v5882, %v4845
    %v5899 = vadd.f32 %v5883, %v4850
    %v5900 = vadd.f32 %v5884, %v4855
    %v5901 = vadd.f32 %v5885, %v4860
    %v5902 = vmul.f32 %v2934, %v3949
    %v5903 = vmul.f32 %v2934, %v3955
    %v5904 = vmul.f32 %v2934, %v3961
    %v5905 = vmul.f32 %v2934, %v3967
    %v5906 = vmul.f32 %v2934, %v3973
    %v5907 = vmul.f32 %v2934, %v3979
    %v5908 = vmul.f32 %v2934, %v3985
    %v5909 = vmul.f32 %v2934, %v3991
    %v5910 = vmul.f32 %v2934, %v3997
    %v5911 = vmul.f32 %v2934, %v4003
    %v5912 = vmul.f32 %v2934, %v4009
    %v5913 = vmul.f32 %v2934, %v4015
    %v5914 = vmul.f32 %v2934, %v4021
    %v5915 = vmul.f32 %v2934, %v4027
    %v5916 = vmul.f32 %v2934, %v4033
    %v5917 = vmul.f32 %v2934, %v4039
    %v5918 = vmul.f32 %v2955, %v3951
    %v5919 = vmul.f32 %v2955, %v3957
    %v5920 = vmul.f32 %v2955, %v3963
    %v5921 = vmul.f32 %v2955, %v3969
    %v5922 = vmul.f32 %v2955, %v3975
    %v5923 = vmul.f32 %v2955, %v3981
    %v5924 = vmul.f32 %v2955, %v3987
    %v5925 = vmul.f32 %v2955, %v3993
    %v5926 = vmul.f32 %v2955, %v3999
    %v5927 = vmul.f32 %v2955, %v4005
    %v5928 = vmul.f32 %v2955, %v4011
    %v5929 = vmul.f32 %v2955, %v4017
    %v5930 = vmul.f32 %v2955, %v4023
    %v5931 = vmul.f32 %v2955, %v4029
    %v5932 = vmul.f32 %v2955, %v4035
    %v5933 = vmul.f32 %v2955, %v4041
    %v5934 = vadd.f32 %v5902, %v5918
    %v5935 = vadd.f32 %v5903, %v5919
    %v5936 = vadd.f32 %v5904, %v5920
    %v5937 = vadd.f32 %v5905, %v5921
    %v5938 = vadd.f32 %v5906, %v5922
    %v5939 = vadd.f32 %v5907, %v5923
    %v5940 = vadd.f32 %v5908, %v5924
    %v5941 = vadd.f32 %v5909, %v5925
    %v5942 = vadd.f32 %v5910, %v5926
    %v5943 = vadd.f32 %v5911, %v5927
    %v5944 = vadd.f32 %v5912, %v5928
    %v5945 = vadd.f32 %v5913, %v5929
    %v5946 = vadd.f32 %v5914, %v5930
    %v5947 = vadd.f32 %v5915, %v5931
    %v5948 = vadd.f32 %v5916, %v5932
    %v5949 = vadd.f32 %v5917, %v5933
    %v5950 = vmul.f32 %v2992, %v4110
    %v5951 = vmul.f32 %v2992, %v4116
    %v5952 = vmul.f32 %v2992, %v4122
    %v5953 = vmul.f32 %v2992, %v4128
    %v5954 = vmul.f32 %v2992, %v4134
    %v5955 = vmul.f32 %v2992, %v4140
    %v5956 = vmul.f32 %v2992, %v4146
    %v5957 = vmul.f32 %v2992, %v4152
    %v5958 = vmul.f32 %v2992, %v4158
    %v5959 = vmul.f32 %v2992, %v4164
    %v5960 = vmul.f32 %v2992, %v4170
    %v5961 = vmul.f32 %v2992, %v4176
    %v5962 = vmul.f32 %v2992, %v4182
    %v5963 = vmul.f32 %v2992, %v4188
    %v5964 = vmul.f32 %v2992, %v4194
    %v5965 = vmul.f32 %v2992, %v4200
    %v5966 = vadd.f32 %v5934, %v5950
    %v5967 = vadd.f32 %v5935, %v5951
    %v5968 = vadd.f32 %v5936, %v5952
    %v5969 = vadd.f32 %v5937, %v5953
    %v5970 = vadd.f32 %v5938, %v5954
    %v5971 = vadd.f32 %v5939, %v5955
    %v5972 = vadd.f32 %v5940, %v5956
    %v5973 = vadd.f32 %v5941, %v5957
    %v5974 = vadd.f32 %v5942, %v5958
    %v5975 = vadd.f32 %v5943, %v5959
    %v5976 = vadd.f32 %v5944, %v5960
    %v5977 = vadd.f32 %v5945, %v5961
    %v5978 = vadd.f32 %v5946, %v5962
    %v5979 = vadd.f32 %v5947, %v5963
    %v5980 = vadd.f32 %v5948, %v5964
    %v5981 = vadd.f32 %v5949, %v5965
    %v5982 = vmul.f32 %v3029, %v4112
    %v5983 = vmul.f32 %v3029, %v4118
    %v5984 = vmul.f32 %v3029, %v4124
    %v5985 = vmul.f32 %v3029, %v4130
    %v5986 = vmul.f32 %v3029, %v4136
    %v5987 = vmul.f32 %v3029, %v4142
    %v5988 = vmul.f32 %v3029, %v4148
    %v5989 = vmul.f32 %v3029, %v4154
    %v5990 = vmul.f32 %v3029, %v4160
    %v5991 = vmul.f32 %v3029, %v4166
    %v5992 = vmul.f32 %v3029, %v4172
    %v5993 = vmul.f32 %v3029, %v4178
    %v5994 = vmul.f32 %v3029, %v4184
    %v5995 = vmul.f32 %v3029, %v4190
    %v5996 = vmul.f32 %v3029, %v4196
    %v5997 = vmul.f32 %v3029, %v4202
    %v5998 = vadd.f32 %v5966, %v5982
    %v5999 = vadd.f32 %v5967, %v5983
    %v6000 = vadd.f32 %v5968, %v5984
    %v6001 = vadd.f32 %v5969, %v5985
    %v6002 = vadd.f32 %v5970, %v5986
    %v6003 = vadd.f32 %v5971, %v5987
    %v6004 = vadd.f32 %v5972, %v5988
    %v6005 = vadd.f32 %v5973, %v5989
    %v6006 = vadd.f32 %v5974, %v5990
    %v6007 = vadd.f32 %v5975, %v5991
    %v6008 = vadd.f32 %v5976, %v5992
    %v6009 = vadd.f32 %v5977, %v5993
    %v6010 = vadd.f32 %v5978, %v5994
    %v6011 = vadd.f32 %v5979, %v5995
    %v6012 = vadd.f32 %v5980, %v5996
    %v6013 = vadd.f32 %v5981, %v5997
    %v6014 = vmul.f32 %v3066, %v4271
    %v6015 = vmul.f32 %v3066, %v4277
    %v6016 = vmul.f32 %v3066, %v4283
    %v6017 = vmul.f32 %v3066, %v4289
    %v6018 = vmul.f32 %v3066, %v4295
    %v6019 = vmul.f32 %v3066, %v4301
    %v6020 = vmul.f32 %v3066, %v4307
    %v6021 = vmul.f32 %v3066, %v4313
    %v6022 = vmul.f32 %v3066, %v4319
    %v6023 = vmul.f32 %v3066, %v4325
    %v6024 = vmul.f32 %v3066, %v4331
    %v6025 = vmul.f32 %v3066, %v4337
    %v6026 = vmul.f32 %v3066, %v4343
    %v6027 = vmul.f32 %v3066, %v4349
    %v6028 = vmul.f32 %v3066, %v4355
    %v6029 = vmul.f32 %v3066, %v4361
    %v6030 = vadd.f32 %v5998, %v6014
    %v6031 = vadd.f32 %v5999, %v6015
    %v6032 = vadd.f32 %v6000, %v6016
    %v6033 = vadd.f32 %v6001, %v6017
    %v6034 = vadd.f32 %v6002, %v6018
    %v6035 = vadd.f32 %v6003, %v6019
    %v6036 = vadd.f32 %v6004, %v6020
    %v6037 = vadd.f32 %v6005, %v6021
    %v6038 = vadd.f32 %v6006, %v6022
    %v6039 = vadd.f32 %v6007, %v6023
    %v6040 = vadd.f32 %v6008, %v6024
    %v6041 = vadd.f32 %v6009, %v6025
    %v6042 = vadd.f32 %v6010, %v6026
    %v6043 = vadd.f32 %v6011, %v6027
    %v6044 = vadd.f32 %v6012, %v6028
    %v6045 = vadd.f32 %v6013, %v6029
    %v6046 = vmul.f32 %v3103, %v4273
    %v6047 = vmul.f32 %v3103, %v4279
    %v6048 = vmul.f32 %v3103, %v4285
    %v6049 = vmul.f32 %v3103, %v4291
    %v6050 = vmul.f32 %v3103, %v4297
    %v6051 = vmul.f32 %v3103, %v4303
    %v6052 = vmul.f32 %v3103, %v4309
    %v6053 = vmul.f32 %v3103, %v4315
    %v6054 = vmul.f32 %v3103, %v4321
    %v6055 = vmul.f32 %v3103, %v4327
    %v6056 = vmul.f32 %v3103, %v4333
    %v6057 = vmul.f32 %v3103, %v4339
    %v6058 = vmul.f32 %v3103, %v4345
    %v6059 = vmul.f32 %v3103, %v4351
    %v6060 = vmul.f32 %v3103, %v4357
    %v6061 = vmul.f32 %v3103, %v4363
    %v6062 = vadd.f32 %v6030, %v6046
    %v6063 = vadd.f32 %v6031, %v6047
    %v6064 = vadd.f32 %v6032, %v6048
    %v6065 = vadd.f32 %v6033, %v6049
    %v6066 = vadd.f32 %v6034, %v6050
    %v6067 = vadd.f32 %v6035, %v6051
    %v6068 = vadd.f32 %v6036, %v6052
    %v6069 = vadd.f32 %v6037, %v6053
    %v6070 = vadd.f32 %v6038, %v6054
    %v6071 = vadd.f32 %v6039, %v6055
    %v6072 = vadd.f32 %v6040, %v6056
    %v6073 = vadd.f32 %v6041, %v6057
    %v6074 = vadd.f32 %v6042, %v6058
    %v6075 = vadd.f32 %v6043, %v6059
    %v6076 = vadd.f32 %v6044, %v6060
    %v6077 = vadd.f32 %v6045, %v6061
    %v6078 = vmul.f32 %v3140, %v4432
    %v6079 = vmul.f32 %v3140, %v4438
    %v6080 = vmul.f32 %v3140, %v4444
    %v6081 = vmul.f32 %v3140, %v4450
    %v6082 = vmul.f32 %v3140, %v4456
    %v6083 = vmul.f32 %v3140, %v4462
    %v6084 = vmul.f32 %v3140, %v4468
    %v6085 = vmul.f32 %v3140, %v4474
    %v6086 = vmul.f32 %v3140, %v4480
    %v6087 = vmul.f32 %v3140, %v4486
    %v6088 = vmul.f32 %v3140, %v4492
    %v6089 = vmul.f32 %v3140, %v4498
    %v6090 = vmul.f32 %v3140, %v4504
    %v6091 = vmul.f32 %v3140, %v4510
    %v6092 = vmul.f32 %v3140, %v4516
    %v6093 = vmul.f32 %v3140, %v4522
    %v6094 = vadd.f32 %v6062, %v6078
    %v6095 = vadd.f32 %v6063, %v6079
    %v6096 = vadd.f32 %v6064, %v6080
    %v6097 = vadd.f32 %v6065, %v6081
    %v6098 = vadd.f32 %v6066, %v6082
    %v6099 = vadd.f32 %v6067, %v6083
    %v6100 = vadd.f32 %v6068, %v6084
    %v6101 = vadd.f32 %v6069, %v6085
    %v6102 = vadd.f32 %v6070, %v6086
    %v6103 = vadd.f32 %v6071, %v6087
    %v6104 = vadd.f32 %v6072, %v6088
    %v6105 = vadd.f32 %v6073, %v6089
    %v6106 = vadd.f32 %v6074, %v6090
    %v6107 = vadd.f32 %v6075, %v6091
    %v6108 = vadd.f32 %v6076, %v6092
    %v6109 = vadd.f32 %v6077, %v6093
    %v6110 = vmul.f32 %v3177, %v4434
    %v6111 = vmul.f32 %v3177, %v4440
    %v6112 = vmul.f32 %v3177, %v4446
    %v6113 = vmul.f32 %v3177, %v4452
    %v6114 = vmul.f32 %v3177, %v4458
    %v6115 = vmul.f32 %v3177, %v4464
    %v6116 = vmul.f32 %v3177, %v4470
    %v6117 = vmul.f32 %v3177, %v4476
    %v6118 = vmul.f32 %v3177, %v4482
    %v6119 = vmul.f32 %v3177, %v4488
    %v6120 = vmul.f32 %v3177, %v4494
    %v6121 = vmul.f32 %v3177, %v4500
    %v6122 = vmul.f32 %v3177, %v4506
    %v6123 = vmul.f32 %v3177, %v4512
    %v6124 = vmul.f32 %v3177, %v4518
    %v6125 = vmul.f32 %v3177, %v4524
    %v6126 = vadd.f32 %v6094, %v6110
    %v6127 = vadd.f32 %v6095, %v6111
    %v6128 = vadd.f32 %v6096, %v6112
    %v6129 = vadd.f32 %v6097, %v6113
    %v6130 = vadd.f32 %v6098, %v6114
    %v6131 = vadd.f32 %v6099, %v6115
    %v6132 = vadd.f32 %v6100, %v6116
    %v6133 = vadd.f32 %v6101, %v6117
    %v6134 = vadd.f32 %v6102, %v6118
    %v6135 = vadd.f32 %v6103, %v6119
    %v6136 = vadd.f32 %v6104, %v6120
    %v6137 = vadd.f32 %v6105, %v6121
    %v6138 = vadd.f32 %v6106, %v6122
    %v6139 = vadd.f32 %v6107, %v6123
    %v6140 = vadd.f32 %v6108, %v6124
    %v6141 = vadd.f32 %v6109, %v6125
    %v6142 = vadd.f32 %v6126, %v4785
    %v6143 = vadd.f32 %v6127, %v4790
    %v6144 = vadd.f32 %v6128, %v4795
    %v6145 = vadd.f32 %v6129, %v4800
    %v6146 = vadd.f32 %v6130, %v4805
    %v6147 = vadd.f32 %v6131, %v4810
    %v6148 = vadd.f32 %v6132, %v4815
    %v6149 = vadd.f32 %v6133, %v4820
    %v6150 = vadd.f32 %v6134, %v4825
    %v6151 = vadd.f32 %v6135, %v4830
    %v6152 = vadd.f32 %v6136, %v4835
    %v6153 = vadd.f32 %v6137, %v4840
    %v6154 = vadd.f32 %v6138, %v4845
    %v6155 = vadd.f32 %v6139, %v4850
    %v6156 = vadd.f32 %v6140, %v4855
    %v6157 = vadd.f32 %v6141, %v4860
    %v6158 = vmul.f32 %v3246, %v3949
    %v6159 = vmul.f32 %v3246, %v3955
    %v6160 = vmul.f32 %v3246, %v3961
    %v6161 = vmul.f32 %v3246, %v3967
    %v6162 = vmul.f32 %v3246, %v3973
    %v6163 = vmul.f32 %v3246, %v3979
    %v6164 = vmul.f32 %v3246, %v3985
    %v6165 = vmul.f32 %v3246, %v3991
    %v6166 = vmul.f32 %v3246, %v3997
    %v6167 = vmul.f32 %v3246, %v4003
    %v6168 = vmul.f32 %v3246, %v4009
    %v6169 = vmul.f32 %v3246, %v4015
    %v6170 = vmul.f32 %v3246, %v4021
    %v6171 = vmul.f32 %v3246, %v4027
    %v6172 = vmul.f32 %v3246, %v4033
    %v6173 = vmul.f32 %v3246, %v4039
    %v6174 = vmul.f32 %v3267, %v3951
    %v6175 = vmul.f32 %v3267, %v3957
    %v6176 = vmul.f32 %v3267, %v3963
    %v6177 = vmul.f32 %v3267, %v3969
    %v6178 = vmul.f32 %v3267, %v3975
    %v6179 = vmul.f32 %v3267, %v3981
    %v6180 = vmul.f32 %v3267, %v3987
    %v6181 = vmul.f32 %v3267, %v3993
    %v6182 = vmul.f32 %v3267, %v3999
    %v6183 = vmul.f32 %v3267, %v4005
    %v6184 = vmul.f32 %v3267, %v4011
    %v6185 = vmul.f32 %v3267, %v4017
    %v6186 = vmul.f32 %v3267, %v4023
    %v6187 = vmul.f32 %v3267, %v4029
    %v6188 = vmul.f32 %v3267, %v4035
    %v6189 = vmul.f32 %v3267, %v4041
    %v6190 = vadd.f32 %v6158, %v6174
    %v6191 = vadd.f32 %v6159, %v6175
    %v6192 = vadd.f32 %v6160, %v6176
    %v6193 = vadd.f32 %v6161, %v6177
    %v6194 = vadd.f32 %v6162, %v6178
    %v6195 = vadd.f32 %v6163, %v6179
    %v6196 = vadd.f32 %v6164, %v6180
    %v6197 = vadd.f32 %v6165, %v6181
    %v6198 = vadd.f32 %v6166, %v6182
    %v6199 = vadd.f32 %v6167, %v6183
    %v6200 = vadd.f32 %v6168, %v6184
    %v6201 = vadd.f32 %v6169, %v6185
    %v6202 = vadd.f32 %v6170, %v6186
    %v6203 = vadd.f32 %v6171, %v6187
    %v6204 = vadd.f32 %v6172, %v6188
    %v6205 = vadd.f32 %v6173, %v6189
    %v6206 = vmul.f32 %v3304, %v4110
    %v6207 = vmul.f32 %v3304, %v4116
    %v6208 = vmul.f32 %v3304, %v4122
    %v6209 = vmul.f32 %v3304, %v4128
    %v6210 = vmul.f32 %v3304, %v4134
    %v6211 = vmul.f32 %v3304, %v4140
    %v6212 = vmul.f32 %v3304, %v4146
    %v6213 = vmul.f32 %v3304, %v4152
    %v6214 = vmul.f32 %v3304, %v4158
    %v6215 = vmul.f32 %v3304, %v4164
    %v6216 = vmul.f32 %v3304, %v4170
    %v6217 = vmul.f32 %v3304, %v4176
    %v6218 = vmul.f32 %v3304, %v4182
    %v6219 = vmul.f32 %v3304, %v4188
    %v6220 = vmul.f32 %v3304, %v4194
    %v6221 = vmul.f32 %v3304, %v4200
    %v6222 = vadd.f32 %v6190, %v6206
    %v6223 = vadd.f32 %v6191, %v6207
    %v6224 = vadd.f32 %v6192, %v6208
    %v6225 = vadd.f32 %v6193, %v6209
    %v6226 = vadd.f32 %v6194, %v6210
    %v6227 = vadd.f32 %v6195, %v6211
    %v6228 = vadd.f32 %v6196, %v6212
    %v6229 = vadd.f32 %v6197, %v6213
    %v6230 = vadd.f32 %v6198, %v6214
    %v6231 = vadd.f32 %v6199, %v6215
    %v6232 = vadd.f32 %v6200, %v6216
    %v6233 = vadd.f32 %v6201, %v6217
    %v6234 = vadd.f32 %v6202, %v6218
    %v6235 = vadd.f32 %v6203, %v6219
    %v6236 = vadd.f32 %v6204, %v6220
    %v6237 = vadd.f32 %v6205, %v6221
    %v6238 = vmul.f32 %v3341, %v4112
    %v6239 = vmul.f32 %v3341, %v4118
    %v6240 = vmul.f32 %v3341, %v4124
    %v6241 = vmul.f32 %v3341, %v4130
    %v6242 = vmul.f32 %v3341, %v4136
    %v6243 = vmul.f32 %v3341, %v4142
    %v6244 = vmul.f32 %v3341, %v4148
    %v6245 = vmul.f32 %v3341, %v4154
    %v6246 = vmul.f32 %v3341, %v4160
    %v6247 = vmul.f32 %v3341, %v4166
    %v6248 = vmul.f32 %v3341, %v4172
    %v6249 = vmul.f32 %v3341, %v4178
    %v6250 = vmul.f32 %v3341, %v4184
    %v6251 = vmul.f32 %v3341, %v4190
    %v6252 = vmul.f32 %v3341, %v4196
    %v6253 = vmul.f32 %v3341, %v4202
    %v6254 = vadd.f32 %v6222, %v6238
    %v6255 = vadd.f32 %v6223, %v6239
    %v6256 = vadd.f32 %v6224, %v6240
    %v6257 = vadd.f32 %v6225, %v6241
    %v6258 = vadd.f32 %v6226, %v6242
    %v6259 = vadd.f32 %v6227, %v6243
    %v6260 = vadd.f32 %v6228, %v6244
    %v6261 = vadd.f32 %v6229, %v6245
    %v6262 = vadd.f32 %v6230, %v6246
    %v6263 = vadd.f32 %v6231, %v6247
    %v6264 = vadd.f32 %v6232, %v6248
    %v6265 = vadd.f32 %v6233, %v6249
    %v6266 = vadd.f32 %v6234, %v6250
    %v6267 = vadd.f32 %v6235, %v6251
    %v6268 = vadd.f32 %v6236, %v6252
    %v6269 = vadd.f32 %v6237, %v6253
    %v6270 = vmul.f32 %v3378, %v4271
    %v6271 = vmul.f32 %v3378, %v4277
    %v6272 = vmul.f32 %v3378, %v4283
    %v6273 = vmul.f32 %v3378, %v4289
    %v6274 = vmul.f32 %v3378, %v4295
    %v6275 = vmul.f32 %v3378, %v4301
    %v6276 = vmul.f32 %v3378, %v4307
    %v6277 = vmul.f32 %v3378, %v4313
    %v6278 = vmul.f32 %v3378, %v4319
    %v6279 = vmul.f32 %v3378, %v4325
    %v6280 = vmul.f32 %v3378, %v4331
    %v6281 = vmul.f32 %v3378, %v4337
    %v6282 = vmul.f32 %v3378, %v4343
    %v6283 = vmul.f32 %v3378, %v4349
    %v6284 = vmul.f32 %v3378, %v4355
    %v6285 = vmul.f32 %v3378, %v4361
    %v6286 = vadd.f32 %v6254, %v6270
    %v6287 = vadd.f32 %v6255, %v6271
    %v6288 = vadd.f32 %v6256, %v6272
    %v6289 = vadd.f32 %v6257, %v6273
    %v6290 = vadd.f32 %v6258, %v6274
    %v6291 = vadd.f32 %v6259, %v6275
    %v6292 = vadd.f32 %v6260, %v6276
    %v6293 = vadd.f32 %v6261, %v6277
    %v6294 = vadd.f32 %v6262, %v6278
    %v6295 = vadd.f32 %v6263, %v6279
    %v6296 = vadd.f32 %v6264, %v6280
    %v6297 = vadd.f32 %v6265, %v6281
    %v6298 = vadd.f32 %v6266, %v6282
    %v6299 = vadd.f32 %v6267, %v6283
    %v6300 = vadd.f32 %v6268, %v6284
    %v6301 = vadd.f32 %v6269, %v6285
    %v6302 = vmul.f32 %v3415, %v4273
    %v6303 = vmul.f32 %v3415, %v4279
    %v6304 = vmul.f32 %v3415, %v4285
    %v6305 = vmul.f32 %v3415, %v4291
    %v6306 = vmul.f32 %v3415, %v4297
    %v6307 = vmul.f32 %v3415, %v4303
    %v6308 = vmul.f32 %v3415, %v4309
    %v6309 = vmul.f32 %v3415, %v4315
    %v6310 = vmul.f32 %v3415, %v4321
    %v6311 = vmul.f32 %v3415, %v4327
    %v6312 = vmul.f32 %v3415, %v4333
    %v6313 = vmul.f32 %v3415, %v4339
    %v6314 = vmul.f32 %v3415, %v4345
    %v6315 = vmul.f32 %v3415, %v4351
    %v6316 = vmul.f32 %v3415, %v4357
    %v6317 = vmul.f32 %v3415, %v4363
    %v6318 = vadd.f32 %v6286, %v6302
    %v6319 = vadd.f32 %v6287, %v6303
    %v6320 = vadd.f32 %v6288, %v6304
    %v6321 = vadd.f32 %v6289, %v6305
    %v6322 = vadd.f32 %v6290, %v6306
    %v6323 = vadd.f32 %v6291, %v6307
    %v6324 = vadd.f32 %v6292, %v6308
    %v6325 = vadd.f32 %v6293, %v6309
    %v6326 = vadd.f32 %v6294, %v6310
    %v6327 = vadd.f32 %v6295, %v6311
    %v6328 = vadd.f32 %v6296, %v6312
    %v6329 = vadd.f32 %v6297, %v6313
    %v6330 = vadd.f32 %v6298, %v6314
    %v6331 = vadd.f32 %v6299, %v6315
    %v6332 = vadd.f32 %v6300, %v6316
    %v6333 = vadd.f32 %v6301, %v6317
    %v6334 = vmul.f32 %v3452, %v4432
    %v6335 = vmul.f32 %v3452, %v4438
    %v6336 = vmul.f32 %v3452, %v4444
    %v6337 = vmul.f32 %v3452, %v4450
    %v6338 = vmul.f32 %v3452, %v4456
    %v6339 = vmul.f32 %v3452, %v4462
    %v6340 = vmul.f32 %v3452, %v4468
    %v6341 = vmul.f32 %v3452, %v4474
    %v6342 = vmul.f32 %v3452, %v4480
    %v6343 = vmul.f32 %v3452, %v4486
    %v6344 = vmul.f32 %v3452, %v4492
    %v6345 = vmul.f32 %v3452, %v4498
    %v6346 = vmul.f32 %v3452, %v4504
    %v6347 = vmul.f32 %v3452, %v4510
    %v6348 = vmul.f32 %v3452, %v4516
    %v6349 = vmul.f32 %v3452, %v4522
    %v6350 = vadd.f32 %v6318, %v6334
    %v6351 = vadd.f32 %v6319, %v6335
    %v6352 = vadd.f32 %v6320, %v6336
    %v6353 = vadd.f32 %v6321, %v6337
    %v6354 = vadd.f32 %v6322, %v6338
    %v6355 = vadd.f32 %v6323, %v6339
    %v6356 = vadd.f32 %v6324, %v6340
    %v6357 = vadd.f32 %v6325, %v6341
    %v6358 = vadd.f32 %v6326, %v6342
    %v6359 = vadd.f32 %v6327, %v6343
    %v6360 = vadd.f32 %v6328, %v6344
    %v6361 = vadd.f32 %v6329, %v6345
    %v6362 = vadd.f32 %v6330, %v6346
    %v6363 = vadd.f32 %v6331, %v6347
    %v6364 = vadd.f32 %v6332, %v6348
    %v6365 = vadd.f32 %v6333, %v6349
    %v6366 = vmul.f32 %v3489, %v4434
    %v6367 = vmul.f32 %v3489, %v4440
    %v6368 = vmul.f32 %v3489, %v4446
    %v6369 = vmul.f32 %v3489, %v4452
    %v6370 = vmul.f32 %v3489, %v4458
    %v6371 = vmul.f32 %v3489, %v4464
    %v6372 = vmul.f32 %v3489, %v4470
    %v6373 = vmul.f32 %v3489, %v4476
    %v6374 = vmul.f32 %v3489, %v4482
    %v6375 = vmul.f32 %v3489, %v4488
    %v6376 = vmul.f32 %v3489, %v4494
    %v6377 = vmul.f32 %v3489, %v4500
    %v6378 = vmul.f32 %v3489, %v4506
    %v6379 = vmul.f32 %v3489, %v4512
    %v6380 = vmul.f32 %v3489, %v4518
    %v6381 = vmul.f32 %v3489, %v4524
    %v6382 = vadd.f32 %v6350, %v6366
    %v6383 = vadd.f32 %v6351, %v6367
    %v6384 = vadd.f32 %v6352, %v6368
    %v6385 = vadd.f32 %v6353, %v6369
    %v6386 = vadd.f32 %v6354, %v6370
    %v6387 = vadd.f32 %v6355, %v6371
    %v6388 = vadd.f32 %v6356, %v6372
    %v6389 = vadd.f32 %v6357, %v6373
    %v6390 = vadd.f32 %v6358, %v6374
    %v6391 = vadd.f32 %v6359, %v6375
    %v6392 = vadd.f32 %v6360, %v6376
    %v6393 = vadd.f32 %v6361, %v6377
    %v6394 = vadd.f32 %v6362, %v6378
    %v6395 = vadd.f32 %v6363, %v6379
    %v6396 = vadd.f32 %v6364, %v6380
    %v6397 = vadd.f32 %v6365, %v6381
    %v6398 = vadd.f32 %v6382, %v4785
    %v6399 = vadd.f32 %v6383, %v4790
    %v6400 = vadd.f32 %v6384, %v4795
    %v6401 = vadd.f32 %v6385, %v4800
    %v6402 = vadd.f32 %v6386, %v4805
    %v6403 = vadd.f32 %v6387, %v4810
    %v6404 = vadd.f32 %v6388, %v4815
    %v6405 = vadd.f32 %v6389, %v4820
    %v6406 = vadd.f32 %v6390, %v4825
    %v6407 = vadd.f32 %v6391, %v4830
    %v6408 = vadd.f32 %v6392, %v4835
    %v6409 = vadd.f32 %v6393, %v4840
    %v6410 = vadd.f32 %v6394, %v4845
    %v6411 = vadd.f32 %v6395, %v4850
    %v6412 = vadd.f32 %v6396, %v4855
    %v6413 = vadd.f32 %v6397, %v4860
    %v6414 = vmul.f32 %v3558, %v3949
    %v6415 = vmul.f32 %v3558, %v3955
    %v6416 = vmul.f32 %v3558, %v3961
    %v6417 = vmul.f32 %v3558, %v3967
    %v6418 = vmul.f32 %v3558, %v3973
    %v6419 = vmul.f32 %v3558, %v3979
    %v6420 = vmul.f32 %v3558, %v3985
    %v6421 = vmul.f32 %v3558, %v3991
    %v6422 = vmul.f32 %v3558, %v3997
    %v6423 = vmul.f32 %v3558, %v4003
    %v6424 = vmul.f32 %v3558, %v4009
    %v6425 = vmul.f32 %v3558, %v4015
    %v6426 = vmul.f32 %v3558, %v4021
    %v6427 = vmul.f32 %v3558, %v4027
    %v6428 = vmul.f32 %v3558, %v4033
    %v6429 = vmul.f32 %v3558, %v4039
    %v6430 = vmul.f32 %v3579, %v3951
    %v6431 = vmul.f32 %v3579, %v3957
    %v6432 = vmul.f32 %v3579, %v3963
    %v6433 = vmul.f32 %v3579, %v3969
    %v6434 = vmul.f32 %v3579, %v3975
    %v6435 = vmul.f32 %v3579, %v3981
    %v6436 = vmul.f32 %v3579, %v3987
    %v6437 = vmul.f32 %v3579, %v3993
    %v6438 = vmul.f32 %v3579, %v3999
    %v6439 = vmul.f32 %v3579, %v4005
    %v6440 = vmul.f32 %v3579, %v4011
    %v6441 = vmul.f32 %v3579, %v4017
    %v6442 = vmul.f32 %v3579, %v4023
    %v6443 = vmul.f32 %v3579, %v4029
    %v6444 = vmul.f32 %v3579, %v4035
    %v6445 = vmul.f32 %v3579, %v4041
    %v6446 = vadd.f32 %v6414, %v6430
    %v6447 = vadd.f32 %v6415, %v6431
    %v6448 = vadd.f32 %v6416, %v6432
    %v6449 = vadd.f32 %v6417, %v6433
    %v6450 = vadd.f32 %v6418, %v6434
    %v6451 = vadd.f32 %v6419, %v6435
    %v6452 = vadd.f32 %v6420, %v6436
    %v6453 = vadd.f32 %v6421, %v6437
    %v6454 = vadd.f32 %v6422, %v6438
    %v6455 = vadd.f32 %v6423, %v6439
    %v6456 = vadd.f32 %v6424, %v6440
    %v6457 = vadd.f32 %v6425, %v6441
    %v6458 = vadd.f32 %v6426, %v6442
    %v6459 = vadd.f32 %v6427, %v6443
    %v6460 = vadd.f32 %v6428, %v6444
    %v6461 = vadd.f32 %v6429, %v6445
    %v6462 = vmul.f32 %v3616, %v4110
    %v6463 = vmul.f32 %v3616, %v4116
    %v6464 = vmul.f32 %v3616, %v4122
    %v6465 = vmul.f32 %v3616, %v4128
    %v6466 = vmul.f32 %v3616, %v4134
    %v6467 = vmul.f32 %v3616, %v4140
    %v6468 = vmul.f32 %v3616, %v4146
    %v6469 = vmul.f32 %v3616, %v4152
    %v6470 = vmul.f32 %v3616, %v4158
    %v6471 = vmul.f32 %v3616, %v4164
    %v6472 = vmul.f32 %v3616, %v4170
    %v6473 = vmul.f32 %v3616, %v4176
    %v6474 = vmul.f32 %v3616, %v4182
    %v6475 = vmul.f32 %v3616, %v4188
    %v6476 = vmul.f32 %v3616, %v4194
    %v6477 = vmul.f32 %v3616, %v4200
    %v6478 = vadd.f32 %v6446, %v6462
    %v6479 = vadd.f32 %v6447, %v6463
    %v6480 = vadd.f32 %v6448, %v6464
    %v6481 = vadd.f32 %v6449, %v6465
    %v6482 = vadd.f32 %v6450, %v6466
    %v6483 = vadd.f32 %v6451, %v6467
    %v6484 = vadd.f32 %v6452, %v6468
    %v6485 = vadd.f32 %v6453, %v6469
    %v6486 = vadd.f32 %v6454, %v6470
    %v6487 = vadd.f32 %v6455, %v6471
    %v6488 = vadd.f32 %v6456, %v6472
    %v6489 = vadd.f32 %v6457, %v6473
    %v6490 = vadd.f32 %v6458, %v6474
    %v6491 = vadd.f32 %v6459, %v6475
    %v6492 = vadd.f32 %v6460, %v6476
    %v6493 = vadd.f32 %v6461, %v6477
    %v6494 = vmul.f32 %v3653, %v4112
    %v6495 = vmul.f32 %v3653, %v4118
    %v6496 = vmul.f32 %v3653, %v4124
    %v6497 = vmul.f32 %v3653, %v4130
    %v6498 = vmul.f32 %v3653, %v4136
    %v6499 = vmul.f32 %v3653, %v4142
    %v6500 = vmul.f32 %v3653, %v4148
    %v6501 = vmul.f32 %v3653, %v4154
    %v6502 = vmul.f32 %v3653, %v4160
    %v6503 = vmul.f32 %v3653, %v4166
    %v6504 = vmul.f32 %v3653, %v4172
    %v6505 = vmul.f32 %v3653, %v4178
    %v6506 = vmul.f32 %v3653, %v4184
    %v6507 = vmul.f32 %v3653, %v4190
    %v6508 = vmul.f32 %v3653, %v4196
    %v6509 = vmul.f32 %v3653, %v4202
    %v6510 = vadd.f32 %v6478, %v6494
    %v6511 = vadd.f32 %v6479, %v6495
    %v6512 = vadd.f32 %v6480, %v6496
    %v6513 = vadd.f32 %v6481, %v6497
    %v6514 = vadd.f32 %v6482, %v6498
    %v6515 = vadd.f32 %v6483, %v6499
    %v6516 = vadd.f32 %v6484, %v6500
    %v6517 = vadd.f32 %v6485, %v6501
    %v6518 = vadd.f32 %v6486, %v6502
    %v6519 = vadd.f32 %v6487, %v6503
    %v6520 = vadd.f32 %v6488, %v6504
    %v6521 = vadd.f32 %v6489, %v6505
    %v6522 = vadd.f32 %v6490, %v6506
    %v6523 = vadd.f32 %v6491, %v6507
    %v6524 = vadd.f32 %v6492, %v6508
    %v6525 = vadd.f32 %v6493, %v6509
    %v6526 = vmul.f32 %v3690, %v4271
    %v6527 = vmul.f32 %v3690, %v4277
    %v6528 = vmul.f32 %v3690, %v4283
    %v6529 = vmul.f32 %v3690, %v4289
    %v6530 = vmul.f32 %v3690, %v4295
    %v6531 = vmul.f32 %v3690, %v4301
    %v6532 = vmul.f32 %v3690, %v4307
    %v6533 = vmul.f32 %v3690, %v4313
    %v6534 = vmul.f32 %v3690, %v4319
    %v6535 = vmul.f32 %v3690, %v4325
    %v6536 = vmul.f32 %v3690, %v4331
    %v6537 = vmul.f32 %v3690, %v4337
    %v6538 = vmul.f32 %v3690, %v4343
    %v6539 = vmul.f32 %v3690, %v4349
    %v6540 = vmul.f32 %v3690, %v4355
    %v6541 = vmul.f32 %v3690, %v4361
    %v6542 = vadd.f32 %v6510, %v6526
    %v6543 = vadd.f32 %v6511, %v6527
    %v6544 = vadd.f32 %v6512, %v6528
    %v6545 = vadd.f32 %v6513, %v6529
    %v6546 = vadd.f32 %v6514, %v6530
    %v6547 = vadd.f32 %v6515, %v6531
    %v6548 = vadd.f32 %v6516, %v6532
    %v6549 = vadd.f32 %v6517, %v6533
    %v6550 = vadd.f32 %v6518, %v6534
    %v6551 = vadd.f32 %v6519, %v6535
    %v6552 = vadd.f32 %v6520, %v6536
    %v6553 = vadd.f32 %v6521, %v6537
    %v6554 = vadd.f32 %v6522, %v6538
    %v6555 = vadd.f32 %v6523, %v6539
    %v6556 = vadd.f32 %v6524, %v6540
    %v6557 = vadd.f32 %v6525, %v6541
    %v6558 = vmul.f32 %v3727, %v4273
    %v6559 = vmul.f32 %v3727, %v4279
    %v6560 = vmul.f32 %v3727, %v4285
    %v6561 = vmul.f32 %v3727, %v4291
    %v6562 = vmul.f32 %v3727, %v4297
    %v6563 = vmul.f32 %v3727, %v4303
    %v6564 = vmul.f32 %v3727, %v4309
    %v6565 = vmul.f32 %v3727, %v4315
    %v6566 = vmul.f32 %v3727, %v4321
    %v6567 = vmul.f32 %v3727, %v4327
    %v6568 = vmul.f32 %v3727, %v4333
    %v6569 = vmul.f32 %v3727, %v4339
    %v6570 = vmul.f32 %v3727, %v4345
    %v6571 = vmul.f32 %v3727, %v4351
    %v6572 = vmul.f32 %v3727, %v4357
    %v6573 = vmul.f32 %v3727, %v4363
    %v6574 = vadd.f32 %v6542, %v6558
    %v6575 = vadd.f32 %v6543, %v6559
    %v6576 = vadd.f32 %v6544, %v6560
    %v6577 = vadd.f32 %v6545, %v6561
    %v6578 = vadd.f32 %v6546, %v6562
    %v6579 = vadd.f32 %v6547, %v6563
    %v6580 = vadd.f32 %v6548, %v6564
    %v6581 = vadd.f32 %v6549, %v6565
    %v6582 = vadd.f32 %v6550, %v6566
    %v6583 = vadd.f32 %v6551, %v6567
    %v6584 = vadd.f32 %v6552, %v6568
    %v6585 = vadd.f32 %v6553, %v6569
    %v6586 = vadd.f32 %v6554, %v6570
    %v6587 = vadd.f32 %v6555, %v6571
    %v6588 = vadd.f32 %v6556, %v6572
    %v6589 = vadd.f32 %v6557, %v6573
    %v6590 = vmul.f32 %v3764, %v4432
    %v6591 = vmul.f32 %v3764, %v4438
    %v6592 = vmul.f32 %v3764, %v4444
    %v6593 = vmul.f32 %v3764, %v4450
    %v6594 = vmul.f32 %v3764, %v4456
    %v6595 = vmul.f32 %v3764, %v4462
    %v6596 = vmul.f32 %v3764, %v4468
    %v6597 = vmul.f32 %v3764, %v4474
    %v6598 = vmul.f32 %v3764, %v4480
    %v6599 = vmul.f32 %v3764, %v4486
    %v6600 = vmul.f32 %v3764, %v4492
    %v6601 = vmul.f32 %v3764, %v4498
    %v6602 = vmul.f32 %v3764, %v4504
    %v6603 = vmul.f32 %v3764, %v4510
    %v6604 = vmul.f32 %v3764, %v4516
    %v6605 = vmul.f32 %v3764, %v4522
    %v6606 = vadd.f32 %v6574, %v6590
    %v6607 = vadd.f32 %v6575, %v6591
    %v6608 = vadd.f32 %v6576, %v6592
    %v6609 = vadd.f32 %v6577, %v6593
    %v6610 = vadd.f32 %v6578, %v6594
    %v6611 = vadd.f32 %v6579, %v6595
    %v6612 = vadd.f32 %v6580, %v6596
    %v6613 = vadd.f32 %v6581, %v6597
    %v6614 = vadd.f32 %v6582, %v6598
    %v6615 = vadd.f32 %v6583, %v6599
    %v6616 = vadd.f32 %v6584, %v6600
    %v6617 = vadd.f32 %v6585, %v6601
    %v6618 = vadd.f32 %v6586, %v6602
    %v6619 = vadd.f32 %v6587, %v6603
    %v6620 = vadd.f32 %v6588, %v6604
    %v6621 = vadd.f32 %v6589, %v6605
    %v6622 = vmul.f32 %v3801, %v4434
    %v6623 = vmul.f32 %v3801, %v4440
    %v6624 = vmul.f32 %v3801, %v4446
    %v6625 = vmul.f32 %v3801, %v4452
    %v6626 = vmul.f32 %v3801, %v4458
    %v6627 = vmul.f32 %v3801, %v4464
    %v6628 = vmul.f32 %v3801, %v4470
    %v6629 = vmul.f32 %v3801, %v4476
    %v6630 = vmul.f32 %v3801, %v4482
    %v6631 = vmul.f32 %v3801, %v4488
    %v6632 = vmul.f32 %v3801, %v4494
    %v6633 = vmul.f32 %v3801, %v4500
    %v6634 = vmul.f32 %v3801, %v4506
    %v6635 = vmul.f32 %v3801, %v4512
    %v6636 = vmul.f32 %v3801, %v4518
    %v6637 = vmul.f32 %v3801, %v4524
    %v6638 = vadd.f32 %v6606, %v6622
    %v6639 = vadd.f32 %v6607, %v6623
    %v6640 = vadd.f32 %v6608, %v6624
    %v6641 = vadd.f32 %v6609, %v6625
    %v6642 = vadd.f32 %v6610, %v6626
    %v6643 = vadd.f32 %v6611, %v6627
    %v6644 = vadd.f32 %v6612, %v6628
    %v6645 = vadd.f32 %v6613, %v6629
    %v6646 = vadd.f32 %v6614, %v6630
    %v6647 = vadd.f32 %v6615, %v6631
    %v6648 = vadd.f32 %v6616, %v6632
    %v6649 = vadd.f32 %v6617, %v6633
    %v6650 = vadd.f32 %v6618, %v6634
    %v6651 = vadd.f32 %v6619, %v6635
    %v6652 = vadd.f32 %v6620, %v6636
    %v6653 = vadd.f32 %v6621, %v6637
    %v6654 = vadd.f32 %v6638, %v4785
    %v6655 = vadd.f32 %v6639, %v4790
    %v6656 = vadd.f32 %v6640, %v4795
    %v6657 = vadd.f32 %v6641, %v4800
    %v6658 = vadd.f32 %v6642, %v4805
    %v6659 = vadd.f32 %v6643, %v4810
    %v6660 = vadd.f32 %v6644, %v4815
    %v6661 = vadd.f32 %v6645, %v4820
    %v6662 = vadd.f32 %v6646, %v4825
    %v6663 = vadd.f32 %v6647, %v4830
    %v6664 = vadd.f32 %v6648, %v4835
    %v6665 = vadd.f32 %v6649, %v4840
    %v6666 = vadd.f32 %v6650, %v4845
    %v6667 = vadd.f32 %v6651, %v4850
    %v6668 = vadd.f32 %v6652, %v4855
    %v6669 = vadd.f32 %v6653, %v4860
    %v6670 = vld [vmem:[%s7] sm:$0xff]
    %v6671 = vld [vmem:[%s7 + $0x8] sm:$0xff]
    %v6672 = vld [vmem:[%s7 + $0x10] sm:$0xff]
    %v6673 = vld [vmem:[%s7 + $0x18] sm:$0xff]
    %v6674 = vld [vmem:[%s7 + $0x20] sm:$0xff]
    %v6675 = vld [vmem:[%s7 + $0x28] sm:$0xff]
    %v6676 = vld [vmem:[%s7 + $0x30] sm:$0xff]
    %v6677 = vld [vmem:[%s7 + $0x38] sm:$0xff]
    %v6678 = vld [vmem:[%s7 + $0x40] sm:$0xff]
    %v6679 = vld [vmem:[%s7 + $0x48] sm:$0xff]
    %v6680 = vld [vmem:[%s7 + $0x50] sm:$0xff]
    %v6681 = vld [vmem:[%s7 + $0x58] sm:$0xff]
    %v6682 = vld [vmem:[%s7 + $0x60] sm:$0xff]
    %v6683 = vld [vmem:[%s7 + $0x68] sm:$0xff]
    %v6684 = vld [vmem:[%s7 + $0x70] sm:$0xff]
    %v6685 = vld [vmem:[%s7 + $0x78] sm:$0xff]
    %v6686 = vld [vmem:[%s2] sm:$0x3f]
    %v6687 = vld [vmem:[%s8] sm:$0xff]
    %v6688 = vld [vmem:[%s8 + $0x8] sm:$0xff]
    %v6689 = vld [vmem:[%s8 + $0x10] sm:$0xff]
    %v6690 = vld [vmem:[%s8 + $0x18] sm:$0xff]
    %v6691 = vld [vmem:[%s8 + $0x20] sm:$0xff]
    %v6692 = vld [vmem:[%s8 + $0x28] sm:$0xff]
    %v6693 = vld [vmem:[%s8 + $0x30] sm:$0xff]
    %v6694 = vld [vmem:[%s8 + $0x38] sm:$0xff]
    %v6695 = vld [vmem:[%s8 + $0x40] sm:$0xff]
    %v6696 = vld [vmem:[%s8 + $0x48] sm:$0xff]
    %v6697 = vld [vmem:[%s8 + $0x50] sm:$0xff]
    %v6698 = vld [vmem:[%s8 + $0x58] sm:$0xff]
    %v6699 = vld [vmem:[%s8 + $0x60] sm:$0xff]
    %v6700 = vld [vmem:[%s8 + $0x68] sm:$0xff]
    %v6701 = vld [vmem:[%s8 + $0x70] sm:$0xff]
    %v6702 = vld [vmem:[%s8 + $0x78] sm:$0xff]
    %6704 = vset.pattern.permute.xlu0 0
    %6705 = vperm.xlu0 %6704, %v6687
    %v6706 = vpop.permute.xlu0 %6705
    %6709 = vset.pattern.permute.xlu0 0
    %6710 = vperm.xlu0 %6709, %v6688
    %v6711 = vpop.permute.xlu0 %6710
    %6714 = vset.pattern.permute.xlu0 0
    %6715 = vperm.xlu0 %6714, %v6689
    %v6716 = vpop.permute.xlu0 %6715
    %6719 = vset.pattern.permute.xlu0 0
    %6720 = vperm.xlu0 %6719, %v6690
    %v6721 = vpop.permute.xlu0 %6720
    %6724 = vset.pattern.permute.xlu0 0
    %6725 = vperm.xlu0 %6724, %v6691
    %v6726 = vpop.permute.xlu0 %6725
    %6729 = vset.pattern.permute.xlu0 0
    %6730 = vperm.xlu0 %6729, %v6692
    %v6731 = vpop.permute.xlu0 %6730
    %6734 = vset.pattern.permute.xlu0 0
    %6735 = vperm.xlu0 %6734, %v6693
    %v6736 = vpop.permute.xlu0 %6735
    %6739 = vset.pattern.permute.xlu0 0
    %6740 = vperm.xlu0 %6739, %v6694
    %v6741 = vpop.permute.xlu0 %6740
    %6744 = vset.pattern.permute.xlu0 0
    %6745 = vperm.xlu0 %6744, %v6695
    %v6746 = vpop.permute.xlu0 %6745
    %6749 = vset.pattern.permute.xlu0 0
    %6750 = vperm.xlu0 %6749, %v6696
    %v6751 = vpop.permute.xlu0 %6750
    %6754 = vset.pattern.permute.xlu0 0
    %6755 = vperm.xlu0 %6754, %v6697
    %v6756 = vpop.permute.xlu0 %6755
    %6759 = vset.pattern.permute.xlu0 0
    %6760 = vperm.xlu0 %6759, %v6698
    %v6761 = vpop.permute.xlu0 %6760
    %6764 = vset.pattern.permute.xlu0 0
    %6765 = vperm.xlu0 %6764, %v6699
    %v6766 = vpop.permute.xlu0 %6765
    %6769 = vset.pattern.permute.xlu0 0
    %6770 = vperm.xlu0 %6769, %v6700
    %v6771 = vpop.permute.xlu0 %6770
    %6774 = vset.pattern.permute.xlu0 0
    %6775 = vperm.xlu0 %6774, %v6701
    %v6776 = vpop.permute.xlu0 %6775
    %6779 = vset.pattern.permute.xlu0 0
    %6780 = vperm.xlu0 %6779, %v6702
    %v6781 = vpop.permute.xlu0 %6780
    %vm6783 = vcmask 48128
    %v6785 = vsel %vm6783, %v6670, 0
    %v6788 = vsel %vm6783, %v6671, 0
    %v6791 = vsel %vm6783, %v6672, 0
    %v6794 = vsel %vm6783, %v6673, 0
    %v6797 = vsel %vm6783, %v6674, 0
    %v6800 = vsel %vm6783, %v6675, 0
    %v6803 = vsel %vm6783, %v6676, 0
    %v6806 = vsel %vm6783, %v6677, 0
    %v6809 = vsel %vm6783, %v6678, 0
    %v6812 = vsel %vm6783, %v6679, 0
    %v6815 = vsel %vm6783, %v6680, 0
    %v6818 = vsel %vm6783, %v6681, 0
    %v6821 = vsel %vm6783, %v6682, 0
    %v6824 = vsel %vm6783, %v6683, 0
    %v6827 = vsel %vm6783, %v6684, 0
    %v6830 = vsel %vm6783, %v6685, 0
    %vm6832 = vcmask 1045504
    %v6834 = vsel %vm6832, %v6686, 0
    %6836 = vmatprep.subr.mxu0 0.0
    %6837 = vmatpush1.msra.mxu0 %v6834
    %6838 = vmatprep.subr.mxu0 0.0
    %6839 = vmatpush1.msra.mxu0 0.0
    %6840 = vmatprep.subr.mxu0 0.0
    %6841 = vmatpush1.msra.mxu0 0.0
    %6842 = vmatprep.subr.mxu0 0.0
    %6843 = vmatpush1.msra.mxu0 0.0
    %6844 = vmatprep.subr.mxu0 0.0
    %6845 = vmatpush1.msra.mxu0 0.0
    %6846 = vmatprep.subr.mxu0 0.0
    %6847 = vmatpush1.msra.mxu0 0.0
    %6848 = vmatprep.subr.mxu0 0.0
    %6849 = vmatpush1.msra.mxu0 0.0
    %6850 = vmatprep.subr.mxu0 0.0
    %6851 = vmatpush1.msra.mxu0 0.0
    %6852 = vmatprep.subr.mxu0 0.0
    %6853 = vmatpush1.msra.mxu0 0.0
    %6854 = vmatprep.subr.mxu0 0.0
    %6855 = vmatpush1.msra.mxu0 0.0
    %6856 = vmatprep.subr.mxu0 0.0
    %6857 = vmatpush1.msra.mxu0 0.0
    %6858 = vmatprep.subr.mxu0 0.0
    %6859 = vmatpush1.msra.mxu0 0.0
    %6860 = vmatprep.subr.mxu0 0.0
    %6861 = vmatpush1.msra.mxu0 0.0
    %6862 = vmatprep.subr.mxu0 0.0
    %6863 = vmatpush1.msra.mxu0 0.0
    %6864 = vmatprep.subr.mxu0 0.0
    %6865 = vmatpush1.msra.mxu0 0.0
    %6866 = vmatprep.subr.mxu0 0.0
    %6867 = vmatpush1.msra.mxu0 0.0
    %6868 = vmatprep.subr.mxu0 0.0
    %6869 = vmatpush1.msra.mxu0 0.0
    %6870 = vmatprep.subr.mxu0 0.0
    %6871 = vmatpush1.msra.mxu0 0.0
    %6872 = vmatprep.subr.mxu0 0.0
    %6873 = vmatpush1.msra.mxu0 0.0
    %6874 = vmatprep.subr.mxu0 0.0
    %6875 = vmatpush1.msra.mxu0 0.0
    %6876 = vmatprep.subr.mxu0 0.0
    %6877 = vmatpush1.msra.mxu0 0.0
    %6878 = vmatprep.subr.mxu0 0.0
    %6879 = vmatpush1.msra.mxu0 0.0
    %6880 = vmatprep.subr.mxu0 0.0
    %6881 = vmatpush1.msra.mxu0 0.0
    %6882 = vmatprep.subr.mxu0 0.0
    %6883 = vmatpush1.msra.mxu0 0.0
    %6884 = vmatprep.subr.mxu0 0.0
    %6885 = vmatpush1.msra.mxu0 0.0
    %6886 = vmatprep.subr.mxu0 0.0
    %6887 = vmatpush1.msra.mxu0 0.0
    %6888 = vmatprep.subr.mxu0 0.0
    %6889 = vmatpush1.msra.mxu0 0.0
    %6890 = vmatprep.subr.mxu0 0.0
    %6891 = vmatpush1.msra.mxu0 0.0
    %6892 = vmatprep.subr.mxu0 0.0
    %6893 = vmatpush1.msra.mxu0 0.0
    %6894 = vmatprep.subr.mxu0 0.0
    %6895 = vmatpush1.msra.mxu0 0.0
    %6896 = vmatprep.subr.mxu0 0.0
    %6897 = vmatpush1.msra.mxu0 0.0
    %6898 = vmatprep.subr.mxu0 0.0
    %6899 = vmatpush1.msra.mxu0 0.0
    %6900 = vmatprep.mubr.f32.mxu0 0.0
    %6901 = vmatmul.mubr.f32.gmra.mrb[0].mxu0 %v6785
    %v6902 = vpop.f32.mrb[0].mxu0
    %v6903 = vadd.f32 %v6706, %v6902
    %v6904 = vpop.f32.mrb[0].mxu0
    %6905 = vmatprep.mubr.f32.mxu0 0.0
    %6906 = vmatmul.mubr.f32.gmra.mrb[0].mxu0 %v6788
    %v6907 = vpop.f32.mrb[0].mxu0
    %v6908 = vadd.f32 %v6711, %v6907
    %v6909 = vpop.f32.mrb[0].mxu0
    %6910 = vmatprep.mubr.f32.mxu0 0.0
    %6911 = vmatmul.mubr.f32.gmra.mrb[0].mxu0 %v6791
    %v6912 = vpop.f32.mrb[0].mxu0
    %v6913 = vadd.f32 %v6716, %v6912
    %v6914 = vpop.f32.mrb[0].mxu0
    %6915 = vmatprep.mubr.f32.mxu0 0.0
    %6916 = vmatmul.mubr.f32.gmra.mrb[0].mxu0 %v6794
    %v6917 = vpop.f32.mrb[0].mxu0
    %v6918 = vadd.f32 %v6721, %v6917
    %v6919 = vpop.f32.mrb[0].mxu0
    %6920 = vmatprep.mubr.f32.mxu0 0.0
    %6921 = vmatmul.mubr.f32.gmra.mrb[0].mxu0 %v6797
    %v6922 = vpop.f32.mrb[0].mxu0
    %v6923 = vadd.f32 %v6726, %v6922
    %v6924 = vpop.f32.mrb[0].mxu0
    %6925 = vmatprep.mubr.f32.mxu0 0.0
    %6926 = vmatmul.mubr.f32.gmra.mrb[0].mxu0 %v6800
    %v6927 = vpop.f32.mrb[0].mxu0
    %v6928 = vadd.f32 %v6731, %v6927
    %v6929 = vpop.f32.mrb[0].mxu0
    %6930 = vmatprep.mubr.f32.mxu0 0.0
    %6931 = vmatmul.mubr.f32.gmra.mrb[0].mxu0 %v6803
    %v6932 = vpop.f32.mrb[0].mxu0
    %v6933 = vadd.f32 %v6736, %v6932
    %v6934 = vpop.f32.mrb[0].mxu0
    %6935 = vmatprep.mubr.f32.mxu0 0.0
    %6936 = vmatmul.mubr.f32.gmra.mrb[0].mxu0 %v6806
    %v6937 = vpop.f32.mrb[0].mxu0
    %v6938 = vadd.f32 %v6741, %v6937
    %v6939 = vpop.f32.mrb[0].mxu0
    %6940 = vmatprep.mubr.f32.mxu0 0.0
    %6941 = vmatmul.mubr.f32.gmra.mrb[0].mxu0 %v6809
    %v6942 = vpop.f32.mrb[0].mxu0
    %v6943 = vadd.f32 %v6746, %v6942
    %v6944 = vpop.f32.mrb[0].mxu0
    %6945 = vmatprep.mubr.f32.mxu0 0.0
    %6946 = vmatmul.mubr.f32.gmra.mrb[0].mxu0 %v6812
    %v6947 = vpop.f32.mrb[0].mxu0
    %v6948 = vadd.f32 %v6751, %v6947
    %v6949 = vpop.f32.mrb[0].mxu0
    %6950 = vmatprep.mubr.f32.mxu0 0.0
    %6951 = vmatmul.mubr.f32.gmra.mrb[0].mxu0 %v6815
    %v6952 = vpop.f32.mrb[0].mxu0
    %v6953 = vadd.f32 %v6756, %v6952
    %v6954 = vpop.f32.mrb[0].mxu0
    %6955 = vmatprep.mubr.f32.mxu0 0.0
    %6956 = vmatmul.mubr.f32.gmra.mrb[0].mxu0 %v6818
    %v6957 = vpop.f32.mrb[0].mxu0
    %v6958 = vadd.f32 %v6761, %v6957
    %v6959 = vpop.f32.mrb[0].mxu0
    %6960 = vmatprep.mubr.f32.mxu0 0.0
    %6961 = vmatmul.mubr.f32.gmra.mrb[0].mxu0 %v6821
    %v6962 = vpop.f32.mrb[0].mxu0
    %v6963 = vadd.f32 %v6766, %v6962
    %v6964 = vpop.f32.mrb[0].mxu0
    %6965 = vmatprep.mubr.f32.mxu0 0.0
    %6966 = vmatmul.mubr.f32.gmra.mrb[0].mxu0 %v6824
    %v6967 = vpop.f32.mrb[0].mxu0
    %v6968 = vadd.f32 %v6771, %v6967
    %v6969 = vpop.f32.mrb[0].mxu0
    %6970 = vmatprep.mubr.f32.mxu0 0.0
    %6971 = vmatmul.mubr.f32.gmra.mrb[0].mxu0 %v6827
    %v6972 = vpop.f32.mrb[0].mxu0
    %v6973 = vadd.f32 %v6776, %v6972
    %v6974 = vpop.f32.mrb[0].mxu0
    %6975 = vmatprep.mubr.f32.mxu0 0.0
    %6976 = vmatmul.mubr.f32.gmra.mrb[0].mxu0 %v6830
    %v6977 = vpop.f32.mrb[0].mxu0
    %v6978 = vadd.f32 %v6781, %v6977
    %v6979 = vpop.f32.mrb[0].mxu0
    %6980 = vdwg.mxu0
    %v6981 = vmax.f32 %v6903, 0.0
    %v6982 = vmax.f32 %v6908, 0.0
    %v6983 = vmax.f32 %v6913, 0.0
    %v6984 = vmax.f32 %v6918, 0.0
    %v6985 = vmax.f32 %v6923, 0.0
    %v6986 = vmax.f32 %v6928, 0.0
    %v6987 = vmax.f32 %v6933, 0.0
    %v6988 = vmax.f32 %v6938, 0.0
    %v6989 = vmax.f32 %v6943, 0.0
    %v6990 = vmax.f32 %v6948, 0.0
    %v6991 = vmax.f32 %v6953, 0.0
    %v6992 = vmax.f32 %v6958, 0.0
    %v6993 = vmax.f32 %v6963, 0.0
    %v6994 = vmax.f32 %v6968, 0.0
    %v6995 = vmax.f32 %v6973, 0.0
    %v6996 = vmax.f32 %v6978, 0.0
    %v6997 = vld [vmem:[%s9] sm:$0xff]
    %v6998 = vld [vmem:[%s9 + $0x8] sm:$0xff]
    %v6999 = vld [vmem:[%s9 + $0x10] sm:$0xff]
    %v7000 = vld [vmem:[%s9 + $0x18] sm:$0xff]
    %v7001 = vld [vmem:[%s9 + $0x20] sm:$0xff]
    %v7002 = vld [vmem:[%s9 + $0x28] sm:$0xff]
    %v7003 = vld [vmem:[%s9 + $0x30] sm:$0xff]
    %v7004 = vld [vmem:[%s9 + $0x38] sm:$0xff]
    %v7005 = vld [vmem:[%s9 + $0x40] sm:$0xff]
    %v7006 = vld [vmem:[%s9 + $0x48] sm:$0xff]
    %v7007 = vld [vmem:[%s9 + $0x50] sm:$0xff]
    %v7008 = vld [vmem:[%s9 + $0x58] sm:$0xff]
    %v7009 = vld [vmem:[%s9 + $0x60] sm:$0xff]
    %v7010 = vld [vmem:[%s9 + $0x68] sm:$0xff]
    %v7011 = vld [vmem:[%s9 + $0x70] sm:$0xff]
    %v7012 = vld [vmem:[%s9 + $0x78] sm:$0xff]
    %v7013 = vld [vmem:[%s10] sm:$0xff]
    %v7014 = vld [vmem:[%s10 + $0x8] sm:$0xff]
    %v7015 = vld [vmem:[%s10 + $0x10] sm:$0xff]
    %v7016 = vld [vmem:[%s10 + $0x18] sm:$0xff]
    %v7017 = vld [vmem:[%s10 + $0x20] sm:$0xff]
    %v7018 = vld [vmem:[%s10 + $0x28] sm:$0xff]
    %v7019 = vld [vmem:[%s10 + $0x30] sm:$0xff]
    %v7020 = vld [vmem:[%s10 + $0x38] sm:$0xff]
    %v7021 = vld [vmem:[%s10 + $0x40] sm:$0xff]
    %v7022 = vld [vmem:[%s10 + $0x48] sm:$0xff]
    %v7023 = vld [vmem:[%s10 + $0x50] sm:$0xff]
    %v7024 = vld [vmem:[%s10 + $0x58] sm:$0xff]
    %v7025 = vld [vmem:[%s10 + $0x60] sm:$0xff]
    %v7026 = vld [vmem:[%s10 + $0x68] sm:$0xff]
    %v7027 = vld [vmem:[%s10 + $0x70] sm:$0xff]
    %v7028 = vld [vmem:[%s10 + $0x78] sm:$0xff]
    %7030 = vset.pattern.permute.xlu0 0
    %7031 = vperm.xlu0 %7030, %v7013
    %v7032 = vpop.permute.xlu0 %7031
    %7035 = vset.pattern.permute.xlu0 0
    %7036 = vperm.xlu0 %7035, %v7014
    %v7037 = vpop.permute.xlu0 %7036
    %7040 = vset.pattern.permute.xlu0 0
    %7041 = vperm.xlu0 %7040, %v7015
    %v7042 = vpop.permute.xlu0 %7041
    %7045 = vset.pattern.permute.xlu0 0
    %7046 = vperm.xlu0 %7045, %v7016
    %v7047 = vpop.permute.xlu0 %7046
    %7050 = vset.pattern.permute.xlu0 0
    %7051 = vperm.xlu0 %7050, %v7017
    %v7052 = vpop.permute.xlu0 %7051
    %7055 = vset.pattern.permute.xlu0 0
    %7056 = vperm.xlu0 %7055, %v7018
    %v7057 = vpop.permute.xlu0 %7056
    %7060 = vset.pattern.permute.xlu0 0
    %7061 = vperm.xlu0 %7060, %v7019
    %v7062 = vpop.permute.xlu0 %7061
    %7065 = vset.pattern.permute.xlu0 0
    %7066 = vperm.xlu0 %7065, %v7020
    %v7067 = vpop.permute.xlu0 %7066
    %7070 = vset.pattern.permute.xlu0 0
    %7071 = vperm.xlu0 %7070, %v7021
    %v7072 = vpop.permute.xlu0 %7071
    %7075 = vset.pattern.permute.xlu0 0
    %7076 = vperm.xlu0 %7075, %v7022
    %v7077 = vpop.permute.xlu0 %7076
    %7080 = vset.pattern.permute.xlu0 0
    %7081 = vperm.xlu0 %7080, %v7023
    %v7082 = vpop.permute.xlu0 %7081
    %7085 = vset.pattern.permute.xlu0 0
    %7086 = vperm.xlu0 %7085, %v7024
    %v7087 = vpop.permute.xlu0 %7086
    %7090 = vset.pattern.permute.xlu0 0
    %7091 = vperm.xlu0 %7090, %v7025
    %v7092 = vpop.permute.xlu0 %7091
    %7095 = vset.pattern.permute.xlu0 0
    %7096 = vperm.xlu0 %7095, %v7026
    %v7097 = vpop.permute.xlu0 %7096
    %7100 = vset.pattern.permute.xlu0 0
    %7101 = vperm.xlu0 %7100, %v7027
    %v7102 = vpop.permute.xlu0 %7101
    %7105 = vset.pattern.permute.xlu0 0
    %7106 = vperm.xlu0 %7105, %v7028
    %v7107 = vpop.permute.xlu0 %7106
    %7109 = vmatprep.subr.mxu0 0.0
    %7110 = vmatpush1.msra.mxu0 %v6981
    %7111 = vmatprep.subr.mxu0 0.0
    %7112 = vmatpush1.msra.mxu0 %v6982
    %7113 = vmatprep.subr.mxu0 0.0
    %7114 = vmatpush1.msra.mxu0 %v6983
    %7115 = vmatprep.subr.mxu0 0.0
    %7116 = vmatpush1.msra.mxu0 %v6984
    %7117 = vmatprep.subr.mxu0 0.0
    %7118 = vmatpush1.msra.mxu0 %v6985
    %7119 = vmatprep.subr.mxu0 0.0
    %7120 = vmatpush1.msra.mxu0 %v6986
    %7121 = vmatprep.subr.mxu0 0.0
    %7122 = vmatpush1.msra.mxu0 %v6987
    %7123 = vmatprep.subr.mxu0 0.0
    %7124 = vmatpush1.msra.mxu0 %v6988
    %7125 = vmatprep.subr.mxu0 0.0
    %7126 = vmatpush1.msra.mxu0 %v6989
    %7127 = vmatprep.subr.mxu0 0.0
    %7128 = vmatpush1.msra.mxu0 %v6990
    %7129 = vmatprep.subr.mxu0 0.0
    %7130 = vmatpush1.msra.mxu0 %v6991
    %7131 = vmatprep.subr.mxu0 0.0
    %7132 = vmatpush1.msra.mxu0 %v6992
    %7133 = vmatprep.subr.mxu0 0.0
    %7134 = vmatpush1.msra.mxu0 %v6993
    %7135 = vmatprep.subr.mxu0 0.0
    %7136 = vmatpush1.msra.mxu0 %v6994
    %7137 = vmatprep.subr.mxu0 0.0
    %7138 = vmatpush1.msra.mxu0 %v6995
    %7139 = vmatprep.subr.mxu0 0.0
    %7140 = vmatpush1.msra.mxu0 %v6996
    %7141 = vmatprep.subr.mxu0 0.0
    %7142 = vmatpush1.msra.mxu0 0.0
    %7143 = vmatprep.subr.mxu0 0.0
    %7144 = vmatpush1.msra.mxu0 0.0
    %7145 = vmatprep.subr.mxu0 0.0
    %7146 = vmatpush1.msra.mxu0 0.0
    %7147 = vmatprep.subr.mxu0 0.0
    %7148 = vmatpush1.msra.mxu0 0.0
    %7149 = vmatprep.subr.mxu0 0.0
    %7150 = vmatpush1.msra.mxu0 0.0
    %7151 = vmatprep.subr.mxu0 0.0
    %7152 = vmatpush1.msra.mxu0 0.0
    %7153 = vmatprep.subr.mxu0 0.0
    %7154 = vmatpush1.msra.mxu0 0.0
    %7155 = vmatprep.subr.mxu0 0.0
    %7156 = vmatpush1.msra.mxu0 0.0
    %7157 = vmatprep.subr.mxu0 0.0
    %7158 = vmatpush1.msra.mxu0 0.0
    %7159 = vmatprep.subr.mxu0 0.0
    %7160 = vmatpush1.msra.mxu0 0.0
    %7161 = vmatprep.subr.mxu0 0.0
    %7162 = vmatpush1.msra.mxu0 0.0
    %7163 = vmatprep.subr.mxu0 0.0
    %7164 = vmatpush1.msra.mxu0 0.0
    %7165 = vmatprep.subr.mxu0 0.0
    %7166 = vmatpush1.msra.mxu0 0.0
    %7167 = vmatprep.subr.mxu0 0.0
    %7168 = vmatpush1.msra.mxu0 0.0
    %7169 = vmatprep.subr.mxu0 0.0
    %7170 = vmatpush1.msra.mxu0 0.0
    %7171 = vmatprep.subr.mxu0 0.0
    %7172 = vmatpush1.msra.mxu0 0.0
    %7173 = vmatprep.mubr.f32.mxu0 0.0
    %7174 = vmatmul.mubr.f32.gmra.mrb[0].mxu0 %v6997
    %v7175 = vpop.f32.mrb[0].mxu0
    %v7176 = vadd.f32 %v7032, %v7175
    %v7177 = vpop.f32.mrb[0].mxu0
    %7178 = vmatprep.mubr.f32.mxu0 0.0
    %7179 = vmatmul.mubr.f32.gmra.mrb[0].mxu0 %v6998
    %v7180 = vpop.f32.mrb[0].mxu0
    %v7181 = vadd.f32 %v7037, %v7180
    %v7182 = vpop.f32.mrb[0].mxu0
    %7183 = vmatprep.mubr.f32.mxu0 0.0
    %7184 = vmatmul.mubr.f32.gmra.mrb[0].mxu0 %v6999
    %v7185 = vpop.f32.mrb[0].mxu0
    %v7186 = vadd.f32 %v7042, %v7185
    %v7187 = vpop.f32.mrb[0].mxu0
    %7188 = vmatprep.mubr.f32.mxu0 0.0
    %7189 = vmatmul.mubr.f32.gmra.mrb[0].mxu0 %v7000
    %v7190 = vpop.f32.mrb[0].mxu0
    %v7191 = vadd.f32 %v7047, %v7190
    %v7192 = vpop.f32.mrb[0].mxu0
    %7193 = vmatprep.mubr.f32.mxu0 0.0
    %7194 = vmatmul.mubr.f32.gmra.mrb[0].mxu0 %v7001
    %v7195 = vpop.f32.mrb[0].mxu0
    %v7196 = vadd.f32 %v7052, %v7195
    %v7197 = vpop.f32.mrb[0].mxu0
    %7198 = vmatprep.mubr.f32.mxu0 0.0
    %7199 = vmatmul.mubr.f32.gmra.mrb[0].mxu0 %v7002
    %v7200 = vpop.f32.mrb[0].mxu0
    %v7201 = vadd.f32 %v7057, %v7200
    %v7202 = vpop.f32.mrb[0].mxu0
    %7203 = vmatprep.mubr.f32.mxu0 0.0
    %7204 = vmatmul.mubr.f32.gmra.mrb[0].mxu0 %v7003
    %v7205 = vpop.f32.mrb[0].mxu0
    %v7206 = vadd.f32 %v7062, %v7205
    %v7207 = vpop.f32.mrb[0].mxu0
    %7208 = vmatprep.mubr.f32.mxu0 0.0
    %7209 = vmatmul.mubr.f32.gmra.mrb[0].mxu0 %v7004
    %v7210 = vpop.f32.mrb[0].mxu0
    %v7211 = vadd.f32 %v7067, %v7210
    %v7212 = vpop.f32.mrb[0].mxu0
    %7213 = vmatprep.mubr.f32.mxu0 0.0
    %7214 = vmatmul.mubr.f32.gmra.mrb[0].mxu0 %v7005
    %v7215 = vpop.f32.mrb[0].mxu0
    %v7216 = vadd.f32 %v7072, %v7215
    %v7217 = vpop.f32.mrb[0].mxu0
    %7218 = vmatprep.mubr.f32.mxu0 0.0
    %7219 = vmatmul.mubr.f32.gmra.mrb[0].mxu0 %v7006
    %v7220 = vpop.f32.mrb[0].mxu0
    %v7221 = vadd.f32 %v7077, %v7220
    %v7222 = vpop.f32.mrb[0].mxu0
    %7223 = vmatprep.mubr.f32.mxu0 0.0
    %7224 = vmatmul.mubr.f32.gmra.mrb[0].mxu0 %v7007
    %v7225 = vpop.f32.mrb[0].mxu0
    %v7226 = vadd.f32 %v7082, %v7225
    %v7227 = vpop.f32.mrb[0].mxu0
    %7228 = vmatprep.mubr.f32.mxu0 0.0
    %7229 = vmatmul.mubr.f32.gmra.mrb[0].mxu0 %v7008
    %v7230 = vpop.f32.mrb[0].mxu0
    %v7231 = vadd.f32 %v7087, %v7230
    %v7232 = vpop.f32.mrb[0].mxu0
    %7233 = vmatprep.mubr.f32.mxu0 0.0
    %7234 = vmatmul.mubr.f32.gmra.mrb[0].mxu0 %v7009
    %v7235 = vpop.f32.mrb[0].mxu0
    %v7236 = vadd.f32 %v7092, %v7235
    %v7237 = vpop.f32.mrb[0].mxu0
    %7238 = vmatprep.mubr.f32.mxu0 0.0
    %7239 = vmatmul.mubr.f32.gmra.mrb[0].mxu0 %v7010
    %v7240 = vpop.f32.mrb[0].mxu0
    %v7241 = vadd.f32 %v7097, %v7240
    %v7242 = vpop.f32.mrb[0].mxu0
    %7243 = vmatprep.mubr.f32.mxu0 0.0
    %7244 = vmatmul.mubr.f32.gmra.mrb[0].mxu0 %v7011
    %v7245 = vpop.f32.mrb[0].mxu0
    %v7246 = vadd.f32 %v7102, %v7245
    %v7247 = vpop.f32.mrb[0].mxu0
    %7248 = vmatprep.mubr.f32.mxu0 0.0
    %7249 = vmatmul.mubr.f32.gmra.mrb[0].mxu0 %v7012
    %v7250 = vpop.f32.mrb[0].mxu0
    %v7251 = vadd.f32 %v7107, %v7250
    %v7252 = vpop.f32.mrb[0].mxu0
    %7253 = vdwg.mxu0
    %v7254 = vadd.f32 %v4862, %v7176
    %v7255 = vadd.f32 %v4863, %v7181
    %v7256 = vadd.f32 %v4864, %v7186
    %v7257 = vadd.f32 %v4865, %v7191
    %v7258 = vadd.f32 %v4866, %v7196
    %v7259 = vadd.f32 %v4867, %v7201
    %v7260 = vadd.f32 %v4868, %v7206
    %v7261 = vadd.f32 %v4869, %v7211
    %v7262 = vadd.f32 %v4870, %v7216
    %v7263 = vadd.f32 %v4871, %v7221
    %v7264 = vadd.f32 %v4872, %v7226
    %v7265 = vadd.f32 %v4873, %v7231
    %v7266 = vadd.f32 %v4874, %v7236
    %v7267 = vadd.f32 %v4875, %v7241
    %v7268 = vadd.f32 %v4876, %v7246
    %v7269 = vadd.f32 %v4877, %v7251
    %v7270 = vadd.f32 %v5118, %v7176
    %v7271 = vadd.f32 %v5119, %v7181
    %v7272 = vadd.f32 %v5120, %v7186
    %v7273 = vadd.f32 %v5121, %v7191
    %v7274 = vadd.f32 %v5122, %v7196
    %v7275 = vadd.f32 %v5123, %v7201
    %v7276 = vadd.f32 %v5124, %v7206
    %v7277 = vadd.f32 %v5125, %v7211
    %v7278 = vadd.f32 %v5126, %v7216
    %v7279 = vadd.f32 %v5127, %v7221
    %v7280 = vadd.f32 %v5128, %v7226
    %v7281 = vadd.f32 %v5129, %v7231
    %v7282 = vadd.f32 %v5130, %v7236
    %v7283 = vadd.f32 %v5131, %v7241
    %v7284 = vadd.f32 %v5132, %v7246
    %v7285 = vadd.f32 %v5133, %v7251
    %v7286 = vadd.f32 %v5374, %v7176
    %v7287 = vadd.f32 %v5375, %v7181
    %v7288 = vadd.f32 %v5376, %v7186
    %v7289 = vadd.f32 %v5377, %v7191
    %v7290 = vadd.f32 %v5378, %v7196
    %v7291 = vadd.f32 %v5379, %v7201
    %v7292 = vadd.f32 %v5380, %v7206
    %v7293 = vadd.f32 %v5381, %v7211
    %v7294 = vadd.f32 %v5382, %v7216
    %v7295 = vadd.f32 %v5383, %v7221
    %v7296 = vadd.f32 %v5384, %v7226
    %v7297 = vadd.f32 %v5385, %v7231
    %v7298 = vadd.f32 %v5386, %v7236
    %v7299 = vadd.f32 %v5387, %v7241
    %v7300 = vadd.f32 %v5388, %v7246
    %v7301 = vadd.f32 %v5389, %v7251
    %v7302 = vadd.f32 %v5630, %v7176
    %v7303 = vadd.f32 %v5631, %v7181
    %v7304 = vadd.f32 %v5632, %v7186
    %v7305 = vadd.f32 %v5633, %v7191
    %v7306 = vadd.f32 %v5634, %v7196
    %v7307 = vadd.f32 %v5635, %v7201
    %v7308 = vadd.f32 %v5636, %v7206
    %v7309 = vadd.f32 %v5637, %v7211
    %v7310 = vadd.f32 %v5638, %v7216
    %v7311 = vadd.f32 %v5639, %v7221
    %v7312 = vadd.f32 %v5640, %v7226
    %v7313 = vadd.f32 %v5641, %v7231
    %v7314 = vadd.f32 %v5642, %v7236
    %v7315 = vadd.f32 %v5643, %v7241
    %v7316 = vadd.f32 %v5644, %v7246
    %v7317 = vadd.f32 %v5645, %v7251
    %v7318 = vadd.f32 %v5886, %v7176
    %v7319 = vadd.f32 %v5887, %v7181
    %v7320 = vadd.f32 %v5888, %v7186
    %v7321 = vadd.f32 %v5889, %v7191
    %v7322 = vadd.f32 %v5890, %v7196
    %v7323 = vadd.f32 %v5891, %v7201
    %v7324 = vadd.f32 %v5892, %v7206
    %v7325 = vadd.f32 %v5893, %v7211
    %v7326 = vadd.f32 %v5894, %v7216
    %v7327 = vadd.f32 %v5895, %v7221
    %v7328 = vadd.f32 %v5896, %v7226
    %v7329 = vadd.f32 %v5897, %v7231
    %v7330 = vadd.f32 %v5898, %v7236
    %v7331 = vadd.f32 %v5899, %v7241
    %v7332 = vadd.f32 %v5900, %v7246
    %v7333 = vadd.f32 %v5901, %v7251
    %v7334 = vadd.f32 %v6142, %v7176
    %v7335 = vadd.f32 %v6143, %v7181
    %v7336 = vadd.f32 %v6144, %v7186
    %v7337 = vadd.f32 %v6145, %v7191
    %v7338 = vadd.f32 %v6146, %v7196
    %v7339 = vadd.f32 %v6147, %v7201
    %v7340 = vadd.f32 %v6148, %v7206
    %v7341 = vadd.f32 %v6149, %v7211
    %v7342 = vadd.f32 %v6150, %v7216
    %v7343 = vadd.f32 %v6151, %v7221
    %v7344 = vadd.f32 %v6152, %v7226
    %v7345 = vadd.f32 %v6153, %v7231
    %v7346 = vadd.f32 %v6154, %v7236
    %v7347 = vadd.f32 %v6155, %v7241
    %v7348 = vadd.f32 %v6156, %v7246
    %v7349 = vadd.f32 %v6157, %v7251
    %v7350 = vadd.f32 %v6398, %v7176
    %v7351 = vadd.f32 %v6399, %v7181
    %v7352 = vadd.f32 %v6400, %v7186
    %v7353 = vadd.f32 %v6401, %v7191
    %v7354 = vadd.f32 %v6402, %v7196
    %v7355 = vadd.f32 %v6403, %v7201
    %v7356 = vadd.f32 %v6404, %v7206
    %v7357 = vadd.f32 %v6405, %v7211
    %v7358 = vadd.f32 %v6406, %v7216
    %v7359 = vadd.f32 %v6407, %v7221
    %v7360 = vadd.f32 %v6408, %v7226
    %v7361 = vadd.f32 %v6409, %v7231
    %v7362 = vadd.f32 %v6410, %v7236
    %v7363 = vadd.f32 %v6411, %v7241
    %v7364 = vadd.f32 %v6412, %v7246
    %v7365 = vadd.f32 %v6413, %v7251
    %v7366 = vadd.f32 %v6654, %v7176
    %v7367 = vadd.f32 %v6655, %v7181
    %v7368 = vadd.f32 %v6656, %v7186
    %v7369 = vadd.f32 %v6657, %v7191
    %v7370 = vadd.f32 %v6658, %v7196
    %v7371 = vadd.f32 %v6659, %v7201
    %v7372 = vadd.f32 %v6660, %v7206
    %v7373 = vadd.f32 %v6661, %v7211
    %v7374 = vadd.f32 %v6662, %v7216
    %v7375 = vadd.f32 %v6663, %v7221
    %v7376 = vadd.f32 %v6664, %v7226
    %v7377 = vadd.f32 %v6665, %v7231
    %v7378 = vadd.f32 %v6666, %v7236
    %v7379 = vadd.f32 %v6667, %v7241
    %v7380 = vadd.f32 %v6668, %v7246
    %v7381 = vadd.f32 %v6669, %v7251
    %v7382 = vld [vmem:[%s11] sm:$0xff]
    %v7383 = vld [vmem:[%s11 + $0x8] sm:$0xff]
    %v7384 = vld [vmem:[%s11 + $0x10] sm:$0xff]
    %v7385 = vld [vmem:[%s11 + $0x18] sm:$0xff]
    %v7386 = vld [vmem:[%s11 + $0x20] sm:$0xff]
    %v7387 = vld [vmem:[%s11 + $0x28] sm:$0xff]
    %v7388 = vld [vmem:[%s11 + $0x30] sm:$0xff]
    %v7389 = vld [vmem:[%s11 + $0x38] sm:$0xff]
    %v7390 = vld [vmem:[%s11 + $0x40] sm:$0xff]
    %v7391 = vld [vmem:[%s11 + $0x48] sm:$0xff]
    %v7392 = vld [vmem:[%s11 + $0x50] sm:$0xff]
    %v7393 = vld [vmem:[%s11 + $0x58] sm:$0xff]
    %v7394 = vld [vmem:[%s11 + $0x60] sm:$0xff]
    %v7395 = vld [vmem:[%s11 + $0x68] sm:$0xff]
    %v7396 = vld [vmem:[%s11 + $0x70] sm:$0xff]
    %v7397 = vld [vmem:[%s11 + $0x78] sm:$0xff]
    %v7398 = vld [vmem:[%s12] sm:$0xff]
    %v7399 = vld [vmem:[%s12 + $0x8] sm:$0xff]
    %v7400 = vld [vmem:[%s12 + $0x10] sm:$0xff]
    %v7401 = vld [vmem:[%s12 + $0x18] sm:$0xff]
    %v7402 = vld [vmem:[%s12 + $0x20] sm:$0xff]
    %v7403 = vld [vmem:[%s12 + $0x28] sm:$0xff]
    %v7404 = vld [vmem:[%s12 + $0x30] sm:$0xff]
    %v7405 = vld [vmem:[%s12 + $0x38] sm:$0xff]
    %v7406 = vld [vmem:[%s12 + $0x40] sm:$0xff]
    %v7407 = vld [vmem:[%s12 + $0x48] sm:$0xff]
    %v7408 = vld [vmem:[%s12 + $0x50] sm:$0xff]
    %v7409 = vld [vmem:[%s12 + $0x58] sm:$0xff]
    %v7410 = vld [vmem:[%s12 + $0x60] sm:$0xff]
    %v7411 = vld [vmem:[%s12 + $0x68] sm:$0xff]
    %v7412 = vld [vmem:[%s12 + $0x70] sm:$0xff]
    %v7413 = vld [vmem:[%s12 + $0x78] sm:$0xff]
    %7415 = vset.pattern.permute.xlu0 0
    %7416 = vperm.xlu0 %7415, %v7398
    %v7417 = vpop.permute.xlu0 %7416
    %7420 = vset.pattern.permute.xlu0 0
    %7421 = vperm.xlu0 %7420, %v7399
    %v7422 = vpop.permute.xlu0 %7421
    %7425 = vset.pattern.permute.xlu0 0
    %7426 = vperm.xlu0 %7425, %v7400
    %v7427 = vpop.permute.xlu0 %7426
    %7430 = vset.pattern.permute.xlu0 0
    %7431 = vperm.xlu0 %7430, %v7401
    %v7432 = vpop.permute.xlu0 %7431
    %7435 = vset.pattern.permute.xlu0 0
    %7436 = vperm.xlu0 %7435, %v7402
    %v7437 = vpop.permute.xlu0 %7436
    %7440 = vset.pattern.permute.xlu0 0
    %7441 = vperm.xlu0 %7440, %v7403
    %v7442 = vpop.permute.xlu0 %7441
    %7445 = vset.pattern.permute.xlu0 0
    %7446 = vperm.xlu0 %7445, %v7404
    %v7447 = vpop.permute.xlu0 %7446
    %7450 = vset.pattern.permute.xlu0 0
    %7451 = vperm.xlu0 %7450, %v7405
    %v7452 = vpop.permute.xlu0 %7451
    %7455 = vset.pattern.permute.xlu0 0
    %7456 = vperm.xlu0 %7455, %v7406
    %v7457 = vpop.permute.xlu0 %7456
    %7460 = vset.pattern.permute.xlu0 0
    %7461 = vperm.xlu0 %7460, %v7407
    %v7462 = vpop.permute.xlu0 %7461
    %7465 = vset.pattern.permute.xlu0 0
    %7466 = vperm.xlu0 %7465, %v7408
    %v7467 = vpop.permute.xlu0 %7466
    %7470 = vset.pattern.permute.xlu0 0
    %7471 = vperm.xlu0 %7470, %v7409
    %v7472 = vpop.permute.xlu0 %7471
    %7475 = vset.pattern.permute.xlu0 0
    %7476 = vperm.xlu0 %7475, %v7410
    %v7477 = vpop.permute.xlu0 %7476
    %7480 = vset.pattern.permute.xlu0 0
    %7481 = vperm.xlu0 %7480, %v7411
    %v7482 = vpop.permute.xlu0 %7481
    %7485 = vset.pattern.permute.xlu0 0
    %7486 = vperm.xlu0 %7485, %v7412
    %v7487 = vpop.permute.xlu0 %7486
    %7490 = vset.pattern.permute.xlu0 0
    %7491 = vperm.xlu0 %7490, %v7413
    %v7492 = vpop.permute.xlu0 %7491
    %7494 = vmatprep.subr.mxu0 %v7270
    %7495 = vmatpush1.msra.mxu0 %v7254
    %7496 = vmatprep.subr.mxu0 %v7271
    %7497 = vmatpush1.msra.mxu0 %v7255
    %7498 = vmatprep.subr.mxu0 %v7272
    %7499 = vmatpush1.msra.mxu0 %v7256
    %7500 = vmatprep.subr.mxu0 %v7273
    %7501 = vmatpush1.msra.mxu0 %v7257
    %7502 = vmatprep.subr.mxu0 %v7274
    %7503 = vmatpush1.msra.mxu0 %v7258
    %7504 = vmatprep.subr.mxu0 %v7275
    %7505 = vmatpush1.msra.mxu0 %v7259
    %7506 = vmatprep.subr.mxu0 %v7276
    %7507 = vmatpush1.msra.mxu0 %v7260
    %7508 = vmatprep.subr.mxu0 %v7277
    %7509 = vmatpush1.msra.mxu0 %v7261
    %7510 = vmatprep.subr.mxu0 %v7278
    %7511 = vmatpush1.msra.mxu0 %v7262
    %7512 = vmatprep.subr.mxu0 %v7279
    %7513 = vmatpush1.msra.mxu0 %v7263
    %7514 = vmatprep.subr.mxu0 %v7280
    %7515 = vmatpush1.msra.mxu0 %v7264
    %7516 = vmatprep.subr.mxu0 %v7281
    %7517 = vmatpush1.msra.mxu0 %v7265
    %7518 = vmatprep.subr.mxu0 %v7282
    %7519 = vmatpush1.msra.mxu0 %v7266
    %7520 = vmatprep.subr.mxu0 %v7283
    %7521 = vmatpush1.msra.mxu0 %v7267
    %7522 = vmatprep.subr.mxu0 %v7284
    %7523 = vmatpush1.msra.mxu0 %v7268
    %7524 = vmatprep.subr.mxu0 %v7285
    %7525 = vmatpush1.msra.mxu0 %v7269
    %7526 = vmatprep.subr.mxu0 0.0
    %7527 = vmatpush1.msra.mxu0 0.0
    %7528 = vmatprep.subr.mxu0 0.0
    %7529 = vmatpush1.msra.mxu0 0.0
    %7530 = vmatprep.subr.mxu0 0.0
    %7531 = vmatpush1.msra.mxu0 0.0
    %7532 = vmatprep.subr.mxu0 0.0
    %7533 = vmatpush1.msra.mxu0 0.0
    %7534 = vmatprep.subr.mxu0 0.0
    %7535 = vmatpush1.msra.mxu0 0.0
    %7536 = vmatprep.subr.mxu0 0.0
    %7537 = vmatpush1.msra.mxu0 0.0
    %7538 = vmatprep.subr.mxu0 0.0
    %7539 = vmatpush1.msra.mxu0 0.0
    %7540 = vmatprep.subr.mxu0 0.0
    %7541 = vmatpush1.msra.mxu0 0.0
    %7542 = vmatprep.subr.mxu0 0.0
    %7543 = vmatpush1.msra.mxu0 0.0
    %7544 = vmatprep.subr.mxu0 0.0
    %7545 = vmatpush1.msra.mxu0 0.0
    %7546 = vmatprep.subr.mxu0 0.0
    %7547 = vmatpush1.msra.mxu0 0.0
    %7548 = vmatprep.subr.mxu0 0.0
    %7549 = vmatpush1.msra.mxu0 0.0
    %7550 = vmatprep.subr.mxu0 0.0
    %7551 = vmatpush1.msra.mxu0 0.0
    %7552 = vmatprep.subr.mxu0 0.0
    %7553 = vmatpush1.msra.mxu0 0.0
    %7554 = vmatprep.subr.mxu0 0.0
    %7555 = vmatpush1.msra.mxu0 0.0
    %7556 = vmatprep.subr.mxu0 0.0
    %7557 = vmatpush1.msra.mxu0 0.0
    %7558 = vmatprep.mubr.f32.mxu0 0.0
    %7559 = vmatmul.mubr.f32.gmra.mrb[0].mxu0 %v7382
    %v7560 = vpop.f32.mrb[0].mxu0
    %v7561 = vadd.f32 %v7417, %v7560
    %v7562 = vpop.f32.mrb[0].mxu0
    %v7563 = vadd.f32 %v7417, %v7562
    %7564 = vmatprep.mubr.f32.mxu0 0.0
    %7565 = vmatmul.mubr.f32.gmra.mrb[0].mxu0 %v7383
    %v7566 = vpop.f32.mrb[0].mxu0
    %v7567 = vadd.f32 %v7422, %v7566
    %v7568 = vpop.f32.mrb[0].mxu0
    %v7569 = vadd.f32 %v7422, %v7568
    %7570 = vmatprep.mubr.f32.mxu0 0.0
    %7571 = vmatmul.mubr.f32.gmra.mrb[0].mxu0 %v7384
    %v7572 = vpop.f32.mrb[0].mxu0
    %v7573 = vadd.f32 %v7427, %v7572
    %v7574 = vpop.f32.mrb[0].mxu0
    %v7575 = vadd.f32 %v7427, %v7574
    %7576 = vmatprep.mubr.f32.mxu0 0.0
    %7577 = vmatmul.mubr.f32.gmra.mrb[0].mxu0 %v7385
    %v7578 = vpop.f32.mrb[0].mxu0
    %v7579 = vadd.f32 %v7432, %v7578
    %v7580 = vpop.f32.mrb[0].mxu0
    %v7581 = vadd.f32 %v7432, %v7580
    %7582 = vmatprep.mubr.f32.mxu0 0.0
    %7583 = vmatmul.mubr.f32.gmra.mrb[0].mxu0 %v7386
    %v7584 = vpop.f32.mrb[0].mxu0
    %v7585 = vadd.f32 %v7437, %v7584
    %v7586 = vpop.f32.mrb[0].mxu0
    %v7587 = vadd.f32 %v7437, %v7586
    %7588 = vmatprep.mubr.f32.mxu0 0.0
    %7589 = vmatmul.mubr.f32.gmra.mrb[0].mxu0 %v7387
    %v7590 = vpop.f32.mrb[0].mxu0
    %v7591 = vadd.f32 %v7442, %v7590
    %v7592 = vpop.f32.mrb[0].mxu0
    %v7593 = vadd.f32 %v7442, %v7592
    %7594 = vmatprep.mubr.f32.mxu0 0.0
    %7595 = vmatmul.mubr.f32.gmra.mrb[0].mxu0 %v7388
    %v7596 = vpop.f32.mrb[0].mxu0
    %v7597 = vadd.f32 %v7447, %v7596
    %v7598 = vpop.f32.mrb[0].mxu0
    %v7599 = vadd.f32 %v7447, %v7598
    %7600 = vmatprep.mubr.f32.mxu0 0.0
    %7601 = vmatmul.mubr.f32.gmra.mrb[0].mxu0 %v7389
    %v7602 = vpop.f32.mrb[0].mxu0
    %v7603 = vadd.f32 %v7452, %v7602
    %v7604 = vpop.f32.mrb[0].mxu0
    %v7605 = vadd.f32 %v7452, %v7604
    %7606 = vmatprep.mubr.f32.mxu0 0.0
    %7607 = vmatmul.mubr.f32.gmra.mrb[0].mxu0 %v7390
    %v7608 = vpop.f32.mrb[0].mxu0
    %v7609 = vadd.f32 %v7457, %v7608
    %v7610 = vpop.f32.mrb[0].mxu0
    %v7611 = vadd.f32 %v7457, %v7610
    %7612 = vmatprep.mubr.f32.mxu0 0.0
    %7613 = vmatmul.mubr.f32.gmra.mrb[0].mxu0 %v7391
    %v7614 = vpop.f32.mrb[0].mxu0
    %v7615 = vadd.f32 %v7462, %v7614
    %v7616 = vpop.f32.mrb[0].mxu0
    %v7617 = vadd.f32 %v7462, %v7616
    %7618 = vmatprep.mubr.f32.mxu0 0.0
    %7619 = vmatmul.mubr.f32.gmra.mrb[0].mxu0 %v7392
    %v7620 = vpop.f32.mrb[0].mxu0
    %v7621 = vadd.f32 %v7467, %v7620
    %v7622 = vpop.f32.mrb[0].mxu0
    %v7623 = vadd.f32 %v7467, %v7622
    %7624 = vmatprep.mubr.f32.mxu0 0.0
    %7625 = vmatmul.mubr.f32.gmra.mrb[0].mxu0 %v7393
    %v7626 = vpop.f32.mrb[0].mxu0
    %v7627 = vadd.f32 %v7472, %v7626
    %v7628 = vpop.f32.mrb[0].mxu0
    %v7629 = vadd.f32 %v7472, %v7628
    %7630 = vmatprep.mubr.f32.mxu0 0.0
    %7631 = vmatmul.mubr.f32.gmra.mrb[0].mxu0 %v7394
    %v7632 = vpop.f32.mrb[0].mxu0
    %v7633 = vadd.f32 %v7477, %v7632
    %v7634 = vpop.f32.mrb[0].mxu0
    %v7635 = vadd.f32 %v7477, %v7634
    %7636 = vmatprep.mubr.f32.mxu0 0.0
    %7637 = vmatmul.mubr.f32.gmra.mrb[0].mxu0 %v7395
    %v7638 = vpop.f32.mrb[0].mxu0
    %v7639 = vadd.f32 %v7482, %v7638
    %v7640 = vpop.f32.mrb[0].mxu0
    %v7641 = vadd.f32 %v7482, %v7640
    %7642 = vmatprep.mubr.f32.mxu0 0.0
    %7643 = vmatmul.mubr.f32.gmra.mrb[0].mxu0 %v7396
    %v7644 = vpop.f32.mrb[0].mxu0
    %v7645 = vadd.f32 %v7487, %v7644
    %v7646 = vpop.f32.mrb[0].mxu0
    %v7647 = vadd.f32 %v7487, %v7646
    %7648 = vmatprep.mubr.f32.mxu0 0.0
    %7649 = vmatmul.mubr.f32.gmra.mrb[0].mxu0 %v7397
    %v7650 = vpop.f32.mrb[0].mxu0
    %v7651 = vadd.f32 %v7492, %v7650
    %v7652 = vpop.f32.mrb[0].mxu0
    %v7653 = vadd.f32 %v7492, %v7652
    %7654 = vdwg.mxu0
    %7655 = vmatprep.subr.mxu0 %v7302
    %7656 = vmatpush1.msra.mxu0 %v7286
    %7657 = vmatprep.subr.mxu0 %v7303
    %7658 = vmatpush1.msra.mxu0 %v7287
    %7659 = vmatprep.subr.mxu0 %v7304
    %7660 = vmatpush1.msra.mxu0 %v7288
    %7661 = vmatprep.subr.mxu0 %v7305
    %7662 = vmatpush1.msra.mxu0 %v7289
    %7663 = vmatprep.subr.mxu0 %v7306
    %7664 = vmatpush1.msra.mxu0 %v7290
    %7665 = vmatprep.subr.mxu0 %v7307
    %7666 = vmatpush1.msra.mxu0 %v7291
    %7667 = vmatprep.subr.mxu0 %v7308
    %7668 = vmatpush1.msra.mxu0 %v7292
    %7669 = vmatprep.subr.mxu0 %v7309
    %7670 = vmatpush1.msra.mxu0 %v7293
    %7671 = vmatprep.subr.mxu0 %v7310
    %7672 = vmatpush1.msra.mxu0 %v7294
    %7673 = vmatprep.subr.mxu0 %v7311
    %7674 = vmatpush1.msra.mxu0 %v7295
    %7675 = vmatprep.subr.mxu0 %v7312
    %7676 = vmatpush1.msra.mxu0 %v7296
    %7677 = vmatprep.subr.mxu0 %v7313
    %7678 = vmatpush1.msra.mxu0 %v7297
    %7679 = vmatprep.subr.mxu0 %v7314
    %7680 = vmatpush1.msra.mxu0 %v7298
    %7681 = vmatprep.subr.mxu0 %v7315
    %7682 = vmatpush1.msra.mxu0 %v7299
    %7683 = vmatprep.subr.mxu0 %v7316
    %7684 = vmatpush1.msra.mxu0 %v7300
    %7685 = vmatprep.subr.mxu0 %v7317
    %7686 = vmatpush1.msra.mxu0 %v7301
    %7687 = vmatprep.subr.mxu0 0.0
    %7688 = vmatpush1.msra.mxu0 0.0
    %7689 = vmatprep.subr.mxu0 0.0
    %7690 = vmatpush1.msra.mxu0 0.0
    %7691 = vmatprep.subr.mxu0 0.0
    %7692 = vmatpush1.msra.mxu0 0.0
    %7693 = vmatprep.subr.mxu0 0.0
    %7694 = vmatpush1.msra.mxu0 0.0
    %7695 = vmatprep.subr.mxu0 0.0
    %7696 = vmatpush1.msra.mxu0 0.0
    %7697 = vmatprep.subr.mxu0 0.0
    %7698 = vmatpush1.msra.mxu0 0.0
    %7699 = vmatprep.subr.mxu0 0.0
    %7700 = vmatpush1.msra.mxu0 0.0
    %7701 = vmatprep.subr.mxu0 0.0
    %7702 = vmatpush1.msra.mxu0 0.0
    %7703 = vmatprep.subr.mxu0 0.0
    %7704 = vmatpush1.msra.mxu0 0.0
    %7705 = vmatprep.subr.mxu0 0.0
    %7706 = vmatpush1.msra.mxu0 0.0
    %7707 = vmatprep.subr.mxu0 0.0
    %7708 = vmatpush1.msra.mxu0 0.0
    %7709 = vmatprep.subr.mxu0 0.0
    %7710 = vmatpush1.msra.mxu0 0.0
    %7711 = vmatprep.subr.mxu0 0.0
    %7712 = vmatpush1.msra.mxu0 0.0
    %7713 = vmatprep.subr.mxu0 0.0
    %7714 = vmatpush1.msra.mxu0 0.0
    %7715 = vmatprep.subr.mxu0 0.0
    %7716 = vmatpush1.msra.mxu0 0.0
    %7717 = vmatprep.subr.mxu0 0.0
    %7718 = vmatpush1.msra.mxu0 0.0
    %7719 = vmatprep.mubr.f32.mxu0 0.0
    %7720 = vmatmul.mubr.f32.gmra.mrb[0].mxu0 %v7382
    %v7721 = vpop.f32.mrb[0].mxu0
    %v7722 = vadd.f32 %v7417, %v7721
    %v7723 = vpop.f32.mrb[0].mxu0
    %v7724 = vadd.f32 %v7417, %v7723
    %7725 = vmatprep.mubr.f32.mxu0 0.0
    %7726 = vmatmul.mubr.f32.gmra.mrb[0].mxu0 %v7383
    %v7727 = vpop.f32.mrb[0].mxu0
    %v7728 = vadd.f32 %v7422, %v7727
    %v7729 = vpop.f32.mrb[0].mxu0
    %v7730 = vadd.f32 %v7422, %v7729
    %7731 = vmatprep.mubr.f32.mxu0 0.0
    %7732 = vmatmul.mubr.f32.gmra.mrb[0].mxu0 %v7384
    %v7733 = vpop.f32.mrb[0].mxu0
    %v7734 = vadd.f32 %v7427, %v7733
    %v7735 = vpop.f32.mrb[0].mxu0
    %v7736 = vadd.f32 %v7427, %v7735
    %7737 = vmatprep.mubr.f32.mxu0 0.0
    %7738 = vmatmul.mubr.f32.gmra.mrb[0].mxu0 %v7385
    %v7739 = vpop.f32.mrb[0].mxu0
    %v7740 = vadd.f32 %v7432, %v7739
    %v7741 = vpop.f32.mrb[0].mxu0
    %v7742 = vadd.f32 %v7432, %v7741
    %7743 = vmatprep.mubr.f32.mxu0 0.0
    %7744 = vmatmul.mubr.f32.gmra.mrb[0].mxu0 %v7386
    %v7745 = vpop.f32.mrb[0].mxu0
    %v7746 = vadd.f32 %v7437, %v7745
    %v7747 = vpop.f32.mrb[0].mxu0
    %v7748 = vadd.f32 %v7437, %v7747
    %7749 = vmatprep.mubr.f32.mxu0 0.0
    %7750 = vmatmul.mubr.f32.gmra.mrb[0].mxu0 %v7387
    %v7751 = vpop.f32.mrb[0].mxu0
    %v7752 = vadd.f32 %v7442, %v7751
    %v7753 = vpop.f32.mrb[0].mxu0
    %v7754 = vadd.f32 %v7442, %v7753
    %7755 = vmatprep.mubr.f32.mxu0 0.0
    %7756 = vmatmul.mubr.f32.gmra.mrb[0].mxu0 %v7388
    %v7757 = vpop.f32.mrb[0].mxu0
    %v7758 = vadd.f32 %v7447, %v7757
    %v7759 = vpop.f32.mrb[0].mxu0
    %v7760 = vadd.f32 %v7447, %v7759
    %7761 = vmatprep.mubr.f32.mxu0 0.0
    %7762 = vmatmul.mubr.f32.gmra.mrb[0].mxu0 %v7389
    %v7763 = vpop.f32.mrb[0].mxu0
    %v7764 = vadd.f32 %v7452, %v7763
    %v7765 = vpop.f32.mrb[0].mxu0
    %v7766 = vadd.f32 %v7452, %v7765
    %7767 = vmatprep.mubr.f32.mxu0 0.0
    %7768 = vmatmul.mubr.f32.gmra.mrb[0].mxu0 %v7390
    %v7769 = vpop.f32.mrb[0].mxu0
    %v7770 = vadd.f32 %v7457, %v7769
    %v7771 = vpop.f32.mrb[0].mxu0
    %v7772 = vadd.f32 %v7457, %v7771
    %7773 = vmatprep.mubr.f32.mxu0 0.0
    %7774 = vmatmul.mubr.f32.gmra.mrb[0].mxu0 %v7391
    %v7775 = vpop.f32.mrb[0].mxu0
    %v7776 = vadd.f32 %v7462, %v7775
    %v7777 = vpop.f32.mrb[0].mxu0
    %v7778 = vadd.f32 %v7462, %v7777
    %7779 = vmatprep.mubr.f32.mxu0 0.0
    %7780 = vmatmul.mubr.f32.gmra.mrb[0].mxu0 %v7392
    %v7781 = vpop.f32.mrb[0].mxu0
    %v7782 = vadd.f32 %v7467, %v7781
    %v7783 = vpop.f32.mrb[0].mxu0
    %v7784 = vadd.f32 %v7467, %v7783
    %7785 = vmatprep.mubr.f32.mxu0 0.0
    %7786 = vmatmul.mubr.f32.gmra.mrb[0].mxu0 %v7393
    %v7787 = vpop.f32.mrb[0].mxu0
    %v7788 = vadd.f32 %v7472, %v7787
    %v7789 = vpop.f32.mrb[0].mxu0
    %v7790 = vadd.f32 %v7472, %v7789
    %7791 = vmatprep.mubr.f32.mxu0 0.0
    %7792 = vmatmul.mubr.f32.gmra.mrb[0].mxu0 %v7394
    %v7793 = vpop.f32.mrb[0].mxu0
    %v7794 = vadd.f32 %v7477, %v7793
    %v7795 = vpop.f32.mrb[0].mxu0
    %v7796 = vadd.f32 %v7477, %v7795
    %7797 = vmatprep.mubr.f32.mxu0 0.0
    %7798 = vmatmul.mubr.f32.gmra.mrb[0].mxu0 %v7395
    %v7799 = vpop.f32.mrb[0].mxu0
    %v7800 = vadd.f32 %v7482, %v7799
    %v7801 = vpop.f32.mrb[0].mxu0
    %v7802 = vadd.f32 %v7482, %v7801
    %7803 = vmatprep.mubr.f32.mxu0 0.0
    %7804 = vmatmul.mubr.f32.gmra.mrb[0].mxu0 %v7396
    %v7805 = vpop.f32.mrb[0].mxu0
    %v7806 = vadd.f32 %v7487, %v7805
    %v7807 = vpop.f32.mrb[0].mxu0
    %v7808 = vadd.f32 %v7487, %v7807
    %7809 = vmatprep.mubr.f32.mxu0 0.0
    %7810 = vmatmul.mubr.f32.gmra.mrb[0].mxu0 %v7397
    %v7811 = vpop.f32.mrb[0].mxu0
    %v7812 = vadd.f32 %v7492, %v7811
    %v7813 = vpop.f32.mrb[0].mxu0
    %v7814 = vadd.f32 %v7492, %v7813
    %7815 = vdwg.mxu0
    %7816 = vmatprep.subr.mxu0 %v7334
    %7817 = vmatpush1.msra.mxu0 %v7318
    %7818 = vmatprep.subr.mxu0 %v7335
    %7819 = vmatpush1.msra.mxu0 %v7319
    %7820 = vmatprep.subr.mxu0 %v7336
    %7821 = vmatpush1.msra.mxu0 %v7320
    %7822 = vmatprep.subr.mxu0 %v7337
    %7823 = vmatpush1.msra.mxu0 %v7321
    %7824 = vmatprep.subr.mxu0 %v7338
    %7825 = vmatpush1.msra.mxu0 %v7322
    %7826 = vmatprep.subr.mxu0 %v7339
    %7827 = vmatpush1.msra.mxu0 %v7323
    %7828 = vmatprep.subr.mxu0 %v7340
    %7829 = vmatpush1.msra.mxu0 %v7324
    %7830 = vmatprep.subr.mxu0 %v7341
    %7831 = vmatpush1.msra.mxu0 %v7325
    %7832 = vmatprep.subr.mxu0 %v7342
    %7833 = vmatpush1.msra.mxu0 %v7326
    %7834 = vmatprep.subr.mxu0 %v7343
    %7835 = vmatpush1.msra.mxu0 %v7327
    %7836 = vmatprep.subr.mxu0 %v7344
    %7837 = vmatpush1.msra.mxu0 %v7328
    %7838 = vmatprep.subr.mxu0 %v7345
    %7839 = vmatpush1.msra.mxu0 %v7329
    %7840 = vmatprep.subr.mxu0 %v7346
    %7841 = vmatpush1.msra.mxu0 %v7330
    %7842 = vmatprep.subr.mxu0 %v7347
    %7843 = vmatpush1.msra.mxu0 %v7331
    %7844 = vmatprep.subr.mxu0 %v7348
    %7845 = vmatpush1.msra.mxu0 %v7332
    %7846 = vmatprep.subr.mxu0 %v7349
    %7847 = vmatpush1.msra.mxu0 %v7333
    %7848 = vmatprep.subr.mxu0 0.0
    %7849 = vmatpush1.msra.mxu0 0.0
    %7850 = vmatprep.subr.mxu0 0.0
    %7851 = vmatpush1.msra.mxu0 0.0
    %7852 = vmatprep.subr.mxu0 0.0
    %7853 = vmatpush1.msra.mxu0 0.0
    %7854 = vmatprep.subr.mxu0 0.0
    %7855 = vmatpush1.msra.mxu0 0.0
    %7856 = vmatprep.subr.mxu0 0.0
    %7857 = vmatpush1.msra.mxu0 0.0
    %7858 = vmatprep.subr.mxu0 0.0
    %7859 = vmatpush1.msra.mxu0 0.0
    %7860 = vmatprep.subr.mxu0 0.0
    %7861 = vmatpush1.msra.mxu0 0.0
    %7862 = vmatprep.subr.mxu0 0.0
    %7863 = vmatpush1.msra.mxu0 0.0
    %7864 = vmatprep.subr.mxu0 0.0
    %7865 = vmatpush1.msra.mxu0 0.0
    %7866 = vmatprep.subr.mxu0 0.0
    %7867 = vmatpush1.msra.mxu0 0.0
    %7868 = vmatprep.subr.mxu0 0.0
    %7869 = vmatpush1.msra.mxu0 0.0
    %7870 = vmatprep.subr.mxu0 0.0
    %7871 = vmatpush1.msra.mxu0 0.0
    %7872 = vmatprep.subr.mxu0 0.0
    %7873 = vmatpush1.msra.mxu0 0.0
    %7874 = vmatprep.subr.mxu0 0.0
    %7875 = vmatpush1.msra.mxu0 0.0
    %7876 = vmatprep.subr.mxu0 0.0
    %7877 = vmatpush1.msra.mxu0 0.0
    %7878 = vmatprep.subr.mxu0 0.0
    %7879 = vmatpush1.msra.mxu0 0.0
    %7880 = vmatprep.mubr.f32.mxu0 0.0
    %7881 = vmatmul.mubr.f32.gmra.mrb[0].mxu0 %v7382
    %v7882 = vpop.f32.mrb[0].mxu0
    %v7883 = vadd.f32 %v7417, %v7882
    %v7884 = vpop.f32.mrb[0].mxu0
    %v7885 = vadd.f32 %v7417, %v7884
    %7886 = vmatprep.mubr.f32.mxu0 0.0
    %7887 = vmatmul.mubr.f32.gmra.mrb[0].mxu0 %v7383
    %v7888 = vpop.f32.mrb[0].mxu0
    %v7889 = vadd.f32 %v7422, %v7888
    %v7890 = vpop.f32.mrb[0].mxu0
    %v7891 = vadd.f32 %v7422, %v7890
    %7892 = vmatprep.mubr.f32.mxu0 0.0
    %7893 = vmatmul.mubr.f32.gmra.mrb[0].mxu0 %v7384
    %v7894 = vpop.f32.mrb[0].mxu0
    %v7895 = vadd.f32 %v7427, %v7894
    %v7896 = vpop.f32.mrb[0].mxu0
    %v7897 = vadd.f32 %v7427, %v7896
    %7898 = vmatprep.mubr.f32.mxu0 0.0
    %7899 = vmatmul.mubr.f32.gmra.mrb[0].mxu0 %v7385
    %v7900 = vpop.f32.mrb[0].mxu0
    %v7901 = vadd.f32 %v7432, %v7900
    %v7902 = vpop.f32.mrb[0].mxu0
    %v7903 = vadd.f32 %v7432, %v7902
    %7904 = vmatprep.mubr.f32.mxu0 0.0
    %7905 = vmatmul.mubr.f32.gmra.mrb[0].mxu0 %v7386
    %v7906 = vpop.f32.mrb[0].mxu0
    %v7907 = vadd.f32 %v7437, %v7906
    %v7908 = vpop.f32.mrb[0].mxu0
    %v7909 = vadd.f32 %v7437, %v7908
    %7910 = vmatprep.mubr.f32.mxu0 0.0
    %7911 = vmatmul.mubr.f32.gmra.mrb[0].mxu0 %v7387
    %v7912 = vpop.f32.mrb[0].mxu0
    %v7913 = vadd.f32 %v7442, %v7912
    %v7914 = vpop.f32.mrb[0].mxu0
    %v7915 = vadd.f32 %v7442, %v7914
    %7916 = vmatprep.mubr.f32.mxu0 0.0
    %7917 = vmatmul.mubr.f32.gmra.mrb[0].mxu0 %v7388
    %v7918 = vpop.f32.mrb[0].mxu0
    %v7919 = vadd.f32 %v7447, %v7918
    %v7920 = vpop.f32.mrb[0].mxu0
    %v7921 = vadd.f32 %v7447, %v7920
    %7922 = vmatprep.mubr.f32.mxu0 0.0
    %7923 = vmatmul.mubr.f32.gmra.mrb[0].mxu0 %v7389
    %v7924 = vpop.f32.mrb[0].mxu0
    %v7925 = vadd.f32 %v7452, %v7924
    %v7926 = vpop.f32.mrb[0].mxu0
    %v7927 = vadd.f32 %v7452, %v7926
    %7928 = vmatprep.mubr.f32.mxu0 0.0
    %7929 = vmatmul.mubr.f32.gmra.mrb[0].mxu0 %v7390
    %v7930 = vpop.f32.mrb[0].mxu0
    %v7931 = vadd.f32 %v7457, %v7930
    %v7932 = vpop.f32.mrb[0].mxu0
    %v7933 = vadd.f32 %v7457, %v7932
    %7934 = vmatprep.mubr.f32.mxu0 0.0
    %7935 = vmatmul.mubr.f32.gmra.mrb[0].mxu0 %v7391
    %v7936 = vpop.f32.mrb[0].mxu0
    %v7937 = vadd.f32 %v7462, %v7936
    %v7938 = vpop.f32.mrb[0].mxu0
    %v7939 = vadd.f32 %v7462, %v7938
    %7940 = vmatprep.mubr.f32.mxu0 0.0
    %7941 = vmatmul.mubr.f32.gmra.mrb[0].mxu0 %v7392
    %v7942 = vpop.f32.mrb[0].mxu0
    %v7943 = vadd.f32 %v7467, %v7942
    %v7944 = vpop.f32.mrb[0].mxu0
    %v7945 = vadd.f32 %v7467, %v7944
    %7946 = vmatprep.mubr.f32.mxu0 0.0
    %7947 = vmatmul.mubr.f32.gmra.mrb[0].mxu0 %v7393
    %v7948 = vpop.f32.mrb[0].mxu0
    %v7949 = vadd.f32 %v7472, %v7948
    %v7950 = vpop.f32.mrb[0].mxu0
    %v7951 = vadd.f32 %v7472, %v7950
    %7952 = vmatprep.mubr.f32.mxu0 0.0
    %7953 = vmatmul.mubr.f32.gmra.mrb[0].mxu0 %v7394
    %v7954 = vpop.f32.mrb[0].mxu0
    %v7955 = vadd.f32 %v7477, %v7954
    %v7956 = vpop.f32.mrb[0].mxu0
    %v7957 = vadd.f32 %v7477, %v7956
    %7958 = vmatprep.mubr.f32.mxu0 0.0
    %7959 = vmatmul.mubr.f32.gmra.mrb[0].mxu0 %v7395
    %v7960 = vpop.f32.mrb[0].mxu0
    %v7961 = vadd.f32 %v7482, %v7960
    %v7962 = vpop.f32.mrb[0].mxu0
    %v7963 = vadd.f32 %v7482, %v7962
    %7964 = vmatprep.mubr.f32.mxu0 0.0
    %7965 = vmatmul.mubr.f32.gmra.mrb[0].mxu0 %v7396
    %v7966 = vpop.f32.mrb[0].mxu0
    %v7967 = vadd.f32 %v7487, %v7966
    %v7968 = vpop.f32.mrb[0].mxu0
    %v7969 = vadd.f32 %v7487, %v7968
    %7970 = vmatprep.mubr.f32.mxu0 0.0
    %7971 = vmatmul.mubr.f32.gmra.mrb[0].mxu0 %v7397
    %v7972 = vpop.f32.mrb[0].mxu0
    %v7973 = vadd.f32 %v7492, %v7972
    %v7974 = vpop.f32.mrb[0].mxu0
    %v7975 = vadd.f32 %v7492, %v7974
    %7976 = vdwg.mxu0
    %7977 = vmatprep.subr.mxu0 %v7366
    %7978 = vmatpush1.msra.mxu0 %v7350
    %7979 = vmatprep.subr.mxu0 %v7367
    %7980 = vmatpush1.msra.mxu0 %v7351
    %7981 = vmatprep.subr.mxu0 %v7368
    %7982 = vmatpush1.msra.mxu0 %v7352
    %7983 = vmatprep.subr.mxu0 %v7369
    %7984 = vmatpush1.msra.mxu0 %v7353
    %7985 = vmatprep.subr.mxu0 %v7370
    %7986 = vmatpush1.msra.mxu0 %v7354
    %7987 = vmatprep.subr.mxu0 %v7371
    %7988 = vmatpush1.msra.mxu0 %v7355
    %7989 = vmatprep.subr.mxu0 %v7372
    %7990 = vmatpush1.msra.mxu0 %v7356
    %7991 = vmatprep.subr.mxu0 %v7373
    %7992 = vmatpush1.msra.mxu0 %v7357
    %7993 = vmatprep.subr.mxu0 %v7374
    %7994 = vmatpush1.msra.mxu0 %v7358
    %7995 = vmatprep.subr.mxu0 %v7375
    %7996 = vmatpush1.msra.mxu0 %v7359
    %7997 = vmatprep.subr.mxu0 %v7376
    %7998 = vmatpush1.msra.mxu0 %v7360
    %7999 = vmatprep.subr.mxu0 %v7377
    %8000 = vmatpush1.msra.mxu0 %v7361
    %8001 = vmatprep.subr.mxu0 %v7378
    %8002 = vmatpush1.msra.mxu0 %v7362
    %8003 = vmatprep.subr.mxu0 %v7379
    %8004 = vmatpush1.msra.mxu0 %v7363
    %8005 = vmatprep.subr.mxu0 %v7380
    %8006 = vmatpush1.msra.mxu0 %v7364
    %8007 = vmatprep.subr.mxu0 %v7381
    %8008 = vmatpush1.msra.mxu0 %v7365
    %8009 = vmatprep.subr.mxu0 0.0
    %8010 = vmatpush1.msra.mxu0 0.0
    %8011 = vmatprep.subr.mxu0 0.0
    %8012 = vmatpush1.msra.mxu0 0.0
    %8013 = vmatprep.subr.mxu0 0.0
    %8014 = vmatpush1.msra.mxu0 0.0
    %8015 = vmatprep.subr.mxu0 0.0
    %8016 = vmatpush1.msra.mxu0 0.0
    %8017 = vmatprep.subr.mxu0 0.0
    %8018 = vmatpush1.msra.mxu0 0.0
    %8019 = vmatprep.subr.mxu0 0.0
    %8020 = vmatpush1.msra.mxu0 0.0
    %8021 = vmatprep.subr.mxu0 0.0
    %8022 = vmatpush1.msra.mxu0 0.0
    %8023 = vmatprep.subr.mxu0 0.0
    %8024 = vmatpush1.msra.mxu0 0.0
    %8025 = vmatprep.subr.mxu0 0.0
    %8026 = vmatpush1.msra.mxu0 0.0
    %8027 = vmatprep.subr.mxu0 0.0
    %8028 = vmatpush1.msra.mxu0 0.0
    %8029 = vmatprep.subr.mxu0 0.0
    %8030 = vmatpush1.msra.mxu0 0.0
    %8031 = vmatprep.subr.mxu0 0.0
    %8032 = vmatpush1.msra.mxu0 0.0
    %8033 = vmatprep.subr.mxu0 0.0
    %8034 = vmatpush1.msra.mxu0 0.0
    %8035 = vmatprep.subr.mxu0 0.0
    %8036 = vmatpush1.msra.mxu0 0.0
    %8037 = vmatprep.subr.mxu0 0.0
    %8038 = vmatpush1.msra.mxu0 0.0
    %8039 = vmatprep.subr.mxu0 0.0
    %8040 = vmatpush1.msra.mxu0 0.0
    %8041 = vmatprep.mubr.f32.mxu0 0.0
    %8042 = vmatmul.mubr.f32.gmra.mrb[0].mxu0 %v7382
    %v8043 = vpop.f32.mrb[0].mxu0
    %v8044 = vadd.f32 %v7417, %v8043
    %v8045 = vpop.f32.mrb[0].mxu0
    %v8046 = vadd.f32 %v7417, %v8045
    %8047 = vmatprep.mubr.f32.mxu0 0.0
    %8048 = vmatmul.mubr.f32.gmra.mrb[0].mxu0 %v7383
    %v8049 = vpop.f32.mrb[0].mxu0
    %v8050 = vadd.f32 %v7422, %v8049
    %v8051 = vpop.f32.mrb[0].mxu0
    %v8052 = vadd.f32 %v7422, %v8051
    %8053 = vmatprep.mubr.f32.mxu0 0.0
    %8054 = vmatmul.mubr.f32.gmra.mrb[0].mxu0 %v7384
    %v8055 = vpop.f32.mrb[0].mxu0
    %v8056 = vadd.f32 %v7427, %v8055
    %v8057 = vpop.f32.mrb[0].mxu0
    %v8058 = vadd.f32 %v7427, %v8057
    %8059 = vmatprep.mubr.f32.mxu0 0.0
    %8060 = vmatmul.mubr.f32.gmra.mrb[0].mxu0 %v7385
    %v8061 = vpop.f32.mrb[0].mxu0
    %v8062 = vadd.f32 %v7432, %v8061
    %v8063 = vpop.f32.mrb[0].mxu0
    %v8064 = vadd.f32 %v7432, %v8063
    %8065 = vmatprep.mubr.f32.mxu0 0.0
    %8066 = vmatmul.mubr.f32.gmra.mrb[0].mxu0 %v7386
    %v8067 = vpop.f32.mrb[0].mxu0
    %v8068 = vadd.f32 %v7437, %v8067
    %v8069 = vpop.f32.mrb[0].mxu0
    %v8070 = vadd.f32 %v7437, %v8069
    %8071 = vmatprep.mubr.f32.mxu0 0.0
    %8072 = vmatmul.mubr.f32.gmra.mrb[0].mxu0 %v7387
    %v8073 = vpop.f32.mrb[0].mxu0
    %v8074 = vadd.f32 %v7442, %v8073
    %v8075 = vpop.f32.mrb[0].mxu0
    %v8076 = vadd.f32 %v7442, %v8075
    %8077 = vmatprep.mubr.f32.mxu0 0.0
    %8078 = vmatmul.mubr.f32.gmra.mrb[0].mxu0 %v7388
    %v8079 = vpop.f32.mrb[0].mxu0
    %v8080 = vadd.f32 %v7447, %v8079
    %v8081 = vpop.f32.mrb[0].mxu0
    %v8082 = vadd.f32 %v7447, %v8081
    %8083 = vmatprep.mubr.f32.mxu0 0.0
    %8084 = vmatmul.mubr.f32.gmra.mrb[0].mxu0 %v7389
    %v8085 = vpop.f32.mrb[0].mxu0
    %v8086 = vadd.f32 %v7452, %v8085
    %v8087 = vpop.f32.mrb[0].mxu0
    %v8088 = vadd.f32 %v7452, %v8087
    %8089 = vmatprep.mubr.f32.mxu0 0.0
    %8090 = vmatmul.mubr.f32.gmra.mrb[0].mxu0 %v7390
    %v8091 = vpop.f32.mrb[0].mxu0
    %v8092 = vadd.f32 %v7457, %v8091
    %v8093 = vpop.f32.mrb[0].mxu0
    %v8094 = vadd.f32 %v7457, %v8093
    %8095 = vmatprep.mubr.f32.mxu0 0.0
    %8096 = vmatmul.mubr.f32.gmra.mrb[0].mxu0 %v7391
    %v8097 = vpop.f32.mrb[0].mxu0
    %v8098 = vadd.f32 %v7462, %v8097
    %v8099 = vpop.f32.mrb[0].mxu0
    %v8100 = vadd.f32 %v7462, %v8099
    %8101 = vmatprep.mubr.f32.mxu0 0.0
    %8102 = vmatmul.mubr.f32.gmra.mrb[0].mxu0 %v7392
    %v8103 = vpop.f32.mrb[0].mxu0
    %v8104 = vadd.f32 %v7467, %v8103
    %v8105 = vpop.f32.mrb[0].mxu0
    %v8106 = vadd.f32 %v7467, %v8105
    %8107 = vmatprep.mubr.f32.mxu0 0.0
    %8108 = vmatmul.mubr.f32.gmra.mrb[0].mxu0 %v7393
    %v8109 = vpop.f32.mrb[0].mxu0
    %v8110 = vadd.f32 %v7472, %v8109
    %v8111 = vpop.f32.mrb[0].mxu0
    %v8112 = vadd.f32 %v7472, %v8111
    %8113 = vmatprep.mubr.f32.mxu0 0.0
    %8114 = vmatmul.mubr.f32.gmra.mrb[0].mxu0 %v7394
    %v8115 = vpop.f32.mrb[0].mxu0
    %v8116 = vadd.f32 %v7477, %v8115
    %v8117 = vpop.f32.mrb[0].mxu0
    %v8118 = vadd.f32 %v7477, %v8117
    %8119 = vmatprep.mubr.f32.mxu0 0.0
    %8120 = vmatmul.mubr.f32.gmra.mrb[0].mxu0 %v7395
    %v8121 = vpop.f32.mrb[0].mxu0
    %v8122 = vadd.f32 %v7482, %v8121
    %v8123 = vpop.f32.mrb[0].mxu0
    %v8124 = vadd.f32 %v7482, %v8123
    %8125 = vmatprep.mubr.f32.mxu0 0.0
    %8126 = vmatmul.mubr.f32.gmra.mrb[0].mxu0 %v7396
    %v8127 = vpop.f32.mrb[0].mxu0
    %v8128 = vadd.f32 %v7487, %v8127
    %v8129 = vpop.f32.mrb[0].mxu0
    %v8130 = vadd.f32 %v7487, %v8129
    %8131 = vmatprep.mubr.f32.mxu0 0.0
    %8132 = vmatmul.mubr.f32.gmra.mrb[0].mxu0 %v7397
    %v8133 = vpop.f32.mrb[0].mxu0
    %v8134 = vadd.f32 %v7492, %v8133
    %v8135 = vpop.f32.mrb[0].mxu0
    %v8136 = vadd.f32 %v7492, %v8135
    %8137 = vdwg.mxu0
    %v8138 = vmax.f32 %v7561, 0.0
    %v8139 = vmax.f32 %v7563, 0.0
    %v8140 = vmax.f32 %v7722, 0.0
    %v8141 = vmax.f32 %v7724, 0.0
    %v8142 = vmax.f32 %v7883, 0.0
    %v8143 = vmax.f32 %v7885, 0.0
    %v8144 = vmax.f32 %v8044, 0.0
    %v8145 = vmax.f32 %v8046, 0.0
    %v8146 = vmax.f32 %v7567, 0.0
    %v8147 = vmax.f32 %v7569, 0.0
    %v8148 = vmax.f32 %v7728, 0.0
    %v8149 = vmax.f32 %v7730, 0.0
    %v8150 = vmax.f32 %v7889, 0.0
    %v8151 = vmax.f32 %v7891, 0.0
    %v8152 = vmax.f32 %v8050, 0.0
    %v8153 = vmax.f32 %v8052, 0.0
    %v8154 = vmax.f32 %v7573, 0.0
    %v8155 = vmax.f32 %v7575, 0.0
    %v8156 = vmax.f32 %v7734, 0.0
    %v8157 = vmax.f32 %v7736, 0.0
    %v8158 = vmax.f32 %v7895, 0.0
    %v8159 = vmax.f32 %v7897, 0.0
    %v8160 = vmax.f32 %v8056, 0.0
    %v8161 = vmax.f32 %v8058, 0.0
    %v8162 = vmax.f32 %v7579, 0.0
    %v8163 = vmax.f32 %v7581, 0.0
    %v8164 = vmax.f32 %v7740, 0.0
    %v8165 = vmax.f32 %v7742, 0.0
    %v8166 = vmax.f32 %v7901, 0.0
    %v8167 = vmax.f32 %v7903, 0.0
    %v8168 = vmax.f32 %v8062, 0.0
    %v8169 = vmax.f32 %v8064, 0.0
    %v8170 = vmax.f32 %v7585, 0.0
    %v8171 = vmax.f32 %v7587, 0.0
    %v8172 = vmax.f32 %v7746, 0.0
    %v8173 = vmax.f32 %v7748, 0.0
    %v8174 = vmax.f32 %v7907, 0.0
    %v8175 = vmax.f32 %v7909, 0.0
    %v8176 = vmax.f32 %v8068, 0.0
    %v8177 = vmax.f32 %v8070, 0.0
    %v8178 = vmax.f32 %v7591, 0.0
    %v8179 = vmax.f32 %v7593, 0.0
    %v8180 = vmax.f32 %v7752, 0.0
    %v8181 = vmax.f32 %v7754, 0.0
    %v8182 = vmax.f32 %v7913, 0.0
    %v8183 = vmax.f32 %v7915, 0.0
    %v8184 = vmax.f32 %v8074, 0.0
    %v8185 = vmax.f32 %v8076, 0.0
    %v8186 = vmax.f32 %v7597, 0.0
    %v8187 = vmax.f32 %v7599, 0.0
    %v8188 = vmax.f32 %v7758, 0.0
    %v8189 = vmax.f32 %v7760, 0.0
    %v8190 = vmax.f32 %v7919, 0.0
    %v8191 = vmax.f32 %v7921, 0.0
    %v8192 = vmax.f32 %v8080, 0.0
    %v8193 = vmax.f32 %v8082, 0.0
    %v8194 = vmax.f32 %v7603, 0.0
    %v8195 = vmax.f32 %v7605, 0.0
    %v8196 = vmax.f32 %v7764, 0.0
    %v8197 = vmax.f32 %v7766, 0.0
    %v8198 = vmax.f32 %v7925, 0.0
    %v8199 = vmax.f32 %v7927, 0.0
    %v8200 = vmax.f32 %v8086, 0.0
    %v8201 = vmax.f32 %v8088, 0.0
    %v8202 = vmax.f32 %v7609, 0.0
    %v8203 = vmax.f32 %v7611, 0.0
    %v8204 = vmax.f32 %v7770, 0.0
    %v8205 = vmax.f32 %v7772, 0.0
    %v8206 = vmax.f32 %v7931, 0.0
    %v8207 = vmax.f32 %v7933, 0.0
    %v8208 = vmax.f32 %v8092, 0.0
    %v8209 = vmax.f32 %v8094, 0.0
    %v8210 = vmax.f32 %v7615, 0.0
    %v8211 = vmax.f32 %v7617, 0.0
    %v8212 = vmax.f32 %v7776, 0.0
    %v8213 = vmax.f32 %v7778, 0.0
    %v8214 = vmax.f32 %v7937, 0.0
    %v8215 = vmax.f32 %v7939, 0.0
    %v8216 = vmax.f32 %v8098, 0.0
    %v8217 = vmax.f32 %v8100, 0.0
    %v8218 = vmax.f32 %v7621, 0.0
    %v8219 = vmax.f32 %v7623, 0.0
    %v8220 = vmax.f32 %v7782, 0.0
    %v8221 = vmax.f32 %v7784, 0.0
    %v8222 = vmax.f32 %v7943, 0.0
    %v8223 = vmax.f32 %v7945, 0.0
    %v8224 = vmax.f32 %v8104, 0.0
    %v8225 = vmax.f32 %v8106, 0.0
    %v8226 = vmax.f32 %v7627, 0.0
    %v8227 = vmax.f32 %v7629, 0.0
    %v8228 = vmax.f32 %v7788, 0.0
    %v8229 = vmax.f32 %v7790, 0.0
    %v8230 = vmax.f32 %v7949, 0.0
    %v8231 = vmax.f32 %v7951, 0.0
    %v8232 = vmax.f32 %v8110, 0.0
    %v8233 = vmax.f32 %v8112, 0.0
    %v8234 = vmax.f32 %v7633, 0.0
    %v8235 = vmax.f32 %v7635, 0.0
    %v8236 = vmax.f32 %v7794, 0.0
    %v8237 = vmax.f32 %v7796, 0.0
    %v8238 = vmax.f32 %v7955, 0.0
    %v8239 = vmax.f32 %v7957, 0.0
    %v8240 = vmax.f32 %v8116, 0.0
    %v8241 = vmax.f32 %v8118, 0.0
    %v8242 = vmax.f32 %v7639, 0.0
    %v8243 = vmax.f32 %v7641, 0.0
    %v8244 = vmax.f32 %v7800, 0.0
    %v8245 = vmax.f32 %v7802, 0.0
    %v8246 = vmax.f32 %v7961, 0.0
    %v8247 = vmax.f32 %v7963, 0.0
    %v8248 = vmax.f32 %v8122, 0.0
    %v8249 = vmax.f32 %v8124, 0.0
    %v8250 = vmax.f32 %v7645, 0.0
    %v8251 = vmax.f32 %v7647, 0.0
    %v8252 = vmax.f32 %v7806, 0.0
    %v8253 = vmax.f32 %v7808, 0.0
    %v8254 = vmax.f32 %v7967, 0.0
    %v8255 = vmax.f32 %v7969, 0.0
    %v8256 = vmax.f32 %v8128, 0.0
    %v8257 = vmax.f32 %v8130, 0.0
    %v8258 = vmax.f32 %v7651, 0.0
    %v8259 = vmax.f32 %v7653, 0.0
    %v8260 = vmax.f32 %v7812, 0.0
    %v8261 = vmax.f32 %v7814, 0.0
    %v8262 = vmax.f32 %v7973, 0.0
    %v8263 = vmax.f32 %v7975, 0.0
    %v8264 = vmax.f32 %v8134, 0.0
    %v8265 = vmax.f32 %v8136, 0.0
    %v8266 = vadd.f32 %v8138, %v8139
    %v8267 = vadd.f32 %v8146, %v8147
    %v8268 = vadd.f32 %v8154, %v8155
    %v8269 = vadd.f32 %v8162, %v8163
    %v8270 = vadd.f32 %v8170, %v8171
    %v8271 = vadd.f32 %v8178, %v8179
    %v8272 = vadd.f32 %v8186, %v8187
    %v8273 = vadd.f32 %v8194, %v8195
    %v8274 = vadd.f32 %v8202, %v8203
    %v8275 = vadd.f32 %v8210, %v8211
    %v8276 = vadd.f32 %v8218, %v8219
    %v8277 = vadd.f32 %v8226, %v8227
    %v8278 = vadd.f32 %v8234, %v8235
    %v8279 = vadd.f32 %v8242, %v8243
    %v8280 = vadd.f32 %v8250, %v8251
    %v8281 = vadd.f32 %v8258, %v8259
    %v8282 = vadd.f32 %v8266, %v8140
    %v8283 = vadd.f32 %v8267, %v8148
    %v8284 = vadd.f32 %v8268, %v8156
    %v8285 = vadd.f32 %v8269, %v8164
    %v8286 = vadd.f32 %v8270, %v8172
    %v8287 = vadd.f32 %v8271, %v8180
    %v8288 = vadd.f32 %v8272, %v8188
    %v8289 = vadd.f32 %v8273, %v8196
    %v8290 = vadd.f32 %v8274, %v8204
    %v8291 = vadd.f32 %v8275, %v8212
    %v8292 = vadd.f32 %v8276, %v8220
    %v8293 = vadd.f32 %v8277, %v8228
    %v8294 = vadd.f32 %v8278, %v8236
    %v8295 = vadd.f32 %v8279, %v8244
    %v8296 = vadd.f32 %v8280, %v8252
    %v8297 = vadd.f32 %v8281, %v8260
    %v8298 = vadd.f32 %v8282, %v8141
    %v8299 = vadd.f32 %v8283, %v8149
    %v8300 = vadd.f32 %v8284, %v8157
    %v8301 = vadd.f32 %v8285, %v8165
    %v8302 = vadd.f32 %v8286, %v8173
    %v8303 = vadd.f32 %v8287, %v8181
    %v8304 = vadd.f32 %v8288, %v8189
    %v8305 = vadd.f32 %v8289, %v8197
    %v8306 = vadd.f32 %v8290, %v8205
    %v8307 = vadd.f32 %v8291, %v8213
    %v8308 = vadd.f32 %v8292, %v8221
    %v8309 = vadd.f32 %v8293, %v8229
    %v8310 = vadd.f32 %v8294, %v8237
    %v8311 = vadd.f32 %v8295, %v8245
    %v8312 = vadd.f32 %v8296, %v8253
    %v8313 = vadd.f32 %v8297, %v8261
    %v8314 = vadd.f32 %v8298, %v8142
    %v8315 = vadd.f32 %v8299, %v8150
    %v8316 = vadd.f32 %v8300, %v8158
    %v8317 = vadd.f32 %v8301, %v8166
    %v8318 = vadd.f32 %v8302, %v8174
    %v8319 = vadd.f32 %v8303, %v8182
    %v8320 = vadd.f32 %v8304, %v8190
    %v8321 = vadd.f32 %v8305, %v8198
    %v8322 = vadd.f32 %v8306, %v8206
    %v8323 = vadd.f32 %v8307, %v8214
    %v8324 = vadd.f32 %v8308, %v8222
    %v8325 = vadd.f32 %v8309, %v8230
    %v8326 = vadd.f32 %v8310, %v8238
    %v8327 = vadd.f32 %v8311, %v8246
    %v8328 = vadd.f32 %v8312, %v8254
    %v8329 = vadd.f32 %v8313, %v8262
    %v8330 = vadd.f32 %v8314, %v8143
    %v8331 = vadd.f32 %v8315, %v8151
    %v8332 = vadd.f32 %v8316, %v8159
    %v8333 = vadd.f32 %v8317, %v8167
    %v8334 = vadd.f32 %v8318, %v8175
    %v8335 = vadd.f32 %v8319, %v8183
    %v8336 = vadd.f32 %v8320, %v8191
    %v8337 = vadd.f32 %v8321, %v8199
    %v8338 = vadd.f32 %v8322, %v8207
    %v8339 = vadd.f32 %v8323, %v8215
    %v8340 = vadd.f32 %v8324, %v8223
    %v8341 = vadd.f32 %v8325, %v8231
    %v8342 = vadd.f32 %v8326, %v8239
    %v8343 = vadd.f32 %v8327, %v8247
    %v8344 = vadd.f32 %v8328, %v8255
    %v8345 = vadd.f32 %v8329, %v8263
    %v8346 = vadd.f32 %v8330, %v8144
    %v8347 = vadd.f32 %v8331, %v8152
    %v8348 = vadd.f32 %v8332, %v8160
    %v8349 = vadd.f32 %v8333, %v8168
    %v8350 = vadd.f32 %v8334, %v8176
    %v8351 = vadd.f32 %v8335, %v8184
    %v8352 = vadd.f32 %v8336, %v8192
    %v8353 = vadd.f32 %v8337, %v8200
    %v8354 = vadd.f32 %v8338, %v8208
    %v8355 = vadd.f32 %v8339, %v8216
    %v8356 = vadd.f32 %v8340, %v8224
    %v8357 = vadd.f32 %v8341, %v8232
    %v8358 = vadd.f32 %v8342, %v8240
    %v8359 = vadd.f32 %v8343, %v8248
    %v8360 = vadd.f32 %v8344, %v8256
    %v8361 = vadd.f32 %v8345, %v8264
    %v8362 = vadd.f32 %v8346, %v8145
    %v8363 = vadd.f32 %v8347, %v8153
    %v8364 = vadd.f32 %v8348, %v8161
    %v8365 = vadd.f32 %v8349, %v8169
    %v8366 = vadd.f32 %v8350, %v8177
    %v8367 = vadd.f32 %v8351, %v8185
    %v8368 = vadd.f32 %v8352, %v8193
    %v8369 = vadd.f32 %v8353, %v8201
    %v8370 = vadd.f32 %v8354, %v8209
    %v8371 = vadd.f32 %v8355, %v8217
    %v8372 = vadd.f32 %v8356, %v8225
    %v8373 = vadd.f32 %v8357, %v8233
    %v8374 = vadd.f32 %v8358, %v8241
    %v8375 = vadd.f32 %v8359, %v8249
    %v8376 = vadd.f32 %v8360, %v8257
    %v8377 = vadd.f32 %v8361, %v8265
    %v8378 = vmul.f32 %v8362, 0.125
    %v8379 = vmul.f32 %v8363, 0.125
    %v8380 = vmul.f32 %v8364, 0.125
    %v8381 = vmul.f32 %v8365, 0.125
    %v8382 = vmul.f32 %v8366, 0.125
    %v8383 = vmul.f32 %v8367, 0.125
    %v8384 = vmul.f32 %v8368, 0.125
    %v8385 = vmul.f32 %v8369, 0.125
    %v8386 = vmul.f32 %v8370, 0.125
    %v8387 = vmul.f32 %v8371, 0.125
    %v8388 = vmul.f32 %v8372, 0.125
    %v8389 = vmul.f32 %v8373, 0.125
    %v8390 = vmul.f32 %v8374, 0.125
    %v8391 = vmul.f32 %v8375, 0.125
    %v8392 = vmul.f32 %v8376, 0.125
    %v8393 = vmul.f32 %v8377, 0.125
    %v8394 = vld [vmem:[%s13] sm:$0xff]
    %v8395 = vld [vmem:[%s13 + $0x8] sm:$0xff]
    %v8396 = vld [vmem:[%s13 + $0x10] sm:$0xff]
    %v8397 = vld [vmem:[%s13 + $0x18] sm:$0xff]
    %v8398 = vld [vmem:[%s13 + $0x20] sm:$0xff]
    %v8399 = vld [vmem:[%s13 + $0x28] sm:$0xff]
    %v8400 = vld [vmem:[%s13 + $0x30] sm:$0xff]
    %v8401 = vld [vmem:[%s13 + $0x38] sm:$0xff]
    %v8402 = vld [vmem:[%s13 + $0x40] sm:$0xff]
    %v8403 = vld [vmem:[%s13 + $0x48] sm:$0xff]
    %v8404 = vld [vmem:[%s13 + $0x50] sm:$0xff]
    %v8405 = vld [vmem:[%s13 + $0x58] sm:$0xff]
    %v8406 = vld [vmem:[%s13 + $0x60] sm:$0xff]
    %v8407 = vld [vmem:[%s13 + $0x68] sm:$0xff]
    %v8408 = vld [vmem:[%s13 + $0x70] sm:$0xff]
    %v8409 = vld [vmem:[%s13 + $0x78] sm:$0xff]
    %8411 = vset.pattern.permute.xlu0 0
    %8412 = vperm.xlu0 %8411, %v8394
    %v8413 = vpop.permute.xlu0 %8412
    %8416 = vset.pattern.permute.xlu0 0
    %8417 = vperm.xlu0 %8416, %v8395
    %v8418 = vpop.permute.xlu0 %8417
    %8421 = vset.pattern.permute.xlu0 0
    %8422 = vperm.xlu0 %8421, %v8396
    %v8423 = vpop.permute.xlu0 %8422
    %8426 = vset.pattern.permute.xlu0 0
    %8427 = vperm.xlu0 %8426, %v8397
    %v8428 = vpop.permute.xlu0 %8427
    %8431 = vset.pattern.permute.xlu0 0
    %8432 = vperm.xlu0 %8431, %v8398
    %v8433 = vpop.permute.xlu0 %8432
    %8436 = vset.pattern.permute.xlu0 0
    %8437 = vperm.xlu0 %8436, %v8399
    %v8438 = vpop.permute.xlu0 %8437
    %8441 = vset.pattern.permute.xlu0 0
    %8442 = vperm.xlu0 %8441, %v8400
    %v8443 = vpop.permute.xlu0 %8442
    %8446 = vset.pattern.permute.xlu0 0
    %8447 = vperm.xlu0 %8446, %v8401
    %v8448 = vpop.permute.xlu0 %8447
    %8451 = vset.pattern.permute.xlu0 0
    %8452 = vperm.xlu0 %8451, %v8402
    %v8453 = vpop.permute.xlu0 %8452
    %8456 = vset.pattern.permute.xlu0 0
    %8457 = vperm.xlu0 %8456, %v8403
    %v8458 = vpop.permute.xlu0 %8457
    %8461 = vset.pattern.permute.xlu0 0
    %8462 = vperm.xlu0 %8461, %v8404
    %v8463 = vpop.permute.xlu0 %8462
    %8466 = vset.pattern.permute.xlu0 0
    %8467 = vperm.xlu0 %8466, %v8405
    %v8468 = vpop.permute.xlu0 %8467
    %8471 = vset.pattern.permute.xlu0 0
    %8472 = vperm.xlu0 %8471, %v8406
    %v8473 = vpop.permute.xlu0 %8472
    %8476 = vset.pattern.permute.xlu0 0
    %8477 = vperm.xlu0 %8476, %v8407
    %v8478 = vpop.permute.xlu0 %8477
    %8481 = vset.pattern.permute.xlu0 0
    %8482 = vperm.xlu0 %8481, %v8408
    %v8483 = vpop.permute.xlu0 %8482
    %8486 = vset.pattern.permute.xlu0 0
    %8487 = vperm.xlu0 %8486, %v8409
    %v8488 = vpop.permute.xlu0 %8487
    %v8490 = vmul.f32 %v8378, %v8413
    %v8491 = vmul.f32 %v8379, %v8418
    %v8492 = vmul.f32 %v8380, %v8423
    %v8493 = vmul.f32 %v8381, %v8428
    %v8494 = vmul.f32 %v8382, %v8433
    %v8495 = vmul.f32 %v8383, %v8438
    %v8496 = vmul.f32 %v8384, %v8443
    %v8497 = vmul.f32 %v8385, %v8448
    %v8498 = vmul.f32 %v8386, %v8453
    %v8499 = vmul.f32 %v8387, %v8458
    %v8500 = vmul.f32 %v8388, %v8463
    %v8501 = vmul.f32 %v8389, %v8468
    %v8502 = vmul.f32 %v8390, %v8473
    %v8503 = vmul.f32 %v8391, %v8478
    %v8504 = vmul.f32 %v8392, %v8483
    %v8505 = vmul.f32 %v8393, %v8488
    %v8506 = vadd.f32 %v8490, %v8491
    %v8507 = vadd.f32 %v8506, %v8492
    %v8508 = vadd.f32 %v8507, %v8493
    %v8509 = vadd.f32 %v8508, %v8494
    %v8510 = vadd.f32 %v8509, %v8495
    %v8511 = vadd.f32 %v8510, %v8496
    %v8512 = vadd.f32 %v8511, %v8497
    %v8513 = vadd.f32 %v8512, %v8498
    %v8514 = vadd.f32 %v8513, %v8499
    %v8515 = vadd.f32 %v8514, %v8500
    %v8516 = vadd.f32 %v8515, %v8501
    %v8517 = vadd.f32 %v8516, %v8502
    %v8518 = vadd.f32 %v8517, %v8503
    %v8519 = vadd.f32 %v8518, %v8504
    %v8520 = vadd.f32 %v8519, %v8505
    %v8521 = vrot.slane %v8520, 4
    %v8522 = vadd.f32 %v8520, %v8521
    %v8523 = vrot.slane %v8522, 2
    %v8524 = vadd.f32 %v8522, %v8523
    %v8525 = vrot.slane %v8524, 1
    %v8526 = vadd.f32 %v8524, %v8525
    %s8527 = sld [smem:[#allocation2]]
    %v8528 = vstv %s8527
    %v8529 = vadd.f32 %v8526, %v8528
    %8530 = vst [vmem:[#allocation3] sm:$0x1] %v8529
    // Predicated region
    $region62: #{tpu_custom_call.1} parent=1 // pred_check
      _
    $region63: #{tpu_custom_call.1} parent=1 // pred_check_branch
      %8532 = sbr.rel (0) target = $region65
    $region64: #{tpu_custom_call.1} parent=1 // pred_region
      %s8534 = ssub.s32 16, 16
      %8535 = vsyncadd [#allocation4], %s8534
      %s8537 = sshll.u32 [#allocation3], 4
      %s8538 = int_to_ptr.vmem [resolvable:$true] %s8537
      %8540 = dma.vmem_to_hbm [thread:$0]  %s8538, 16, %s15, [#allocation4]
    $region65: #{tpu_custom_call.1} parent=1 // pred_fallthru
      _
    // Predicated region
    $region66: #{tpu_custom_call.1} parent=1 // pred_check
      _
    $region67: #{tpu_custom_call.1} parent=1 // pred_check_branch
      %8542 = sbr.rel (0) target = $region69
    $region68: #{tpu_custom_call.1} parent=1 // pred_region
      %8543 = dma.done [#allocation4], 16
    $region69: #{tpu_custom_call.1} parent=1 // pred_fallthru
      _
    %8544 = vsyncpa [#allocation4], 1

</llo_original>
